<compile_context>
chip_gen: v7x
topology: tpu7x:2x2x1
jax: 0.10.0
libtpu: 0.0.40
codegen_flags: <defaults>
</compile_context>

<pallas_src>
import functools
import numpy as np
import jax
import jax.numpy as jnp
from jax.experimental import pallas as pl
from jax.experimental.pallas import tpu as pltpu

BN_EPS = 1e-5
FEAT = 2048                        # backbone feature width (ResNet50 fc input)
TK = 1024                          # K-tile for the backbone matmul (mult. of 128)
N_BLK = 1024                       # N-split of the 2048 backbone outputs (2 blocks)
VMEM_LIMIT = 48 * 1024 * 1024      # <= 64 MiB (v7x per-core VMEM)
VMEM_SPEC = pl.BlockSpec(memory_space=pltpu.MemorySpace.VMEM)


# ----------------------------- kernel bodies ---------------------------------
def _backbone_kernel(x_ref, wb_ref, scale_ref, bb_ref, feat_ref):
    """Backbone-stub matmul: grid=(n_blocks, k_tiles), n parallel / k reduction.

    wb is int8; per-column dequant scale is deferred to the epilogue (scale is
    per output column, so x @ (q * s) == (x @ q) * s), then bias + ReLU.
    """
    k = pl.program_id(1)

    @pl.when(k == 0)
    def _():
        feat_ref[...] = jnp.zeros_like(feat_ref)

    # int8 -> f32 -> bf16 (exact for int8 values); MXU runs bf16 with f32 acc.
    w_tile = wb_ref[...].astype(jnp.float32).astype(jnp.bfloat16)
    feat_ref[...] += jnp.dot(x_ref[...], w_tile,
                             preferred_element_type=jnp.float32)

    @pl.when(k == pl.num_programs(1) - 1)
    def _():
        feat_ref[...] = jnp.maximum(
            feat_ref[...] * scale_ref[...] + bb_ref[...], 0.0)


def _mlp_tail(f, w1_ref, b1_ref, w2_ref, b2_ref, w3_ref, b3_ref):
    """prnu_extractor MLP (BN folded into w2/b2, eval-mode Dropout = identity)."""
    # Linear(2048,1024) -> ReLU -> Dropout(0.3) [eval: identity]
    h = jnp.maximum(
        jnp.dot(f.astype(w1_ref.dtype), w1_ref[...],
                preferred_element_type=jnp.float32) + b1_ref[...], 0.0)
    # Linear(1024,512) with BatchNorm1d(512) folded in, then ReLU
    h = jnp.maximum(
        jnp.dot(h.astype(w2_ref.dtype), w2_ref[...],
                preferred_element_type=jnp.float32) + b2_ref[...], 0.0)
    # Linear(512,256)
    return (jnp.dot(h.astype(w3_ref.dtype), w3_ref[...],
                    preferred_element_type=jnp.float32) + b3_ref[...])


def _sim_head(s1, s2, ws1a_ref, ws1b_ref, bs1_ref, ws2_ref, bs2_ref):
    """similarity_head: Linear(512,128)->ReLU->Linear(128,1)->Sigmoid.

    concat([s1, s2], dim=1) @ W1 is the split matmul s1 @ W1[:256] + s2 @ W1[256:];
    the final 128->1 Linear is a lane reduce on the VPU.
    """
    h = jnp.maximum(
        jnp.dot(s1.astype(ws1a_ref.dtype), ws1a_ref[...],
                preferred_element_type=jnp.float32)
        + jnp.dot(s2.astype(ws1b_ref.dtype), ws1b_ref[...],
                  preferred_element_type=jnp.float32)
        + bs1_ref[...], 0.0)
    logit = jnp.sum(h * ws2_ref[...], axis=-1, keepdims=True) + bs2_ref[...]
    return jax.nn.sigmoid(logit)


def _tail_kernel(f_ref, w1_ref, b1_ref, w2_ref, b2_ref, w3_ref, b3_ref, sig_ref):
    """Signature-only tail: features -> 256-d signature."""
    sig = _mlp_tail(f_ref[...], w1_ref, b1_ref, w2_ref, b2_ref, w3_ref, b3_ref)
    sig_ref[...] = sig.astype(sig_ref.dtype)


def _tail_compare_kernel(B, f_ref, w1_ref, b1_ref, w2_ref, b2_ref, w3_ref, b3_ref,
                         ws1a_ref, ws1b_ref, bs1_ref, ws2_ref, bs2_ref,
                         sig_ref, sim_ref):
    """Comparison tail: features of x1||x2 -> signatures + similarity score."""
    sig = _mlp_tail(f_ref[...], w1_ref, b1_ref, w2_ref, b2_ref, w3_ref, b3_ref)
    sig_ref[...] = sig.astype(sig_ref.dtype)
    sim = _sim_head(sig[:B], sig[B:], ws1a_ref, ws1b_ref, bs1_ref, ws2_ref, bs2_ref)
    sim_ref[...] = sim.astype(sim_ref.dtype)


def _similarity_kernel(s1_ref, s2_ref, w1a_ref, w1b_ref, b1_ref, w2_ref, b2_ref,
                       out_ref):
    """Standalone similarity head on pre-computed signatures."""
    out_ref[...] = _sim_head(s1_ref[...], s2_ref[...], w1a_ref, w1b_ref,
                             b1_ref, w2_ref, b2_ref).astype(out_ref.dtype)


# ----------------------------- parameters ------------------------------------
def init_params(key, in_features):
    """Deterministic synthetic parameters matching the module's layer shapes."""
    ks = jax.random.split(key, 12)

    def lin(k, fan_in, fan_out):
        kw, kb = jax.random.split(k)
        w = jax.random.normal(kw, (fan_in, fan_out), jnp.float32) / jnp.sqrt(fan_in)
        b = 0.01 * jax.random.normal(kb, (1, fan_out), jnp.float32)
        return w, b

    p = {}
    p['wb'], p['bb'] = lin(ks[0], in_features, FEAT)       # backbone stub
    p['w1'], p['b1'] = lin(ks[1], 2048, 1024)              # prnu_extractor[0]
    p['w2'], p['b2'] = lin(ks[2], 1024, 512)               # prnu_extractor[3]
    p['gamma'] = 1.0 + 0.1 * jax.random.normal(ks[3], (1, 512), jnp.float32)
    p['beta']  = 0.1 * jax.random.normal(ks[4], (1, 512), jnp.float32)
    p['mean']  = 0.1 * jax.random.normal(ks[5], (1, 512), jnp.float32)
    p['var']   = jnp.abs(jax.random.normal(ks[6], (1, 512), jnp.float32)) + 0.5
    p['w3'], p['b3'] = lin(ks[7], 512, 256)                # prnu_extractor[7]
    p['ws1'], p['bs1'] = lin(ks[8], 512, 128)              # similarity_head[0]
    p['ws2'], p['bs2'] = lin(ks[9], 128, 1)                # similarity_head[2]
    return p


def prepare_params(raw, tk=TK):
    """Fold BN into w2/b2, quantize wb to int8 (per-col scale), cast tail to bf16."""
    bn_scale = raw['gamma'] * jax.lax.rsqrt(raw['var'] + BN_EPS)         # (1,512)
    w2f = raw['w2'] * bn_scale
    b2f = (raw['b2'] - raw['mean']) * bn_scale + raw['beta']

    wb = raw['wb']
    f_in = wb.shape[0]
    f_pad = ((f_in + tk - 1) // tk) * tk
    if f_pad != f_in:
        wb = jnp.pad(wb, ((0, f_pad - f_in), (0, 0)))

    # Per-output-column symmetric int8 quantization of the backbone weight.
    col_max = jnp.max(jnp.abs(wb), axis=0, keepdims=True)                # (1,2048)
    wb_scale = jnp.maximum(col_max, 1e-8) / 127.0
    wb_q = jnp.clip(jnp.round(wb / wb_scale), -127, 127).astype(jnp.int8)

    p = {}
    p['wb'] = wb_q                                         # int8, rows padded to TK
    p['wb_scale'] = wb_scale.astype(jnp.float32)           # per-column dequant scale
    p['bb'] = raw['bb']
    p['w1'] = raw['w1'].astype(jnp.bfloat16)
    p['b1'] = raw['b1']
    p['w2'] = w2f.astype(jnp.bfloat16)                     # BN folded in
    p['b2'] = b2f
    p['w3'] = raw['w3'].astype(jnp.bfloat16)
    p['b3'] = raw['b3']
    p['ws1a'] = raw['ws1'][:256].astype(jnp.bfloat16)      # top half of concat
    p['ws1b'] = raw['ws1'][256:].astype(jnp.bfloat16)      # bottom half of concat
    p['bs1'] = raw['bs1']
    p['ws2'] = raw['ws2'].T.astype(jnp.float32)            # (1,128) row for lane reduce
    p['bs2'] = raw['bs2']                                  # (1,1)
    return p


# ------------------------------- wrappers -------------------------------------
def _flatten_pad(x_nchw, f_pad):
    b = x_nchw.shape[0]
    x = x_nchw.reshape(b, -1).astype(jnp.bfloat16)
    if x.shape[1] != f_pad:
        x = jnp.pad(x, ((0, 0), (0, f_pad - x.shape[1])))
    return x


def _backbone_features(x_flat, p):
    """[rows, f_pad] bf16 -> [rows, 2048] f32 post-ReLU features.

    grid=(n_blocks, k_tiles): n ('parallel') splits the 2048 outputs across
    TensorCores on v7x; k ('arbitrary') streams int8 weight K-tiles with
    BlockSpec double-buffering so DMA overlaps the MXU.
    """
    rows = x_flat.shape[0]
    f_pad = p['wb'].shape[0]
    k_tiles = f_pad // TK
    n_blocks = FEAT // N_BLK

    grid_spec = pltpu.PrefetchScalarGridSpec(
        num_scalar_prefetch=0, grid=(n_blocks, k_tiles),
        in_specs=[
            pl.BlockSpec((rows, TK), lambda n, k: (0, k)),        # x
            pl.BlockSpec((TK, N_BLK), lambda n, k: (k, n)),       # wb (int8)
            pl.BlockSpec((1, N_BLK), lambda n, k: (0, n)),        # dequant scale
            pl.BlockSpec((1, N_BLK), lambda n, k: (0, n)),        # backbone bias
        ],
        out_specs=pl.BlockSpec((rows, N_BLK), lambda n, k: (0, n)),
    )
    return pl.pallas_call(
        _backbone_kernel,
        out_shape=jax.ShapeDtypeStruct((rows, FEAT), jnp.float32),
        grid_spec=grid_spec,
        compiler_params=pltpu.CompilerParams(
            dimension_semantics=("parallel", "arbitrary"),
            vmem_limit_bytes=VMEM_LIMIT),
    )(x_flat, p['wb'], p['wb_scale'], p['bb'])


@jax.jit
def extract_signature(x_nchw, p):
    """Signature mode: [B,3,H,W] -> [B,256]."""
    x = _flatten_pad(x_nchw, p['wb'].shape[0])
    feats = _backbone_features(x, p)
    rows = feats.shape[0]
    return pl.pallas_call(
        _tail_kernel,
        out_shape=jax.ShapeDtypeStruct((rows, 256), jnp.float32),
        in_specs=[VMEM_SPEC] * 7,
        out_specs=VMEM_SPEC,
        compiler_params=pltpu.CompilerParams(vmem_limit_bytes=VMEM_LIMIT),
    )(feats, p['w1'], p['b1'], p['w2'], p['b2'], p['w3'], p['b3'])


@jax.jit
def prnu_forward(p, x1, x2=None):
    """Matches PRNUModel.forward: signature mode or comparison mode."""
    if x2 is None:
        return extract_signature(x1, p)

    B = x1.shape[0]
    f_pad = p['wb'].shape[0]
    # Batch both images through one backbone pass (rows = 2B): weights stream once.
    x = jnp.concatenate([_flatten_pad(x1, f_pad), _flatten_pad(x2, f_pad)], axis=0)
    feats = _backbone_features(x, p)
    rows = 2 * B

    sig, sim = pl.pallas_call(
        functools.partial(_tail_compare_kernel, B),
        out_shape=(jax.ShapeDtypeStruct((rows, 256), jnp.float32),
                   jax.ShapeDtypeStruct((B, 1), jnp.float32)),
        in_specs=[VMEM_SPEC] * 12,
        out_specs=(VMEM_SPEC, VMEM_SPEC),
        compiler_params=pltpu.CompilerParams(vmem_limit_bytes=VMEM_LIMIT),
    )(feats, p['w1'], p['b1'], p['w2'], p['b2'], p['w3'], p['b3'],
      p['ws1a'], p['ws1b'], p['bs1'], p['ws2'], p['bs2'])
    return sim, sig[:B], sig[B:]


@jax.jit
def compute_similarity(sig1, sig2, p):
    """Standalone similarity head on pre-computed signatures (module parity)."""
    B = sig1.shape[0]
    return pl.pallas_call(
        _similarity_kernel,
        out_shape=jax.ShapeDtypeStruct((B, 1), jnp.float32),
        in_specs=[VMEM_SPEC] * 7,
        out_specs=VMEM_SPEC,
    )(sig1, sig2, p['ws1a'], p['ws1b'], p['bs1'], p['ws2'], p['bs2'])


# -------------------------- pure-JAX reference --------------------------------
def _ref_signature(x, p):
    xb = _flatten_pad(x, p['wb'].shape[0])
    acc = jnp.dot(xb, p['wb'].astype(jnp.bfloat16),
                  preferred_element_type=jnp.float32)
    f = jnp.maximum(acc * p['wb_scale'] + p['bb'], 0.0)
    h = jnp.maximum(jnp.dot(f.astype(jnp.bfloat16), p['w1'],
                            preferred_element_type=jnp.float32) + p['b1'], 0.0)
    h = jnp.maximum(jnp.dot(h.astype(jnp.bfloat16), p['w2'],
                            preferred_element_type=jnp.float32) + p['b2'], 0.0)
    return (jnp.dot(h.astype(jnp.bfloat16), p['w3'],
                    preferred_element_type=jnp.float32) + p['b3'])


def _ref_forward(p, x1, x2):
    s1, s2 = _ref_signature(x1, p), _ref_signature(x2, p)
    h = jnp.maximum(
        jnp.dot(s1.astype(jnp.bfloat16), p['ws1a'], preferred_element_type=jnp.float32)
        + jnp.dot(s2.astype(jnp.bfloat16), p['ws1b'], preferred_element_type=jnp.float32)
        + p['bs1'], 0.0)
    logit = jnp.sum(h * p['ws2'], axis=-1, keepdims=True) + p['bs2']
    return jax.nn.sigmoid(logit), s1, s2


# ------------------------------- main -----------------------------------------
if __name__ == "__main__":
    key = jax.random.PRNGKey(0)
    k_p, k_x1, k_x2 = jax.random.split(key, 3)

    B, C, H, W = 2, 3, 16, 16
    x1 = jax.random.normal(k_x1, (B, C, H, W), jnp.float32)
    x2 = jax.random.normal(k_x2, (B, C, H, W), jnp.float32)

    raw = init_params(k_p, C * H * W)
    params = prepare_params(raw)

    # comparison mode: (x1, x2) -> (similarity, sig1, sig2)
    sim, sig1, sig2 = prnu_forward(params, x1, x2)
    jax.block_until_ready((sim, sig1, sig2))

    # signature mode: x1 only -> sig
    sig_only = prnu_forward(params, x1)
    jax.block_until_ready(sig_only)

    # standalone similarity on pre-computed signatures
    sim_sa = compute_similarity(sig1, sig2, params)
    jax.block_until_ready(sim_sa)

    # sanity check against pure-JAX reference (same int8/bf16/f32 mixed precision)
    sim_r, sig1_r, sig2_r = _ref_forward(params, x1, x2)
    assert sim.shape == (B, 1) and sig1.shape == (B, 256) and sig2.shape == (B, 256)
    np.testing.assert_allclose(np.asarray(sig1), np.asarray(sig1_r), rtol=1e-2, atol=1e-2)
    np.testing.assert_allclose(np.asarray(sig2), np.asarray(sig2_r), rtol=1e-2, atol=1e-2)
    np.testing.assert_allclose(np.asarray(sim), np.asarray(sim_r), rtol=1e-2, atol=1e-2)
    np.testing.assert_allclose(np.asarray(sim_sa), np.asarray(sim_r), rtol=1e-2, atol=1e-2)
    np.testing.assert_allclose(np.asarray(sig_only), np.asarray(sig1_r), rtol=1e-2, atol=1e-2)

    print("KERNEL_OK")
</pallas_src>

<mosaic_0001>
module attributes {stable_mosaic.version = 11 : i64} {
  func.func @_backbone_kernel(%arg0: i32, %arg1: i32, %arg2: memref<4x1024xbf16, #tpu.memory_space<vmem>>, %arg3: memref<1024x1024xi8, #tpu.memory_space<vmem>>, %arg4: memref<1x1024xf32, #tpu.memory_space<vmem>>, %arg5: memref<1x1024xf32, #tpu.memory_space<vmem>>, %arg6: memref<4x1024xf32, #tpu.memory_space<vmem>>) attributes {dimension_semantics = [#tpu.dimension_semantics<parallel>, #tpu.dimension_semantics<arbitrary>], iteration_bounds = array<i64: 2, 1>, scalar_prefetch = 0 : i64, scratch_operands = 0 : i64, tpu.core_type = #tpu.core_type<tc>, window_params = [{transform_indices = @transform_0, window_bounds = array<i64: 4, 1024>}, {transform_indices = @transform_1, window_bounds = array<i64: 1024, 1024>}, {transform_indices = @transform_2, window_bounds = array<i64: 1, 1024>}, {transform_indices = @transform_3, window_bounds = array<i64: 1, 1024>}, {transform_indices = @transform_4, window_bounds = array<i64: 4, 1024>}]} {
    %c0_i32 = arith.constant 0 : i32
    %0 = arith.cmpi eq, %arg1, %c0_i32 : i32
    %1 = arith.extui %0 : i1 to i32
    %c0_i32_0 = arith.constant 0 : i32
    %2 = arith.cmpi ne, %1, %c0_i32_0 : i32
    scf.if %2 {
      %cst_10 = arith.constant 0.000000e+00 : f32
      %14 = vector.broadcast %cst_10 : f32 to vector<4x1024xf32>
      %c0_11 = arith.constant 0 : index
      %c0_12 = arith.constant 0 : index
      %15 = vector.load %arg6[%c0_11, %c0_12] : memref<4x1024xf32, #tpu.memory_space<vmem>>, vector<4x1024xf32>
      tpu.vector_store %arg6[%c0_11, %c0_12], %14 {strides = array<i32>} : memref<4x1024xf32, #tpu.memory_space<vmem>>, vector<4x1024xf32>,
    } else {
    }
    %c0 = arith.constant 0 : index
    %c0_1 = arith.constant 0 : index
    %3 = vector.load %arg3[%c0, %c0_1] : memref<1024x1024xi8, #tpu.memory_space<vmem>>, vector<1024x1024xi8>
    %4 = arith.sitofp %3 : vector<1024x1024xi8> to vector<1024x1024xf32>
    %5 = arith.truncf %4 : vector<1024x1024xf32> to vector<1024x1024xbf16>
    %c0_2 = arith.constant 0 : index
    %c0_3 = arith.constant 0 : index
    %6 = vector.load %arg6[%c0_2, %c0_3] : memref<4x1024xf32, #tpu.memory_space<vmem>>, vector<4x1024xf32>
    %c0_4 = arith.constant 0 : index
    %c0_5 = arith.constant 0 : index
    %7 = vector.load %arg2[%c0_4, %c0_5] : memref<4x1024xbf16, #tpu.memory_space<vmem>>, vector<4x1024xbf16>
    %cst = arith.constant dense<0.000000e+00> : vector<4x1024xf32>
    %8 = tpu.matmul %7, %5, %cst {dimension_numbers = #tpu.dot_dimension_numbers<[1], [0], [0], [1], [0, 0, 1, 1], [], []>} : vector<4x1024xbf16>, vector<1024x1024xbf16>, vector<4x1024xf32> -> vector<4x1024xf32>
    %9 = arith.addf %6, %8 : vector<4x1024xf32>
    %c0_6 = arith.constant 0 : index
    %c0_7 = arith.constant 0 : index
    %10 = vector.load %arg6[%c0_6, %c0_7] : memref<4x1024xf32, #tpu.memory_space<vmem>>, vector<4x1024xf32>
    tpu.vector_store %arg6[%c0_6, %c0_7], %9 {strides = array<i32>} : memref<4x1024xf32, #tpu.memory_space<vmem>>, vector<4x1024xf32>,
    %c0_i32_8 = arith.constant 0 : i32
    %11 = arith.cmpi eq, %arg1, %c0_i32_8 : i32
    %12 = arith.extui %11 : i1 to i32
    %c0_i32_9 = arith.constant 0 : i32
    %13 = arith.cmpi ne, %12, %c0_i32_9 : i32
    scf.if %13 {
      %c0_10 = arith.constant 0 : index
      %c0_11 = arith.constant 0 : index
      %14 = vector.load %arg6[%c0_10, %c0_11] : memref<4x1024xf32, #tpu.memory_space<vmem>>, vector<4x1024xf32>
      %c0_12 = arith.constant 0 : index
      %c0_13 = arith.constant 0 : index
      %15 = vector.load %arg4[%c0_12, %c0_13] : memref<1x1024xf32, #tpu.memory_space<vmem>>, vector<1x1024xf32>
      %16 = vector.broadcast %15 : vector<1x1024xf32> to vector<4x1024xf32>
      %17 = arith.mulf %14, %16 : vector<4x1024xf32>
      %c0_14 = arith.constant 0 : index
      %c0_15 = arith.constant 0 : index
      %18 = vector.load %arg5[%c0_14, %c0_15] : memref<1x1024xf32, #tpu.memory_space<vmem>>, vector<1x1024xf32>
      %19 = vector.broadcast %18 : vector<1x1024xf32> to vector<4x1024xf32>
      %20 = arith.addf %17, %19 : vector<4x1024xf32>
      %cst_16 = arith.constant 0.000000e+00 : f32
      %21 = vector.broadcast %cst_16 : f32 to vector<4x1024xf32>
      %22 = arith.maximumf %20, %21 : vector<4x1024xf32>
      %c0_17 = arith.constant 0 : index
      %c0_18 = arith.constant 0 : index
      %23 = vector.load %arg6[%c0_17, %c0_18] : memref<4x1024xf32, #tpu.memory_space<vmem>>, vector<4x1024xf32>
      tpu.vector_store %arg6[%c0_17, %c0_18], %22 {strides = array<i32>} : memref<4x1024xf32, #tpu.memory_space<vmem>>, vector<4x1024xf32>,
    } else {
    }
    return
  }
  func.func @transform_0(%arg0: i32, %arg1: i32) -> (i32, i32) {
    %c0_i32 = arith.constant 0 : i32
    %c0_i32_0 = arith.constant 0 : i32
    return %c0_i32, %arg1 : i32, i32
  }
  func.func @transform_1(%arg0: i32, %arg1: i32) -> (i32, i32) {
    %c0_i32 = arith.constant 0 : i32
    return %arg1, %arg0 : i32, i32
  }
  func.func @transform_2(%arg0: i32, %arg1: i32) -> (i32, i32) {
    %c0_i32 = arith.constant 0 : i32
    %c0_i32_0 = arith.constant 0 : i32
    return %c0_i32, %arg0 : i32, i32
  }
  func.func @transform_3(%arg0: i32, %arg1: i32) -> (i32, i32) {
    %c0_i32 = arith.constant 0 : i32
    %c0_i32_0 = arith.constant 0 : i32
    return %c0_i32, %arg0 : i32, i32
  }
  func.func @transform_4(%arg0: i32, %arg1: i32) -> (i32, i32) {
    %c0_i32 = arith.constant 0 : i32
    %c0_i32_0 = arith.constant 0 : i32
    return %c0_i32, %arg0 : i32, i32
  }
}

module attributes {stable_mosaic.version = 11 : i64} {
  func.func @_tail_compare_kernel(%arg0: memref<4x2048xf32, #tpu.memory_space<vmem>>, %arg1: memref<2048x1024xbf16, #tpu.memory_space<vmem>>, %arg2: memref<1x1024xf32, #tpu.memory_space<vmem>>, %arg3: memref<1024x512xbf16, #tpu.memory_space<vmem>>, %arg4: memref<1x512xf32, #tpu.memory_space<vmem>>, %arg5: memref<512x256xbf16, #tpu.memory_space<vmem>>, %arg6: memref<1x256xf32, #tpu.memory_space<vmem>>, %arg7: memref<256x128xbf16, #tpu.memory_space<vmem>>, %arg8: memref<256x128xbf16, #tpu.memory_space<vmem>>, %arg9: memref<1x128xf32, #tpu.memory_space<vmem>>, %arg10: memref<1x128xf32, #tpu.memory_space<vmem>>, %arg11: memref<1x1xf32, #tpu.memory_space<vmem>>, %arg12: memref<4x256xf32, #tpu.memory_space<vmem>>, %arg13: memref<2x1xf32, #tpu.memory_space<vmem>>) attributes {dimension_semantics = [], scalar_prefetch = 0 : i64, scratch_operands = 0 : i64, tpu.core_type = #tpu.core_type<tc>} {
    %c0 = arith.constant 0 : index
    %c0_0 = arith.constant 0 : index
    %0 = vector.load %arg0[%c0, %c0_0] : memref<4x2048xf32, #tpu.memory_space<vmem>>, vector<4x2048xf32>
    %1 = arith.truncf %0 : vector<4x2048xf32> to vector<4x2048xbf16>
    %c0_1 = arith.constant 0 : index
    %c0_2 = arith.constant 0 : index
    %2 = vector.load %arg1[%c0_1, %c0_2] : memref<2048x1024xbf16, #tpu.memory_space<vmem>>, vector<2048x1024xbf16>
    %cst = arith.constant dense<0.000000e+00> : vector<4x1024xf32>
    %3 = tpu.matmul %1, %2, %cst {dimension_numbers = #tpu.dot_dimension_numbers<[1], [0], [0], [1], [0, 0, 1, 1], [], []>} : vector<4x2048xbf16>, vector<2048x1024xbf16>, vector<4x1024xf32> -> vector<4x1024xf32>
    %c0_3 = arith.constant 0 : index
    %c0_4 = arith.constant 0 : index
    %4 = vector.load %arg2[%c0_3, %c0_4] : memref<1x1024xf32, #tpu.memory_space<vmem>>, vector<1x1024xf32>
    %5 = vector.broadcast %4 : vector<1x1024xf32> to vector<4x1024xf32>
    %6 = arith.addf %3, %5 : vector<4x1024xf32>
    %cst_5 = arith.constant 0.000000e+00 : f32
    %7 = vector.broadcast %cst_5 : f32 to vector<4x1024xf32>
    %8 = arith.maximumf %6, %7 : vector<4x1024xf32>
    %9 = arith.truncf %8 : vector<4x1024xf32> to vector<4x1024xbf16>
    %c0_6 = arith.constant 0 : index
    %c0_7 = arith.constant 0 : index
    %10 = vector.load %arg3[%c0_6, %c0_7] : memref<1024x512xbf16, #tpu.memory_space<vmem>>, vector<1024x512xbf16>
    %cst_8 = arith.constant dense<0.000000e+00> : vector<4x512xf32>
    %11 = tpu.matmul %9, %10, %cst_8 {dimension_numbers = #tpu.dot_dimension_numbers<[1], [0], [0], [1], [0, 0, 1, 1], [], []>} : vector<4x1024xbf16>, vector<1024x512xbf16>, vector<4x512xf32> -> vector<4x512xf32>
    %c0_9 = arith.constant 0 : index
    %c0_10 = arith.constant 0 : index
    %12 = vector.load %arg4[%c0_9, %c0_10] : memref<1x512xf32, #tpu.memory_space<vmem>>, vector<1x512xf32>
    %13 = vector.broadcast %12 : vector<1x512xf32> to vector<4x512xf32>
    %14 = arith.addf %11, %13 : vector<4x512xf32>
    %cst_11 = arith.constant 0.000000e+00 : f32
    %15 = vector.broadcast %cst_11 : f32 to vector<4x512xf32>
    %16 = arith.maximumf %14, %15 : vector<4x512xf32>
    %17 = arith.truncf %16 : vector<4x512xf32> to vector<4x512xbf16>
    %c0_12 = arith.constant 0 : index
    %c0_13 = arith.constant 0 : index
    %18 = vector.load %arg5[%c0_12, %c0_13] : memref<512x256xbf16, #tpu.memory_space<vmem>>, vector<512x256xbf16>
    %cst_14 = arith.constant dense<0.000000e+00> : vector<4x256xf32>
    %19 = tpu.matmul %17, %18, %cst_14 {dimension_numbers = #tpu.dot_dimension_numbers<[1], [0], [0], [1], [0, 0, 1, 1], [], []>} : vector<4x512xbf16>, vector<512x256xbf16>, vector<4x256xf32> -> vector<4x256xf32>
    %c0_15 = arith.constant 0 : index
    %c0_16 = arith.constant 0 : index
    %20 = vector.load %arg6[%c0_15, %c0_16] : memref<1x256xf32, #tpu.memory_space<vmem>>, vector<1x256xf32>
    %21 = vector.broadcast %20 : vector<1x256xf32> to vector<4x256xf32>
    %22 = arith.addf %19, %21 : vector<4x256xf32>
    %c0_17 = arith.constant 0 : index
    %c0_18 = arith.constant 0 : index
    %23 = vector.load %arg12[%c0_17, %c0_18] : memref<4x256xf32, #tpu.memory_space<vmem>>, vector<4x256xf32>
    tpu.vector_store %arg12[%c0_17, %c0_18], %22 {strides = array<i32>} : memref<4x256xf32, #tpu.memory_space<vmem>>, vector<4x256xf32>,
    %24 = vector.extract_strided_slice %22 {offsets = [0, 0], sizes = [2, 256], strides = [1, 1]} : vector<4x256xf32> to vector<2x256xf32>
    %25 = vector.extract_strided_slice %22 {offsets = [2, 0], sizes = [2, 256], strides = [1, 1]} : vector<4x256xf32> to vector<2x256xf32>
    %26 = arith.truncf %24 : vector<2x256xf32> to vector<2x256xbf16>
    %c0_19 = arith.constant 0 : index
    %c0_20 = arith.constant 0 : index
    %27 = vector.load %arg7[%c0_19, %c0_20] : memref<256x128xbf16, #tpu.memory_space<vmem>>, vector<256x128xbf16>
    %cst_21 = arith.constant dense<0.000000e+00> : vector<2x128xf32>
    %28 = tpu.matmul %26, %27, %cst_21 {dimension_numbers = #tpu.dot_dimension_numbers<[1], [0], [0], [1], [0, 0, 1, 1], [], []>} : vector<2x256xbf16>, vector<256x128xbf16>, vector<2x128xf32> -> vector<2x128xf32>
    %29 = arith.truncf %25 : vector<2x256xf32> to vector<2x256xbf16>
    %c0_22 = arith.constant 0 : index
    %c0_23 = arith.constant 0 : index
    %30 = vector.load %arg8[%c0_22, %c0_23] : memref<256x128xbf16, #tpu.memory_space<vmem>>, vector<256x128xbf16>
    %cst_24 = arith.constant dense<0.000000e+00> : vector<2x128xf32>
    %31 = tpu.matmul %29, %30, %cst_24 {dimension_numbers = #tpu.dot_dimension_numbers<[1], [0], [0], [1], [0, 0, 1, 1], [], []>} : vector<2x256xbf16>, vector<256x128xbf16>, vector<2x128xf32> -> vector<2x128xf32>
    %32 = arith.addf %28, %31 : vector<2x128xf32>
    %c0_25 = arith.constant 0 : index
    %c0_26 = arith.constant 0 : index
    %33 = vector.load %arg9[%c0_25, %c0_26] : memref<1x128xf32, #tpu.memory_space<vmem>>, vector<1x128xf32>
    %34 = vector.broadcast %33 : vector<1x128xf32> to vector<2x128xf32>
    %35 = arith.addf %32, %34 : vector<2x128xf32>
    %cst_27 = arith.constant 0.000000e+00 : f32
    %36 = vector.broadcast %cst_27 : f32 to vector<2x128xf32>
    %37 = arith.maximumf %35, %36 : vector<2x128xf32>
    %c0_28 = arith.constant 0 : index
    %c0_29 = arith.constant 0 : index
    %38 = vector.load %arg10[%c0_28, %c0_29] : memref<1x128xf32, #tpu.memory_space<vmem>>, vector<1x128xf32>
    %39 = vector.broadcast %38 : vector<1x128xf32> to vector<2x128xf32>
    %40 = arith.mulf %37, %39 : vector<2x128xf32>
    %cst_30 = arith.constant dense<0.000000e+00> : vector<2xf32>
    %41 = vector.multi_reduction <add>, %40, %cst_30 [1] : vector<2x128xf32> to vector<2xf32>
    %42 = vector.shape_cast %41 : vector<2xf32> to vector<2x1xf32>
    %c0_31 = arith.constant 0 : index
    %c0_32 = arith.constant 0 : index
    %43 = vector.load %arg11[%c0_31, %c0_32] : memref<1x1xf32, #tpu.memory_space<vmem>>, vector<1x1xf32>
    %44 = vector.broadcast %43 : vector<1x1xf32> to vector<2x1xf32>
    %45 = arith.addf %42, %44 : vector<2x1xf32>
    %46 = arith.negf %45 : vector<2x1xf32>
    %47 = math.exp %46 : vector<2x1xf32>
    %cst_33 = arith.constant 1.000000e+00 : f32
    %48 = vector.broadcast %cst_33 : f32 to vector<2x1xf32>
    %49 = arith.addf %48, %47 : vector<2x1xf32>
    %50 = arith.divf %48, %49 : vector<2x1xf32>
    %c0_34 = arith.constant 0 : index
    %c0_35 = arith.constant 0 : index
    %51 = vector.load %arg13[%c0_34, %c0_35] : memref<2x1xf32, #tpu.memory_space<vmem>>, vector<2x1xf32>
    tpu.vector_store %arg13[%c0_34, %c0_35], %50 {strides = array<i32>} : memref<2x1xf32, #tpu.memory_space<vmem>>, vector<2x1xf32>,
    return
  }
}

</mosaic_0001>

<llo_original>
// kernel: prnu_forward.2
$region0: #{prnu_forward.2}
  #allocation0 [shape = 'u32[]', space=smem, size = 0x4, offset = 0x4, fixed_abs, tag = 'smem constant byte address 0x4 - core index']
  #allocation1 [shape = 'u32[144,128]{1,0:T(1,128)}', space=vmem, size = 0x12000, scoped, tag = 'internal scratch']
  %s0 = inlined_call_operand.vmem [shape: bf16[4,1024], index: 0, kind: input, shape index: {}]
  %s1 = inlined_call_operand.hbm [shape: s8[1024,2048], index: 1, kind: input, shape index: {}]
  %s2 = inlined_call_operand.hbm [shape: f32[1,2048], index: 2, kind: input, shape index: {}]
  %s3 = inlined_call_operand.hbm [shape: f32[1,2048], index: 3, kind: input, shape index: {}]
  %s4 = inlined_call_operand.vmem [shape: f32[4,2048], index: 4, kind: output, shape index: {}]
  %s5 = sld [smem:[#allocation0]]
  $region69: #{prnu_forward.2} parent=0
    _
  %s7 = ssub.s32 1, %s5
  %s8 = scalar_select 0, %s7, %s5
  $region1: #{prnu_forward.2} parent=0
    #allocation2 [shape = 'u8[2097152]{0}', space=vmem, size = 0x200000, scoped, tag = 'input window, operand 1']
    #allocation3 [shape = 's32[2]{0}', space=sflag, size = 0x8, scoped, tag = 'scoped memory for prnu_forward.2']
    #allocation4 [shape = 'u8[8192]{0}', space=vmem, size = 0x2000, scoped, tag = 'input window, operand 2']
    #allocation5 [shape = 's32[2]{0}', space=sflag, size = 0x8, scoped, tag = 'scoped memory for prnu_forward.2']
    #allocation6 [shape = 'u8[8192]{0}', space=vmem, size = 0x2000, scoped, tag = 'input window, operand 3']
    %9 = vsyncpa [#allocation3], 0
    %s10 = scalar_lea.sflag [#allocation3], 1
    %11 = vsyncpa %s10, 0
    %12 = vsyncpa [#allocation5], 0
    %s13 = scalar_lea.sflag [#allocation5], 1
    %14 = vsyncpa %s13, 0
    loop: start=0, step=1, limit=4
    $region2: #{prnu_forward.2} parent=1 // loop_pre_header
      _
    $region3: #{prnu_forward.2} parent=1 // loop_header
      %s16 = sphi 0, %s20
      %p17 = scmp.ge.s32.totalorder %s16, 4
      %s23 = sphi 0, %s35
      %s24 = sphi 0, %s31
      %s25 = sphi 0, %s23
      %s26 = sphi 0, %s24
      %s27 = sphi 0, %s25
      %s28 = sphi 0, %s26
      %s38 = sphi 0, %s40
      %s41 = sphi 0, %s38
      %s42 = sphi 0, %s41
      %s58 = sphi 0, %s42
      %s66 = sphi 0, %s68
      %s69 = sphi 0, %s66
      %s70 = sphi 0, %s69
      %s86 = sphi 0, %s70
      %s92 = sphi 0, %s94
      %s95 = sphi 0, %s92
      %s96 = sphi 0, %s95
      %s112 = sphi 0, %s96
      %s118 = sphi 0, %s120
      %s121 = sphi 0, %s118
      %s122 = sphi 0, %s121
      %s138 = sphi 0, %s122
      %s144 = sphi 0, %s146
      %s147 = sphi 0, %s144
      %s148 = sphi 0, %s147
      %s164 = sphi 0, %s148
    $region4: #{prnu_forward.2} parent=1 // loop_header_branch
      %19 = sbr.rel (%p17) target = $region8
    $region5: #{prnu_forward.2} parent=1 // loop_body
      %s21 = ssub.s32 %s16, 1
      %s22 = ssub.s32 %s16, 2
      %s29 = sadd.s32 1, %s24
      %p30 = scmp.ge.s32.totalorder %s29, 1
      %s31 = scalar_select %p30, 0, %s29
      %s32 = sadd.s32 1, %s23
      %s33 = scalar_select %p30, %s32, %s23
      %p34 = scmp.ge.s32.totalorder %s33, 2
      %s35 = scalar_select %p34, 0, %s33
      %s36 = ssub.s32 %s24, %s31
      %p37 = scmp.eq.s32.totalorder %s36, 0
      %s39 = sadd.s32 %s38, 1
      %s40 = scalar_select %p37, %s38, %s39
      %p43 = pneg %p37
      %p44 = scmp.eq.s32.totalorder %s16, 1
      %p45 = por %p43, %p44
      %p46 = scmp.ne.s32.totalorder %s38, %s41
      %p47 = scmp.eq.s32.totalorder %s16, 0
      %p48 = por %p46, %p47
      %p49 = scmp.ne.s32.totalorder %s38, %s41
      %p50 = scmp.eq.s32.totalorder %s21, 1
      %p51 = por %p49, %p50
      %p52 = scmp.ne.s32.totalorder %s41, %s42
      %p53 = scmp.eq.s32.totalorder %s21, 0
      %p54 = por %p52, %p53
      %p55 = scmp.ne.s32.totalorder %s41, %s42
      %p56 = scmp.eq.s32.totalorder %s22, 1
      %p57 = por %p55, %p56
      %p59 = scmp.ne.s32.totalorder %s42, %s58
      %p60 = scmp.eq.s32.totalorder %s22, 0
      %p61 = por %p59, %p60
      %s62 = ssub.s32 %s24, %s31
      %s63 = ssub.s32 %s23, %s35
      %s64 = sor.u32 %s62, %s63
      %p65 = scmp.eq.s32.totalorder %s64, 0
      %s67 = sadd.s32 %s66, 1
      %s68 = scalar_select %p65, %s66, %s67
      %p71 = pneg %p65
      %p72 = scmp.eq.s32.totalorder %s16, 1
      %p73 = por %p71, %p72
      %p74 = scmp.ne.s32.totalorder %s66, %s69
      %p75 = scmp.eq.s32.totalorder %s16, 0
      %p76 = por %p74, %p75
      %p77 = scmp.ne.s32.totalorder %s66, %s69
      %p78 = scmp.eq.s32.totalorder %s21, 1
      %p79 = por %p77, %p78
      %p80 = scmp.ne.s32.totalorder %s69, %s70
      %p81 = scmp.eq.s32.totalorder %s21, 0
      %p82 = por %p80, %p81
      %p83 = scmp.ne.s32.totalorder %s69, %s70
      %p84 = scmp.eq.s32.totalorder %s22, 1
      %p85 = por %p83, %p84
      %p87 = scmp.ne.s32.totalorder %s70, %s86
      %p88 = scmp.eq.s32.totalorder %s22, 0
      %p89 = por %p87, %p88
      %s90 = ssub.s32 %s23, %s35
      %p91 = scmp.eq.s32.totalorder %s90, 0
      %s93 = sadd.s32 %s92, 1
      %s94 = scalar_select %p91, %s92, %s93
      %p97 = pneg %p91
      %p98 = scmp.eq.s32.totalorder %s16, 1
      %p99 = por %p97, %p98
      %p100 = scmp.ne.s32.totalorder %s92, %s95
      %p101 = scmp.eq.s32.totalorder %s16, 0
      %p102 = por %p100, %p101
      %p103 = scmp.ne.s32.totalorder %s92, %s95
      %p104 = scmp.eq.s32.totalorder %s21, 1
      %p105 = por %p103, %p104
      %p106 = scmp.ne.s32.totalorder %s95, %s96
      %p107 = scmp.eq.s32.totalorder %s21, 0
      %p108 = por %p106, %p107
      %p109 = scmp.ne.s32.totalorder %s95, %s96
      %p110 = scmp.eq.s32.totalorder %s22, 1
      %p111 = por %p109, %p110
      %p113 = scmp.ne.s32.totalorder %s96, %s112
      %p114 = scmp.eq.s32.totalorder %s22, 0
      %p115 = por %p113, %p114
      %s116 = ssub.s32 %s23, %s35
      %p117 = scmp.eq.s32.totalorder %s116, 0
      %s119 = sadd.s32 %s118, 1
      %s120 = scalar_select %p117, %s118, %s119
      %p123 = pneg %p117
      %p124 = scmp.eq.s32.totalorder %s16, 1
      %p125 = por %p123, %p124
      %p126 = scmp.ne.s32.totalorder %s118, %s121
      %p127 = scmp.eq.s32.totalorder %s16, 0
      %p128 = por %p126, %p127
      %p129 = scmp.ne.s32.totalorder %s118, %s121
      %p130 = scmp.eq.s32.totalorder %s21, 1
      %p131 = por %p129, %p130
      %p132 = scmp.ne.s32.totalorder %s121, %s122
      %p133 = scmp.eq.s32.totalorder %s21, 0
      %p134 = por %p132, %p133
      %p135 = scmp.ne.s32.totalorder %s121, %s122
      %p136 = scmp.eq.s32.totalorder %s22, 1
      %p137 = por %p135, %p136
      %p139 = scmp.ne.s32.totalorder %s122, %s138
      %p140 = scmp.eq.s32.totalorder %s22, 0
      %p141 = por %p139, %p140
      %s142 = ssub.s32 %s23, %s35
      %p143 = scmp.eq.s32.totalorder %s142, 0
      %s145 = sadd.s32 %s144, 1
      %s146 = scalar_select %p143, %s144, %s145
      %p149 = pneg %p143
      %p150 = scmp.eq.s32.totalorder %s16, 1
      %p151 = por %p149, %p150
      %p152 = scmp.ne.s32.totalorder %s144, %s147
      %p153 = scmp.eq.s32.totalorder %s16, 0
      %p154 = por %p152, %p153
      %p155 = scmp.ne.s32.totalorder %s144, %s147
      %p156 = scmp.eq.s32.totalorder %s21, 1
      %p157 = por %p155, %p156
      %p158 = scmp.ne.s32.totalorder %s147, %s148
      %p159 = scmp.eq.s32.totalorder %s21, 0
      %p160 = por %p158, %p159
      %p161 = scmp.ne.s32.totalorder %s147, %s148
      %p162 = scmp.eq.s32.totalorder %s22, 1
      %p163 = por %p161, %p162
      %p165 = scmp.ne.s32.totalorder %s148, %s164
      %p166 = scmp.eq.s32.totalorder %s22, 0
      %p167 = por %p165, %p166
      %p168 = scmp.le.s32.totalorder 1, %s16
      %p169 = scmp.lt.s32.totalorder %s16, 3
      %p170 = pnand %p168, %p169
      %p171 = pneg %p170
      // Predicated region
      $region9: #{prnu_forward.2} parent=5 // pred_check
        _
      $region10: #{prnu_forward.2} parent=5 // pred_check_branch
        %173 = sbr.rel (%p170) target = $region12
      $region11: #{prnu_forward.2} parent=5 // pred_region
        %s174 = ssub.s32 %s16, 1
        // Predicated region
        $region13: #{prnu_forward.2} parent=11 // pred_check
          %p175 = pneg %p54
        $region14: #{prnu_forward.2} parent=11 // pred_check_branch
          %177 = sbr.rel (%p175) target = $region16
        $region15: #{prnu_forward.2} parent=11 // pred_region
          %s178 = smul.u32 8, %s26
          %p179 = scmp.lt.s32.totalorder %s178, 7
          %s180 = scalar_select %p179, %s178, 7
          %s181 = smul.addr %s180, 2
          %s182 = scalar_lea.vmem %s0, %s181
          %s183 = smul.u32 8, %s26
        $region16: #{prnu_forward.2} parent=11 // pred_fallthru
          _
      $region12: #{prnu_forward.2} parent=5 // pred_fallthru
        _
      %p184 = scmp.lt.s32.totalorder %s16, 2
      // Predicated region
      $region17: #{prnu_forward.2} parent=5 // pred_check
        %p185 = pneg %p184
      $region18: #{prnu_forward.2} parent=5 // pred_check_branch
        %187 = sbr.rel (%p185) target = $region20
      $region19: #{prnu_forward.2} parent=5 // pred_region
        // Predicated region
        $region21: #{prnu_forward.2} parent=19 // pred_check
          %p188 = pneg %p76
        $region22: #{prnu_forward.2} parent=19 // pred_check_branch
          %190 = sbr.rel (%p188) target = $region24
        $region23: #{prnu_forward.2} parent=19 // pred_region
          %s191 = sand.u32 %s66, 1
          %s192 = scalar_lea.sflag [#allocation3], %s191
          %s193 = sand.u32 %s66, 1
          %s194 = smul.addr %s193, 2048
          %s195 = scalar_lea.vmem [#allocation2], %s194
          %s196 = smul.u32 32, %s24
          %s197 = smul.u32 8, %s23
          %s199 = ssub.s32 32768, 32768
          %200 = vsyncadd %s192, %s199
          %s201 = smul.addr %s196, 16
          %s202 = sadd.s32 %s197, %s201
          %s203 = smul.addr %s202, 128
          %s204 = scalar_lea.hbm %s1, %s203
          %s205 = sshll.u32 %s195, 4
          %s206 = int_to_ptr.vmem [resolvable:$true] %s205
          %211 = dma.hbm_to_vmem [thread:$0]  %s204, 32768, %s206, %s192, 2048, 1024, 64
        $region24: #{prnu_forward.2} parent=19 // pred_fallthru
          _
        // Predicated region
        $region25: #{prnu_forward.2} parent=19 // pred_check
          %p212 = pneg %p102
        $region26: #{prnu_forward.2} parent=19 // pred_check_branch
          %214 = sbr.rel (%p212) target = $region28
        $region27: #{prnu_forward.2} parent=19 // pred_region
          %s215 = sand.u32 %s16, 1
          %s216 = scalar_lea.sflag [#allocation5], %s215
          %s217 = sand.u32 %s92, 1
          %s218 = smul.addr %s217, 8
          %s219 = scalar_lea.vmem [#allocation4], %s218
          %s220 = smul.u32 8, %s23
          %s222 = ssub.s32 128, 128
          %223 = vsyncadd %s216, %s222
          %s224 = smul.addr %s220, 16
          %s225 = scalar_lea.hbm %s2, %s224
          %s227 = sshll.u32 %s219, 4
          %s228 = int_to_ptr.vmem [resolvable:$true] %s227
          %230 = dma.hbm_to_vmem [thread:$0]  %s225, 128, %s228, %s216
        $region28: #{prnu_forward.2} parent=19 // pred_fallthru
          _
        // Predicated region
        $region29: #{prnu_forward.2} parent=19 // pred_check
          %p231 = pneg %p128
        $region30: #{prnu_forward.2} parent=19 // pred_check_branch
          %233 = sbr.rel (%p231) target = $region32
        $region31: #{prnu_forward.2} parent=19 // pred_region
          %s234 = sand.u32 %s16, 1
          %s235 = scalar_lea.sflag [#allocation5], %s234
          %s236 = sand.u32 %s118, 1
          %s237 = smul.addr %s236, 8
          %s238 = scalar_lea.vmem [#allocation6], %s237
          %s239 = smul.u32 8, %s23
          %s241 = ssub.s32 128, 128
          %242 = vsyncadd %s235, %s241
          %s243 = smul.addr %s239, 16
          %s244 = scalar_lea.hbm %s3, %s243
          %s246 = sshll.u32 %s238, 4
          %s247 = int_to_ptr.vmem [resolvable:$true] %s246
          %249 = dma.hbm_to_vmem [thread:$0]  %s244, 128, %s247, %s235
        $region32: #{prnu_forward.2} parent=19 // pred_fallthru
          _
      $region20: #{prnu_forward.2} parent=5 // pred_fallthru
        _
      %p250 = scmp.le.s32.totalorder 1, %s16
      %p251 = scmp.lt.s32.totalorder %s16, 3
      %p252 = pnand %p250, %p251
      %p253 = pneg %p252
      // Predicated region
      $region33: #{prnu_forward.2} parent=5 // pred_check
        _
      $region34: #{prnu_forward.2} parent=5 // pred_check_branch
        %255 = sbr.rel (%p252) target = $region36
      $region35: #{prnu_forward.2} parent=5 // pred_region
        %s256 = ssub.s32 %s16, 1
        %s257 = sand.u32 %s69, 1
        %s258 = scalar_lea.sflag [#allocation3], %s257
        %s259 = sand.u32 %s69, 1
        %s260 = smul.addr %s259, 2048
        %s261 = scalar_lea.vmem [#allocation2], %s260
        // Predicated region
        $region37: #{prnu_forward.2} parent=35 // pred_check
          %p262 = pneg %p82
        $region38: #{prnu_forward.2} parent=35 // pred_check_branch
          %264 = sbr.rel (%p262) target = $region40
        $region39: #{prnu_forward.2} parent=35 // pred_region
          %265 = dma.done %s258, 32768
        $region40: #{prnu_forward.2} parent=35 // pred_fallthru
          _
        %s266 = sand.u32 %s21, 1
        %s267 = scalar_lea.sflag [#allocation5], %s266
        %s268 = sand.u32 %s95, 1
        %s269 = smul.addr %s268, 8
        %s270 = scalar_lea.vmem [#allocation4], %s269
        // Predicated region
        $region41: #{prnu_forward.2} parent=35 // pred_check
          %p271 = pneg %p108
        $region42: #{prnu_forward.2} parent=35 // pred_check_branch
          %273 = sbr.rel (%p271) target = $region44
        $region43: #{prnu_forward.2} parent=35 // pred_region
          %274 = dma.done %s267, 128
        $region44: #{prnu_forward.2} parent=35 // pred_fallthru
          _
        %s275 = sand.u32 %s21, 1
        %s276 = scalar_lea.sflag [#allocation5], %s275
        %s277 = sand.u32 %s121, 1
        %s278 = smul.addr %s277, 8
        %s279 = scalar_lea.vmem [#allocation6], %s278
        // Predicated region
        $region45: #{prnu_forward.2} parent=35 // pred_check
          %p280 = pneg %p134
        $region46: #{prnu_forward.2} parent=35 // pred_check_branch
          %282 = sbr.rel (%p280) target = $region48
        $region47: #{prnu_forward.2} parent=35 // pred_region
          %283 = dma.done %s276, 128
        $region48: #{prnu_forward.2} parent=35 // pred_fallthru
          _
        %s284 = smul.u32 8, %s26
        %p285 = scmp.lt.s32.totalorder %s284, 7
        %s286 = scalar_select %p285, %s284, 7
        %s287 = smul.addr %s286, 2
        %s288 = scalar_lea.vmem %s0, %s287
        %p289 = pneg %p54
        %p290 = pneg %p51
        %s291 = sand.u32 %s69, 1
        %s292 = scalar_lea.sflag [#allocation3], %s291
        %s293 = sand.u32 %s69, 1
        %s294 = smul.addr %s293, 2048
        %s295 = scalar_lea.vmem [#allocation2], %s294
        %p296 = pneg %p82
        %p297 = pneg %p79
        %s298 = sand.u32 %s21, 1
        %s299 = scalar_lea.sflag [#allocation5], %s298
        %s300 = sand.u32 %s95, 1
        %s301 = smul.addr %s300, 8
        %s302 = scalar_lea.vmem [#allocation4], %s301
        %p303 = pneg %p108
        %p304 = pneg %p105
        %s305 = sand.u32 %s21, 1
        %s306 = scalar_lea.sflag [#allocation5], %s305
        %s307 = sand.u32 %s121, 1
        %s308 = smul.addr %s307, 8
        %s309 = scalar_lea.vmem [#allocation6], %s308
        %p310 = pneg %p134
        %p311 = pneg %p131
        %p312 = pneg %p160
        %p313 = pneg %p157
        %s314 = smul.u32 8, %s25
        %p315 = scmp.lt.s32.totalorder %s314, 15
        %s316 = scalar_select %p315, %s314, 15
        %s317 = smul.addr %s316, 4
        %s318 = scalar_lea.vmem %s4, %s317
        %s319 = smul.u32 8, %s26
        %p320 = scmp.lt.s32.totalorder %s319, 7
        %s321 = scalar_select %p320, %s319, 7
        %s322 = smul.addr %s321, 2
        %s323 = scalar_lea.vmem %s0, %s322
        %s324 = smul.u32 8, %s26
        %s325 = smul.u32 32, %s26
        %s326 = smul.u32 8, %s25
        %s327 = smul.u32 8, %s25
        %s328 = smul.u32 8, %s25
        %s329 = smul.u32 8, %s25
        %p330 = scmp.lt.s32.totalorder %s329, 15
        %s331 = scalar_select %p330, %s329, 15
        %s332 = smul.addr %s331, 4
        %s333 = scalar_lea.vmem %s4, %s332
        %s334 = smul.u32 8, %s25
        %p335 = scmp.eq.s32.totalorder %s26, 0
        // Predicated region
        $region49: #{prnu_forward.2} parent=35 // pred_check
          %p336 = pneg %p335
        $region50: #{prnu_forward.2} parent=35 // pred_check_branch
          %338 = sbr.rel (%p336) target = $region52
        $region51: #{prnu_forward.2} parent=35 // pred_region
          %339 = vst [vmem:[%s333] sm:$0xff] 0.0
          %340 = vst [vmem:[%s333 + $0x8] sm:$0xff] 0.0
          %341 = vst [vmem:[%s333 + $0x10] sm:$0xff] 0.0
          %342 = vst [vmem:[%s333 + $0x18] sm:$0xff] 0.0
        $region52: #{prnu_forward.2} parent=35 // pred_fallthru
          _
        %v343 = vld [vmem:[%s261] sm:$0xff]
        %v344 = vld [vmem:[%s261 + $0x8] sm:$0xff]
        %v345 = vld [vmem:[%s261 + $0x10] sm:$0xff]
        %v346 = vld [vmem:[%s261 + $0x18] sm:$0xff]
        %v347 = vld [vmem:[%s261 + $0x20] sm:$0xff]
        %v348 = vld [vmem:[%s261 + $0x28] sm:$0xff]
        %v349 = vld [vmem:[%s261 + $0x30] sm:$0xff]
        %v350 = vld [vmem:[%s261 + $0x38] sm:$0xff]
        %v351 = vld [vmem:[%s261 + $0x40] sm:$0xff]
        %v352 = vld [vmem:[%s261 + $0x48] sm:$0xff]
        %v353 = vld [vmem:[%s261 + $0x50] sm:$0xff]
        %v354 = vld [vmem:[%s261 + $0x58] sm:$0xff]
        %v355 = vld [vmem:[%s261 + $0x60] sm:$0xff]
        %v356 = vld [vmem:[%s261 + $0x68] sm:$0xff]
        %v357 = vld [vmem:[%s261 + $0x70] sm:$0xff]
        %v358 = vld [vmem:[%s261 + $0x78] sm:$0xff]
        %v359 = vld [vmem:[%s261 + $0x80] sm:$0xff]
        %v360 = vld [vmem:[%s261 + $0x88] sm:$0xff]
        %v361 = vld [vmem:[%s261 + $0x90] sm:$0xff]
        %v362 = vld [vmem:[%s261 + $0x98] sm:$0xff]
        %v363 = vld [vmem:[%s261 + $0xa0] sm:$0xff]
        %v364 = vld [vmem:[%s261 + $0xa8] sm:$0xff]
        %v365 = vld [vmem:[%s261 + $0xb0] sm:$0xff]
        %v366 = vld [vmem:[%s261 + $0xb8] sm:$0xff]
        %v367 = vld [vmem:[%s261 + $0xc0] sm:$0xff]
        %v368 = vld [vmem:[%s261 + $0xc8] sm:$0xff]
        %v369 = vld [vmem:[%s261 + $0xd0] sm:$0xff]
        %v370 = vld [vmem:[%s261 + $0xd8] sm:$0xff]
        %v371 = vld [vmem:[%s261 + $0xe0] sm:$0xff]
        %v372 = vld [vmem:[%s261 + $0xe8] sm:$0xff]
        %v373 = vld [vmem:[%s261 + $0xf0] sm:$0xff]
        %v374 = vld [vmem:[%s261 + $0xf8] sm:$0xff]
        %v375 = vld [vmem:[%s261 + $0x100] sm:$0xff]
        %v376 = vld [vmem:[%s261 + $0x108] sm:$0xff]
        %v377 = vld [vmem:[%s261 + $0x110] sm:$0xff]
        %v378 = vld [vmem:[%s261 + $0x118] sm:$0xff]
        %v379 = vld [vmem:[%s261 + $0x120] sm:$0xff]
        %v380 = vld [vmem:[%s261 + $0x128] sm:$0xff]
        %v381 = vld [vmem:[%s261 + $0x130] sm:$0xff]
        %v382 = vld [vmem:[%s261 + $0x138] sm:$0xff]
        %v383 = vld [vmem:[%s261 + $0x140] sm:$0xff]
        %v384 = vld [vmem:[%s261 + $0x148] sm:$0xff]
        %v385 = vld [vmem:[%s261 + $0x150] sm:$0xff]
        %v386 = vld [vmem:[%s261 + $0x158] sm:$0xff]
        %v387 = vld [vmem:[%s261 + $0x160] sm:$0xff]
        %v388 = vld [vmem:[%s261 + $0x168] sm:$0xff]
        %v389 = vld [vmem:[%s261 + $0x170] sm:$0xff]
        %v390 = vld [vmem:[%s261 + $0x178] sm:$0xff]
        %v391 = vld [vmem:[%s261 + $0x180] sm:$0xff]
        %v392 = vld [vmem:[%s261 + $0x188] sm:$0xff]
        %v393 = vld [vmem:[%s261 + $0x190] sm:$0xff]
        %v394 = vld [vmem:[%s261 + $0x198] sm:$0xff]
        %v395 = vld [vmem:[%s261 + $0x1a0] sm:$0xff]
        %v396 = vld [vmem:[%s261 + $0x1a8] sm:$0xff]
        %v397 = vld [vmem:[%s261 + $0x1b0] sm:$0xff]
        %v398 = vld [vmem:[%s261 + $0x1b8] sm:$0xff]
        %v399 = vld [vmem:[%s261 + $0x1c0] sm:$0xff]
        %v400 = vld [vmem:[%s261 + $0x1c8] sm:$0xff]
        %v401 = vld [vmem:[%s261 + $0x1d0] sm:$0xff]
        %v402 = vld [vmem:[%s261 + $0x1d8] sm:$0xff]
        %v403 = vld [vmem:[%s261 + $0x1e0] sm:$0xff]
        %v404 = vld [vmem:[%s261 + $0x1e8] sm:$0xff]
        %v405 = vld [vmem:[%s261 + $0x1f0] sm:$0xff]
        %v406 = vld [vmem:[%s261 + $0x1f8] sm:$0xff]
        %v407 = vld [vmem:[%s261 + $0x200] sm:$0xff]
        %v408 = vld [vmem:[%s261 + $0x208] sm:$0xff]
        %v409 = vld [vmem:[%s261 + $0x210] sm:$0xff]
        %v410 = vld [vmem:[%s261 + $0x218] sm:$0xff]
        %v411 = vld [vmem:[%s261 + $0x220] sm:$0xff]
        %v412 = vld [vmem:[%s261 + $0x228] sm:$0xff]
        %v413 = vld [vmem:[%s261 + $0x230] sm:$0xff]
        %v414 = vld [vmem:[%s261 + $0x238] sm:$0xff]
        %v415 = vld [vmem:[%s261 + $0x240] sm:$0xff]
        %v416 = vld [vmem:[%s261 + $0x248] sm:$0xff]
        %v417 = vld [vmem:[%s261 + $0x250] sm:$0xff]
        %v418 = vld [vmem:[%s261 + $0x258] sm:$0xff]
        %v419 = vld [vmem:[%s261 + $0x260] sm:$0xff]
        %v420 = vld [vmem:[%s261 + $0x268] sm:$0xff]
        %v421 = vld [vmem:[%s261 + $0x270] sm:$0xff]
        %v422 = vld [vmem:[%s261 + $0x278] sm:$0xff]
        %v423 = vld [vmem:[%s261 + $0x280] sm:$0xff]
        %v424 = vld [vmem:[%s261 + $0x288] sm:$0xff]
        %v425 = vld [vmem:[%s261 + $0x290] sm:$0xff]
        %v426 = vld [vmem:[%s261 + $0x298] sm:$0xff]
        %v427 = vld [vmem:[%s261 + $0x2a0] sm:$0xff]
        %v428 = vld [vmem:[%s261 + $0x2a8] sm:$0xff]
        %v429 = vld [vmem:[%s261 + $0x2b0] sm:$0xff]
        %v430 = vld [vmem:[%s261 + $0x2b8] sm:$0xff]
        %v431 = vld [vmem:[%s261 + $0x2c0] sm:$0xff]
        %v432 = vld [vmem:[%s261 + $0x2c8] sm:$0xff]
        %v433 = vld [vmem:[%s261 + $0x2d0] sm:$0xff]
        %v434 = vld [vmem:[%s261 + $0x2d8] sm:$0xff]
        %v435 = vld [vmem:[%s261 + $0x2e0] sm:$0xff]
        %v436 = vld [vmem:[%s261 + $0x2e8] sm:$0xff]
        %v437 = vld [vmem:[%s261 + $0x2f0] sm:$0xff]
        %v438 = vld [vmem:[%s261 + $0x2f8] sm:$0xff]
        %v439 = vld [vmem:[%s261 + $0x300] sm:$0xff]
        %v440 = vld [vmem:[%s261 + $0x308] sm:$0xff]
        %v441 = vld [vmem:[%s261 + $0x310] sm:$0xff]
        %v442 = vld [vmem:[%s261 + $0x318] sm:$0xff]
        %v443 = vld [vmem:[%s261 + $0x320] sm:$0xff]
        %v444 = vld [vmem:[%s261 + $0x328] sm:$0xff]
        %v445 = vld [vmem:[%s261 + $0x330] sm:$0xff]
        %v446 = vld [vmem:[%s261 + $0x338] sm:$0xff]
        %v447 = vld [vmem:[%s261 + $0x340] sm:$0xff]
        %v448 = vld [vmem:[%s261 + $0x348] sm:$0xff]
        %v449 = vld [vmem:[%s261 + $0x350] sm:$0xff]
        %v450 = vld [vmem:[%s261 + $0x358] sm:$0xff]
        %v451 = vld [vmem:[%s261 + $0x360] sm:$0xff]
        %v452 = vld [vmem:[%s261 + $0x368] sm:$0xff]
        %v453 = vld [vmem:[%s261 + $0x370] sm:$0xff]
        %v454 = vld [vmem:[%s261 + $0x378] sm:$0xff]
        %v455 = vld [vmem:[%s261 + $0x380] sm:$0xff]
        %v456 = vld [vmem:[%s261 + $0x388] sm:$0xff]
        %v457 = vld [vmem:[%s261 + $0x390] sm:$0xff]
        %v458 = vld [vmem:[%s261 + $0x398] sm:$0xff]
        %v459 = vld [vmem:[%s261 + $0x3a0] sm:$0xff]
        %v460 = vld [vmem:[%s261 + $0x3a8] sm:$0xff]
        %v461 = vld [vmem:[%s261 + $0x3b0] sm:$0xff]
        %v462 = vld [vmem:[%s261 + $0x3b8] sm:$0xff]
        %v463 = vld [vmem:[%s261 + $0x3c0] sm:$0xff]
        %v464 = vld [vmem:[%s261 + $0x3c8] sm:$0xff]
        %v465 = vld [vmem:[%s261 + $0x3d0] sm:$0xff]
        %v466 = vld [vmem:[%s261 + $0x3d8] sm:$0xff]
        %v467 = vld [vmem:[%s261 + $0x3e0] sm:$0xff]
        %v468 = vld [vmem:[%s261 + $0x3e8] sm:$0xff]
        %v469 = vld [vmem:[%s261 + $0x3f0] sm:$0xff]
        %v470 = vld [vmem:[%s261 + $0x3f8] sm:$0xff]
        %v471 = vld [vmem:[%s261 + $0x400] sm:$0xff]
        %v472 = vld [vmem:[%s261 + $0x408] sm:$0xff]
        %v473 = vld [vmem:[%s261 + $0x410] sm:$0xff]
        %v474 = vld [vmem:[%s261 + $0x418] sm:$0xff]
        %v475 = vld [vmem:[%s261 + $0x420] sm:$0xff]
        %v476 = vld [vmem:[%s261 + $0x428] sm:$0xff]
        %v477 = vld [vmem:[%s261 + $0x430] sm:$0xff]
        %v478 = vld [vmem:[%s261 + $0x438] sm:$0xff]
        %v479 = vld [vmem:[%s261 + $0x440] sm:$0xff]
        %v480 = vld [vmem:[%s261 + $0x448] sm:$0xff]
        %v481 = vld [vmem:[%s261 + $0x450] sm:$0xff]
        %v482 = vld [vmem:[%s261 + $0x458] sm:$0xff]
        %v483 = vld [vmem:[%s261 + $0x460] sm:$0xff]
        %v484 = vld [vmem:[%s261 + $0x468] sm:$0xff]
        %v485 = vld [vmem:[%s261 + $0x470] sm:$0xff]
        %v486 = vld [vmem:[%s261 + $0x478] sm:$0xff]
        %v487 = vld [vmem:[%s261 + $0x480] sm:$0xff]
        %v488 = vld [vmem:[%s261 + $0x488] sm:$0xff]
        %v489 = vld [vmem:[%s261 + $0x490] sm:$0xff]
        %v490 = vld [vmem:[%s261 + $0x498] sm:$0xff]
        %v491 = vld [vmem:[%s261 + $0x4a0] sm:$0xff]
        %v492 = vld [vmem:[%s261 + $0x4a8] sm:$0xff]
        %v493 = vld [vmem:[%s261 + $0x4b0] sm:$0xff]
        %v494 = vld [vmem:[%s261 + $0x4b8] sm:$0xff]
        %v495 = vld [vmem:[%s261 + $0x4c0] sm:$0xff]
        %v496 = vld [vmem:[%s261 + $0x4c8] sm:$0xff]
        %v497 = vld [vmem:[%s261 + $0x4d0] sm:$0xff]
        %v498 = vld [vmem:[%s261 + $0x4d8] sm:$0xff]
        %v499 = vld [vmem:[%s261 + $0x4e0] sm:$0xff]
        %v500 = vld [vmem:[%s261 + $0x4e8] sm:$0xff]
        %v501 = vld [vmem:[%s261 + $0x4f0] sm:$0xff]
        %v502 = vld [vmem:[%s261 + $0x4f8] sm:$0xff]
        %v503 = vld [vmem:[%s261 + $0x500] sm:$0xff]
        %v504 = vld [vmem:[%s261 + $0x508] sm:$0xff]
        %v505 = vld [vmem:[%s261 + $0x510] sm:$0xff]
        %v506 = vld [vmem:[%s261 + $0x518] sm:$0xff]
        %v507 = vld [vmem:[%s261 + $0x520] sm:$0xff]
        %v508 = vld [vmem:[%s261 + $0x528] sm:$0xff]
        %v509 = vld [vmem:[%s261 + $0x530] sm:$0xff]
        %v510 = vld [vmem:[%s261 + $0x538] sm:$0xff]
        %v511 = vld [vmem:[%s261 + $0x540] sm:$0xff]
        %v512 = vld [vmem:[%s261 + $0x548] sm:$0xff]
        %v513 = vld [vmem:[%s261 + $0x550] sm:$0xff]
        %v514 = vld [vmem:[%s261 + $0x558] sm:$0xff]
        %v515 = vld [vmem:[%s261 + $0x560] sm:$0xff]
        %v516 = vld [vmem:[%s261 + $0x568] sm:$0xff]
        %v517 = vld [vmem:[%s261 + $0x570] sm:$0xff]
        %v518 = vld [vmem:[%s261 + $0x578] sm:$0xff]
        %v519 = vld [vmem:[%s261 + $0x580] sm:$0xff]
        %v520 = vld [vmem:[%s261 + $0x588] sm:$0xff]
        %v521 = vld [vmem:[%s261 + $0x590] sm:$0xff]
        %v522 = vld [vmem:[%s261 + $0x598] sm:$0xff]
        %v523 = vld [vmem:[%s261 + $0x5a0] sm:$0xff]
        %v524 = vld [vmem:[%s261 + $0x5a8] sm:$0xff]
        %v525 = vld [vmem:[%s261 + $0x5b0] sm:$0xff]
        %v526 = vld [vmem:[%s261 + $0x5b8] sm:$0xff]
        %v527 = vld [vmem:[%s261 + $0x5c0] sm:$0xff]
        %v528 = vld [vmem:[%s261 + $0x5c8] sm:$0xff]
        %v529 = vld [vmem:[%s261 + $0x5d0] sm:$0xff]
        %v530 = vld [vmem:[%s261 + $0x5d8] sm:$0xff]
        %v531 = vld [vmem:[%s261 + $0x5e0] sm:$0xff]
        %v532 = vld [vmem:[%s261 + $0x5e8] sm:$0xff]
        %v533 = vld [vmem:[%s261 + $0x5f0] sm:$0xff]
        %v534 = vld [vmem:[%s261 + $0x5f8] sm:$0xff]
        %v535 = vld [vmem:[%s261 + $0x600] sm:$0xff]
        %v536 = vld [vmem:[%s261 + $0x608] sm:$0xff]
        %v537 = vld [vmem:[%s261 + $0x610] sm:$0xff]
        %v538 = vld [vmem:[%s261 + $0x618] sm:$0xff]
        %v539 = vld [vmem:[%s261 + $0x620] sm:$0xff]
        %v540 = vld [vmem:[%s261 + $0x628] sm:$0xff]
        %v541 = vld [vmem:[%s261 + $0x630] sm:$0xff]
        %v542 = vld [vmem:[%s261 + $0x638] sm:$0xff]
        %v543 = vld [vmem:[%s261 + $0x640] sm:$0xff]
        %v544 = vld [vmem:[%s261 + $0x648] sm:$0xff]
        %v545 = vld [vmem:[%s261 + $0x650] sm:$0xff]
        %v546 = vld [vmem:[%s261 + $0x658] sm:$0xff]
        %v547 = vld [vmem:[%s261 + $0x660] sm:$0xff]
        %v548 = vld [vmem:[%s261 + $0x668] sm:$0xff]
        %v549 = vld [vmem:[%s261 + $0x670] sm:$0xff]
        %v550 = vld [vmem:[%s261 + $0x678] sm:$0xff]
        %v551 = vld [vmem:[%s261 + $0x680] sm:$0xff]
        %v552 = vld [vmem:[%s261 + $0x688] sm:$0xff]
        %v553 = vld [vmem:[%s261 + $0x690] sm:$0xff]
        %v554 = vld [vmem:[%s261 + $0x698] sm:$0xff]
        %v555 = vld [vmem:[%s261 + $0x6a0] sm:$0xff]
        %v556 = vld [vmem:[%s261 + $0x6a8] sm:$0xff]
        %v557 = vld [vmem:[%s261 + $0x6b0] sm:$0xff]
        %v558 = vld [vmem:[%s261 + $0x6b8] sm:$0xff]
        %v559 = vld [vmem:[%s261 + $0x6c0] sm:$0xff]
        %v560 = vld [vmem:[%s261 + $0x6c8] sm:$0xff]
        %v561 = vld [vmem:[%s261 + $0x6d0] sm:$0xff]
        %v562 = vld [vmem:[%s261 + $0x6d8] sm:$0xff]
        %v563 = vld [vmem:[%s261 + $0x6e0] sm:$0xff]
        %v564 = vld [vmem:[%s261 + $0x6e8] sm:$0xff]
        %v565 = vld [vmem:[%s261 + $0x6f0] sm:$0xff]
        %v566 = vld [vmem:[%s261 + $0x6f8] sm:$0xff]
        %v567 = vld [vmem:[%s261 + $0x700] sm:$0xff]
        %v568 = vld [vmem:[%s261 + $0x708] sm:$0xff]
        %v569 = vld [vmem:[%s261 + $0x710] sm:$0xff]
        %v570 = vld [vmem:[%s261 + $0x718] sm:$0xff]
        %v571 = vld [vmem:[%s261 + $0x720] sm:$0xff]
        %v572 = vld [vmem:[%s261 + $0x728] sm:$0xff]
        %v573 = vld [vmem:[%s261 + $0x730] sm:$0xff]
        %v574 = vld [vmem:[%s261 + $0x738] sm:$0xff]
        %v575 = vld [vmem:[%s261 + $0x740] sm:$0xff]
        %v576 = vld [vmem:[%s261 + $0x748] sm:$0xff]
        %v577 = vld [vmem:[%s261 + $0x750] sm:$0xff]
        %v578 = vld [vmem:[%s261 + $0x758] sm:$0xff]
        %v579 = vld [vmem:[%s261 + $0x760] sm:$0xff]
        %v580 = vld [vmem:[%s261 + $0x768] sm:$0xff]
        %v581 = vld [vmem:[%s261 + $0x770] sm:$0xff]
        %v582 = vld [vmem:[%s261 + $0x778] sm:$0xff]
        %v583 = vld [vmem:[%s261 + $0x780] sm:$0xff]
        %v584 = vld [vmem:[%s261 + $0x788] sm:$0xff]
        %v585 = vld [vmem:[%s261 + $0x790] sm:$0xff]
        %v586 = vld [vmem:[%s261 + $0x798] sm:$0xff]
        %v587 = vld [vmem:[%s261 + $0x7a0] sm:$0xff]
        %v588 = vld [vmem:[%s261 + $0x7a8] sm:$0xff]
        %v589 = vld [vmem:[%s261 + $0x7b0] sm:$0xff]
        %v590 = vld [vmem:[%s261 + $0x7b8] sm:$0xff]
        %v591 = vld [vmem:[%s261 + $0x7c0] sm:$0xff]
        %v592 = vld [vmem:[%s261 + $0x7c8] sm:$0xff]
        %v593 = vld [vmem:[%s261 + $0x7d0] sm:$0xff]
        %v594 = vld [vmem:[%s261 + $0x7d8] sm:$0xff]
        %v595 = vld [vmem:[%s261 + $0x7e0] sm:$0xff]
        %v596 = vld [vmem:[%s261 + $0x7e8] sm:$0xff]
        %v597 = vld [vmem:[%s261 + $0x7f0] sm:$0xff]
        %v598 = vld [vmem:[%s261 + $0x7f8] sm:$0xff]
        %v599 = vunpack.c.l.s8.bf16 %v343
        %v600 = vunpack.c.l.s8.bf16 %v344
        %v601 = vunpack.c.l.s8.bf16 %v345
        %v602 = vunpack.c.l.s8.bf16 %v346
        %v603 = vunpack.c.l.s8.bf16 %v347
        %v604 = vunpack.c.l.s8.bf16 %v348
        %v605 = vunpack.c.l.s8.bf16 %v349
        %v606 = vunpack.c.l.s8.bf16 %v350
        %v607 = vunpack.c.h.s8.bf16 %v343
        %v608 = vunpack.c.h.s8.bf16 %v344
        %v609 = vunpack.c.h.s8.bf16 %v345
        %v610 = vunpack.c.h.s8.bf16 %v346
        %v611 = vunpack.c.h.s8.bf16 %v347
        %v612 = vunpack.c.h.s8.bf16 %v348
        %v613 = vunpack.c.h.s8.bf16 %v349
        %v614 = vunpack.c.h.s8.bf16 %v350
        %v615 = vunpack.c.l.s8.bf16 %v351
        %v616 = vunpack.c.l.s8.bf16 %v352
        %v617 = vunpack.c.l.s8.bf16 %v353
        %v618 = vunpack.c.l.s8.bf16 %v354
        %v619 = vunpack.c.l.s8.bf16 %v355
        %v620 = vunpack.c.l.s8.bf16 %v356
        %v621 = vunpack.c.l.s8.bf16 %v357
        %v622 = vunpack.c.l.s8.bf16 %v358
        %v623 = vunpack.c.h.s8.bf16 %v351
        %v624 = vunpack.c.h.s8.bf16 %v352
        %v625 = vunpack.c.h.s8.bf16 %v353
        %v626 = vunpack.c.h.s8.bf16 %v354
        %v627 = vunpack.c.h.s8.bf16 %v355
        %v628 = vunpack.c.h.s8.bf16 %v356
        %v629 = vunpack.c.h.s8.bf16 %v357
        %v630 = vunpack.c.h.s8.bf16 %v358
        %v631 = vunpack.c.l.s8.bf16 %v359
        %v632 = vunpack.c.l.s8.bf16 %v360
        %v633 = vunpack.c.l.s8.bf16 %v361
        %v634 = vunpack.c.l.s8.bf16 %v362
        %v635 = vunpack.c.l.s8.bf16 %v363
        %v636 = vunpack.c.l.s8.bf16 %v364
        %v637 = vunpack.c.l.s8.bf16 %v365
        %v638 = vunpack.c.l.s8.bf16 %v366
        %v639 = vunpack.c.h.s8.bf16 %v359
        %v640 = vunpack.c.h.s8.bf16 %v360
        %v641 = vunpack.c.h.s8.bf16 %v361
        %v642 = vunpack.c.h.s8.bf16 %v362
        %v643 = vunpack.c.h.s8.bf16 %v363
        %v644 = vunpack.c.h.s8.bf16 %v364
        %v645 = vunpack.c.h.s8.bf16 %v365
        %v646 = vunpack.c.h.s8.bf16 %v366
        %v647 = vunpack.c.l.s8.bf16 %v367
        %v648 = vunpack.c.l.s8.bf16 %v368
        %v649 = vunpack.c.l.s8.bf16 %v369
        %v650 = vunpack.c.l.s8.bf16 %v370
        %v651 = vunpack.c.l.s8.bf16 %v371
        %v652 = vunpack.c.l.s8.bf16 %v372
        %v653 = vunpack.c.l.s8.bf16 %v373
        %v654 = vunpack.c.l.s8.bf16 %v374
        %v655 = vunpack.c.h.s8.bf16 %v367
        %v656 = vunpack.c.h.s8.bf16 %v368
        %v657 = vunpack.c.h.s8.bf16 %v369
        %v658 = vunpack.c.h.s8.bf16 %v370
        %v659 = vunpack.c.h.s8.bf16 %v371
        %v660 = vunpack.c.h.s8.bf16 %v372
        %v661 = vunpack.c.h.s8.bf16 %v373
        %v662 = vunpack.c.h.s8.bf16 %v374
        %v663 = vunpack.c.l.s8.bf16 %v375
        %v664 = vunpack.c.l.s8.bf16 %v376
        %v665 = vunpack.c.l.s8.bf16 %v377
        %v666 = vunpack.c.l.s8.bf16 %v378
        %v667 = vunpack.c.l.s8.bf16 %v379
        %v668 = vunpack.c.l.s8.bf16 %v380
        %v669 = vunpack.c.l.s8.bf16 %v381
        %v670 = vunpack.c.l.s8.bf16 %v382
        %v671 = vunpack.c.h.s8.bf16 %v375
        %v672 = vunpack.c.h.s8.bf16 %v376
        %v673 = vunpack.c.h.s8.bf16 %v377
        %v674 = vunpack.c.h.s8.bf16 %v378
        %v675 = vunpack.c.h.s8.bf16 %v379
        %v676 = vunpack.c.h.s8.bf16 %v380
        %v677 = vunpack.c.h.s8.bf16 %v381
        %v678 = vunpack.c.h.s8.bf16 %v382
        %v679 = vunpack.c.l.s8.bf16 %v383
        %v680 = vunpack.c.l.s8.bf16 %v384
        %v681 = vunpack.c.l.s8.bf16 %v385
        %v682 = vunpack.c.l.s8.bf16 %v386
        %v683 = vunpack.c.l.s8.bf16 %v387
        %v684 = vunpack.c.l.s8.bf16 %v388
        %v685 = vunpack.c.l.s8.bf16 %v389
        %v686 = vunpack.c.l.s8.bf16 %v390
        %v687 = vunpack.c.h.s8.bf16 %v383
        %v688 = vunpack.c.h.s8.bf16 %v384
        %v689 = vunpack.c.h.s8.bf16 %v385
        %v690 = vunpack.c.h.s8.bf16 %v386
        %v691 = vunpack.c.h.s8.bf16 %v387
        %v692 = vunpack.c.h.s8.bf16 %v388
        %v693 = vunpack.c.h.s8.bf16 %v389
        %v694 = vunpack.c.h.s8.bf16 %v390
        %v695 = vunpack.c.l.s8.bf16 %v391
        %v696 = vunpack.c.l.s8.bf16 %v392
        %v697 = vunpack.c.l.s8.bf16 %v393
        %v698 = vunpack.c.l.s8.bf16 %v394
        %v699 = vunpack.c.l.s8.bf16 %v395
        %v700 = vunpack.c.l.s8.bf16 %v396
        %v701 = vunpack.c.l.s8.bf16 %v397
        %v702 = vunpack.c.l.s8.bf16 %v398
        %v703 = vunpack.c.h.s8.bf16 %v391
        %v704 = vunpack.c.h.s8.bf16 %v392
        %v705 = vunpack.c.h.s8.bf16 %v393
        %v706 = vunpack.c.h.s8.bf16 %v394
        %v707 = vunpack.c.h.s8.bf16 %v395
        %v708 = vunpack.c.h.s8.bf16 %v396
        %v709 = vunpack.c.h.s8.bf16 %v397
        %v710 = vunpack.c.h.s8.bf16 %v398
        %v711 = vunpack.c.l.s8.bf16 %v399
        %v712 = vunpack.c.l.s8.bf16 %v400
        %v713 = vunpack.c.l.s8.bf16 %v401
        %v714 = vunpack.c.l.s8.bf16 %v402
        %v715 = vunpack.c.l.s8.bf16 %v403
        %v716 = vunpack.c.l.s8.bf16 %v404
        %v717 = vunpack.c.l.s8.bf16 %v405
        %v718 = vunpack.c.l.s8.bf16 %v406
        %v719 = vunpack.c.h.s8.bf16 %v399
        %v720 = vunpack.c.h.s8.bf16 %v400
        %v721 = vunpack.c.h.s8.bf16 %v401
        %v722 = vunpack.c.h.s8.bf16 %v402
        %v723 = vunpack.c.h.s8.bf16 %v403
        %v724 = vunpack.c.h.s8.bf16 %v404
        %v725 = vunpack.c.h.s8.bf16 %v405
        %v726 = vunpack.c.h.s8.bf16 %v406
        %v727 = vunpack.c.l.s8.bf16 %v407
        %v728 = vunpack.c.l.s8.bf16 %v408
        %v729 = vunpack.c.l.s8.bf16 %v409
        %v730 = vunpack.c.l.s8.bf16 %v410
        %v731 = vunpack.c.l.s8.bf16 %v411
        %v732 = vunpack.c.l.s8.bf16 %v412
        %v733 = vunpack.c.l.s8.bf16 %v413
        %v734 = vunpack.c.l.s8.bf16 %v414
        %v735 = vunpack.c.h.s8.bf16 %v407
        %v736 = vunpack.c.h.s8.bf16 %v408
        %v737 = vunpack.c.h.s8.bf16 %v409
        %v738 = vunpack.c.h.s8.bf16 %v410
        %v739 = vunpack.c.h.s8.bf16 %v411
        %v740 = vunpack.c.h.s8.bf16 %v412
        %v741 = vunpack.c.h.s8.bf16 %v413
        %v742 = vunpack.c.h.s8.bf16 %v414
        %v743 = vunpack.c.l.s8.bf16 %v415
        %v744 = vunpack.c.l.s8.bf16 %v416
        %v745 = vunpack.c.l.s8.bf16 %v417
        %v746 = vunpack.c.l.s8.bf16 %v418
        %v747 = vunpack.c.l.s8.bf16 %v419
        %v748 = vunpack.c.l.s8.bf16 %v420
        %v749 = vunpack.c.l.s8.bf16 %v421
        %v750 = vunpack.c.l.s8.bf16 %v422
        %v751 = vunpack.c.h.s8.bf16 %v415
        %v752 = vunpack.c.h.s8.bf16 %v416
        %v753 = vunpack.c.h.s8.bf16 %v417
        %v754 = vunpack.c.h.s8.bf16 %v418
        %v755 = vunpack.c.h.s8.bf16 %v419
        %v756 = vunpack.c.h.s8.bf16 %v420
        %v757 = vunpack.c.h.s8.bf16 %v421
        %v758 = vunpack.c.h.s8.bf16 %v422
        %v759 = vunpack.c.l.s8.bf16 %v423
        %v760 = vunpack.c.l.s8.bf16 %v424
        %v761 = vunpack.c.l.s8.bf16 %v425
        %v762 = vunpack.c.l.s8.bf16 %v426
        %v763 = vunpack.c.l.s8.bf16 %v427
        %v764 = vunpack.c.l.s8.bf16 %v428
        %v765 = vunpack.c.l.s8.bf16 %v429
        %v766 = vunpack.c.l.s8.bf16 %v430
        %v767 = vunpack.c.h.s8.bf16 %v423
        %v768 = vunpack.c.h.s8.bf16 %v424
        %v769 = vunpack.c.h.s8.bf16 %v425
        %v770 = vunpack.c.h.s8.bf16 %v426
        %v771 = vunpack.c.h.s8.bf16 %v427
        %v772 = vunpack.c.h.s8.bf16 %v428
        %v773 = vunpack.c.h.s8.bf16 %v429
        %v774 = vunpack.c.h.s8.bf16 %v430
        %v775 = vunpack.c.l.s8.bf16 %v431
        %v776 = vunpack.c.l.s8.bf16 %v432
        %v777 = vunpack.c.l.s8.bf16 %v433
        %v778 = vunpack.c.l.s8.bf16 %v434
        %v779 = vunpack.c.l.s8.bf16 %v435
        %v780 = vunpack.c.l.s8.bf16 %v436
        %v781 = vunpack.c.l.s8.bf16 %v437
        %v782 = vunpack.c.l.s8.bf16 %v438
        %v783 = vunpack.c.h.s8.bf16 %v431
        %v784 = vunpack.c.h.s8.bf16 %v432
        %v785 = vunpack.c.h.s8.bf16 %v433
        %v786 = vunpack.c.h.s8.bf16 %v434
        %v787 = vunpack.c.h.s8.bf16 %v435
        %v788 = vunpack.c.h.s8.bf16 %v436
        %v789 = vunpack.c.h.s8.bf16 %v437
        %v790 = vunpack.c.h.s8.bf16 %v438
        %v791 = vunpack.c.l.s8.bf16 %v439
        %v792 = vunpack.c.l.s8.bf16 %v440
        %v793 = vunpack.c.l.s8.bf16 %v441
        %v794 = vunpack.c.l.s8.bf16 %v442
        %v795 = vunpack.c.l.s8.bf16 %v443
        %v796 = vunpack.c.l.s8.bf16 %v444
        %v797 = vunpack.c.l.s8.bf16 %v445
        %v798 = vunpack.c.l.s8.bf16 %v446
        %v799 = vunpack.c.h.s8.bf16 %v439
        %v800 = vunpack.c.h.s8.bf16 %v440
        %v801 = vunpack.c.h.s8.bf16 %v441
        %v802 = vunpack.c.h.s8.bf16 %v442
        %v803 = vunpack.c.h.s8.bf16 %v443
        %v804 = vunpack.c.h.s8.bf16 %v444
        %v805 = vunpack.c.h.s8.bf16 %v445
        %v806 = vunpack.c.h.s8.bf16 %v446
        %v807 = vunpack.c.l.s8.bf16 %v447
        %v808 = vunpack.c.l.s8.bf16 %v448
        %v809 = vunpack.c.l.s8.bf16 %v449
        %v810 = vunpack.c.l.s8.bf16 %v450
        %v811 = vunpack.c.l.s8.bf16 %v451
        %v812 = vunpack.c.l.s8.bf16 %v452
        %v813 = vunpack.c.l.s8.bf16 %v453
        %v814 = vunpack.c.l.s8.bf16 %v454
        %v815 = vunpack.c.h.s8.bf16 %v447
        %v816 = vunpack.c.h.s8.bf16 %v448
        %v817 = vunpack.c.h.s8.bf16 %v449
        %v818 = vunpack.c.h.s8.bf16 %v450
        %v819 = vunpack.c.h.s8.bf16 %v451
        %v820 = vunpack.c.h.s8.bf16 %v452
        %v821 = vunpack.c.h.s8.bf16 %v453
        %v822 = vunpack.c.h.s8.bf16 %v454
        %v823 = vunpack.c.l.s8.bf16 %v455
        %v824 = vunpack.c.l.s8.bf16 %v456
        %v825 = vunpack.c.l.s8.bf16 %v457
        %v826 = vunpack.c.l.s8.bf16 %v458
        %v827 = vunpack.c.l.s8.bf16 %v459
        %v828 = vunpack.c.l.s8.bf16 %v460
        %v829 = vunpack.c.l.s8.bf16 %v461
        %v830 = vunpack.c.l.s8.bf16 %v462
        %v831 = vunpack.c.h.s8.bf16 %v455
        %v832 = vunpack.c.h.s8.bf16 %v456
        %v833 = vunpack.c.h.s8.bf16 %v457
        %v834 = vunpack.c.h.s8.bf16 %v458
        %v835 = vunpack.c.h.s8.bf16 %v459
        %v836 = vunpack.c.h.s8.bf16 %v460
        %v837 = vunpack.c.h.s8.bf16 %v461
        %v838 = vunpack.c.h.s8.bf16 %v462
        %v839 = vunpack.c.l.s8.bf16 %v463
        %v840 = vunpack.c.l.s8.bf16 %v464
        %v841 = vunpack.c.l.s8.bf16 %v465
        %v842 = vunpack.c.l.s8.bf16 %v466
        %v843 = vunpack.c.l.s8.bf16 %v467
        %v844 = vunpack.c.l.s8.bf16 %v468
        %v845 = vunpack.c.l.s8.bf16 %v469
        %v846 = vunpack.c.l.s8.bf16 %v470
        %v847 = vunpack.c.h.s8.bf16 %v463
        %v848 = vunpack.c.h.s8.bf16 %v464
        %v849 = vunpack.c.h.s8.bf16 %v465
        %v850 = vunpack.c.h.s8.bf16 %v466
        %v851 = vunpack.c.h.s8.bf16 %v467
        %v852 = vunpack.c.h.s8.bf16 %v468
        %v853 = vunpack.c.h.s8.bf16 %v469
        %v854 = vunpack.c.h.s8.bf16 %v470
        %v855 = vunpack.c.l.s8.bf16 %v471
        %v856 = vunpack.c.l.s8.bf16 %v472
        %v857 = vunpack.c.l.s8.bf16 %v473
        %v858 = vunpack.c.l.s8.bf16 %v474
        %v859 = vunpack.c.l.s8.bf16 %v475
        %v860 = vunpack.c.l.s8.bf16 %v476
        %v861 = vunpack.c.l.s8.bf16 %v477
        %v862 = vunpack.c.l.s8.bf16 %v478
        %v863 = vunpack.c.h.s8.bf16 %v471
        %v864 = vunpack.c.h.s8.bf16 %v472
        %v865 = vunpack.c.h.s8.bf16 %v473
        %v866 = vunpack.c.h.s8.bf16 %v474
        %v867 = vunpack.c.h.s8.bf16 %v475
        %v868 = vunpack.c.h.s8.bf16 %v476
        %v869 = vunpack.c.h.s8.bf16 %v477
        %v870 = vunpack.c.h.s8.bf16 %v478
        %v871 = vunpack.c.l.s8.bf16 %v479
        %v872 = vunpack.c.l.s8.bf16 %v480
        %v873 = vunpack.c.l.s8.bf16 %v481
        %v874 = vunpack.c.l.s8.bf16 %v482
        %v875 = vunpack.c.l.s8.bf16 %v483
        %v876 = vunpack.c.l.s8.bf16 %v484
        %v877 = vunpack.c.l.s8.bf16 %v485
        %v878 = vunpack.c.l.s8.bf16 %v486
        %v879 = vunpack.c.h.s8.bf16 %v479
        %v880 = vunpack.c.h.s8.bf16 %v480
        %v881 = vunpack.c.h.s8.bf16 %v481
        %v882 = vunpack.c.h.s8.bf16 %v482
        %v883 = vunpack.c.h.s8.bf16 %v483
        %v884 = vunpack.c.h.s8.bf16 %v484
        %v885 = vunpack.c.h.s8.bf16 %v485
        %v886 = vunpack.c.h.s8.bf16 %v486
        %v887 = vunpack.c.l.s8.bf16 %v487
        %v888 = vunpack.c.l.s8.bf16 %v488
        %v889 = vunpack.c.l.s8.bf16 %v489
        %v890 = vunpack.c.l.s8.bf16 %v490
        %v891 = vunpack.c.l.s8.bf16 %v491
        %v892 = vunpack.c.l.s8.bf16 %v492
        %v893 = vunpack.c.l.s8.bf16 %v493
        %v894 = vunpack.c.l.s8.bf16 %v494
        %v895 = vunpack.c.h.s8.bf16 %v487
        %v896 = vunpack.c.h.s8.bf16 %v488
        %v897 = vunpack.c.h.s8.bf16 %v489
        %v898 = vunpack.c.h.s8.bf16 %v490
        %v899 = vunpack.c.h.s8.bf16 %v491
        %v900 = vunpack.c.h.s8.bf16 %v492
        %v901 = vunpack.c.h.s8.bf16 %v493
        %v902 = vunpack.c.h.s8.bf16 %v494
        %v903 = vunpack.c.l.s8.bf16 %v495
        %v904 = vunpack.c.l.s8.bf16 %v496
        %v905 = vunpack.c.l.s8.bf16 %v497
        %v906 = vunpack.c.l.s8.bf16 %v498
        %v907 = vunpack.c.l.s8.bf16 %v499
        %v908 = vunpack.c.l.s8.bf16 %v500
        %v909 = vunpack.c.l.s8.bf16 %v501
        %v910 = vunpack.c.l.s8.bf16 %v502
        %v911 = vunpack.c.h.s8.bf16 %v495
        %v912 = vunpack.c.h.s8.bf16 %v496
        %v913 = vunpack.c.h.s8.bf16 %v497
        %v914 = vunpack.c.h.s8.bf16 %v498
        %v915 = vunpack.c.h.s8.bf16 %v499
        %v916 = vunpack.c.h.s8.bf16 %v500
        %v917 = vunpack.c.h.s8.bf16 %v501
        %v918 = vunpack.c.h.s8.bf16 %v502
        %v919 = vunpack.c.l.s8.bf16 %v503
        %v920 = vunpack.c.l.s8.bf16 %v504
        %v921 = vunpack.c.l.s8.bf16 %v505
        %v922 = vunpack.c.l.s8.bf16 %v506
        %v923 = vunpack.c.l.s8.bf16 %v507
        %v924 = vunpack.c.l.s8.bf16 %v508
        %v925 = vunpack.c.l.s8.bf16 %v509
        %v926 = vunpack.c.l.s8.bf16 %v510
        %v927 = vunpack.c.h.s8.bf16 %v503
        %v928 = vunpack.c.h.s8.bf16 %v504
        %v929 = vunpack.c.h.s8.bf16 %v505
        %v930 = vunpack.c.h.s8.bf16 %v506
        %v931 = vunpack.c.h.s8.bf16 %v507
        %v932 = vunpack.c.h.s8.bf16 %v508
        %v933 = vunpack.c.h.s8.bf16 %v509
        %v934 = vunpack.c.h.s8.bf16 %v510
        %v935 = vunpack.c.l.s8.bf16 %v511
        %v936 = vunpack.c.l.s8.bf16 %v512
        %v937 = vunpack.c.l.s8.bf16 %v513
        %v938 = vunpack.c.l.s8.bf16 %v514
        %v939 = vunpack.c.l.s8.bf16 %v515
        %v940 = vunpack.c.l.s8.bf16 %v516
        %v941 = vunpack.c.l.s8.bf16 %v517
        %v942 = vunpack.c.l.s8.bf16 %v518
        %v943 = vunpack.c.h.s8.bf16 %v511
        %v944 = vunpack.c.h.s8.bf16 %v512
        %v945 = vunpack.c.h.s8.bf16 %v513
        %v946 = vunpack.c.h.s8.bf16 %v514
        %v947 = vunpack.c.h.s8.bf16 %v515
        %v948 = vunpack.c.h.s8.bf16 %v516
        %v949 = vunpack.c.h.s8.bf16 %v517
        %v950 = vunpack.c.h.s8.bf16 %v518
        %v951 = vunpack.c.l.s8.bf16 %v519
        %v952 = vunpack.c.l.s8.bf16 %v520
        %v953 = vunpack.c.l.s8.bf16 %v521
        %v954 = vunpack.c.l.s8.bf16 %v522
        %v955 = vunpack.c.l.s8.bf16 %v523
        %v956 = vunpack.c.l.s8.bf16 %v524
        %v957 = vunpack.c.l.s8.bf16 %v525
        %v958 = vunpack.c.l.s8.bf16 %v526
        %v959 = vunpack.c.h.s8.bf16 %v519
        %v960 = vunpack.c.h.s8.bf16 %v520
        %v961 = vunpack.c.h.s8.bf16 %v521
        %v962 = vunpack.c.h.s8.bf16 %v522
        %v963 = vunpack.c.h.s8.bf16 %v523
        %v964 = vunpack.c.h.s8.bf16 %v524
        %v965 = vunpack.c.h.s8.bf16 %v525
        %v966 = vunpack.c.h.s8.bf16 %v526
        %v967 = vunpack.c.l.s8.bf16 %v527
        %v968 = vunpack.c.l.s8.bf16 %v528
        %v969 = vunpack.c.l.s8.bf16 %v529
        %v970 = vunpack.c.l.s8.bf16 %v530
        %v971 = vunpack.c.l.s8.bf16 %v531
        %v972 = vunpack.c.l.s8.bf16 %v532
        %v973 = vunpack.c.l.s8.bf16 %v533
        %v974 = vunpack.c.l.s8.bf16 %v534
        %v975 = vunpack.c.h.s8.bf16 %v527
        %v976 = vunpack.c.h.s8.bf16 %v528
        %v977 = vunpack.c.h.s8.bf16 %v529
        %v978 = vunpack.c.h.s8.bf16 %v530
        %v979 = vunpack.c.h.s8.bf16 %v531
        %v980 = vunpack.c.h.s8.bf16 %v532
        %v981 = vunpack.c.h.s8.bf16 %v533
        %v982 = vunpack.c.h.s8.bf16 %v534
        %v983 = vunpack.c.l.s8.bf16 %v535
        %v984 = vunpack.c.l.s8.bf16 %v536
        %v985 = vunpack.c.l.s8.bf16 %v537
        %v986 = vunpack.c.l.s8.bf16 %v538
        %v987 = vunpack.c.l.s8.bf16 %v539
        %v988 = vunpack.c.l.s8.bf16 %v540
        %v989 = vunpack.c.l.s8.bf16 %v541
        %v990 = vunpack.c.l.s8.bf16 %v542
        %v991 = vunpack.c.h.s8.bf16 %v535
        %v992 = vunpack.c.h.s8.bf16 %v536
        %v993 = vunpack.c.h.s8.bf16 %v537
        %v994 = vunpack.c.h.s8.bf16 %v538
        %v995 = vunpack.c.h.s8.bf16 %v539
        %v996 = vunpack.c.h.s8.bf16 %v540
        %v997 = vunpack.c.h.s8.bf16 %v541
        %v998 = vunpack.c.h.s8.bf16 %v542
        %v999 = vunpack.c.l.s8.bf16 %v543
        %v1000 = vunpack.c.l.s8.bf16 %v544
        %v1001 = vunpack.c.l.s8.bf16 %v545
        %v1002 = vunpack.c.l.s8.bf16 %v546
        %v1003 = vunpack.c.l.s8.bf16 %v547
        %v1004 = vunpack.c.l.s8.bf16 %v548
        %v1005 = vunpack.c.l.s8.bf16 %v549
        %v1006 = vunpack.c.l.s8.bf16 %v550
        %v1007 = vunpack.c.h.s8.bf16 %v543
        %v1008 = vunpack.c.h.s8.bf16 %v544
        %v1009 = vunpack.c.h.s8.bf16 %v545
        %v1010 = vunpack.c.h.s8.bf16 %v546
        %v1011 = vunpack.c.h.s8.bf16 %v547
        %v1012 = vunpack.c.h.s8.bf16 %v548
        %v1013 = vunpack.c.h.s8.bf16 %v549
        %v1014 = vunpack.c.h.s8.bf16 %v550
        %v1015 = vunpack.c.l.s8.bf16 %v551
        %v1016 = vunpack.c.l.s8.bf16 %v552
        %v1017 = vunpack.c.l.s8.bf16 %v553
        %v1018 = vunpack.c.l.s8.bf16 %v554
        %v1019 = vunpack.c.l.s8.bf16 %v555
        %v1020 = vunpack.c.l.s8.bf16 %v556
        %v1021 = vunpack.c.l.s8.bf16 %v557
        %v1022 = vunpack.c.l.s8.bf16 %v558
        %v1023 = vunpack.c.h.s8.bf16 %v551
        %v1024 = vunpack.c.h.s8.bf16 %v552
        %v1025 = vunpack.c.h.s8.bf16 %v553
        %v1026 = vunpack.c.h.s8.bf16 %v554
        %v1027 = vunpack.c.h.s8.bf16 %v555
        %v1028 = vunpack.c.h.s8.bf16 %v556
        %v1029 = vunpack.c.h.s8.bf16 %v557
        %v1030 = vunpack.c.h.s8.bf16 %v558
        %v1031 = vunpack.c.l.s8.bf16 %v559
        %v1032 = vunpack.c.l.s8.bf16 %v560
        %v1033 = vunpack.c.l.s8.bf16 %v561
        %v1034 = vunpack.c.l.s8.bf16 %v562
        %v1035 = vunpack.c.l.s8.bf16 %v563
        %v1036 = vunpack.c.l.s8.bf16 %v564
        %v1037 = vunpack.c.l.s8.bf16 %v565
        %v1038 = vunpack.c.l.s8.bf16 %v566
        %v1039 = vunpack.c.h.s8.bf16 %v559
        %v1040 = vunpack.c.h.s8.bf16 %v560
        %v1041 = vunpack.c.h.s8.bf16 %v561
        %v1042 = vunpack.c.h.s8.bf16 %v562
        %v1043 = vunpack.c.h.s8.bf16 %v563
        %v1044 = vunpack.c.h.s8.bf16 %v564
        %v1045 = vunpack.c.h.s8.bf16 %v565
        %v1046 = vunpack.c.h.s8.bf16 %v566
        %v1047 = vunpack.c.l.s8.bf16 %v567
        %v1048 = vunpack.c.l.s8.bf16 %v568
        %v1049 = vunpack.c.l.s8.bf16 %v569
        %v1050 = vunpack.c.l.s8.bf16 %v570
        %v1051 = vunpack.c.l.s8.bf16 %v571
        %v1052 = vunpack.c.l.s8.bf16 %v572
        %v1053 = vunpack.c.l.s8.bf16 %v573
        %v1054 = vunpack.c.l.s8.bf16 %v574
        %v1055 = vunpack.c.h.s8.bf16 %v567
        %v1056 = vunpack.c.h.s8.bf16 %v568
        %v1057 = vunpack.c.h.s8.bf16 %v569
        %v1058 = vunpack.c.h.s8.bf16 %v570
        %v1059 = vunpack.c.h.s8.bf16 %v571
        %v1060 = vunpack.c.h.s8.bf16 %v572
        %v1061 = vunpack.c.h.s8.bf16 %v573
        %v1062 = vunpack.c.h.s8.bf16 %v574
        %v1063 = vunpack.c.l.s8.bf16 %v575
        %v1064 = vunpack.c.l.s8.bf16 %v576
        %v1065 = vunpack.c.l.s8.bf16 %v577
        %v1066 = vunpack.c.l.s8.bf16 %v578
        %v1067 = vunpack.c.l.s8.bf16 %v579
        %v1068 = vunpack.c.l.s8.bf16 %v580
        %v1069 = vunpack.c.l.s8.bf16 %v581
        %v1070 = vunpack.c.l.s8.bf16 %v582
        %v1071 = vunpack.c.h.s8.bf16 %v575
        %v1072 = vunpack.c.h.s8.bf16 %v576
        %v1073 = vunpack.c.h.s8.bf16 %v577
        %v1074 = vunpack.c.h.s8.bf16 %v578
        %v1075 = vunpack.c.h.s8.bf16 %v579
        %v1076 = vunpack.c.h.s8.bf16 %v580
        %v1077 = vunpack.c.h.s8.bf16 %v581
        %v1078 = vunpack.c.h.s8.bf16 %v582
        %v1079 = vunpack.c.l.s8.bf16 %v583
        %v1080 = vunpack.c.l.s8.bf16 %v584
        %v1081 = vunpack.c.l.s8.bf16 %v585
        %v1082 = vunpack.c.l.s8.bf16 %v586
        %v1083 = vunpack.c.l.s8.bf16 %v587
        %v1084 = vunpack.c.l.s8.bf16 %v588
        %v1085 = vunpack.c.l.s8.bf16 %v589
        %v1086 = vunpack.c.l.s8.bf16 %v590
        %v1087 = vunpack.c.h.s8.bf16 %v583
        %v1088 = vunpack.c.h.s8.bf16 %v584
        %v1089 = vunpack.c.h.s8.bf16 %v585
        %v1090 = vunpack.c.h.s8.bf16 %v586
        %v1091 = vunpack.c.h.s8.bf16 %v587
        %v1092 = vunpack.c.h.s8.bf16 %v588
        %v1093 = vunpack.c.h.s8.bf16 %v589
        %v1094 = vunpack.c.h.s8.bf16 %v590
        %v1095 = vunpack.c.l.s8.bf16 %v591
        %v1096 = vunpack.c.l.s8.bf16 %v592
        %v1097 = vunpack.c.l.s8.bf16 %v593
        %v1098 = vunpack.c.l.s8.bf16 %v594
        %v1099 = vunpack.c.l.s8.bf16 %v595
        %v1100 = vunpack.c.l.s8.bf16 %v596
        %v1101 = vunpack.c.l.s8.bf16 %v597
        %v1102 = vunpack.c.l.s8.bf16 %v598
        %v1103 = vunpack.c.h.s8.bf16 %v591
        %v1104 = vunpack.c.h.s8.bf16 %v592
        %v1105 = vunpack.c.h.s8.bf16 %v593
        %v1106 = vunpack.c.h.s8.bf16 %v594
        %v1107 = vunpack.c.h.s8.bf16 %v595
        %v1108 = vunpack.c.h.s8.bf16 %v596
        %v1109 = vunpack.c.h.s8.bf16 %v597
        %v1110 = vunpack.c.h.s8.bf16 %v598
        %v1111 = vld [vmem:[%s333] sm:$0xff]
        %v1112 = vld [vmem:[%s333 + $0x8] sm:$0xff]
        %v1113 = vld [vmem:[%s333 + $0x10] sm:$0xff]
        %v1114 = vld [vmem:[%s333 + $0x18] sm:$0xff]
        %v1115 = vld [vmem:[%s323] sm:$0xff]
        %v1116 = vld [vmem:[%s323 + $0x8] sm:$0xff]
        %v1119 = vcombine.high %v1115, %v1115
        %v1121 = vunpack.c.l.s4 1983009808
        %v1122 = vunpack.c.0.s8 %v1121
        %v1123 = vlaneseq
        %v1124 = vshrl.u32 %v1123, 7
        %v1125 = vsub.s32 %v1122, %v1124
        %v1126 = vrot.slane %v1115, %v1125
        %v1128 = vunpack.c.l.s4 1983009808
        %v1129 = vunpack.c.0.s8 %v1128
        %v1130 = vlaneseq
        %v1131 = vshrl.u32 %v1130, 7
        %v1132 = vsub.s32 %v1129, %v1131
        %v1133 = vrot.slane %v1119, %v1132
        %v1134 = vcombine.high %v1126, %v1126
        %v1135 = vcombine.high %v1133, %v1133
        %v1136 = vcombine.high %v1116, %v1116
        %v1138 = vunpack.c.l.s4 1983009808
        %v1139 = vunpack.c.0.s8 %v1138
        %v1140 = vlaneseq
        %v1141 = vshrl.u32 %v1140, 7
        %v1142 = vsub.s32 %v1139, %v1141
        %v1143 = vrot.slane %v1116, %v1142
        %v1145 = vunpack.c.l.s4 1983009808
        %v1146 = vunpack.c.0.s8 %v1145
        %v1147 = vlaneseq
        %v1148 = vshrl.u32 %v1147, 7
        %v1149 = vsub.s32 %v1146, %v1148
        %v1150 = vrot.slane %v1136, %v1149
        %v1151 = vcombine.high %v1143, %v1143
        %v1152 = vcombine.high %v1150, %v1150
        %1161 = vmatprep.subr.bf16.mxu0 %v600
        %1162 = vmatpush1.bf16.msra.mxu0 %v599
        %1163 = vmatprep.subr.bf16.mxu0 %v608
        %1164 = vmatpush1.bf16.msra.mxu0 %v607
        %1165 = vmatprep.subr.bf16.mxu0 %v616
        %1166 = vmatpush1.bf16.msra.mxu0 %v615
        %1167 = vmatprep.subr.bf16.mxu0 %v624
        %1168 = vmatpush1.bf16.msra.mxu0 %v623
        %1169 = vmatprep.subr.bf16.mxu0 %v632
        %1170 = vmatpush1.bf16.msra.mxu0 %v631
        %1171 = vmatprep.subr.bf16.mxu0 %v640
        %1172 = vmatpush1.bf16.msra.mxu0 %v639
        %1173 = vmatprep.subr.bf16.mxu0 %v648
        %1174 = vmatpush1.bf16.msra.mxu0 %v647
        %1175 = vmatprep.subr.bf16.mxu0 %v656
        %1176 = vmatpush1.bf16.msra.mxu0 %v655
        %1177 = vmatprep.subr.bf16.mxu0 %v664
        %1178 = vmatpush1.bf16.msra.mxu0 %v663
        %1179 = vmatprep.subr.bf16.mxu0 %v672
        %1180 = vmatpush1.bf16.msra.mxu0 %v671
        %1181 = vmatprep.subr.bf16.mxu0 %v680
        %1182 = vmatpush1.bf16.msra.mxu0 %v679
        %1183 = vmatprep.subr.bf16.mxu0 %v688
        %1184 = vmatpush1.bf16.msra.mxu0 %v687
        %1185 = vmatprep.subr.bf16.mxu0 %v696
        %1186 = vmatpush1.bf16.msra.mxu0 %v695
        %1187 = vmatprep.subr.bf16.mxu0 %v704
        %1188 = vmatpush1.bf16.msra.mxu0 %v703
        %1189 = vmatprep.subr.bf16.mxu0 %v712
        %1190 = vmatpush1.bf16.msra.mxu0 %v711
        %1191 = vmatprep.subr.bf16.mxu0 %v720
        %1192 = vmatpush1.bf16.msra.mxu0 %v719
        %1193 = vmatprep.mubr.bf16.mxu0 %v1134
        %1194 = vmatmul.mubr.bf16.gmra.mrb[0].mxu0 %v1126
        %v1195 = vpop.f32.mrb[0].mxu0
        %v1196 = vadd.f32 0.0, %v1195
        %v1197 = vpop.f32.mrb[0].mxu0
        %v1198 = vadd.f32 0.0, %v1197
        %v1199 = vpop.f32.mrb[0].mxu0
        %v1200 = vpop.f32.mrb[0].mxu0
        %1201 = vdwg.mxu0
        %1202 = vmatprep.subr.bf16.mxu0 %v728
        %1203 = vmatpush1.bf16.msra.mxu0 %v727
        %1204 = vmatprep.subr.bf16.mxu0 %v736
        %1205 = vmatpush1.bf16.msra.mxu0 %v735
        %1206 = vmatprep.subr.bf16.mxu0 %v744
        %1207 = vmatpush1.bf16.msra.mxu0 %v743
        %1208 = vmatprep.subr.bf16.mxu0 %v752
        %1209 = vmatpush1.bf16.msra.mxu0 %v751
        %1210 = vmatprep.subr.bf16.mxu0 %v760
        %1211 = vmatpush1.bf16.msra.mxu0 %v759
        %1212 = vmatprep.subr.bf16.mxu0 %v768
        %1213 = vmatpush1.bf16.msra.mxu0 %v767
        %1214 = vmatprep.subr.bf16.mxu0 %v776
        %1215 = vmatpush1.bf16.msra.mxu0 %v775
        %1216 = vmatprep.subr.bf16.mxu0 %v784
        %1217 = vmatpush1.bf16.msra.mxu0 %v783
        %1218 = vmatprep.subr.bf16.mxu0 %v792
        %1219 = vmatpush1.bf16.msra.mxu0 %v791
        %1220 = vmatprep.subr.bf16.mxu0 %v800
        %1221 = vmatpush1.bf16.msra.mxu0 %v799
        %1222 = vmatprep.subr.bf16.mxu0 %v808
        %1223 = vmatpush1.bf16.msra.mxu0 %v807
        %1224 = vmatprep.subr.bf16.mxu0 %v816
        %1225 = vmatpush1.bf16.msra.mxu0 %v815
        %1226 = vmatprep.subr.bf16.mxu0 %v824
        %1227 = vmatpush1.bf16.msra.mxu0 %v823
        %1228 = vmatprep.subr.bf16.mxu0 %v832
        %1229 = vmatpush1.bf16.msra.mxu0 %v831
        %1230 = vmatprep.subr.bf16.mxu0 %v840
        %1231 = vmatpush1.bf16.msra.mxu0 %v839
        %1232 = vmatprep.subr.bf16.mxu0 %v848
        %1233 = vmatpush1.bf16.msra.mxu0 %v847
        %1234 = vmatprep.mubr.bf16.mxu0 %v1135
        %1235 = vmatmul.mubr.bf16.gmra.mrb[0].mxu0 %v1133
        %v1236 = vpop.f32.mrb[0].mxu0
        %v1237 = vadd.f32 %v1196, %v1236
        %v1238 = vpop.f32.mrb[0].mxu0
        %v1239 = vadd.f32 %v1198, %v1238
        %v1240 = vpop.f32.mrb[0].mxu0
        %v1241 = vpop.f32.mrb[0].mxu0
        %1242 = vdwg.mxu0
        %1243 = vmatprep.subr.bf16.mxu0 %v856
        %1244 = vmatpush1.bf16.msra.mxu0 %v855
        %1245 = vmatprep.subr.bf16.mxu0 %v864
        %1246 = vmatpush1.bf16.msra.mxu0 %v863
        %1247 = vmatprep.subr.bf16.mxu0 %v872
        %1248 = vmatpush1.bf16.msra.mxu0 %v871
        %1249 = vmatprep.subr.bf16.mxu0 %v880
        %1250 = vmatpush1.bf16.msra.mxu0 %v879
        %1251 = vmatprep.subr.bf16.mxu0 %v888
        %1252 = vmatpush1.bf16.msra.mxu0 %v887
        %1253 = vmatprep.subr.bf16.mxu0 %v896
        %1254 = vmatpush1.bf16.msra.mxu0 %v895
        %1255 = vmatprep.subr.bf16.mxu0 %v904
        %1256 = vmatpush1.bf16.msra.mxu0 %v903
        %1257 = vmatprep.subr.bf16.mxu0 %v912
        %1258 = vmatpush1.bf16.msra.mxu0 %v911
        %1259 = vmatprep.subr.bf16.mxu0 %v920
        %1260 = vmatpush1.bf16.msra.mxu0 %v919
        %1261 = vmatprep.subr.bf16.mxu0 %v928
        %1262 = vmatpush1.bf16.msra.mxu0 %v927
        %1263 = vmatprep.subr.bf16.mxu0 %v936
        %1264 = vmatpush1.bf16.msra.mxu0 %v935
        %1265 = vmatprep.subr.bf16.mxu0 %v944
        %1266 = vmatpush1.bf16.msra.mxu0 %v943
        %1267 = vmatprep.subr.bf16.mxu0 %v952
        %1268 = vmatpush1.bf16.msra.mxu0 %v951
        %1269 = vmatprep.subr.bf16.mxu0 %v960
        %1270 = vmatpush1.bf16.msra.mxu0 %v959
        %1271 = vmatprep.subr.bf16.mxu0 %v968
        %1272 = vmatpush1.bf16.msra.mxu0 %v967
        %1273 = vmatprep.subr.bf16.mxu0 %v976
        %1274 = vmatpush1.bf16.msra.mxu0 %v975
        %1275 = vmatprep.mubr.bf16.mxu0 %v1151
        %1276 = vmatmul.mubr.bf16.gmra.mrb[0].mxu0 %v1143
        %v1277 = vpop.f32.mrb[0].mxu0
        %v1278 = vadd.f32 %v1237, %v1277
        %v1279 = vpop.f32.mrb[0].mxu0
        %v1280 = vadd.f32 %v1239, %v1279
        %v1281 = vpop.f32.mrb[0].mxu0
        %v1282 = vpop.f32.mrb[0].mxu0
        %1283 = vdwg.mxu0
        %1284 = vmatprep.subr.bf16.mxu0 %v984
        %1285 = vmatpush1.bf16.msra.mxu0 %v983
        %1286 = vmatprep.subr.bf16.mxu0 %v992
        %1287 = vmatpush1.bf16.msra.mxu0 %v991
        %1288 = vmatprep.subr.bf16.mxu0 %v1000
        %1289 = vmatpush1.bf16.msra.mxu0 %v999
        %1290 = vmatprep.subr.bf16.mxu0 %v1008
        %1291 = vmatpush1.bf16.msra.mxu0 %v1007
        %1292 = vmatprep.subr.bf16.mxu0 %v1016
        %1293 = vmatpush1.bf16.msra.mxu0 %v1015
        %1294 = vmatprep.subr.bf16.mxu0 %v1024
        %1295 = vmatpush1.bf16.msra.mxu0 %v1023
        %1296 = vmatprep.subr.bf16.mxu0 %v1032
        %1297 = vmatpush1.bf16.msra.mxu0 %v1031
        %1298 = vmatprep.subr.bf16.mxu0 %v1040
        %1299 = vmatpush1.bf16.msra.mxu0 %v1039
        %1300 = vmatprep.subr.bf16.mxu0 %v1048
        %1301 = vmatpush1.bf16.msra.mxu0 %v1047
        %1302 = vmatprep.subr.bf16.mxu0 %v1056
        %1303 = vmatpush1.bf16.msra.mxu0 %v1055
        %1304 = vmatprep.subr.bf16.mxu0 %v1064
        %1305 = vmatpush1.bf16.msra.mxu0 %v1063
        %1306 = vmatprep.subr.bf16.mxu0 %v1072
        %1307 = vmatpush1.bf16.msra.mxu0 %v1071
        %1308 = vmatprep.subr.bf16.mxu0 %v1080
        %1309 = vmatpush1.bf16.msra.mxu0 %v1079
        %1310 = vmatprep.subr.bf16.mxu0 %v1088
        %1311 = vmatpush1.bf16.msra.mxu0 %v1087
        %1312 = vmatprep.subr.bf16.mxu0 %v1096
        %1313 = vmatpush1.bf16.msra.mxu0 %v1095
        %1314 = vmatprep.subr.bf16.mxu0 %v1104
        %1315 = vmatpush1.bf16.msra.mxu0 %v1103
        %1316 = vmatprep.mubr.bf16.mxu0 %v1152
        %1317 = vmatmul.mubr.bf16.gmra.mrb[0].mxu0 %v1150
        %v1318 = vpop.f32.mrb[0].mxu0
        %v1319 = vadd.f32 %v1278, %v1318
        %v1320 = vpop.f32.mrb[0].mxu0
        %v1321 = vadd.f32 %v1280, %v1320
        %v1322 = vpop.f32.mrb[0].mxu0
        %v1323 = vpop.f32.mrb[0].mxu0
        %1324 = vdwg.mxu0
        %1325 = vmatprep.subr.bf16.mxu0 %v602
        %1326 = vmatpush1.bf16.msra.mxu0 %v601
        %1327 = vmatprep.subr.bf16.mxu0 %v610
        %1328 = vmatpush1.bf16.msra.mxu0 %v609
        %1329 = vmatprep.subr.bf16.mxu0 %v618
        %1330 = vmatpush1.bf16.msra.mxu0 %v617
        %1331 = vmatprep.subr.bf16.mxu0 %v626
        %1332 = vmatpush1.bf16.msra.mxu0 %v625
        %1333 = vmatprep.subr.bf16.mxu0 %v634
        %1334 = vmatpush1.bf16.msra.mxu0 %v633
        %1335 = vmatprep.subr.bf16.mxu0 %v642
        %1336 = vmatpush1.bf16.msra.mxu0 %v641
        %1337 = vmatprep.subr.bf16.mxu0 %v650
        %1338 = vmatpush1.bf16.msra.mxu0 %v649
        %1339 = vmatprep.subr.bf16.mxu0 %v658
        %1340 = vmatpush1.bf16.msra.mxu0 %v657
        %1341 = vmatprep.subr.bf16.mxu0 %v666
        %1342 = vmatpush1.bf16.msra.mxu0 %v665
        %1343 = vmatprep.subr.bf16.mxu0 %v674
        %1344 = vmatpush1.bf16.msra.mxu0 %v673
        %1345 = vmatprep.subr.bf16.mxu0 %v682
        %1346 = vmatpush1.bf16.msra.mxu0 %v681
        %1347 = vmatprep.subr.bf16.mxu0 %v690
        %1348 = vmatpush1.bf16.msra.mxu0 %v689
        %1349 = vmatprep.subr.bf16.mxu0 %v698
        %1350 = vmatpush1.bf16.msra.mxu0 %v697
        %1351 = vmatprep.subr.bf16.mxu0 %v706
        %1352 = vmatpush1.bf16.msra.mxu0 %v705
        %1353 = vmatprep.subr.bf16.mxu0 %v714
        %1354 = vmatpush1.bf16.msra.mxu0 %v713
        %1355 = vmatprep.subr.bf16.mxu0 %v722
        %1356 = vmatpush1.bf16.msra.mxu0 %v721
        %1357 = vmatprep.mubr.bf16.mxu0 %v1134
        %1358 = vmatmul.mubr.bf16.gmra.mrb[0].mxu0 %v1126
        %v1359 = vpop.f32.mrb[0].mxu0
        %v1360 = vadd.f32 0.0, %v1359
        %v1361 = vpop.f32.mrb[0].mxu0
        %v1362 = vadd.f32 0.0, %v1361
        %v1363 = vpop.f32.mrb[0].mxu0
        %v1364 = vpop.f32.mrb[0].mxu0
        %1365 = vdwg.mxu0
        %1366 = vmatprep.subr.bf16.mxu0 %v730
        %1367 = vmatpush1.bf16.msra.mxu0 %v729
        %1368 = vmatprep.subr.bf16.mxu0 %v738
        %1369 = vmatpush1.bf16.msra.mxu0 %v737
        %1370 = vmatprep.subr.bf16.mxu0 %v746
        %1371 = vmatpush1.bf16.msra.mxu0 %v745
        %1372 = vmatprep.subr.bf16.mxu0 %v754
        %1373 = vmatpush1.bf16.msra.mxu0 %v753
        %1374 = vmatprep.subr.bf16.mxu0 %v762
        %1375 = vmatpush1.bf16.msra.mxu0 %v761
        %1376 = vmatprep.subr.bf16.mxu0 %v770
        %1377 = vmatpush1.bf16.msra.mxu0 %v769
        %1378 = vmatprep.subr.bf16.mxu0 %v778
        %1379 = vmatpush1.bf16.msra.mxu0 %v777
        %1380 = vmatprep.subr.bf16.mxu0 %v786
        %1381 = vmatpush1.bf16.msra.mxu0 %v785
        %1382 = vmatprep.subr.bf16.mxu0 %v794
        %1383 = vmatpush1.bf16.msra.mxu0 %v793
        %1384 = vmatprep.subr.bf16.mxu0 %v802
        %1385 = vmatpush1.bf16.msra.mxu0 %v801
        %1386 = vmatprep.subr.bf16.mxu0 %v810
        %1387 = vmatpush1.bf16.msra.mxu0 %v809
        %1388 = vmatprep.subr.bf16.mxu0 %v818
        %1389 = vmatpush1.bf16.msra.mxu0 %v817
        %1390 = vmatprep.subr.bf16.mxu0 %v826
        %1391 = vmatpush1.bf16.msra.mxu0 %v825
        %1392 = vmatprep.subr.bf16.mxu0 %v834
        %1393 = vmatpush1.bf16.msra.mxu0 %v833
        %1394 = vmatprep.subr.bf16.mxu0 %v842
        %1395 = vmatpush1.bf16.msra.mxu0 %v841
        %1396 = vmatprep.subr.bf16.mxu0 %v850
        %1397 = vmatpush1.bf16.msra.mxu0 %v849
        %1398 = vmatprep.mubr.bf16.mxu0 %v1135
        %1399 = vmatmul.mubr.bf16.gmra.mrb[0].mxu0 %v1133
        %v1400 = vpop.f32.mrb[0].mxu0
        %v1401 = vadd.f32 %v1360, %v1400
        %v1402 = vpop.f32.mrb[0].mxu0
        %v1403 = vadd.f32 %v1362, %v1402
        %v1404 = vpop.f32.mrb[0].mxu0
        %v1405 = vpop.f32.mrb[0].mxu0
        %1406 = vdwg.mxu0
        %1407 = vmatprep.subr.bf16.mxu0 %v858
        %1408 = vmatpush1.bf16.msra.mxu0 %v857
        %1409 = vmatprep.subr.bf16.mxu0 %v866
        %1410 = vmatpush1.bf16.msra.mxu0 %v865
        %1411 = vmatprep.subr.bf16.mxu0 %v874
        %1412 = vmatpush1.bf16.msra.mxu0 %v873
        %1413 = vmatprep.subr.bf16.mxu0 %v882
        %1414 = vmatpush1.bf16.msra.mxu0 %v881
        %1415 = vmatprep.subr.bf16.mxu0 %v890
        %1416 = vmatpush1.bf16.msra.mxu0 %v889
        %1417 = vmatprep.subr.bf16.mxu0 %v898
        %1418 = vmatpush1.bf16.msra.mxu0 %v897
        %1419 = vmatprep.subr.bf16.mxu0 %v906
        %1420 = vmatpush1.bf16.msra.mxu0 %v905
        %1421 = vmatprep.subr.bf16.mxu0 %v914
        %1422 = vmatpush1.bf16.msra.mxu0 %v913
        %1423 = vmatprep.subr.bf16.mxu0 %v922
        %1424 = vmatpush1.bf16.msra.mxu0 %v921
        %1425 = vmatprep.subr.bf16.mxu0 %v930
        %1426 = vmatpush1.bf16.msra.mxu0 %v929
        %1427 = vmatprep.subr.bf16.mxu0 %v938
        %1428 = vmatpush1.bf16.msra.mxu0 %v937
        %1429 = vmatprep.subr.bf16.mxu0 %v946
        %1430 = vmatpush1.bf16.msra.mxu0 %v945
        %1431 = vmatprep.subr.bf16.mxu0 %v954
        %1432 = vmatpush1.bf16.msra.mxu0 %v953
        %1433 = vmatprep.subr.bf16.mxu0 %v962
        %1434 = vmatpush1.bf16.msra.mxu0 %v961
        %1435 = vmatprep.subr.bf16.mxu0 %v970
        %1436 = vmatpush1.bf16.msra.mxu0 %v969
        %1437 = vmatprep.subr.bf16.mxu0 %v978
        %1438 = vmatpush1.bf16.msra.mxu0 %v977
        %1439 = vmatprep.mubr.bf16.mxu0 %v1151
        %1440 = vmatmul.mubr.bf16.gmra.mrb[0].mxu0 %v1143
        %v1441 = vpop.f32.mrb[0].mxu0
        %v1442 = vadd.f32 %v1401, %v1441
        %v1443 = vpop.f32.mrb[0].mxu0
        %v1444 = vadd.f32 %v1403, %v1443
        %v1445 = vpop.f32.mrb[0].mxu0
        %v1446 = vpop.f32.mrb[0].mxu0
        %1447 = vdwg.mxu0
        %1448 = vmatprep.subr.bf16.mxu0 %v986
        %1449 = vmatpush1.bf16.msra.mxu0 %v985
        %1450 = vmatprep.subr.bf16.mxu0 %v994
        %1451 = vmatpush1.bf16.msra.mxu0 %v993
        %1452 = vmatprep.subr.bf16.mxu0 %v1002
        %1453 = vmatpush1.bf16.msra.mxu0 %v1001
        %1454 = vmatprep.subr.bf16.mxu0 %v1010
        %1455 = vmatpush1.bf16.msra.mxu0 %v1009
        %1456 = vmatprep.subr.bf16.mxu0 %v1018
        %1457 = vmatpush1.bf16.msra.mxu0 %v1017
        %1458 = vmatprep.subr.bf16.mxu0 %v1026
        %1459 = vmatpush1.bf16.msra.mxu0 %v1025
        %1460 = vmatprep.subr.bf16.mxu0 %v1034
        %1461 = vmatpush1.bf16.msra.mxu0 %v1033
        %1462 = vmatprep.subr.bf16.mxu0 %v1042
        %1463 = vmatpush1.bf16.msra.mxu0 %v1041
        %1464 = vmatprep.subr.bf16.mxu0 %v1050
        %1465 = vmatpush1.bf16.msra.mxu0 %v1049
        %1466 = vmatprep.subr.bf16.mxu0 %v1058
        %1467 = vmatpush1.bf16.msra.mxu0 %v1057
        %1468 = vmatprep.subr.bf16.mxu0 %v1066
        %1469 = vmatpush1.bf16.msra.mxu0 %v1065
        %1470 = vmatprep.subr.bf16.mxu0 %v1074
        %1471 = vmatpush1.bf16.msra.mxu0 %v1073
        %1472 = vmatprep.subr.bf16.mxu0 %v1082
        %1473 = vmatpush1.bf16.msra.mxu0 %v1081
        %1474 = vmatprep.subr.bf16.mxu0 %v1090
        %1475 = vmatpush1.bf16.msra.mxu0 %v1089
        %1476 = vmatprep.subr.bf16.mxu0 %v1098
        %1477 = vmatpush1.bf16.msra.mxu0 %v1097
        %1478 = vmatprep.subr.bf16.mxu0 %v1106
        %1479 = vmatpush1.bf16.msra.mxu0 %v1105
        %1480 = vmatprep.mubr.bf16.mxu0 %v1152
        %1481 = vmatmul.mubr.bf16.gmra.mrb[0].mxu0 %v1150
        %v1482 = vpop.f32.mrb[0].mxu0
        %v1483 = vadd.f32 %v1442, %v1482
        %v1484 = vpop.f32.mrb[0].mxu0
        %v1485 = vadd.f32 %v1444, %v1484
        %v1486 = vpop.f32.mrb[0].mxu0
        %v1487 = vpop.f32.mrb[0].mxu0
        %1488 = vdwg.mxu0
        %1489 = vmatprep.subr.bf16.mxu0 %v604
        %1490 = vmatpush1.bf16.msra.mxu0 %v603
        %1491 = vmatprep.subr.bf16.mxu0 %v612
        %1492 = vmatpush1.bf16.msra.mxu0 %v611
        %1493 = vmatprep.subr.bf16.mxu0 %v620
        %1494 = vmatpush1.bf16.msra.mxu0 %v619
        %1495 = vmatprep.subr.bf16.mxu0 %v628
        %1496 = vmatpush1.bf16.msra.mxu0 %v627
        %1497 = vmatprep.subr.bf16.mxu0 %v636
        %1498 = vmatpush1.bf16.msra.mxu0 %v635
        %1499 = vmatprep.subr.bf16.mxu0 %v644
        %1500 = vmatpush1.bf16.msra.mxu0 %v643
        %1501 = vmatprep.subr.bf16.mxu0 %v652
        %1502 = vmatpush1.bf16.msra.mxu0 %v651
        %1503 = vmatprep.subr.bf16.mxu0 %v660
        %1504 = vmatpush1.bf16.msra.mxu0 %v659
        %1505 = vmatprep.subr.bf16.mxu0 %v668
        %1506 = vmatpush1.bf16.msra.mxu0 %v667
        %1507 = vmatprep.subr.bf16.mxu0 %v676
        %1508 = vmatpush1.bf16.msra.mxu0 %v675
        %1509 = vmatprep.subr.bf16.mxu0 %v684
        %1510 = vmatpush1.bf16.msra.mxu0 %v683
        %1511 = vmatprep.subr.bf16.mxu0 %v692
        %1512 = vmatpush1.bf16.msra.mxu0 %v691
        %1513 = vmatprep.subr.bf16.mxu0 %v700
        %1514 = vmatpush1.bf16.msra.mxu0 %v699
        %1515 = vmatprep.subr.bf16.mxu0 %v708
        %1516 = vmatpush1.bf16.msra.mxu0 %v707
        %1517 = vmatprep.subr.bf16.mxu0 %v716
        %1518 = vmatpush1.bf16.msra.mxu0 %v715
        %1519 = vmatprep.subr.bf16.mxu0 %v724
        %1520 = vmatpush1.bf16.msra.mxu0 %v723
        %1521 = vmatprep.mubr.bf16.mxu0 %v1134
        %1522 = vmatmul.mubr.bf16.gmra.mrb[0].mxu0 %v1126
        %v1523 = vpop.f32.mrb[0].mxu0
        %v1524 = vadd.f32 0.0, %v1523
        %v1525 = vpop.f32.mrb[0].mxu0
        %v1526 = vadd.f32 0.0, %v1525
        %v1527 = vpop.f32.mrb[0].mxu0
        %v1528 = vpop.f32.mrb[0].mxu0
        %1529 = vdwg.mxu0
        %1530 = vmatprep.subr.bf16.mxu0 %v732
        %1531 = vmatpush1.bf16.msra.mxu0 %v731
        %1532 = vmatprep.subr.bf16.mxu0 %v740
        %1533 = vmatpush1.bf16.msra.mxu0 %v739
        %1534 = vmatprep.subr.bf16.mxu0 %v748
        %1535 = vmatpush1.bf16.msra.mxu0 %v747
        %1536 = vmatprep.subr.bf16.mxu0 %v756
        %1537 = vmatpush1.bf16.msra.mxu0 %v755
        %1538 = vmatprep.subr.bf16.mxu0 %v764
        %1539 = vmatpush1.bf16.msra.mxu0 %v763
        %1540 = vmatprep.subr.bf16.mxu0 %v772
        %1541 = vmatpush1.bf16.msra.mxu0 %v771
        %1542 = vmatprep.subr.bf16.mxu0 %v780
        %1543 = vmatpush1.bf16.msra.mxu0 %v779
        %1544 = vmatprep.subr.bf16.mxu0 %v788
        %1545 = vmatpush1.bf16.msra.mxu0 %v787
        %1546 = vmatprep.subr.bf16.mxu0 %v796
        %1547 = vmatpush1.bf16.msra.mxu0 %v795
        %1548 = vmatprep.subr.bf16.mxu0 %v804
        %1549 = vmatpush1.bf16.msra.mxu0 %v803
        %1550 = vmatprep.subr.bf16.mxu0 %v812
        %1551 = vmatpush1.bf16.msra.mxu0 %v811
        %1552 = vmatprep.subr.bf16.mxu0 %v820
        %1553 = vmatpush1.bf16.msra.mxu0 %v819
        %1554 = vmatprep.subr.bf16.mxu0 %v828
        %1555 = vmatpush1.bf16.msra.mxu0 %v827
        %1556 = vmatprep.subr.bf16.mxu0 %v836
        %1557 = vmatpush1.bf16.msra.mxu0 %v835
        %1558 = vmatprep.subr.bf16.mxu0 %v844
        %1559 = vmatpush1.bf16.msra.mxu0 %v843
        %1560 = vmatprep.subr.bf16.mxu0 %v852
        %1561 = vmatpush1.bf16.msra.mxu0 %v851
        %1562 = vmatprep.mubr.bf16.mxu0 %v1135
        %1563 = vmatmul.mubr.bf16.gmra.mrb[0].mxu0 %v1133
        %v1564 = vpop.f32.mrb[0].mxu0
        %v1565 = vadd.f32 %v1524, %v1564
        %v1566 = vpop.f32.mrb[0].mxu0
        %v1567 = vadd.f32 %v1526, %v1566
        %v1568 = vpop.f32.mrb[0].mxu0
        %v1569 = vpop.f32.mrb[0].mxu0
        %1570 = vdwg.mxu0
        %1571 = vmatprep.subr.bf16.mxu0 %v860
        %1572 = vmatpush1.bf16.msra.mxu0 %v859
        %1573 = vmatprep.subr.bf16.mxu0 %v868
        %1574 = vmatpush1.bf16.msra.mxu0 %v867
        %1575 = vmatprep.subr.bf16.mxu0 %v876
        %1576 = vmatpush1.bf16.msra.mxu0 %v875
        %1577 = vmatprep.subr.bf16.mxu0 %v884
        %1578 = vmatpush1.bf16.msra.mxu0 %v883
        %1579 = vmatprep.subr.bf16.mxu0 %v892
        %1580 = vmatpush1.bf16.msra.mxu0 %v891
        %1581 = vmatprep.subr.bf16.mxu0 %v900
        %1582 = vmatpush1.bf16.msra.mxu0 %v899
        %1583 = vmatprep.subr.bf16.mxu0 %v908
        %1584 = vmatpush1.bf16.msra.mxu0 %v907
        %1585 = vmatprep.subr.bf16.mxu0 %v916
        %1586 = vmatpush1.bf16.msra.mxu0 %v915
        %1587 = vmatprep.subr.bf16.mxu0 %v924
        %1588 = vmatpush1.bf16.msra.mxu0 %v923
        %1589 = vmatprep.subr.bf16.mxu0 %v932
        %1590 = vmatpush1.bf16.msra.mxu0 %v931
        %1591 = vmatprep.subr.bf16.mxu0 %v940
        %1592 = vmatpush1.bf16.msra.mxu0 %v939
        %1593 = vmatprep.subr.bf16.mxu0 %v948
        %1594 = vmatpush1.bf16.msra.mxu0 %v947
        %1595 = vmatprep.subr.bf16.mxu0 %v956
        %1596 = vmatpush1.bf16.msra.mxu0 %v955
        %1597 = vmatprep.subr.bf16.mxu0 %v964
        %1598 = vmatpush1.bf16.msra.mxu0 %v963
        %1599 = vmatprep.subr.bf16.mxu0 %v972
        %1600 = vmatpush1.bf16.msra.mxu0 %v971
        %1601 = vmatprep.subr.bf16.mxu0 %v980
        %1602 = vmatpush1.bf16.msra.mxu0 %v979
        %1603 = vmatprep.mubr.bf16.mxu0 %v1151
        %1604 = vmatmul.mubr.bf16.gmra.mrb[0].mxu0 %v1143
        %v1605 = vpop.f32.mrb[0].mxu0
        %v1606 = vadd.f32 %v1565, %v1605
        %v1607 = vpop.f32.mrb[0].mxu0
        %v1608 = vadd.f32 %v1567, %v1607
        %v1609 = vpop.f32.mrb[0].mxu0
        %v1610 = vpop.f32.mrb[0].mxu0
        %1611 = vdwg.mxu0
        %1612 = vmatprep.subr.bf16.mxu0 %v988
        %1613 = vmatpush1.bf16.msra.mxu0 %v987
        %1614 = vmatprep.subr.bf16.mxu0 %v996
        %1615 = vmatpush1.bf16.msra.mxu0 %v995
        %1616 = vmatprep.subr.bf16.mxu0 %v1004
        %1617 = vmatpush1.bf16.msra.mxu0 %v1003
        %1618 = vmatprep.subr.bf16.mxu0 %v1012
        %1619 = vmatpush1.bf16.msra.mxu0 %v1011
        %1620 = vmatprep.subr.bf16.mxu0 %v1020
        %1621 = vmatpush1.bf16.msra.mxu0 %v1019
        %1622 = vmatprep.subr.bf16.mxu0 %v1028
        %1623 = vmatpush1.bf16.msra.mxu0 %v1027
        %1624 = vmatprep.subr.bf16.mxu0 %v1036
        %1625 = vmatpush1.bf16.msra.mxu0 %v1035
        %1626 = vmatprep.subr.bf16.mxu0 %v1044
        %1627 = vmatpush1.bf16.msra.mxu0 %v1043
        %1628 = vmatprep.subr.bf16.mxu0 %v1052
        %1629 = vmatpush1.bf16.msra.mxu0 %v1051
        %1630 = vmatprep.subr.bf16.mxu0 %v1060
        %1631 = vmatpush1.bf16.msra.mxu0 %v1059
        %1632 = vmatprep.subr.bf16.mxu0 %v1068
        %1633 = vmatpush1.bf16.msra.mxu0 %v1067
        %1634 = vmatprep.subr.bf16.mxu0 %v1076
        %1635 = vmatpush1.bf16.msra.mxu0 %v1075
        %1636 = vmatprep.subr.bf16.mxu0 %v1084
        %1637 = vmatpush1.bf16.msra.mxu0 %v1083
        %1638 = vmatprep.subr.bf16.mxu0 %v1092
        %1639 = vmatpush1.bf16.msra.mxu0 %v1091
        %1640 = vmatprep.subr.bf16.mxu0 %v1100
        %1641 = vmatpush1.bf16.msra.mxu0 %v1099
        %1642 = vmatprep.subr.bf16.mxu0 %v1108
        %1643 = vmatpush1.bf16.msra.mxu0 %v1107
        %1644 = vmatprep.mubr.bf16.mxu0 %v1152
        %1645 = vmatmul.mubr.bf16.gmra.mrb[0].mxu0 %v1150
        %v1646 = vpop.f32.mrb[0].mxu0
        %v1647 = vadd.f32 %v1606, %v1646
        %v1648 = vpop.f32.mrb[0].mxu0
        %v1649 = vadd.f32 %v1608, %v1648
        %v1650 = vpop.f32.mrb[0].mxu0
        %v1651 = vpop.f32.mrb[0].mxu0
        %1652 = vdwg.mxu0
        %1653 = vmatprep.subr.bf16.mxu0 %v606
        %1654 = vmatpush1.bf16.msra.mxu0 %v605
        %1655 = vmatprep.subr.bf16.mxu0 %v614
        %1656 = vmatpush1.bf16.msra.mxu0 %v613
        %1657 = vmatprep.subr.bf16.mxu0 %v622
        %1658 = vmatpush1.bf16.msra.mxu0 %v621
        %1659 = vmatprep.subr.bf16.mxu0 %v630
        %1660 = vmatpush1.bf16.msra.mxu0 %v629
        %1661 = vmatprep.subr.bf16.mxu0 %v638
        %1662 = vmatpush1.bf16.msra.mxu0 %v637
        %1663 = vmatprep.subr.bf16.mxu0 %v646
        %1664 = vmatpush1.bf16.msra.mxu0 %v645
        %1665 = vmatprep.subr.bf16.mxu0 %v654
        %1666 = vmatpush1.bf16.msra.mxu0 %v653
        %1667 = vmatprep.subr.bf16.mxu0 %v662
        %1668 = vmatpush1.bf16.msra.mxu0 %v661
        %1669 = vmatprep.subr.bf16.mxu0 %v670
        %1670 = vmatpush1.bf16.msra.mxu0 %v669
        %1671 = vmatprep.subr.bf16.mxu0 %v678
        %1672 = vmatpush1.bf16.msra.mxu0 %v677
        %1673 = vmatprep.subr.bf16.mxu0 %v686
        %1674 = vmatpush1.bf16.msra.mxu0 %v685
        %1675 = vmatprep.subr.bf16.mxu0 %v694
        %1676 = vmatpush1.bf16.msra.mxu0 %v693
        %1677 = vmatprep.subr.bf16.mxu0 %v702
        %1678 = vmatpush1.bf16.msra.mxu0 %v701
        %1679 = vmatprep.subr.bf16.mxu0 %v710
        %1680 = vmatpush1.bf16.msra.mxu0 %v709
        %1681 = vmatprep.subr.bf16.mxu0 %v718
        %1682 = vmatpush1.bf16.msra.mxu0 %v717
        %1683 = vmatprep.subr.bf16.mxu0 %v726
        %1684 = vmatpush1.bf16.msra.mxu0 %v725
        %1685 = vmatprep.mubr.bf16.mxu0 %v1134
        %1686 = vmatmul.mubr.bf16.gmra.mrb[0].mxu0 %v1126
        %v1687 = vpop.f32.mrb[0].mxu0
        %v1688 = vadd.f32 0.0, %v1687
        %v1689 = vpop.f32.mrb[0].mxu0
        %v1690 = vadd.f32 0.0, %v1689
        %v1691 = vpop.f32.mrb[0].mxu0
        %v1692 = vpop.f32.mrb[0].mxu0
        %1693 = vdwg.mxu0
        %1694 = vmatprep.subr.bf16.mxu0 %v734
        %1695 = vmatpush1.bf16.msra.mxu0 %v733
        %1696 = vmatprep.subr.bf16.mxu0 %v742
        %1697 = vmatpush1.bf16.msra.mxu0 %v741
        %1698 = vmatprep.subr.bf16.mxu0 %v750
        %1699 = vmatpush1.bf16.msra.mxu0 %v749
        %1700 = vmatprep.subr.bf16.mxu0 %v758
        %1701 = vmatpush1.bf16.msra.mxu0 %v757
        %1702 = vmatprep.subr.bf16.mxu0 %v766
        %1703 = vmatpush1.bf16.msra.mxu0 %v765
        %1704 = vmatprep.subr.bf16.mxu0 %v774
        %1705 = vmatpush1.bf16.msra.mxu0 %v773
        %1706 = vmatprep.subr.bf16.mxu0 %v782
        %1707 = vmatpush1.bf16.msra.mxu0 %v781
        %1708 = vmatprep.subr.bf16.mxu0 %v790
        %1709 = vmatpush1.bf16.msra.mxu0 %v789
        %1710 = vmatprep.subr.bf16.mxu0 %v798
        %1711 = vmatpush1.bf16.msra.mxu0 %v797
        %1712 = vmatprep.subr.bf16.mxu0 %v806
        %1713 = vmatpush1.bf16.msra.mxu0 %v805
        %1714 = vmatprep.subr.bf16.mxu0 %v814
        %1715 = vmatpush1.bf16.msra.mxu0 %v813
        %1716 = vmatprep.subr.bf16.mxu0 %v822
        %1717 = vmatpush1.bf16.msra.mxu0 %v821
        %1718 = vmatprep.subr.bf16.mxu0 %v830
        %1719 = vmatpush1.bf16.msra.mxu0 %v829
        %1720 = vmatprep.subr.bf16.mxu0 %v838
        %1721 = vmatpush1.bf16.msra.mxu0 %v837
        %1722 = vmatprep.subr.bf16.mxu0 %v846
        %1723 = vmatpush1.bf16.msra.mxu0 %v845
        %1724 = vmatprep.subr.bf16.mxu0 %v854
        %1725 = vmatpush1.bf16.msra.mxu0 %v853
        %1726 = vmatprep.mubr.bf16.mxu0 %v1135
        %1727 = vmatmul.mubr.bf16.gmra.mrb[0].mxu0 %v1133
        %v1728 = vpop.f32.mrb[0].mxu0
        %v1729 = vadd.f32 %v1688, %v1728
        %v1730 = vpop.f32.mrb[0].mxu0
        %v1731 = vadd.f32 %v1690, %v1730
        %v1732 = vpop.f32.mrb[0].mxu0
        %v1733 = vpop.f32.mrb[0].mxu0
        %1734 = vdwg.mxu0
        %1735 = vmatprep.subr.bf16.mxu0 %v862
        %1736 = vmatpush1.bf16.msra.mxu0 %v861
        %1737 = vmatprep.subr.bf16.mxu0 %v870
        %1738 = vmatpush1.bf16.msra.mxu0 %v869
        %1739 = vmatprep.subr.bf16.mxu0 %v878
        %1740 = vmatpush1.bf16.msra.mxu0 %v877
        %1741 = vmatprep.subr.bf16.mxu0 %v886
        %1742 = vmatpush1.bf16.msra.mxu0 %v885
        %1743 = vmatprep.subr.bf16.mxu0 %v894
        %1744 = vmatpush1.bf16.msra.mxu0 %v893
        %1745 = vmatprep.subr.bf16.mxu0 %v902
        %1746 = vmatpush1.bf16.msra.mxu0 %v901
        %1747 = vmatprep.subr.bf16.mxu0 %v910
        %1748 = vmatpush1.bf16.msra.mxu0 %v909
        %1749 = vmatprep.subr.bf16.mxu0 %v918
        %1750 = vmatpush1.bf16.msra.mxu0 %v917
        %1751 = vmatprep.subr.bf16.mxu0 %v926
        %1752 = vmatpush1.bf16.msra.mxu0 %v925
        %1753 = vmatprep.subr.bf16.mxu0 %v934
        %1754 = vmatpush1.bf16.msra.mxu0 %v933
        %1755 = vmatprep.subr.bf16.mxu0 %v942
        %1756 = vmatpush1.bf16.msra.mxu0 %v941
        %1757 = vmatprep.subr.bf16.mxu0 %v950
        %1758 = vmatpush1.bf16.msra.mxu0 %v949
        %1759 = vmatprep.subr.bf16.mxu0 %v958
        %1760 = vmatpush1.bf16.msra.mxu0 %v957
        %1761 = vmatprep.subr.bf16.mxu0 %v966
        %1762 = vmatpush1.bf16.msra.mxu0 %v965
        %1763 = vmatprep.subr.bf16.mxu0 %v974
        %1764 = vmatpush1.bf16.msra.mxu0 %v973
        %1765 = vmatprep.subr.bf16.mxu0 %v982
        %1766 = vmatpush1.bf16.msra.mxu0 %v981
        %1767 = vmatprep.mubr.bf16.mxu0 %v1151
        %1768 = vmatmul.mubr.bf16.gmra.mrb[0].mxu0 %v1143
        %v1769 = vpop.f32.mrb[0].mxu0
        %v1770 = vadd.f32 %v1729, %v1769
        %v1771 = vpop.f32.mrb[0].mxu0
        %v1772 = vadd.f32 %v1731, %v1771
        %v1773 = vpop.f32.mrb[0].mxu0
        %v1774 = vpop.f32.mrb[0].mxu0
        %1775 = vdwg.mxu0
        %1776 = vmatprep.subr.bf16.mxu0 %v990
        %1777 = vmatpush1.bf16.msra.mxu0 %v989
        %1778 = vmatprep.subr.bf16.mxu0 %v998
        %1779 = vmatpush1.bf16.msra.mxu0 %v997
        %1780 = vmatprep.subr.bf16.mxu0 %v1006
        %1781 = vmatpush1.bf16.msra.mxu0 %v1005
        %1782 = vmatprep.subr.bf16.mxu0 %v1014
        %1783 = vmatpush1.bf16.msra.mxu0 %v1013
        %1784 = vmatprep.subr.bf16.mxu0 %v1022
        %1785 = vmatpush1.bf16.msra.mxu0 %v1021
        %1786 = vmatprep.subr.bf16.mxu0 %v1030
        %1787 = vmatpush1.bf16.msra.mxu0 %v1029
        %1788 = vmatprep.subr.bf16.mxu0 %v1038
        %1789 = vmatpush1.bf16.msra.mxu0 %v1037
        %1790 = vmatprep.subr.bf16.mxu0 %v1046
        %1791 = vmatpush1.bf16.msra.mxu0 %v1045
        %1792 = vmatprep.subr.bf16.mxu0 %v1054
        %1793 = vmatpush1.bf16.msra.mxu0 %v1053
        %1794 = vmatprep.subr.bf16.mxu0 %v1062
        %1795 = vmatpush1.bf16.msra.mxu0 %v1061
        %1796 = vmatprep.subr.bf16.mxu0 %v1070
        %1797 = vmatpush1.bf16.msra.mxu0 %v1069
        %1798 = vmatprep.subr.bf16.mxu0 %v1078
        %1799 = vmatpush1.bf16.msra.mxu0 %v1077
        %1800 = vmatprep.subr.bf16.mxu0 %v1086
        %1801 = vmatpush1.bf16.msra.mxu0 %v1085
        %1802 = vmatprep.subr.bf16.mxu0 %v1094
        %1803 = vmatpush1.bf16.msra.mxu0 %v1093
        %1804 = vmatprep.subr.bf16.mxu0 %v1102
        %1805 = vmatpush1.bf16.msra.mxu0 %v1101
        %1806 = vmatprep.subr.bf16.mxu0 %v1110
        %1807 = vmatpush1.bf16.msra.mxu0 %v1109
        %1808 = vmatprep.mubr.bf16.mxu0 %v1152
        %1809 = vmatmul.mubr.bf16.gmra.mrb[0].mxu0 %v1150
        %v1810 = vpop.f32.mrb[0].mxu0
        %v1811 = vadd.f32 %v1770, %v1810
        %v1812 = vpop.f32.mrb[0].mxu0
        %v1813 = vadd.f32 %v1772, %v1812
        %v1814 = vpop.f32.mrb[0].mxu0
        %v1815 = vpop.f32.mrb[0].mxu0
        %1816 = vdwg.mxu0
        %v1825 = vcombine.low %v1319, %v1321
        %v1826 = vcombine.low %v1483, %v1485
        %v1827 = vcombine.low %v1647, %v1649
        %v1828 = vcombine.low %v1811, %v1813
        %v1833 = vadd.f32 %v1111, %v1825
        %v1834 = vadd.f32 %v1112, %v1826
        %v1835 = vadd.f32 %v1113, %v1827
        %v1836 = vadd.f32 %v1114, %v1828
        %1837 = vst [vmem:[%s333] sm:$0xff] %v1833
        %1838 = vst [vmem:[%s333 + $0x8] sm:$0xff] %v1834
        %1839 = vst [vmem:[%s333 + $0x10] sm:$0xff] %v1835
        %1840 = vst [vmem:[%s333 + $0x18] sm:$0xff] %v1836
        // Predicated region
        $region53: #{prnu_forward.2} parent=35 // pred_check
          %p1841 = pneg %p335
        $region54: #{prnu_forward.2} parent=35 // pred_check_branch
          %1843 = sbr.rel (%p1841) target = $region56
        $region55: #{prnu_forward.2} parent=35 // pred_region
          %v1844 = vld [vmem:[%s333] sm:$0xff]
          %v1845 = vld [vmem:[%s333 + $0x8] sm:$0xff]
          %v1846 = vld [vmem:[%s333 + $0x10] sm:$0xff]
          %v1847 = vld [vmem:[%s333 + $0x18] sm:$0xff]
          %v1848 = vld [vmem:[%s270] sm:$0xff]
          %v1850 = vlaneseq
          %v1851 = vshrl.u32 %v1850, 7
          %v1852 = vsub.s32 0, %v1851
          %v1853 = vrot.slane %v1848, %v1852
          %v1854 = vlaneseq
          %v1855 = vshrl.u32 %v1854, 7
          %v1856 = vsub.s32 1, %v1855
          %v1857 = vrot.slane %v1848, %v1856
          %v1858 = vlaneseq
          %v1859 = vshrl.u32 %v1858, 7
          %v1860 = vsub.s32 2, %v1859
          %v1861 = vrot.slane %v1848, %v1860
          %v1862 = vlaneseq
          %v1863 = vshrl.u32 %v1862, 7
          %v1864 = vsub.s32 3, %v1863
          %v1865 = vrot.slane %v1848, %v1864
          %v1866 = vlaneseq
          %v1867 = vshrl.u32 %v1866, 7
          %v1868 = vsub.s32 4, %v1867
          %v1869 = vrot.slane %v1848, %v1868
          %v1870 = vlaneseq
          %v1871 = vshrl.u32 %v1870, 7
          %v1872 = vsub.s32 5, %v1871
          %v1873 = vrot.slane %v1848, %v1872
          %v1874 = vlaneseq
          %v1875 = vshrl.u32 %v1874, 7
          %v1876 = vsub.s32 6, %v1875
          %v1877 = vrot.slane %v1848, %v1876
          %v1878 = vlaneseq
          %v1879 = vshrl.u32 %v1878, 7
          %v1880 = vsub.s32 7, %v1879
          %v1881 = vrot.slane %v1848, %v1880
          %v1882 = vcombine.low %v1853, %v1857
          %v1883 = vcombine.low %v1861, %v1865
          %v1884 = vcombine.low %v1869, %v1873
          %v1885 = vcombine.low %v1877, %v1881
          %v1890 = vmul.f32 %v1844, %v1882
          %v1891 = vmul.f32 %v1845, %v1883
          %v1892 = vmul.f32 %v1846, %v1884
          %v1893 = vmul.f32 %v1847, %v1885
          %v1894 = vld [vmem:[%s279] sm:$0xff]
          %v1896 = vlaneseq
          %v1897 = vshrl.u32 %v1896, 7
          %v1898 = vsub.s32 0, %v1897
          %v1899 = vrot.slane %v1894, %v1898
          %v1900 = vlaneseq
          %v1901 = vshrl.u32 %v1900, 7
          %v1902 = vsub.s32 1, %v1901
          %v1903 = vrot.slane %v1894, %v1902
          %v1904 = vlaneseq
          %v1905 = vshrl.u32 %v1904, 7
          %v1906 = vsub.s32 2, %v1905
          %v1907 = vrot.slane %v1894, %v1906
          %v1908 = vlaneseq
          %v1909 = vshrl.u32 %v1908, 7
          %v1910 = vsub.s32 3, %v1909
          %v1911 = vrot.slane %v1894, %v1910
          %v1912 = vlaneseq
          %v1913 = vshrl.u32 %v1912, 7
          %v1914 = vsub.s32 4, %v1913
          %v1915 = vrot.slane %v1894, %v1914
          %v1916 = vlaneseq
          %v1917 = vshrl.u32 %v1916, 7
          %v1918 = vsub.s32 5, %v1917
          %v1919 = vrot.slane %v1894, %v1918
          %v1920 = vlaneseq
          %v1921 = vshrl.u32 %v1920, 7
          %v1922 = vsub.s32 6, %v1921
          %v1923 = vrot.slane %v1894, %v1922
          %v1924 = vlaneseq
          %v1925 = vshrl.u32 %v1924, 7
          %v1926 = vsub.s32 7, %v1925
          %v1927 = vrot.slane %v1894, %v1926
          %v1928 = vcombine.low %v1899, %v1903
          %v1929 = vcombine.low %v1907, %v1911
          %v1930 = vcombine.low %v1915, %v1919
          %v1931 = vcombine.low %v1923, %v1927
          %v1936 = vadd.f32 %v1890, %v1928
          %v1937 = vadd.f32 %v1891, %v1929
          %v1938 = vadd.f32 %v1892, %v1930
          %v1939 = vadd.f32 %v1893, %v1931
          %v1940 = vmax.f32 %v1936, 0.0
          %v1941 = vmax.f32 %v1937, 0.0
          %v1942 = vmax.f32 %v1938, 0.0
          %v1943 = vmax.f32 %v1939, 0.0
          %1944 = vst [vmem:[%s333] sm:$0xff] %v1940
          %1945 = vst [vmem:[%s333 + $0x8] sm:$0xff] %v1941
          %1946 = vst [vmem:[%s333 + $0x10] sm:$0xff] %v1942
          %1947 = vst [vmem:[%s333 + $0x18] sm:$0xff] %v1943
        $region56: #{prnu_forward.2} parent=35 // pred_fallthru
          _
        %s1948 = smul.u32 8, %s25
        %p1949 = scmp.lt.s32.totalorder %s1948, 15
        %s1950 = scalar_select %p1949, %s1948, 15
        %s1951 = smul.addr %s1950, 4
        %s1952 = scalar_lea.vmem %s4, %s1951
        // Predicated region
        $region57: #{prnu_forward.2} parent=35 // pred_check
          %p1953 = pneg %p157
        $region58: #{prnu_forward.2} parent=35 // pred_check_branch
          %1955 = sbr.rel (%p1953) target = $region60
        $region59: #{prnu_forward.2} parent=35 // pred_region
          %s1956 = smul.u32 8, %s25
        $region60: #{prnu_forward.2} parent=35 // pred_fallthru
          _
      $region36: #{prnu_forward.2} parent=5 // pred_fallthru
        _
      %p1957 = scmp.le.s32.totalorder 2, %s16
      // Predicated region
      $region61: #{prnu_forward.2} parent=5 // pred_check
        %p1958 = pneg %p1957
      $region62: #{prnu_forward.2} parent=5 // pred_check_branch
        %1960 = sbr.rel (%p1958) target = $region64
      $region63: #{prnu_forward.2} parent=5 // pred_region
        %s1961 = ssub.s32 %s16, 2
        // Predicated region
        $region65: #{prnu_forward.2} parent=63 // pred_check
          %p1962 = pneg %p163
        $region66: #{prnu_forward.2} parent=63 // pred_check_branch
          %1964 = sbr.rel (%p1962) target = $region68
        $region67: #{prnu_forward.2} parent=63 // pred_region
          %s1965 = smul.u32 8, %s27
          %p1966 = scmp.lt.s32.totalorder %s1965, 15
          %s1967 = scalar_select %p1966, %s1965, 15
          %s1968 = smul.addr %s1967, 4
          %s1969 = scalar_lea.vmem %s4, %s1968
        $region68: #{prnu_forward.2} parent=63 // pred_fallthru
          _
      $region64: #{prnu_forward.2} parent=5 // pred_fallthru
        _
    $region6: #{prnu_forward.2} parent=1 // loop_footer
      %s20 = sadd.s32 1, %s16
    $region7: #{prnu_forward.2} parent=1 // loop_footer_branch
      %15 = sbr.rel target = $region3
    $region8: #{prnu_forward.2} parent=1 // loop_exit
      _
    %1970 = vsyncpa [#allocation3], 1
    %s1971 = scalar_lea.sflag [#allocation3], 1
    %1972 = vsyncpa %s1971, 1
    %1973 = vsyncpa [#allocation5], 1
    %s1974 = scalar_lea.sflag [#allocation5], 1
    %1975 = vsyncpa %s1974, 1

// kernel: prnu_forward.3
$region0: #{prnu_forward.3}
  #allocation0 [shape = 'u32[]', space=smem, size = 0x4, offset = 0x4, fixed_abs, tag = 'smem constant byte address 0x4 - core index']
  #allocation1 [shape = 'u32[144,128]{1,0:T(1,128)}', space=vmem, size = 0x12000, scoped, tag = 'internal scratch']
  #allocation2 [shape = 'f32[1,1]{1,0:T(1,128)S(1)}', space=vmem, size = 0x200, scoped, tag = 'scoped memory for prnu_forward.3']
  %s0 = inlined_call_operand.vmem [shape: f32[4,2048], index: 0, kind: input, shape index: {}]
  %s1 = inlined_call_operand.hbm [shape: bf16[2048,1024], index: 1, kind: input, shape index: {}]
  %s2 = inlined_call_operand.hbm [shape: f32[1,1024], index: 2, kind: input, shape index: {}]
  %s3 = inlined_call_operand.hbm [shape: bf16[1024,512], index: 3, kind: input, shape index: {}]
  %s4 = inlined_call_operand.hbm [shape: f32[1,512], index: 4, kind: input, shape index: {}]
  %s5 = inlined_call_operand.hbm [shape: bf16[512,256], index: 5, kind: input, shape index: {}]
  %s6 = inlined_call_operand.hbm [shape: f32[1,256], index: 6, kind: input, shape index: {}]
  %s7 = inlined_call_operand.hbm [shape: bf16[256,128], index: 7, kind: input, shape index: {}]
  %s8 = inlined_call_operand.hbm [shape: bf16[256,128], index: 8, kind: input, shape index: {}]
  %s9 = inlined_call_operand.hbm [shape: f32[1,128], index: 9, kind: input, shape index: {}]
  %s10 = inlined_call_operand.hbm [shape: f32[1,128], index: 10, kind: input, shape index: {}]
  %s11 = inlined_call_operand.<no memory space> [shape: f32[1,1], index: 11, kind: input, shape index: {}]
  %s12 = inlined_call_operand.vmem [shape: f32[4,256], index: 12, kind: output, shape index: {0}]
  %s13 = inlined_call_operand.vmem [shape: f32[2,1], index: 13, kind: output, shape index: {1}]
  %14 = xla_tuple %s12, %s13
  %s15 = sld [smem:[#allocation0]]
  $region106: #{prnu_forward.3} parent=0
    _
  %s17 = ssub.s32 1, %s15
  %s18 = scalar_select 0, %s17, %s15
  %v19 = vstv %s11
  %20 = vst [vmem:[#allocation2] sm:$0x1] %v19
  $region1: #{prnu_forward.3} parent=0
    #allocation3 [shape = 'u8[4194304]{0}', space=vmem, size = 0x400000, scoped, tag = 'input window, operand 1, single buffered']
    #allocation4 [shape = 's32[1]{0}', space=sflag, size = 0x4, scoped, tag = 'scoped memory for prnu_forward.3']
    #allocation5 [shape = 'u8[4096]{0}', space=vmem, size = 0x1000, scoped, tag = 'input window, operand 2, single buffered']
    #allocation6 [shape = 's32[1]{0}', space=sflag, size = 0x4, scoped, tag = 'scoped memory for prnu_forward.3']
    #allocation7 [shape = 'u8[1048576]{0}', space=vmem, size = 0x100000, scoped, tag = 'input window, operand 3, single buffered']
    #allocation8 [shape = 'u8[2048]{0}', space=vmem, size = 0x800, scoped, tag = 'input window, operand 4, single buffered']
    #allocation9 [shape = 's32[1]{0}', space=sflag, size = 0x4, scoped, tag = 'scoped memory for prnu_forward.3']
    #allocation10 [shape = 'u8[262144]{0}', space=vmem, size = 0x40000, scoped, tag = 'input window, operand 5, single buffered']
    #allocation11 [shape = 'u8[1024]{0}', space=vmem, size = 0x400, scoped, tag = 'input window, operand 6, single buffered']
    #allocation12 [shape = 's32[1]{0}', space=sflag, size = 0x4, scoped, tag = 'scoped memory for prnu_forward.3']
    #allocation13 [shape = 'u8[65536]{0}', space=vmem, size = 0x10000, scoped, tag = 'input window, operand 7, single buffered']
    #allocation14 [shape = 'u8[65536]{0}', space=vmem, size = 0x10000, scoped, tag = 'input window, operand 8, single buffered']
    #allocation15 [shape = 's32[1]{0}', space=sflag, size = 0x4, scoped, tag = 'scoped memory for prnu_forward.3']
    #allocation16 [shape = 'u8[512]{0}', space=vmem, size = 0x400, scoped, tag = 'input window, operand 9, single buffered']
    #allocation17 [shape = 'u8[512]{0}', space=vmem, size = 0x400, scoped, tag = 'input window, operand 10, single buffered']
    #allocation18 [shape = 's32[1]{0}', space=sflag, size = 0x4, scoped, tag = 'scoped memory for prnu_forward.3']
    %21 = vsyncpa [#allocation4], 0
    %22 = vsyncpa [#allocation6], 0
    %23 = vsyncpa [#allocation9], 0
    %24 = vsyncpa [#allocation12], 0
    %25 = vsyncpa [#allocation15], 0
    %26 = vsyncpa [#allocation18], 0
    // Predicated region
    $region2: #{prnu_forward.3} parent=1 // pred_check
      _
    $region3: #{prnu_forward.3} parent=1 // pred_check_branch
      %28 = sbr.rel (0) target = $region5
    $region4: #{prnu_forward.3} parent=1 // pred_region
      _
    $region5: #{prnu_forward.3} parent=1 // pred_fallthru
      _
    // Predicated region
    $region6: #{prnu_forward.3} parent=1 // pred_check
      _
    $region7: #{prnu_forward.3} parent=1 // pred_check_branch
      %30 = sbr.rel (0) target = $region9
    $region8: #{prnu_forward.3} parent=1 // pred_region
      %s32 = ssub.s32 131072, 131072
      %33 = vsyncadd [#allocation4], %s32
      %s34 = sshll.u32 [#allocation3], 4
      %s35 = int_to_ptr.vmem [resolvable:$true] %s34
      %40 = dma.hbm_to_vmem [thread:$0]  %s1, 131072, %s35, [#allocation4], 512, 512, 32
    $region9: #{prnu_forward.3} parent=1 // pred_fallthru
      _
    // Predicated region
    $region10: #{prnu_forward.3} parent=1 // pred_check
      _
    $region11: #{prnu_forward.3} parent=1 // pred_check_branch
      %42 = sbr.rel (0) target = $region13
    $region12: #{prnu_forward.3} parent=1 // pred_region
      %s44 = ssub.s32 128, 128
      %45 = vsyncadd [#allocation6], %s44
      %s47 = sshll.u32 [#allocation5], 4
      %s48 = int_to_ptr.vmem [resolvable:$true] %s47
      %50 = dma.hbm_to_vmem [thread:$0]  %s2, 128, %s48, [#allocation6]
    $region13: #{prnu_forward.3} parent=1 // pred_fallthru
      _
    // Predicated region
    $region14: #{prnu_forward.3} parent=1 // pred_check
      _
    $region15: #{prnu_forward.3} parent=1 // pred_check_branch
      %52 = sbr.rel (0) target = $region17
    $region16: #{prnu_forward.3} parent=1 // pred_region
      %s54 = ssub.s32 32768, 32768
      %55 = vsyncadd [#allocation6], %s54
      %s56 = sshll.u32 [#allocation7], 4
      %s57 = int_to_ptr.vmem [resolvable:$true] %s56
      %62 = dma.hbm_to_vmem [thread:$0]  %s3, 32768, %s57, [#allocation6], 256, 256, 16
    $region17: #{prnu_forward.3} parent=1 // pred_fallthru
      _
    // Predicated region
    $region18: #{prnu_forward.3} parent=1 // pred_check
      _
    $region19: #{prnu_forward.3} parent=1 // pred_check_branch
      %64 = sbr.rel (0) target = $region21
    $region20: #{prnu_forward.3} parent=1 // pred_region
      %s66 = ssub.s32 64, 64
      %67 = vsyncadd [#allocation9], %s66
      %s69 = sshll.u32 [#allocation8], 4
      %s70 = int_to_ptr.vmem [resolvable:$true] %s69
      %72 = dma.hbm_to_vmem [thread:$0]  %s4, 64, %s70, [#allocation9]
    $region21: #{prnu_forward.3} parent=1 // pred_fallthru
      _
    // Predicated region
    $region22: #{prnu_forward.3} parent=1 // pred_check
      _
    $region23: #{prnu_forward.3} parent=1 // pred_check_branch
      %74 = sbr.rel (0) target = $region25
    $region24: #{prnu_forward.3} parent=1 // pred_region
      %s76 = ssub.s32 8192, 8192
      %77 = vsyncadd [#allocation9], %s76
      %s78 = sshll.u32 [#allocation10], 4
      %s79 = int_to_ptr.vmem [resolvable:$true] %s78
      %84 = dma.hbm_to_vmem [thread:$0]  %s5, 8192, %s79, [#allocation9], 128, 128, 8
    $region25: #{prnu_forward.3} parent=1 // pred_fallthru
      _
    // Predicated region
    $region26: #{prnu_forward.3} parent=1 // pred_check
      _
    $region27: #{prnu_forward.3} parent=1 // pred_check_branch
      %86 = sbr.rel (0) target = $region29
    $region28: #{prnu_forward.3} parent=1 // pred_region
      %s88 = ssub.s32 32, 32
      %89 = vsyncadd [#allocation12], %s88
      %s91 = sshll.u32 [#allocation11], 4
      %s92 = int_to_ptr.vmem [resolvable:$true] %s91
      %94 = dma.hbm_to_vmem [thread:$0]  %s6, 32, %s92, [#allocation12]
    $region29: #{prnu_forward.3} parent=1 // pred_fallthru
      _
    // Predicated region
    $region30: #{prnu_forward.3} parent=1 // pred_check
      _
    $region31: #{prnu_forward.3} parent=1 // pred_check_branch
      %96 = sbr.rel (0) target = $region33
    $region32: #{prnu_forward.3} parent=1 // pred_region
      %s98 = ssub.s32 2048, 2048
      %99 = vsyncadd [#allocation12], %s98
      %s100 = sshll.u32 [#allocation13], 4
      %s101 = int_to_ptr.vmem [resolvable:$true] %s100
      %106 = dma.hbm_to_vmem [thread:$0]  %s7, 2048, %s101, [#allocation12], 64, 64, 4
    $region33: #{prnu_forward.3} parent=1 // pred_fallthru
      _
    // Predicated region
    $region34: #{prnu_forward.3} parent=1 // pred_check
      _
    $region35: #{prnu_forward.3} parent=1 // pred_check_branch
      %108 = sbr.rel (0) target = $region37
    $region36: #{prnu_forward.3} parent=1 // pred_region
      %s110 = ssub.s32 2048, 2048
      %111 = vsyncadd [#allocation15], %s110
      %s112 = sshll.u32 [#allocation14], 4
      %s113 = int_to_ptr.vmem [resolvable:$true] %s112
      %118 = dma.hbm_to_vmem [thread:$0]  %s8, 2048, %s113, [#allocation15], 64, 64, 4
    $region37: #{prnu_forward.3} parent=1 // pred_fallthru
      _
    // Predicated region
    $region38: #{prnu_forward.3} parent=1 // pred_check
      _
    $region39: #{prnu_forward.3} parent=1 // pred_check_branch
      %120 = sbr.rel (0) target = $region41
    $region40: #{prnu_forward.3} parent=1 // pred_region
      %s122 = ssub.s32 16, 16
      %123 = vsyncadd [#allocation15], %s122
      %s125 = sshll.u32 [#allocation16], 4
      %s126 = int_to_ptr.vmem [resolvable:$true] %s125
      %128 = dma.hbm_to_vmem [thread:$0]  %s9, 16, %s126, [#allocation15]
    $region41: #{prnu_forward.3} parent=1 // pred_fallthru
      _
    // Predicated region
    $region42: #{prnu_forward.3} parent=1 // pred_check
      _
    $region43: #{prnu_forward.3} parent=1 // pred_check_branch
      %130 = sbr.rel (0) target = $region45
    $region44: #{prnu_forward.3} parent=1 // pred_region
      %s132 = ssub.s32 16, 16
      %133 = vsyncadd [#allocation18], %s132
      %s135 = sshll.u32 [#allocation17], 4
      %s136 = int_to_ptr.vmem [resolvable:$true] %s135
      %138 = dma.hbm_to_vmem [thread:$0]  %s10, 16, %s136, [#allocation18]
    $region45: #{prnu_forward.3} parent=1 // pred_fallthru
      _
    // Predicated region
    $region46: #{prnu_forward.3} parent=1 // pred_check
      _
    $region47: #{prnu_forward.3} parent=1 // pred_check_branch
      %140 = sbr.rel (0) target = $region49
    $region48: #{prnu_forward.3} parent=1 // pred_region
      _
    $region49: #{prnu_forward.3} parent=1 // pred_fallthru
      _
    // Predicated region
    $region50: #{prnu_forward.3} parent=1 // pred_check
      _
    $region51: #{prnu_forward.3} parent=1 // pred_check_branch
      %142 = sbr.rel (0) target = $region53
    $region52: #{prnu_forward.3} parent=1 // pred_region
      %143 = dma.done [#allocation4], 131072
    $region53: #{prnu_forward.3} parent=1 // pred_fallthru
      _
    // Predicated region
    $region54: #{prnu_forward.3} parent=1 // pred_check
      _
    $region55: #{prnu_forward.3} parent=1 // pred_check_branch
      %145 = sbr.rel (0) target = $region57
    $region56: #{prnu_forward.3} parent=1 // pred_region
      %146 = dma.done [#allocation6], 128
    $region57: #{prnu_forward.3} parent=1 // pred_fallthru
      _
    // Predicated region
    $region58: #{prnu_forward.3} parent=1 // pred_check
      _
    $region59: #{prnu_forward.3} parent=1 // pred_check_branch
      %148 = sbr.rel (0) target = $region61
    $region60: #{prnu_forward.3} parent=1 // pred_region
      %149 = dma.done [#allocation6], 32768
    $region61: #{prnu_forward.3} parent=1 // pred_fallthru
      _
    // Predicated region
    $region62: #{prnu_forward.3} parent=1 // pred_check
      _
    $region63: #{prnu_forward.3} parent=1 // pred_check_branch
      %151 = sbr.rel (0) target = $region65
    $region64: #{prnu_forward.3} parent=1 // pred_region
      %152 = dma.done [#allocation9], 64
    $region65: #{prnu_forward.3} parent=1 // pred_fallthru
      _
    // Predicated region
    $region66: #{prnu_forward.3} parent=1 // pred_check
      _
    $region67: #{prnu_forward.3} parent=1 // pred_check_branch
      %154 = sbr.rel (0) target = $region69
    $region68: #{prnu_forward.3} parent=1 // pred_region
      %155 = dma.done [#allocation9], 8192
    $region69: #{prnu_forward.3} parent=1 // pred_fallthru
      _
    // Predicated region
    $region70: #{prnu_forward.3} parent=1 // pred_check
      _
    $region71: #{prnu_forward.3} parent=1 // pred_check_branch
      %157 = sbr.rel (0) target = $region73
    $region72: #{prnu_forward.3} parent=1 // pred_region
      %158 = dma.done [#allocation12], 32
    $region73: #{prnu_forward.3} parent=1 // pred_fallthru
      _
    // Predicated region
    $region74: #{prnu_forward.3} parent=1 // pred_check
      _
    $region75: #{prnu_forward.3} parent=1 // pred_check_branch
      %160 = sbr.rel (0) target = $region77
    $region76: #{prnu_forward.3} parent=1 // pred_region
      %161 = dma.done [#allocation12], 2048
    $region77: #{prnu_forward.3} parent=1 // pred_fallthru
      _
    // Predicated region
    $region78: #{prnu_forward.3} parent=1 // pred_check
      _
    $region79: #{prnu_forward.3} parent=1 // pred_check_branch
      %163 = sbr.rel (0) target = $region81
    $region80: #{prnu_forward.3} parent=1 // pred_region
      %164 = dma.done [#allocation15], 2048
    $region81: #{prnu_forward.3} parent=1 // pred_fallthru
      _
    // Predicated region
    $region82: #{prnu_forward.3} parent=1 // pred_check
      _
    $region83: #{prnu_forward.3} parent=1 // pred_check_branch
      %166 = sbr.rel (0) target = $region85
    $region84: #{prnu_forward.3} parent=1 // pred_region
      %167 = dma.done [#allocation15], 16
    $region85: #{prnu_forward.3} parent=1 // pred_fallthru
      _
    // Predicated region
    $region86: #{prnu_forward.3} parent=1 // pred_check
      _
    $region87: #{prnu_forward.3} parent=1 // pred_check_branch
      %169 = sbr.rel (0) target = $region89
    $region88: #{prnu_forward.3} parent=1 // pred_region
      %170 = dma.done [#allocation18], 16
    $region89: #{prnu_forward.3} parent=1 // pred_fallthru
      _
    %v172 = vld [vmem:[%s0] sm:$0xff]
    %v173 = vld [vmem:[%s0 + $0x8] sm:$0xff]
    %v174 = vld [vmem:[%s0 + $0x10] sm:$0xff]
    %v175 = vld [vmem:[%s0 + $0x18] sm:$0xff]
    %v176 = vld [vmem:[%s0 + $0x20] sm:$0xff]
    %v177 = vld [vmem:[%s0 + $0x28] sm:$0xff]
    %v178 = vld [vmem:[%s0 + $0x30] sm:$0xff]
    %v179 = vld [vmem:[%s0 + $0x38] sm:$0xff]
    %v188 = vcombine.high %v172, %v172
    %v189 = vcombine.high %v173, %v173
    %v190 = vcombine.high %v174, %v174
    %v191 = vcombine.high %v175, %v175
    %v192 = vcombine.high %v176, %v176
    %v193 = vcombine.high %v177, %v177
    %v194 = vcombine.high %v178, %v178
    %v195 = vcombine.high %v179, %v179
    %v204 = vpack.c.bf16 %v172, %v172
    %v205 = vpack.c.bf16 %v188, %v188
    %v206 = vpack.c.bf16 %v173, %v173
    %v207 = vpack.c.bf16 %v189, %v189
    %v208 = vpack.c.bf16 %v174, %v174
    %v209 = vpack.c.bf16 %v190, %v190
    %v210 = vpack.c.bf16 %v175, %v175
    %v211 = vpack.c.bf16 %v191, %v191
    %v212 = vpack.c.bf16 %v176, %v176
    %v213 = vpack.c.bf16 %v192, %v192
    %v214 = vpack.c.bf16 %v177, %v177
    %v215 = vpack.c.bf16 %v193, %v193
    %v216 = vpack.c.bf16 %v178, %v178
    %v217 = vpack.c.bf16 %v194, %v194
    %v218 = vpack.c.bf16 %v179, %v179
    %v219 = vpack.c.bf16 %v195, %v195
    %v220 = vld [vmem:[#allocation3] sm:$0xff]
    %v221 = vld [vmem:[#allocation3 + $0x8] sm:$0xff]
    %v222 = vld [vmem:[#allocation3 + $0x10] sm:$0xff]
    %v223 = vld [vmem:[#allocation3 + $0x18] sm:$0xff]
    %v224 = vld [vmem:[#allocation3 + $0x20] sm:$0xff]
    %v225 = vld [vmem:[#allocation3 + $0x28] sm:$0xff]
    %v226 = vld [vmem:[#allocation3 + $0x30] sm:$0xff]
    %v227 = vld [vmem:[#allocation3 + $0x38] sm:$0xff]
    %v228 = vld [vmem:[#allocation3 + $0x40] sm:$0xff]
    %v229 = vld [vmem:[#allocation3 + $0x48] sm:$0xff]
    %v230 = vld [vmem:[#allocation3 + $0x50] sm:$0xff]
    %v231 = vld [vmem:[#allocation3 + $0x58] sm:$0xff]
    %v232 = vld [vmem:[#allocation3 + $0x60] sm:$0xff]
    %v233 = vld [vmem:[#allocation3 + $0x68] sm:$0xff]
    %v234 = vld [vmem:[#allocation3 + $0x70] sm:$0xff]
    %v235 = vld [vmem:[#allocation3 + $0x78] sm:$0xff]
    %v236 = vld [vmem:[#allocation3 + $0x80] sm:$0xff]
    %v237 = vld [vmem:[#allocation3 + $0x88] sm:$0xff]
    %v238 = vld [vmem:[#allocation3 + $0x90] sm:$0xff]
    %v239 = vld [vmem:[#allocation3 + $0x98] sm:$0xff]
    %v240 = vld [vmem:[#allocation3 + $0xa0] sm:$0xff]
    %v241 = vld [vmem:[#allocation3 + $0xa8] sm:$0xff]
    %v242 = vld [vmem:[#allocation3 + $0xb0] sm:$0xff]
    %v243 = vld [vmem:[#allocation3 + $0xb8] sm:$0xff]
    %v244 = vld [vmem:[#allocation3 + $0xc0] sm:$0xff]
    %v245 = vld [vmem:[#allocation3 + $0xc8] sm:$0xff]
    %v246 = vld [vmem:[#allocation3 + $0xd0] sm:$0xff]
    %v247 = vld [vmem:[#allocation3 + $0xd8] sm:$0xff]
    %v248 = vld [vmem:[#allocation3 + $0xe0] sm:$0xff]
    %v249 = vld [vmem:[#allocation3 + $0xe8] sm:$0xff]
    %v250 = vld [vmem:[#allocation3 + $0xf0] sm:$0xff]
    %v251 = vld [vmem:[#allocation3 + $0xf8] sm:$0xff]
    %v252 = vld [vmem:[#allocation3 + $0x100] sm:$0xff]
    %v253 = vld [vmem:[#allocation3 + $0x108] sm:$0xff]
    %v254 = vld [vmem:[#allocation3 + $0x110] sm:$0xff]
    %v255 = vld [vmem:[#allocation3 + $0x118] sm:$0xff]
    %v256 = vld [vmem:[#allocation3 + $0x120] sm:$0xff]
    %v257 = vld [vmem:[#allocation3 + $0x128] sm:$0xff]
    %v258 = vld [vmem:[#allocation3 + $0x130] sm:$0xff]
    %v259 = vld [vmem:[#allocation3 + $0x138] sm:$0xff]
    %v260 = vld [vmem:[#allocation3 + $0x140] sm:$0xff]
    %v261 = vld [vmem:[#allocation3 + $0x148] sm:$0xff]
    %v262 = vld [vmem:[#allocation3 + $0x150] sm:$0xff]
    %v263 = vld [vmem:[#allocation3 + $0x158] sm:$0xff]
    %v264 = vld [vmem:[#allocation3 + $0x160] sm:$0xff]
    %v265 = vld [vmem:[#allocation3 + $0x168] sm:$0xff]
    %v266 = vld [vmem:[#allocation3 + $0x170] sm:$0xff]
    %v267 = vld [vmem:[#allocation3 + $0x178] sm:$0xff]
    %v268 = vld [vmem:[#allocation3 + $0x180] sm:$0xff]
    %v269 = vld [vmem:[#allocation3 + $0x188] sm:$0xff]
    %v270 = vld [vmem:[#allocation3 + $0x190] sm:$0xff]
    %v271 = vld [vmem:[#allocation3 + $0x198] sm:$0xff]
    %v272 = vld [vmem:[#allocation3 + $0x1a0] sm:$0xff]
    %v273 = vld [vmem:[#allocation3 + $0x1a8] sm:$0xff]
    %v274 = vld [vmem:[#allocation3 + $0x1b0] sm:$0xff]
    %v275 = vld [vmem:[#allocation3 + $0x1b8] sm:$0xff]
    %v276 = vld [vmem:[#allocation3 + $0x1c0] sm:$0xff]
    %v277 = vld [vmem:[#allocation3 + $0x1c8] sm:$0xff]
    %v278 = vld [vmem:[#allocation3 + $0x1d0] sm:$0xff]
    %v279 = vld [vmem:[#allocation3 + $0x1d8] sm:$0xff]
    %v280 = vld [vmem:[#allocation3 + $0x1e0] sm:$0xff]
    %v281 = vld [vmem:[#allocation3 + $0x1e8] sm:$0xff]
    %v282 = vld [vmem:[#allocation3 + $0x1f0] sm:$0xff]
    %v283 = vld [vmem:[#allocation3 + $0x1f8] sm:$0xff]
    %v284 = vld [vmem:[#allocation3 + $0x200] sm:$0xff]
    %v285 = vld [vmem:[#allocation3 + $0x208] sm:$0xff]
    %v286 = vld [vmem:[#allocation3 + $0x210] sm:$0xff]
    %v287 = vld [vmem:[#allocation3 + $0x218] sm:$0xff]
    %v288 = vld [vmem:[#allocation3 + $0x220] sm:$0xff]
    %v289 = vld [vmem:[#allocation3 + $0x228] sm:$0xff]
    %v290 = vld [vmem:[#allocation3 + $0x230] sm:$0xff]
    %v291 = vld [vmem:[#allocation3 + $0x238] sm:$0xff]
    %v292 = vld [vmem:[#allocation3 + $0x240] sm:$0xff]
    %v293 = vld [vmem:[#allocation3 + $0x248] sm:$0xff]
    %v294 = vld [vmem:[#allocation3 + $0x250] sm:$0xff]
    %v295 = vld [vmem:[#allocation3 + $0x258] sm:$0xff]
    %v296 = vld [vmem:[#allocation3 + $0x260] sm:$0xff]
    %v297 = vld [vmem:[#allocation3 + $0x268] sm:$0xff]
    %v298 = vld [vmem:[#allocation3 + $0x270] sm:$0xff]
    %v299 = vld [vmem:[#allocation3 + $0x278] sm:$0xff]
    %v300 = vld [vmem:[#allocation3 + $0x280] sm:$0xff]
    %v301 = vld [vmem:[#allocation3 + $0x288] sm:$0xff]
    %v302 = vld [vmem:[#allocation3 + $0x290] sm:$0xff]
    %v303 = vld [vmem:[#allocation3 + $0x298] sm:$0xff]
    %v304 = vld [vmem:[#allocation3 + $0x2a0] sm:$0xff]
    %v305 = vld [vmem:[#allocation3 + $0x2a8] sm:$0xff]
    %v306 = vld [vmem:[#allocation3 + $0x2b0] sm:$0xff]
    %v307 = vld [vmem:[#allocation3 + $0x2b8] sm:$0xff]
    %v308 = vld [vmem:[#allocation3 + $0x2c0] sm:$0xff]
    %v309 = vld [vmem:[#allocation3 + $0x2c8] sm:$0xff]
    %v310 = vld [vmem:[#allocation3 + $0x2d0] sm:$0xff]
    %v311 = vld [vmem:[#allocation3 + $0x2d8] sm:$0xff]
    %v312 = vld [vmem:[#allocation3 + $0x2e0] sm:$0xff]
    %v313 = vld [vmem:[#allocation3 + $0x2e8] sm:$0xff]
    %v314 = vld [vmem:[#allocation3 + $0x2f0] sm:$0xff]
    %v315 = vld [vmem:[#allocation3 + $0x2f8] sm:$0xff]
    %v316 = vld [vmem:[#allocation3 + $0x300] sm:$0xff]
    %v317 = vld [vmem:[#allocation3 + $0x308] sm:$0xff]
    %v318 = vld [vmem:[#allocation3 + $0x310] sm:$0xff]
    %v319 = vld [vmem:[#allocation3 + $0x318] sm:$0xff]
    %v320 = vld [vmem:[#allocation3 + $0x320] sm:$0xff]
    %v321 = vld [vmem:[#allocation3 + $0x328] sm:$0xff]
    %v322 = vld [vmem:[#allocation3 + $0x330] sm:$0xff]
    %v323 = vld [vmem:[#allocation3 + $0x338] sm:$0xff]
    %v324 = vld [vmem:[#allocation3 + $0x340] sm:$0xff]
    %v325 = vld [vmem:[#allocation3 + $0x348] sm:$0xff]
    %v326 = vld [vmem:[#allocation3 + $0x350] sm:$0xff]
    %v327 = vld [vmem:[#allocation3 + $0x358] sm:$0xff]
    %v328 = vld [vmem:[#allocation3 + $0x360] sm:$0xff]
    %v329 = vld [vmem:[#allocation3 + $0x368] sm:$0xff]
    %v330 = vld [vmem:[#allocation3 + $0x370] sm:$0xff]
    %v331 = vld [vmem:[#allocation3 + $0x378] sm:$0xff]
    %v332 = vld [vmem:[#allocation3 + $0x380] sm:$0xff]
    %v333 = vld [vmem:[#allocation3 + $0x388] sm:$0xff]
    %v334 = vld [vmem:[#allocation3 + $0x390] sm:$0xff]
    %v335 = vld [vmem:[#allocation3 + $0x398] sm:$0xff]
    %v336 = vld [vmem:[#allocation3 + $0x3a0] sm:$0xff]
    %v337 = vld [vmem:[#allocation3 + $0x3a8] sm:$0xff]
    %v338 = vld [vmem:[#allocation3 + $0x3b0] sm:$0xff]
    %v339 = vld [vmem:[#allocation3 + $0x3b8] sm:$0xff]
    %v340 = vld [vmem:[#allocation3 + $0x3c0] sm:$0xff]
    %v341 = vld [vmem:[#allocation3 + $0x3c8] sm:$0xff]
    %v342 = vld [vmem:[#allocation3 + $0x3d0] sm:$0xff]
    %v343 = vld [vmem:[#allocation3 + $0x3d8] sm:$0xff]
    %v344 = vld [vmem:[#allocation3 + $0x3e0] sm:$0xff]
    %v345 = vld [vmem:[#allocation3 + $0x3e8] sm:$0xff]
    %v346 = vld [vmem:[#allocation3 + $0x3f0] sm:$0xff]
    %v347 = vld [vmem:[#allocation3 + $0x3f8] sm:$0xff]
    %v348 = vld [vmem:[#allocation3 + $0x400] sm:$0xff]
    %v349 = vld [vmem:[#allocation3 + $0x408] sm:$0xff]
    %v350 = vld [vmem:[#allocation3 + $0x410] sm:$0xff]
    %v351 = vld [vmem:[#allocation3 + $0x418] sm:$0xff]
    %v352 = vld [vmem:[#allocation3 + $0x420] sm:$0xff]
    %v353 = vld [vmem:[#allocation3 + $0x428] sm:$0xff]
    %v354 = vld [vmem:[#allocation3 + $0x430] sm:$0xff]
    %v355 = vld [vmem:[#allocation3 + $0x438] sm:$0xff]
    %v356 = vld [vmem:[#allocation3 + $0x440] sm:$0xff]
    %v357 = vld [vmem:[#allocation3 + $0x448] sm:$0xff]
    %v358 = vld [vmem:[#allocation3 + $0x450] sm:$0xff]
    %v359 = vld [vmem:[#allocation3 + $0x458] sm:$0xff]
    %v360 = vld [vmem:[#allocation3 + $0x460] sm:$0xff]
    %v361 = vld [vmem:[#allocation3 + $0x468] sm:$0xff]
    %v362 = vld [vmem:[#allocation3 + $0x470] sm:$0xff]
    %v363 = vld [vmem:[#allocation3 + $0x478] sm:$0xff]
    %v364 = vld [vmem:[#allocation3 + $0x480] sm:$0xff]
    %v365 = vld [vmem:[#allocation3 + $0x488] sm:$0xff]
    %v366 = vld [vmem:[#allocation3 + $0x490] sm:$0xff]
    %v367 = vld [vmem:[#allocation3 + $0x498] sm:$0xff]
    %v368 = vld [vmem:[#allocation3 + $0x4a0] sm:$0xff]
    %v369 = vld [vmem:[#allocation3 + $0x4a8] sm:$0xff]
    %v370 = vld [vmem:[#allocation3 + $0x4b0] sm:$0xff]
    %v371 = vld [vmem:[#allocation3 + $0x4b8] sm:$0xff]
    %v372 = vld [vmem:[#allocation3 + $0x4c0] sm:$0xff]
    %v373 = vld [vmem:[#allocation3 + $0x4c8] sm:$0xff]
    %v374 = vld [vmem:[#allocation3 + $0x4d0] sm:$0xff]
    %v375 = vld [vmem:[#allocation3 + $0x4d8] sm:$0xff]
    %v376 = vld [vmem:[#allocation3 + $0x4e0] sm:$0xff]
    %v377 = vld [vmem:[#allocation3 + $0x4e8] sm:$0xff]
    %v378 = vld [vmem:[#allocation3 + $0x4f0] sm:$0xff]
    %v379 = vld [vmem:[#allocation3 + $0x4f8] sm:$0xff]
    %v380 = vld [vmem:[#allocation3 + $0x500] sm:$0xff]
    %v381 = vld [vmem:[#allocation3 + $0x508] sm:$0xff]
    %v382 = vld [vmem:[#allocation3 + $0x510] sm:$0xff]
    %v383 = vld [vmem:[#allocation3 + $0x518] sm:$0xff]
    %v384 = vld [vmem:[#allocation3 + $0x520] sm:$0xff]
    %v385 = vld [vmem:[#allocation3 + $0x528] sm:$0xff]
    %v386 = vld [vmem:[#allocation3 + $0x530] sm:$0xff]
    %v387 = vld [vmem:[#allocation3 + $0x538] sm:$0xff]
    %v388 = vld [vmem:[#allocation3 + $0x540] sm:$0xff]
    %v389 = vld [vmem:[#allocation3 + $0x548] sm:$0xff]
    %v390 = vld [vmem:[#allocation3 + $0x550] sm:$0xff]
    %v391 = vld [vmem:[#allocation3 + $0x558] sm:$0xff]
    %v392 = vld [vmem:[#allocation3 + $0x560] sm:$0xff]
    %v393 = vld [vmem:[#allocation3 + $0x568] sm:$0xff]
    %v394 = vld [vmem:[#allocation3 + $0x570] sm:$0xff]
    %v395 = vld [vmem:[#allocation3 + $0x578] sm:$0xff]
    %v396 = vld [vmem:[#allocation3 + $0x580] sm:$0xff]
    %v397 = vld [vmem:[#allocation3 + $0x588] sm:$0xff]
    %v398 = vld [vmem:[#allocation3 + $0x590] sm:$0xff]
    %v399 = vld [vmem:[#allocation3 + $0x598] sm:$0xff]
    %v400 = vld [vmem:[#allocation3 + $0x5a0] sm:$0xff]
    %v401 = vld [vmem:[#allocation3 + $0x5a8] sm:$0xff]
    %v402 = vld [vmem:[#allocation3 + $0x5b0] sm:$0xff]
    %v403 = vld [vmem:[#allocation3 + $0x5b8] sm:$0xff]
    %v404 = vld [vmem:[#allocation3 + $0x5c0] sm:$0xff]
    %v405 = vld [vmem:[#allocation3 + $0x5c8] sm:$0xff]
    %v406 = vld [vmem:[#allocation3 + $0x5d0] sm:$0xff]
    %v407 = vld [vmem:[#allocation3 + $0x5d8] sm:$0xff]
    %v408 = vld [vmem:[#allocation3 + $0x5e0] sm:$0xff]
    %v409 = vld [vmem:[#allocation3 + $0x5e8] sm:$0xff]
    %v410 = vld [vmem:[#allocation3 + $0x5f0] sm:$0xff]
    %v411 = vld [vmem:[#allocation3 + $0x5f8] sm:$0xff]
    %v412 = vld [vmem:[#allocation3 + $0x600] sm:$0xff]
    %v413 = vld [vmem:[#allocation3 + $0x608] sm:$0xff]
    %v414 = vld [vmem:[#allocation3 + $0x610] sm:$0xff]
    %v415 = vld [vmem:[#allocation3 + $0x618] sm:$0xff]
    %v416 = vld [vmem:[#allocation3 + $0x620] sm:$0xff]
    %v417 = vld [vmem:[#allocation3 + $0x628] sm:$0xff]
    %v418 = vld [vmem:[#allocation3 + $0x630] sm:$0xff]
    %v419 = vld [vmem:[#allocation3 + $0x638] sm:$0xff]
    %v420 = vld [vmem:[#allocation3 + $0x640] sm:$0xff]
    %v421 = vld [vmem:[#allocation3 + $0x648] sm:$0xff]
    %v422 = vld [vmem:[#allocation3 + $0x650] sm:$0xff]
    %v423 = vld [vmem:[#allocation3 + $0x658] sm:$0xff]
    %v424 = vld [vmem:[#allocation3 + $0x660] sm:$0xff]
    %v425 = vld [vmem:[#allocation3 + $0x668] sm:$0xff]
    %v426 = vld [vmem:[#allocation3 + $0x670] sm:$0xff]
    %v427 = vld [vmem:[#allocation3 + $0x678] sm:$0xff]
    %v428 = vld [vmem:[#allocation3 + $0x680] sm:$0xff]
    %v429 = vld [vmem:[#allocation3 + $0x688] sm:$0xff]
    %v430 = vld [vmem:[#allocation3 + $0x690] sm:$0xff]
    %v431 = vld [vmem:[#allocation3 + $0x698] sm:$0xff]
    %v432 = vld [vmem:[#allocation3 + $0x6a0] sm:$0xff]
    %v433 = vld [vmem:[#allocation3 + $0x6a8] sm:$0xff]
    %v434 = vld [vmem:[#allocation3 + $0x6b0] sm:$0xff]
    %v435 = vld [vmem:[#allocation3 + $0x6b8] sm:$0xff]
    %v436 = vld [vmem:[#allocation3 + $0x6c0] sm:$0xff]
    %v437 = vld [vmem:[#allocation3 + $0x6c8] sm:$0xff]
    %v438 = vld [vmem:[#allocation3 + $0x6d0] sm:$0xff]
    %v439 = vld [vmem:[#allocation3 + $0x6d8] sm:$0xff]
    %v440 = vld [vmem:[#allocation3 + $0x6e0] sm:$0xff]
    %v441 = vld [vmem:[#allocation3 + $0x6e8] sm:$0xff]
    %v442 = vld [vmem:[#allocation3 + $0x6f0] sm:$0xff]
    %v443 = vld [vmem:[#allocation3 + $0x6f8] sm:$0xff]
    %v444 = vld [vmem:[#allocation3 + $0x700] sm:$0xff]
    %v445 = vld [vmem:[#allocation3 + $0x708] sm:$0xff]
    %v446 = vld [vmem:[#allocation3 + $0x710] sm:$0xff]
    %v447 = vld [vmem:[#allocation3 + $0x718] sm:$0xff]
    %v448 = vld [vmem:[#allocation3 + $0x720] sm:$0xff]
    %v449 = vld [vmem:[#allocation3 + $0x728] sm:$0xff]
    %v450 = vld [vmem:[#allocation3 + $0x730] sm:$0xff]
    %v451 = vld [vmem:[#allocation3 + $0x738] sm:$0xff]
    %v452 = vld [vmem:[#allocation3 + $0x740] sm:$0xff]
    %v453 = vld [vmem:[#allocation3 + $0x748] sm:$0xff]
    %v454 = vld [vmem:[#allocation3 + $0x750] sm:$0xff]
    %v455 = vld [vmem:[#allocation3 + $0x758] sm:$0xff]
    %v456 = vld [vmem:[#allocation3 + $0x760] sm:$0xff]
    %v457 = vld [vmem:[#allocation3 + $0x768] sm:$0xff]
    %v458 = vld [vmem:[#allocation3 + $0x770] sm:$0xff]
    %v459 = vld [vmem:[#allocation3 + $0x778] sm:$0xff]
    %v460 = vld [vmem:[#allocation3 + $0x780] sm:$0xff]
    %v461 = vld [vmem:[#allocation3 + $0x788] sm:$0xff]
    %v462 = vld [vmem:[#allocation3 + $0x790] sm:$0xff]
    %v463 = vld [vmem:[#allocation3 + $0x798] sm:$0xff]
    %v464 = vld [vmem:[#allocation3 + $0x7a0] sm:$0xff]
    %v465 = vld [vmem:[#allocation3 + $0x7a8] sm:$0xff]
    %v466 = vld [vmem:[#allocation3 + $0x7b0] sm:$0xff]
    %v467 = vld [vmem:[#allocation3 + $0x7b8] sm:$0xff]
    %v468 = vld [vmem:[#allocation3 + $0x7c0] sm:$0xff]
    %v469 = vld [vmem:[#allocation3 + $0x7c8] sm:$0xff]
    %v470 = vld [vmem:[#allocation3 + $0x7d0] sm:$0xff]
    %v471 = vld [vmem:[#allocation3 + $0x7d8] sm:$0xff]
    %v472 = vld [vmem:[#allocation3 + $0x7e0] sm:$0xff]
    %v473 = vld [vmem:[#allocation3 + $0x7e8] sm:$0xff]
    %v474 = vld [vmem:[#allocation3 + $0x7f0] sm:$0xff]
    %v475 = vld [vmem:[#allocation3 + $0x7f8] sm:$0xff]
    %v476 = vld [vmem:[#allocation3 + $0x800] sm:$0xff]
    %v477 = vld [vmem:[#allocation3 + $0x808] sm:$0xff]
    %v478 = vld [vmem:[#allocation3 + $0x810] sm:$0xff]
    %v479 = vld [vmem:[#allocation3 + $0x818] sm:$0xff]
    %v480 = vld [vmem:[#allocation3 + $0x820] sm:$0xff]
    %v481 = vld [vmem:[#allocation3 + $0x828] sm:$0xff]
    %v482 = vld [vmem:[#allocation3 + $0x830] sm:$0xff]
    %v483 = vld [vmem:[#allocation3 + $0x838] sm:$0xff]
    %v484 = vld [vmem:[#allocation3 + $0x840] sm:$0xff]
    %v485 = vld [vmem:[#allocation3 + $0x848] sm:$0xff]
    %v486 = vld [vmem:[#allocation3 + $0x850] sm:$0xff]
    %v487 = vld [vmem:[#allocation3 + $0x858] sm:$0xff]
    %v488 = vld [vmem:[#allocation3 + $0x860] sm:$0xff]
    %v489 = vld [vmem:[#allocation3 + $0x868] sm:$0xff]
    %v490 = vld [vmem:[#allocation3 + $0x870] sm:$0xff]
    %v491 = vld [vmem:[#allocation3 + $0x878] sm:$0xff]
    %v492 = vld [vmem:[#allocation3 + $0x880] sm:$0xff]
    %v493 = vld [vmem:[#allocation3 + $0x888] sm:$0xff]
    %v494 = vld [vmem:[#allocation3 + $0x890] sm:$0xff]
    %v495 = vld [vmem:[#allocation3 + $0x898] sm:$0xff]
    %v496 = vld [vmem:[#allocation3 + $0x8a0] sm:$0xff]
    %v497 = vld [vmem:[#allocation3 + $0x8a8] sm:$0xff]
    %v498 = vld [vmem:[#allocation3 + $0x8b0] sm:$0xff]
    %v499 = vld [vmem:[#allocation3 + $0x8b8] sm:$0xff]
    %v500 = vld [vmem:[#allocation3 + $0x8c0] sm:$0xff]
    %v501 = vld [vmem:[#allocation3 + $0x8c8] sm:$0xff]
    %v502 = vld [vmem:[#allocation3 + $0x8d0] sm:$0xff]
    %v503 = vld [vmem:[#allocation3 + $0x8d8] sm:$0xff]
    %v504 = vld [vmem:[#allocation3 + $0x8e0] sm:$0xff]
    %v505 = vld [vmem:[#allocation3 + $0x8e8] sm:$0xff]
    %v506 = vld [vmem:[#allocation3 + $0x8f0] sm:$0xff]
    %v507 = vld [vmem:[#allocation3 + $0x8f8] sm:$0xff]
    %v508 = vld [vmem:[#allocation3 + $0x900] sm:$0xff]
    %v509 = vld [vmem:[#allocation3 + $0x908] sm:$0xff]
    %v510 = vld [vmem:[#allocation3 + $0x910] sm:$0xff]
    %v511 = vld [vmem:[#allocation3 + $0x918] sm:$0xff]
    %v512 = vld [vmem:[#allocation3 + $0x920] sm:$0xff]
    %v513 = vld [vmem:[#allocation3 + $0x928] sm:$0xff]
    %v514 = vld [vmem:[#allocation3 + $0x930] sm:$0xff]
    %v515 = vld [vmem:[#allocation3 + $0x938] sm:$0xff]
    %v516 = vld [vmem:[#allocation3 + $0x940] sm:$0xff]
    %v517 = vld [vmem:[#allocation3 + $0x948] sm:$0xff]
    %v518 = vld [vmem:[#allocation3 + $0x950] sm:$0xff]
    %v519 = vld [vmem:[#allocation3 + $0x958] sm:$0xff]
    %v520 = vld [vmem:[#allocation3 + $0x960] sm:$0xff]
    %v521 = vld [vmem:[#allocation3 + $0x968] sm:$0xff]
    %v522 = vld [vmem:[#allocation3 + $0x970] sm:$0xff]
    %v523 = vld [vmem:[#allocation3 + $0x978] sm:$0xff]
    %v524 = vld [vmem:[#allocation3 + $0x980] sm:$0xff]
    %v525 = vld [vmem:[#allocation3 + $0x988] sm:$0xff]
    %v526 = vld [vmem:[#allocation3 + $0x990] sm:$0xff]
    %v527 = vld [vmem:[#allocation3 + $0x998] sm:$0xff]
    %v528 = vld [vmem:[#allocation3 + $0x9a0] sm:$0xff]
    %v529 = vld [vmem:[#allocation3 + $0x9a8] sm:$0xff]
    %v530 = vld [vmem:[#allocation3 + $0x9b0] sm:$0xff]
    %v531 = vld [vmem:[#allocation3 + $0x9b8] sm:$0xff]
    %v532 = vld [vmem:[#allocation3 + $0x9c0] sm:$0xff]
    %v533 = vld [vmem:[#allocation3 + $0x9c8] sm:$0xff]
    %v534 = vld [vmem:[#allocation3 + $0x9d0] sm:$0xff]
    %v535 = vld [vmem:[#allocation3 + $0x9d8] sm:$0xff]
    %v536 = vld [vmem:[#allocation3 + $0x9e0] sm:$0xff]
    %v537 = vld [vmem:[#allocation3 + $0x9e8] sm:$0xff]
    %v538 = vld [vmem:[#allocation3 + $0x9f0] sm:$0xff]
    %v539 = vld [vmem:[#allocation3 + $0x9f8] sm:$0xff]
    %v540 = vld [vmem:[#allocation3 + $0xa00] sm:$0xff]
    %v541 = vld [vmem:[#allocation3 + $0xa08] sm:$0xff]
    %v542 = vld [vmem:[#allocation3 + $0xa10] sm:$0xff]
    %v543 = vld [vmem:[#allocation3 + $0xa18] sm:$0xff]
    %v544 = vld [vmem:[#allocation3 + $0xa20] sm:$0xff]
    %v545 = vld [vmem:[#allocation3 + $0xa28] sm:$0xff]
    %v546 = vld [vmem:[#allocation3 + $0xa30] sm:$0xff]
    %v547 = vld [vmem:[#allocation3 + $0xa38] sm:$0xff]
    %v548 = vld [vmem:[#allocation3 + $0xa40] sm:$0xff]
    %v549 = vld [vmem:[#allocation3 + $0xa48] sm:$0xff]
    %v550 = vld [vmem:[#allocation3 + $0xa50] sm:$0xff]
    %v551 = vld [vmem:[#allocation3 + $0xa58] sm:$0xff]
    %v552 = vld [vmem:[#allocation3 + $0xa60] sm:$0xff]
    %v553 = vld [vmem:[#allocation3 + $0xa68] sm:$0xff]
    %v554 = vld [vmem:[#allocation3 + $0xa70] sm:$0xff]
    %v555 = vld [vmem:[#allocation3 + $0xa78] sm:$0xff]
    %v556 = vld [vmem:[#allocation3 + $0xa80] sm:$0xff]
    %v557 = vld [vmem:[#allocation3 + $0xa88] sm:$0xff]
    %v558 = vld [vmem:[#allocation3 + $0xa90] sm:$0xff]
    %v559 = vld [vmem:[#allocation3 + $0xa98] sm:$0xff]
    %v560 = vld [vmem:[#allocation3 + $0xaa0] sm:$0xff]
    %v561 = vld [vmem:[#allocation3 + $0xaa8] sm:$0xff]
    %v562 = vld [vmem:[#allocation3 + $0xab0] sm:$0xff]
    %v563 = vld [vmem:[#allocation3 + $0xab8] sm:$0xff]
    %v564 = vld [vmem:[#allocation3 + $0xac0] sm:$0xff]
    %v565 = vld [vmem:[#allocation3 + $0xac8] sm:$0xff]
    %v566 = vld [vmem:[#allocation3 + $0xad0] sm:$0xff]
    %v567 = vld [vmem:[#allocation3 + $0xad8] sm:$0xff]
    %v568 = vld [vmem:[#allocation3 + $0xae0] sm:$0xff]
    %v569 = vld [vmem:[#allocation3 + $0xae8] sm:$0xff]
    %v570 = vld [vmem:[#allocation3 + $0xaf0] sm:$0xff]
    %v571 = vld [vmem:[#allocation3 + $0xaf8] sm:$0xff]
    %v572 = vld [vmem:[#allocation3 + $0xb00] sm:$0xff]
    %v573 = vld [vmem:[#allocation3 + $0xb08] sm:$0xff]
    %v574 = vld [vmem:[#allocation3 + $0xb10] sm:$0xff]
    %v575 = vld [vmem:[#allocation3 + $0xb18] sm:$0xff]
    %v576 = vld [vmem:[#allocation3 + $0xb20] sm:$0xff]
    %v577 = vld [vmem:[#allocation3 + $0xb28] sm:$0xff]
    %v578 = vld [vmem:[#allocation3 + $0xb30] sm:$0xff]
    %v579 = vld [vmem:[#allocation3 + $0xb38] sm:$0xff]
    %v580 = vld [vmem:[#allocation3 + $0xb40] sm:$0xff]
    %v581 = vld [vmem:[#allocation3 + $0xb48] sm:$0xff]
    %v582 = vld [vmem:[#allocation3 + $0xb50] sm:$0xff]
    %v583 = vld [vmem:[#allocation3 + $0xb58] sm:$0xff]
    %v584 = vld [vmem:[#allocation3 + $0xb60] sm:$0xff]
    %v585 = vld [vmem:[#allocation3 + $0xb68] sm:$0xff]
    %v586 = vld [vmem:[#allocation3 + $0xb70] sm:$0xff]
    %v587 = vld [vmem:[#allocation3 + $0xb78] sm:$0xff]
    %v588 = vld [vmem:[#allocation3 + $0xb80] sm:$0xff]
    %v589 = vld [vmem:[#allocation3 + $0xb88] sm:$0xff]
    %v590 = vld [vmem:[#allocation3 + $0xb90] sm:$0xff]
    %v591 = vld [vmem:[#allocation3 + $0xb98] sm:$0xff]
    %v592 = vld [vmem:[#allocation3 + $0xba0] sm:$0xff]
    %v593 = vld [vmem:[#allocation3 + $0xba8] sm:$0xff]
    %v594 = vld [vmem:[#allocation3 + $0xbb0] sm:$0xff]
    %v595 = vld [vmem:[#allocation3 + $0xbb8] sm:$0xff]
    %v596 = vld [vmem:[#allocation3 + $0xbc0] sm:$0xff]
    %v597 = vld [vmem:[#allocation3 + $0xbc8] sm:$0xff]
    %v598 = vld [vmem:[#allocation3 + $0xbd0] sm:$0xff]
    %v599 = vld [vmem:[#allocation3 + $0xbd8] sm:$0xff]
    %v600 = vld [vmem:[#allocation3 + $0xbe0] sm:$0xff]
    %v601 = vld [vmem:[#allocation3 + $0xbe8] sm:$0xff]
    %v602 = vld [vmem:[#allocation3 + $0xbf0] sm:$0xff]
    %v603 = vld [vmem:[#allocation3 + $0xbf8] sm:$0xff]
    %v604 = vld [vmem:[#allocation3 + $0xc00] sm:$0xff]
    %v605 = vld [vmem:[#allocation3 + $0xc08] sm:$0xff]
    %v606 = vld [vmem:[#allocation3 + $0xc10] sm:$0xff]
    %v607 = vld [vmem:[#allocation3 + $0xc18] sm:$0xff]
    %v608 = vld [vmem:[#allocation3 + $0xc20] sm:$0xff]
    %v609 = vld [vmem:[#allocation3 + $0xc28] sm:$0xff]
    %v610 = vld [vmem:[#allocation3 + $0xc30] sm:$0xff]
    %v611 = vld [vmem:[#allocation3 + $0xc38] sm:$0xff]
    %v612 = vld [vmem:[#allocation3 + $0xc40] sm:$0xff]
    %v613 = vld [vmem:[#allocation3 + $0xc48] sm:$0xff]
    %v614 = vld [vmem:[#allocation3 + $0xc50] sm:$0xff]
    %v615 = vld [vmem:[#allocation3 + $0xc58] sm:$0xff]
    %v616 = vld [vmem:[#allocation3 + $0xc60] sm:$0xff]
    %v617 = vld [vmem:[#allocation3 + $0xc68] sm:$0xff]
    %v618 = vld [vmem:[#allocation3 + $0xc70] sm:$0xff]
    %v619 = vld [vmem:[#allocation3 + $0xc78] sm:$0xff]
    %v620 = vld [vmem:[#allocation3 + $0xc80] sm:$0xff]
    %v621 = vld [vmem:[#allocation3 + $0xc88] sm:$0xff]
    %v622 = vld [vmem:[#allocation3 + $0xc90] sm:$0xff]
    %v623 = vld [vmem:[#allocation3 + $0xc98] sm:$0xff]
    %v624 = vld [vmem:[#allocation3 + $0xca0] sm:$0xff]
    %v625 = vld [vmem:[#allocation3 + $0xca8] sm:$0xff]
    %v626 = vld [vmem:[#allocation3 + $0xcb0] sm:$0xff]
    %v627 = vld [vmem:[#allocation3 + $0xcb8] sm:$0xff]
    %v628 = vld [vmem:[#allocation3 + $0xcc0] sm:$0xff]
    %v629 = vld [vmem:[#allocation3 + $0xcc8] sm:$0xff]
    %v630 = vld [vmem:[#allocation3 + $0xcd0] sm:$0xff]
    %v631 = vld [vmem:[#allocation3 + $0xcd8] sm:$0xff]
    %v632 = vld [vmem:[#allocation3 + $0xce0] sm:$0xff]
    %v633 = vld [vmem:[#allocation3 + $0xce8] sm:$0xff]
    %v634 = vld [vmem:[#allocation3 + $0xcf0] sm:$0xff]
    %v635 = vld [vmem:[#allocation3 + $0xcf8] sm:$0xff]
    %v636 = vld [vmem:[#allocation3 + $0xd00] sm:$0xff]
    %v637 = vld [vmem:[#allocation3 + $0xd08] sm:$0xff]
    %v638 = vld [vmem:[#allocation3 + $0xd10] sm:$0xff]
    %v639 = vld [vmem:[#allocation3 + $0xd18] sm:$0xff]
    %v640 = vld [vmem:[#allocation3 + $0xd20] sm:$0xff]
    %v641 = vld [vmem:[#allocation3 + $0xd28] sm:$0xff]
    %v642 = vld [vmem:[#allocation3 + $0xd30] sm:$0xff]
    %v643 = vld [vmem:[#allocation3 + $0xd38] sm:$0xff]
    %v644 = vld [vmem:[#allocation3 + $0xd40] sm:$0xff]
    %v645 = vld [vmem:[#allocation3 + $0xd48] sm:$0xff]
    %v646 = vld [vmem:[#allocation3 + $0xd50] sm:$0xff]
    %v647 = vld [vmem:[#allocation3 + $0xd58] sm:$0xff]
    %v648 = vld [vmem:[#allocation3 + $0xd60] sm:$0xff]
    %v649 = vld [vmem:[#allocation3 + $0xd68] sm:$0xff]
    %v650 = vld [vmem:[#allocation3 + $0xd70] sm:$0xff]
    %v651 = vld [vmem:[#allocation3 + $0xd78] sm:$0xff]
    %v652 = vld [vmem:[#allocation3 + $0xd80] sm:$0xff]
    %v653 = vld [vmem:[#allocation3 + $0xd88] sm:$0xff]
    %v654 = vld [vmem:[#allocation3 + $0xd90] sm:$0xff]
    %v655 = vld [vmem:[#allocation3 + $0xd98] sm:$0xff]
    %v656 = vld [vmem:[#allocation3 + $0xda0] sm:$0xff]
    %v657 = vld [vmem:[#allocation3 + $0xda8] sm:$0xff]
    %v658 = vld [vmem:[#allocation3 + $0xdb0] sm:$0xff]
    %v659 = vld [vmem:[#allocation3 + $0xdb8] sm:$0xff]
    %v660 = vld [vmem:[#allocation3 + $0xdc0] sm:$0xff]
    %v661 = vld [vmem:[#allocation3 + $0xdc8] sm:$0xff]
    %v662 = vld [vmem:[#allocation3 + $0xdd0] sm:$0xff]
    %v663 = vld [vmem:[#allocation3 + $0xdd8] sm:$0xff]
    %v664 = vld [vmem:[#allocation3 + $0xde0] sm:$0xff]
    %v665 = vld [vmem:[#allocation3 + $0xde8] sm:$0xff]
    %v666 = vld [vmem:[#allocation3 + $0xdf0] sm:$0xff]
    %v667 = vld [vmem:[#allocation3 + $0xdf8] sm:$0xff]
    %v668 = vld [vmem:[#allocation3 + $0xe00] sm:$0xff]
    %v669 = vld [vmem:[#allocation3 + $0xe08] sm:$0xff]
    %v670 = vld [vmem:[#allocation3 + $0xe10] sm:$0xff]
    %v671 = vld [vmem:[#allocation3 + $0xe18] sm:$0xff]
    %v672 = vld [vmem:[#allocation3 + $0xe20] sm:$0xff]
    %v673 = vld [vmem:[#allocation3 + $0xe28] sm:$0xff]
    %v674 = vld [vmem:[#allocation3 + $0xe30] sm:$0xff]
    %v675 = vld [vmem:[#allocation3 + $0xe38] sm:$0xff]
    %v676 = vld [vmem:[#allocation3 + $0xe40] sm:$0xff]
    %v677 = vld [vmem:[#allocation3 + $0xe48] sm:$0xff]
    %v678 = vld [vmem:[#allocation3 + $0xe50] sm:$0xff]
    %v679 = vld [vmem:[#allocation3 + $0xe58] sm:$0xff]
    %v680 = vld [vmem:[#allocation3 + $0xe60] sm:$0xff]
    %v681 = vld [vmem:[#allocation3 + $0xe68] sm:$0xff]
    %v682 = vld [vmem:[#allocation3 + $0xe70] sm:$0xff]
    %v683 = vld [vmem:[#allocation3 + $0xe78] sm:$0xff]
    %v684 = vld [vmem:[#allocation3 + $0xe80] sm:$0xff]
    %v685 = vld [vmem:[#allocation3 + $0xe88] sm:$0xff]
    %v686 = vld [vmem:[#allocation3 + $0xe90] sm:$0xff]
    %v687 = vld [vmem:[#allocation3 + $0xe98] sm:$0xff]
    %v688 = vld [vmem:[#allocation3 + $0xea0] sm:$0xff]
    %v689 = vld [vmem:[#allocation3 + $0xea8] sm:$0xff]
    %v690 = vld [vmem:[#allocation3 + $0xeb0] sm:$0xff]
    %v691 = vld [vmem:[#allocation3 + $0xeb8] sm:$0xff]
    %v692 = vld [vmem:[#allocation3 + $0xec0] sm:$0xff]
    %v693 = vld [vmem:[#allocation3 + $0xec8] sm:$0xff]
    %v694 = vld [vmem:[#allocation3 + $0xed0] sm:$0xff]
    %v695 = vld [vmem:[#allocation3 + $0xed8] sm:$0xff]
    %v696 = vld [vmem:[#allocation3 + $0xee0] sm:$0xff]
    %v697 = vld [vmem:[#allocation3 + $0xee8] sm:$0xff]
    %v698 = vld [vmem:[#allocation3 + $0xef0] sm:$0xff]
    %v699 = vld [vmem:[#allocation3 + $0xef8] sm:$0xff]
    %v700 = vld [vmem:[#allocation3 + $0xf00] sm:$0xff]
    %v701 = vld [vmem:[#allocation3 + $0xf08] sm:$0xff]
    %v702 = vld [vmem:[#allocation3 + $0xf10] sm:$0xff]
    %v703 = vld [vmem:[#allocation3 + $0xf18] sm:$0xff]
    %v704 = vld [vmem:[#allocation3 + $0xf20] sm:$0xff]
    %v705 = vld [vmem:[#allocation3 + $0xf28] sm:$0xff]
    %v706 = vld [vmem:[#allocation3 + $0xf30] sm:$0xff]
    %v707 = vld [vmem:[#allocation3 + $0xf38] sm:$0xff]
    %v708 = vld [vmem:[#allocation3 + $0xf40] sm:$0xff]
    %v709 = vld [vmem:[#allocation3 + $0xf48] sm:$0xff]
    %v710 = vld [vmem:[#allocation3 + $0xf50] sm:$0xff]
    %v711 = vld [vmem:[#allocation3 + $0xf58] sm:$0xff]
    %v712 = vld [vmem:[#allocation3 + $0xf60] sm:$0xff]
    %v713 = vld [vmem:[#allocation3 + $0xf68] sm:$0xff]
    %v714 = vld [vmem:[#allocation3 + $0xf70] sm:$0xff]
    %v715 = vld [vmem:[#allocation3 + $0xf78] sm:$0xff]
    %v716 = vld [vmem:[#allocation3 + $0xf80] sm:$0xff]
    %v717 = vld [vmem:[#allocation3 + $0xf88] sm:$0xff]
    %v718 = vld [vmem:[#allocation3 + $0xf90] sm:$0xff]
    %v719 = vld [vmem:[#allocation3 + $0xf98] sm:$0xff]
    %v720 = vld [vmem:[#allocation3 + $0xfa0] sm:$0xff]
    %v721 = vld [vmem:[#allocation3 + $0xfa8] sm:$0xff]
    %v722 = vld [vmem:[#allocation3 + $0xfb0] sm:$0xff]
    %v723 = vld [vmem:[#allocation3 + $0xfb8] sm:$0xff]
    %v724 = vld [vmem:[#allocation3 + $0xfc0] sm:$0xff]
    %v725 = vld [vmem:[#allocation3 + $0xfc8] sm:$0xff]
    %v726 = vld [vmem:[#allocation3 + $0xfd0] sm:$0xff]
    %v727 = vld [vmem:[#allocation3 + $0xfd8] sm:$0xff]
    %v728 = vld [vmem:[#allocation3 + $0xfe0] sm:$0xff]
    %v729 = vld [vmem:[#allocation3 + $0xfe8] sm:$0xff]
    %v730 = vld [vmem:[#allocation3 + $0xff0] sm:$0xff]
    %v731 = vld [vmem:[#allocation3 + $0xff8] sm:$0xff]
    %v732 = vld [vmem:[#allocation3 + $0x1000] sm:$0xff]
    %v733 = vld [vmem:[#allocation3 + $0x1008] sm:$0xff]
    %v734 = vld [vmem:[#allocation3 + $0x1010] sm:$0xff]
    %v735 = vld [vmem:[#allocation3 + $0x1018] sm:$0xff]
    %v736 = vld [vmem:[#allocation3 + $0x1020] sm:$0xff]
    %v737 = vld [vmem:[#allocation3 + $0x1028] sm:$0xff]
    %v738 = vld [vmem:[#allocation3 + $0x1030] sm:$0xff]
    %v739 = vld [vmem:[#allocation3 + $0x1038] sm:$0xff]
    %v740 = vld [vmem:[#allocation3 + $0x1040] sm:$0xff]
    %v741 = vld [vmem:[#allocation3 + $0x1048] sm:$0xff]
    %v742 = vld [vmem:[#allocation3 + $0x1050] sm:$0xff]
    %v743 = vld [vmem:[#allocation3 + $0x1058] sm:$0xff]
    %v744 = vld [vmem:[#allocation3 + $0x1060] sm:$0xff]
    %v745 = vld [vmem:[#allocation3 + $0x1068] sm:$0xff]
    %v746 = vld [vmem:[#allocation3 + $0x1070] sm:$0xff]
    %v747 = vld [vmem:[#allocation3 + $0x1078] sm:$0xff]
    %v748 = vld [vmem:[#allocation3 + $0x1080] sm:$0xff]
    %v749 = vld [vmem:[#allocation3 + $0x1088] sm:$0xff]
    %v750 = vld [vmem:[#allocation3 + $0x1090] sm:$0xff]
    %v751 = vld [vmem:[#allocation3 + $0x1098] sm:$0xff]
    %v752 = vld [vmem:[#allocation3 + $0x10a0] sm:$0xff]
    %v753 = vld [vmem:[#allocation3 + $0x10a8] sm:$0xff]
    %v754 = vld [vmem:[#allocation3 + $0x10b0] sm:$0xff]
    %v755 = vld [vmem:[#allocation3 + $0x10b8] sm:$0xff]
    %v756 = vld [vmem:[#allocation3 + $0x10c0] sm:$0xff]
    %v757 = vld [vmem:[#allocation3 + $0x10c8] sm:$0xff]
    %v758 = vld [vmem:[#allocation3 + $0x10d0] sm:$0xff]
    %v759 = vld [vmem:[#allocation3 + $0x10d8] sm:$0xff]
    %v760 = vld [vmem:[#allocation3 + $0x10e0] sm:$0xff]
    %v761 = vld [vmem:[#allocation3 + $0x10e8] sm:$0xff]
    %v762 = vld [vmem:[#allocation3 + $0x10f0] sm:$0xff]
    %v763 = vld [vmem:[#allocation3 + $0x10f8] sm:$0xff]
    %v764 = vld [vmem:[#allocation3 + $0x1100] sm:$0xff]
    %v765 = vld [vmem:[#allocation3 + $0x1108] sm:$0xff]
    %v766 = vld [vmem:[#allocation3 + $0x1110] sm:$0xff]
    %v767 = vld [vmem:[#allocation3 + $0x1118] sm:$0xff]
    %v768 = vld [vmem:[#allocation3 + $0x1120] sm:$0xff]
    %v769 = vld [vmem:[#allocation3 + $0x1128] sm:$0xff]
    %v770 = vld [vmem:[#allocation3 + $0x1130] sm:$0xff]
    %v771 = vld [vmem:[#allocation3 + $0x1138] sm:$0xff]
    %v772 = vld [vmem:[#allocation3 + $0x1140] sm:$0xff]
    %v773 = vld [vmem:[#allocation3 + $0x1148] sm:$0xff]
    %v774 = vld [vmem:[#allocation3 + $0x1150] sm:$0xff]
    %v775 = vld [vmem:[#allocation3 + $0x1158] sm:$0xff]
    %v776 = vld [vmem:[#allocation3 + $0x1160] sm:$0xff]
    %v777 = vld [vmem:[#allocation3 + $0x1168] sm:$0xff]
    %v778 = vld [vmem:[#allocation3 + $0x1170] sm:$0xff]
    %v779 = vld [vmem:[#allocation3 + $0x1178] sm:$0xff]
    %v780 = vld [vmem:[#allocation3 + $0x1180] sm:$0xff]
    %v781 = vld [vmem:[#allocation3 + $0x1188] sm:$0xff]
    %v782 = vld [vmem:[#allocation3 + $0x1190] sm:$0xff]
    %v783 = vld [vmem:[#allocation3 + $0x1198] sm:$0xff]
    %v784 = vld [vmem:[#allocation3 + $0x11a0] sm:$0xff]
    %v785 = vld [vmem:[#allocation3 + $0x11a8] sm:$0xff]
    %v786 = vld [vmem:[#allocation3 + $0x11b0] sm:$0xff]
    %v787 = vld [vmem:[#allocation3 + $0x11b8] sm:$0xff]
    %v788 = vld [vmem:[#allocation3 + $0x11c0] sm:$0xff]
    %v789 = vld [vmem:[#allocation3 + $0x11c8] sm:$0xff]
    %v790 = vld [vmem:[#allocation3 + $0x11d0] sm:$0xff]
    %v791 = vld [vmem:[#allocation3 + $0x11d8] sm:$0xff]
    %v792 = vld [vmem:[#allocation3 + $0x11e0] sm:$0xff]
    %v793 = vld [vmem:[#allocation3 + $0x11e8] sm:$0xff]
    %v794 = vld [vmem:[#allocation3 + $0x11f0] sm:$0xff]
    %v795 = vld [vmem:[#allocation3 + $0x11f8] sm:$0xff]
    %v796 = vld [vmem:[#allocation3 + $0x1200] sm:$0xff]
    %v797 = vld [vmem:[#allocation3 + $0x1208] sm:$0xff]
    %v798 = vld [vmem:[#allocation3 + $0x1210] sm:$0xff]
    %v799 = vld [vmem:[#allocation3 + $0x1218] sm:$0xff]
    %v800 = vld [vmem:[#allocation3 + $0x1220] sm:$0xff]
    %v801 = vld [vmem:[#allocation3 + $0x1228] sm:$0xff]
    %v802 = vld [vmem:[#allocation3 + $0x1230] sm:$0xff]
    %v803 = vld [vmem:[#allocation3 + $0x1238] sm:$0xff]
    %v804 = vld [vmem:[#allocation3 + $0x1240] sm:$0xff]
    %v805 = vld [vmem:[#allocation3 + $0x1248] sm:$0xff]
    %v806 = vld [vmem:[#allocation3 + $0x1250] sm:$0xff]
    %v807 = vld [vmem:[#allocation3 + $0x1258] sm:$0xff]
    %v808 = vld [vmem:[#allocation3 + $0x1260] sm:$0xff]
    %v809 = vld [vmem:[#allocation3 + $0x1268] sm:$0xff]
    %v810 = vld [vmem:[#allocation3 + $0x1270] sm:$0xff]
    %v811 = vld [vmem:[#allocation3 + $0x1278] sm:$0xff]
    %v812 = vld [vmem:[#allocation3 + $0x1280] sm:$0xff]
    %v813 = vld [vmem:[#allocation3 + $0x1288] sm:$0xff]
    %v814 = vld [vmem:[#allocation3 + $0x1290] sm:$0xff]
    %v815 = vld [vmem:[#allocation3 + $0x1298] sm:$0xff]
    %v816 = vld [vmem:[#allocation3 + $0x12a0] sm:$0xff]
    %v817 = vld [vmem:[#allocation3 + $0x12a8] sm:$0xff]
    %v818 = vld [vmem:[#allocation3 + $0x12b0] sm:$0xff]
    %v819 = vld [vmem:[#allocation3 + $0x12b8] sm:$0xff]
    %v820 = vld [vmem:[#allocation3 + $0x12c0] sm:$0xff]
    %v821 = vld [vmem:[#allocation3 + $0x12c8] sm:$0xff]
    %v822 = vld [vmem:[#allocation3 + $0x12d0] sm:$0xff]
    %v823 = vld [vmem:[#allocation3 + $0x12d8] sm:$0xff]
    %v824 = vld [vmem:[#allocation3 + $0x12e0] sm:$0xff]
    %v825 = vld [vmem:[#allocation3 + $0x12e8] sm:$0xff]
    %v826 = vld [vmem:[#allocation3 + $0x12f0] sm:$0xff]
    %v827 = vld [vmem:[#allocation3 + $0x12f8] sm:$0xff]
    %v828 = vld [vmem:[#allocation3 + $0x1300] sm:$0xff]
    %v829 = vld [vmem:[#allocation3 + $0x1308] sm:$0xff]
    %v830 = vld [vmem:[#allocation3 + $0x1310] sm:$0xff]
    %v831 = vld [vmem:[#allocation3 + $0x1318] sm:$0xff]
    %v832 = vld [vmem:[#allocation3 + $0x1320] sm:$0xff]
    %v833 = vld [vmem:[#allocation3 + $0x1328] sm:$0xff]
    %v834 = vld [vmem:[#allocation3 + $0x1330] sm:$0xff]
    %v835 = vld [vmem:[#allocation3 + $0x1338] sm:$0xff]
    %v836 = vld [vmem:[#allocation3 + $0x1340] sm:$0xff]
    %v837 = vld [vmem:[#allocation3 + $0x1348] sm:$0xff]
    %v838 = vld [vmem:[#allocation3 + $0x1350] sm:$0xff]
    %v839 = vld [vmem:[#allocation3 + $0x1358] sm:$0xff]
    %v840 = vld [vmem:[#allocation3 + $0x1360] sm:$0xff]
    %v841 = vld [vmem:[#allocation3 + $0x1368] sm:$0xff]
    %v842 = vld [vmem:[#allocation3 + $0x1370] sm:$0xff]
    %v843 = vld [vmem:[#allocation3 + $0x1378] sm:$0xff]
    %v844 = vld [vmem:[#allocation3 + $0x1380] sm:$0xff]
    %v845 = vld [vmem:[#allocation3 + $0x1388] sm:$0xff]
    %v846 = vld [vmem:[#allocation3 + $0x1390] sm:$0xff]
    %v847 = vld [vmem:[#allocation3 + $0x1398] sm:$0xff]
    %v848 = vld [vmem:[#allocation3 + $0x13a0] sm:$0xff]
    %v849 = vld [vmem:[#allocation3 + $0x13a8] sm:$0xff]
    %v850 = vld [vmem:[#allocation3 + $0x13b0] sm:$0xff]
    %v851 = vld [vmem:[#allocation3 + $0x13b8] sm:$0xff]
    %v852 = vld [vmem:[#allocation3 + $0x13c0] sm:$0xff]
    %v853 = vld [vmem:[#allocation3 + $0x13c8] sm:$0xff]
    %v854 = vld [vmem:[#allocation3 + $0x13d0] sm:$0xff]
    %v855 = vld [vmem:[#allocation3 + $0x13d8] sm:$0xff]
    %v856 = vld [vmem:[#allocation3 + $0x13e0] sm:$0xff]
    %v857 = vld [vmem:[#allocation3 + $0x13e8] sm:$0xff]
    %v858 = vld [vmem:[#allocation3 + $0x13f0] sm:$0xff]
    %v859 = vld [vmem:[#allocation3 + $0x13f8] sm:$0xff]
    %v860 = vld [vmem:[#allocation3 + $0x1400] sm:$0xff]
    %v861 = vld [vmem:[#allocation3 + $0x1408] sm:$0xff]
    %v862 = vld [vmem:[#allocation3 + $0x1410] sm:$0xff]
    %v863 = vld [vmem:[#allocation3 + $0x1418] sm:$0xff]
    %v864 = vld [vmem:[#allocation3 + $0x1420] sm:$0xff]
    %v865 = vld [vmem:[#allocation3 + $0x1428] sm:$0xff]
    %v866 = vld [vmem:[#allocation3 + $0x1430] sm:$0xff]
    %v867 = vld [vmem:[#allocation3 + $0x1438] sm:$0xff]
    %v868 = vld [vmem:[#allocation3 + $0x1440] sm:$0xff]
    %v869 = vld [vmem:[#allocation3 + $0x1448] sm:$0xff]
    %v870 = vld [vmem:[#allocation3 + $0x1450] sm:$0xff]
    %v871 = vld [vmem:[#allocation3 + $0x1458] sm:$0xff]
    %v872 = vld [vmem:[#allocation3 + $0x1460] sm:$0xff]
    %v873 = vld [vmem:[#allocation3 + $0x1468] sm:$0xff]
    %v874 = vld [vmem:[#allocation3 + $0x1470] sm:$0xff]
    %v875 = vld [vmem:[#allocation3 + $0x1478] sm:$0xff]
    %v876 = vld [vmem:[#allocation3 + $0x1480] sm:$0xff]
    %v877 = vld [vmem:[#allocation3 + $0x1488] sm:$0xff]
    %v878 = vld [vmem:[#allocation3 + $0x1490] sm:$0xff]
    %v879 = vld [vmem:[#allocation3 + $0x1498] sm:$0xff]
    %v880 = vld [vmem:[#allocation3 + $0x14a0] sm:$0xff]
    %v881 = vld [vmem:[#allocation3 + $0x14a8] sm:$0xff]
    %v882 = vld [vmem:[#allocation3 + $0x14b0] sm:$0xff]
    %v883 = vld [vmem:[#allocation3 + $0x14b8] sm:$0xff]
    %v884 = vld [vmem:[#allocation3 + $0x14c0] sm:$0xff]
    %v885 = vld [vmem:[#allocation3 + $0x14c8] sm:$0xff]
    %v886 = vld [vmem:[#allocation3 + $0x14d0] sm:$0xff]
    %v887 = vld [vmem:[#allocation3 + $0x14d8] sm:$0xff]
    %v888 = vld [vmem:[#allocation3 + $0x14e0] sm:$0xff]
    %v889 = vld [vmem:[#allocation3 + $0x14e8] sm:$0xff]
    %v890 = vld [vmem:[#allocation3 + $0x14f0] sm:$0xff]
    %v891 = vld [vmem:[#allocation3 + $0x14f8] sm:$0xff]
    %v892 = vld [vmem:[#allocation3 + $0x1500] sm:$0xff]
    %v893 = vld [vmem:[#allocation3 + $0x1508] sm:$0xff]
    %v894 = vld [vmem:[#allocation3 + $0x1510] sm:$0xff]
    %v895 = vld [vmem:[#allocation3 + $0x1518] sm:$0xff]
    %v896 = vld [vmem:[#allocation3 + $0x1520] sm:$0xff]
    %v897 = vld [vmem:[#allocation3 + $0x1528] sm:$0xff]
    %v898 = vld [vmem:[#allocation3 + $0x1530] sm:$0xff]
    %v899 = vld [vmem:[#allocation3 + $0x1538] sm:$0xff]
    %v900 = vld [vmem:[#allocation3 + $0x1540] sm:$0xff]
    %v901 = vld [vmem:[#allocation3 + $0x1548] sm:$0xff]
    %v902 = vld [vmem:[#allocation3 + $0x1550] sm:$0xff]
    %v903 = vld [vmem:[#allocation3 + $0x1558] sm:$0xff]
    %v904 = vld [vmem:[#allocation3 + $0x1560] sm:$0xff]
    %v905 = vld [vmem:[#allocation3 + $0x1568] sm:$0xff]
    %v906 = vld [vmem:[#allocation3 + $0x1570] sm:$0xff]
    %v907 = vld [vmem:[#allocation3 + $0x1578] sm:$0xff]
    %v908 = vld [vmem:[#allocation3 + $0x1580] sm:$0xff]
    %v909 = vld [vmem:[#allocation3 + $0x1588] sm:$0xff]
    %v910 = vld [vmem:[#allocation3 + $0x1590] sm:$0xff]
    %v911 = vld [vmem:[#allocation3 + $0x1598] sm:$0xff]
    %v912 = vld [vmem:[#allocation3 + $0x15a0] sm:$0xff]
    %v913 = vld [vmem:[#allocation3 + $0x15a8] sm:$0xff]
    %v914 = vld [vmem:[#allocation3 + $0x15b0] sm:$0xff]
    %v915 = vld [vmem:[#allocation3 + $0x15b8] sm:$0xff]
    %v916 = vld [vmem:[#allocation3 + $0x15c0] sm:$0xff]
    %v917 = vld [vmem:[#allocation3 + $0x15c8] sm:$0xff]
    %v918 = vld [vmem:[#allocation3 + $0x15d0] sm:$0xff]
    %v919 = vld [vmem:[#allocation3 + $0x15d8] sm:$0xff]
    %v920 = vld [vmem:[#allocation3 + $0x15e0] sm:$0xff]
    %v921 = vld [vmem:[#allocation3 + $0x15e8] sm:$0xff]
    %v922 = vld [vmem:[#allocation3 + $0x15f0] sm:$0xff]
    %v923 = vld [vmem:[#allocation3 + $0x15f8] sm:$0xff]
    %v924 = vld [vmem:[#allocation3 + $0x1600] sm:$0xff]
    %v925 = vld [vmem:[#allocation3 + $0x1608] sm:$0xff]
    %v926 = vld [vmem:[#allocation3 + $0x1610] sm:$0xff]
    %v927 = vld [vmem:[#allocation3 + $0x1618] sm:$0xff]
    %v928 = vld [vmem:[#allocation3 + $0x1620] sm:$0xff]
    %v929 = vld [vmem:[#allocation3 + $0x1628] sm:$0xff]
    %v930 = vld [vmem:[#allocation3 + $0x1630] sm:$0xff]
    %v931 = vld [vmem:[#allocation3 + $0x1638] sm:$0xff]
    %v932 = vld [vmem:[#allocation3 + $0x1640] sm:$0xff]
    %v933 = vld [vmem:[#allocation3 + $0x1648] sm:$0xff]
    %v934 = vld [vmem:[#allocation3 + $0x1650] sm:$0xff]
    %v935 = vld [vmem:[#allocation3 + $0x1658] sm:$0xff]
    %v936 = vld [vmem:[#allocation3 + $0x1660] sm:$0xff]
    %v937 = vld [vmem:[#allocation3 + $0x1668] sm:$0xff]
    %v938 = vld [vmem:[#allocation3 + $0x1670] sm:$0xff]
    %v939 = vld [vmem:[#allocation3 + $0x1678] sm:$0xff]
    %v940 = vld [vmem:[#allocation3 + $0x1680] sm:$0xff]
    %v941 = vld [vmem:[#allocation3 + $0x1688] sm:$0xff]
    %v942 = vld [vmem:[#allocation3 + $0x1690] sm:$0xff]
    %v943 = vld [vmem:[#allocation3 + $0x1698] sm:$0xff]
    %v944 = vld [vmem:[#allocation3 + $0x16a0] sm:$0xff]
    %v945 = vld [vmem:[#allocation3 + $0x16a8] sm:$0xff]
    %v946 = vld [vmem:[#allocation3 + $0x16b0] sm:$0xff]
    %v947 = vld [vmem:[#allocation3 + $0x16b8] sm:$0xff]
    %v948 = vld [vmem:[#allocation3 + $0x16c0] sm:$0xff]
    %v949 = vld [vmem:[#allocation3 + $0x16c8] sm:$0xff]
    %v950 = vld [vmem:[#allocation3 + $0x16d0] sm:$0xff]
    %v951 = vld [vmem:[#allocation3 + $0x16d8] sm:$0xff]
    %v952 = vld [vmem:[#allocation3 + $0x16e0] sm:$0xff]
    %v953 = vld [vmem:[#allocation3 + $0x16e8] sm:$0xff]
    %v954 = vld [vmem:[#allocation3 + $0x16f0] sm:$0xff]
    %v955 = vld [vmem:[#allocation3 + $0x16f8] sm:$0xff]
    %v956 = vld [vmem:[#allocation3 + $0x1700] sm:$0xff]
    %v957 = vld [vmem:[#allocation3 + $0x1708] sm:$0xff]
    %v958 = vld [vmem:[#allocation3 + $0x1710] sm:$0xff]
    %v959 = vld [vmem:[#allocation3 + $0x1718] sm:$0xff]
    %v960 = vld [vmem:[#allocation3 + $0x1720] sm:$0xff]
    %v961 = vld [vmem:[#allocation3 + $0x1728] sm:$0xff]
    %v962 = vld [vmem:[#allocation3 + $0x1730] sm:$0xff]
    %v963 = vld [vmem:[#allocation3 + $0x1738] sm:$0xff]
    %v964 = vld [vmem:[#allocation3 + $0x1740] sm:$0xff]
    %v965 = vld [vmem:[#allocation3 + $0x1748] sm:$0xff]
    %v966 = vld [vmem:[#allocation3 + $0x1750] sm:$0xff]
    %v967 = vld [vmem:[#allocation3 + $0x1758] sm:$0xff]
    %v968 = vld [vmem:[#allocation3 + $0x1760] sm:$0xff]
    %v969 = vld [vmem:[#allocation3 + $0x1768] sm:$0xff]
    %v970 = vld [vmem:[#allocation3 + $0x1770] sm:$0xff]
    %v971 = vld [vmem:[#allocation3 + $0x1778] sm:$0xff]
    %v972 = vld [vmem:[#allocation3 + $0x1780] sm:$0xff]
    %v973 = vld [vmem:[#allocation3 + $0x1788] sm:$0xff]
    %v974 = vld [vmem:[#allocation3 + $0x1790] sm:$0xff]
    %v975 = vld [vmem:[#allocation3 + $0x1798] sm:$0xff]
    %v976 = vld [vmem:[#allocation3 + $0x17a0] sm:$0xff]
    %v977 = vld [vmem:[#allocation3 + $0x17a8] sm:$0xff]
    %v978 = vld [vmem:[#allocation3 + $0x17b0] sm:$0xff]
    %v979 = vld [vmem:[#allocation3 + $0x17b8] sm:$0xff]
    %v980 = vld [vmem:[#allocation3 + $0x17c0] sm:$0xff]
    %v981 = vld [vmem:[#allocation3 + $0x17c8] sm:$0xff]
    %v982 = vld [vmem:[#allocation3 + $0x17d0] sm:$0xff]
    %v983 = vld [vmem:[#allocation3 + $0x17d8] sm:$0xff]
    %v984 = vld [vmem:[#allocation3 + $0x17e0] sm:$0xff]
    %v985 = vld [vmem:[#allocation3 + $0x17e8] sm:$0xff]
    %v986 = vld [vmem:[#allocation3 + $0x17f0] sm:$0xff]
    %v987 = vld [vmem:[#allocation3 + $0x17f8] sm:$0xff]
    %v988 = vld [vmem:[#allocation3 + $0x1800] sm:$0xff]
    %v989 = vld [vmem:[#allocation3 + $0x1808] sm:$0xff]
    %v990 = vld [vmem:[#allocation3 + $0x1810] sm:$0xff]
    %v991 = vld [vmem:[#allocation3 + $0x1818] sm:$0xff]
    %v992 = vld [vmem:[#allocation3 + $0x1820] sm:$0xff]
    %v993 = vld [vmem:[#allocation3 + $0x1828] sm:$0xff]
    %v994 = vld [vmem:[#allocation3 + $0x1830] sm:$0xff]
    %v995 = vld [vmem:[#allocation3 + $0x1838] sm:$0xff]
    %v996 = vld [vmem:[#allocation3 + $0x1840] sm:$0xff]
    %v997 = vld [vmem:[#allocation3 + $0x1848] sm:$0xff]
    %v998 = vld [vmem:[#allocation3 + $0x1850] sm:$0xff]
    %v999 = vld [vmem:[#allocation3 + $0x1858] sm:$0xff]
    %v1000 = vld [vmem:[#allocation3 + $0x1860] sm:$0xff]
    %v1001 = vld [vmem:[#allocation3 + $0x1868] sm:$0xff]
    %v1002 = vld [vmem:[#allocation3 + $0x1870] sm:$0xff]
    %v1003 = vld [vmem:[#allocation3 + $0x1878] sm:$0xff]
    %v1004 = vld [vmem:[#allocation3 + $0x1880] sm:$0xff]
    %v1005 = vld [vmem:[#allocation3 + $0x1888] sm:$0xff]
    %v1006 = vld [vmem:[#allocation3 + $0x1890] sm:$0xff]
    %v1007 = vld [vmem:[#allocation3 + $0x1898] sm:$0xff]
    %v1008 = vld [vmem:[#allocation3 + $0x18a0] sm:$0xff]
    %v1009 = vld [vmem:[#allocation3 + $0x18a8] sm:$0xff]
    %v1010 = vld [vmem:[#allocation3 + $0x18b0] sm:$0xff]
    %v1011 = vld [vmem:[#allocation3 + $0x18b8] sm:$0xff]
    %v1012 = vld [vmem:[#allocation3 + $0x18c0] sm:$0xff]
    %v1013 = vld [vmem:[#allocation3 + $0x18c8] sm:$0xff]
    %v1014 = vld [vmem:[#allocation3 + $0x18d0] sm:$0xff]
    %v1015 = vld [vmem:[#allocation3 + $0x18d8] sm:$0xff]
    %v1016 = vld [vmem:[#allocation3 + $0x18e0] sm:$0xff]
    %v1017 = vld [vmem:[#allocation3 + $0x18e8] sm:$0xff]
    %v1018 = vld [vmem:[#allocation3 + $0x18f0] sm:$0xff]
    %v1019 = vld [vmem:[#allocation3 + $0x18f8] sm:$0xff]
    %v1020 = vld [vmem:[#allocation3 + $0x1900] sm:$0xff]
    %v1021 = vld [vmem:[#allocation3 + $0x1908] sm:$0xff]
    %v1022 = vld [vmem:[#allocation3 + $0x1910] sm:$0xff]
    %v1023 = vld [vmem:[#allocation3 + $0x1918] sm:$0xff]
    %v1024 = vld [vmem:[#allocation3 + $0x1920] sm:$0xff]
    %v1025 = vld [vmem:[#allocation3 + $0x1928] sm:$0xff]
    %v1026 = vld [vmem:[#allocation3 + $0x1930] sm:$0xff]
    %v1027 = vld [vmem:[#allocation3 + $0x1938] sm:$0xff]
    %v1028 = vld [vmem:[#allocation3 + $0x1940] sm:$0xff]
    %v1029 = vld [vmem:[#allocation3 + $0x1948] sm:$0xff]
    %v1030 = vld [vmem:[#allocation3 + $0x1950] sm:$0xff]
    %v1031 = vld [vmem:[#allocation3 + $0x1958] sm:$0xff]
    %v1032 = vld [vmem:[#allocation3 + $0x1960] sm:$0xff]
    %v1033 = vld [vmem:[#allocation3 + $0x1968] sm:$0xff]
    %v1034 = vld [vmem:[#allocation3 + $0x1970] sm:$0xff]
    %v1035 = vld [vmem:[#allocation3 + $0x1978] sm:$0xff]
    %v1036 = vld [vmem:[#allocation3 + $0x1980] sm:$0xff]
    %v1037 = vld [vmem:[#allocation3 + $0x1988] sm:$0xff]
    %v1038 = vld [vmem:[#allocation3 + $0x1990] sm:$0xff]
    %v1039 = vld [vmem:[#allocation3 + $0x1998] sm:$0xff]
    %v1040 = vld [vmem:[#allocation3 + $0x19a0] sm:$0xff]
    %v1041 = vld [vmem:[#allocation3 + $0x19a8] sm:$0xff]
    %v1042 = vld [vmem:[#allocation3 + $0x19b0] sm:$0xff]
    %v1043 = vld [vmem:[#allocation3 + $0x19b8] sm:$0xff]
    %v1044 = vld [vmem:[#allocation3 + $0x19c0] sm:$0xff]
    %v1045 = vld [vmem:[#allocation3 + $0x19c8] sm:$0xff]
    %v1046 = vld [vmem:[#allocation3 + $0x19d0] sm:$0xff]
    %v1047 = vld [vmem:[#allocation3 + $0x19d8] sm:$0xff]
    %v1048 = vld [vmem:[#allocation3 + $0x19e0] sm:$0xff]
    %v1049 = vld [vmem:[#allocation3 + $0x19e8] sm:$0xff]
    %v1050 = vld [vmem:[#allocation3 + $0x19f0] sm:$0xff]
    %v1051 = vld [vmem:[#allocation3 + $0x19f8] sm:$0xff]
    %v1052 = vld [vmem:[#allocation3 + $0x1a00] sm:$0xff]
    %v1053 = vld [vmem:[#allocation3 + $0x1a08] sm:$0xff]
    %v1054 = vld [vmem:[#allocation3 + $0x1a10] sm:$0xff]
    %v1055 = vld [vmem:[#allocation3 + $0x1a18] sm:$0xff]
    %v1056 = vld [vmem:[#allocation3 + $0x1a20] sm:$0xff]
    %v1057 = vld [vmem:[#allocation3 + $0x1a28] sm:$0xff]
    %v1058 = vld [vmem:[#allocation3 + $0x1a30] sm:$0xff]
    %v1059 = vld [vmem:[#allocation3 + $0x1a38] sm:$0xff]
    %v1060 = vld [vmem:[#allocation3 + $0x1a40] sm:$0xff]
    %v1061 = vld [vmem:[#allocation3 + $0x1a48] sm:$0xff]
    %v1062 = vld [vmem:[#allocation3 + $0x1a50] sm:$0xff]
    %v1063 = vld [vmem:[#allocation3 + $0x1a58] sm:$0xff]
    %v1064 = vld [vmem:[#allocation3 + $0x1a60] sm:$0xff]
    %v1065 = vld [vmem:[#allocation3 + $0x1a68] sm:$0xff]
    %v1066 = vld [vmem:[#allocation3 + $0x1a70] sm:$0xff]
    %v1067 = vld [vmem:[#allocation3 + $0x1a78] sm:$0xff]
    %v1068 = vld [vmem:[#allocation3 + $0x1a80] sm:$0xff]
    %v1069 = vld [vmem:[#allocation3 + $0x1a88] sm:$0xff]
    %v1070 = vld [vmem:[#allocation3 + $0x1a90] sm:$0xff]
    %v1071 = vld [vmem:[#allocation3 + $0x1a98] sm:$0xff]
    %v1072 = vld [vmem:[#allocation3 + $0x1aa0] sm:$0xff]
    %v1073 = vld [vmem:[#allocation3 + $0x1aa8] sm:$0xff]
    %v1074 = vld [vmem:[#allocation3 + $0x1ab0] sm:$0xff]
    %v1075 = vld [vmem:[#allocation3 + $0x1ab8] sm:$0xff]
    %v1076 = vld [vmem:[#allocation3 + $0x1ac0] sm:$0xff]
    %v1077 = vld [vmem:[#allocation3 + $0x1ac8] sm:$0xff]
    %v1078 = vld [vmem:[#allocation3 + $0x1ad0] sm:$0xff]
    %v1079 = vld [vmem:[#allocation3 + $0x1ad8] sm:$0xff]
    %v1080 = vld [vmem:[#allocation3 + $0x1ae0] sm:$0xff]
    %v1081 = vld [vmem:[#allocation3 + $0x1ae8] sm:$0xff]
    %v1082 = vld [vmem:[#allocation3 + $0x1af0] sm:$0xff]
    %v1083 = vld [vmem:[#allocation3 + $0x1af8] sm:$0xff]
    %v1084 = vld [vmem:[#allocation3 + $0x1b00] sm:$0xff]
    %v1085 = vld [vmem:[#allocation3 + $0x1b08] sm:$0xff]
    %v1086 = vld [vmem:[#allocation3 + $0x1b10] sm:$0xff]
    %v1087 = vld [vmem:[#allocation3 + $0x1b18] sm:$0xff]
    %v1088 = vld [vmem:[#allocation3 + $0x1b20] sm:$0xff]
    %v1089 = vld [vmem:[#allocation3 + $0x1b28] sm:$0xff]
    %v1090 = vld [vmem:[#allocation3 + $0x1b30] sm:$0xff]
    %v1091 = vld [vmem:[#allocation3 + $0x1b38] sm:$0xff]
    %v1092 = vld [vmem:[#allocation3 + $0x1b40] sm:$0xff]
    %v1093 = vld [vmem:[#allocation3 + $0x1b48] sm:$0xff]
    %v1094 = vld [vmem:[#allocation3 + $0x1b50] sm:$0xff]
    %v1095 = vld [vmem:[#allocation3 + $0x1b58] sm:$0xff]
    %v1096 = vld [vmem:[#allocation3 + $0x1b60] sm:$0xff]
    %v1097 = vld [vmem:[#allocation3 + $0x1b68] sm:$0xff]
    %v1098 = vld [vmem:[#allocation3 + $0x1b70] sm:$0xff]
    %v1099 = vld [vmem:[#allocation3 + $0x1b78] sm:$0xff]
    %v1100 = vld [vmem:[#allocation3 + $0x1b80] sm:$0xff]
    %v1101 = vld [vmem:[#allocation3 + $0x1b88] sm:$0xff]
    %v1102 = vld [vmem:[#allocation3 + $0x1b90] sm:$0xff]
    %v1103 = vld [vmem:[#allocation3 + $0x1b98] sm:$0xff]
    %v1104 = vld [vmem:[#allocation3 + $0x1ba0] sm:$0xff]
    %v1105 = vld [vmem:[#allocation3 + $0x1ba8] sm:$0xff]
    %v1106 = vld [vmem:[#allocation3 + $0x1bb0] sm:$0xff]
    %v1107 = vld [vmem:[#allocation3 + $0x1bb8] sm:$0xff]
    %v1108 = vld [vmem:[#allocation3 + $0x1bc0] sm:$0xff]
    %v1109 = vld [vmem:[#allocation3 + $0x1bc8] sm:$0xff]
    %v1110 = vld [vmem:[#allocation3 + $0x1bd0] sm:$0xff]
    %v1111 = vld [vmem:[#allocation3 + $0x1bd8] sm:$0xff]
    %v1112 = vld [vmem:[#allocation3 + $0x1be0] sm:$0xff]
    %v1113 = vld [vmem:[#allocation3 + $0x1be8] sm:$0xff]
    %v1114 = vld [vmem:[#allocation3 + $0x1bf0] sm:$0xff]
    %v1115 = vld [vmem:[#allocation3 + $0x1bf8] sm:$0xff]
    %v1116 = vld [vmem:[#allocation3 + $0x1c00] sm:$0xff]
    %v1117 = vld [vmem:[#allocation3 + $0x1c08] sm:$0xff]
    %v1118 = vld [vmem:[#allocation3 + $0x1c10] sm:$0xff]
    %v1119 = vld [vmem:[#allocation3 + $0x1c18] sm:$0xff]
    %v1120 = vld [vmem:[#allocation3 + $0x1c20] sm:$0xff]
    %v1121 = vld [vmem:[#allocation3 + $0x1c28] sm:$0xff]
    %v1122 = vld [vmem:[#allocation3 + $0x1c30] sm:$0xff]
    %v1123 = vld [vmem:[#allocation3 + $0x1c38] sm:$0xff]
    %v1124 = vld [vmem:[#allocation3 + $0x1c40] sm:$0xff]
    %v1125 = vld [vmem:[#allocation3 + $0x1c48] sm:$0xff]
    %v1126 = vld [vmem:[#allocation3 + $0x1c50] sm:$0xff]
    %v1127 = vld [vmem:[#allocation3 + $0x1c58] sm:$0xff]
    %v1128 = vld [vmem:[#allocation3 + $0x1c60] sm:$0xff]
    %v1129 = vld [vmem:[#allocation3 + $0x1c68] sm:$0xff]
    %v1130 = vld [vmem:[#allocation3 + $0x1c70] sm:$0xff]
    %v1131 = vld [vmem:[#allocation3 + $0x1c78] sm:$0xff]
    %v1132 = vld [vmem:[#allocation3 + $0x1c80] sm:$0xff]
    %v1133 = vld [vmem:[#allocation3 + $0x1c88] sm:$0xff]
    %v1134 = vld [vmem:[#allocation3 + $0x1c90] sm:$0xff]
    %v1135 = vld [vmem:[#allocation3 + $0x1c98] sm:$0xff]
    %v1136 = vld [vmem:[#allocation3 + $0x1ca0] sm:$0xff]
    %v1137 = vld [vmem:[#allocation3 + $0x1ca8] sm:$0xff]
    %v1138 = vld [vmem:[#allocation3 + $0x1cb0] sm:$0xff]
    %v1139 = vld [vmem:[#allocation3 + $0x1cb8] sm:$0xff]
    %v1140 = vld [vmem:[#allocation3 + $0x1cc0] sm:$0xff]
    %v1141 = vld [vmem:[#allocation3 + $0x1cc8] sm:$0xff]
    %v1142 = vld [vmem:[#allocation3 + $0x1cd0] sm:$0xff]
    %v1143 = vld [vmem:[#allocation3 + $0x1cd8] sm:$0xff]
    %v1144 = vld [vmem:[#allocation3 + $0x1ce0] sm:$0xff]
    %v1145 = vld [vmem:[#allocation3 + $0x1ce8] sm:$0xff]
    %v1146 = vld [vmem:[#allocation3 + $0x1cf0] sm:$0xff]
    %v1147 = vld [vmem:[#allocation3 + $0x1cf8] sm:$0xff]
    %v1148 = vld [vmem:[#allocation3 + $0x1d00] sm:$0xff]
    %v1149 = vld [vmem:[#allocation3 + $0x1d08] sm:$0xff]
    %v1150 = vld [vmem:[#allocation3 + $0x1d10] sm:$0xff]
    %v1151 = vld [vmem:[#allocation3 + $0x1d18] sm:$0xff]
    %v1152 = vld [vmem:[#allocation3 + $0x1d20] sm:$0xff]
    %v1153 = vld [vmem:[#allocation3 + $0x1d28] sm:$0xff]
    %v1154 = vld [vmem:[#allocation3 + $0x1d30] sm:$0xff]
    %v1155 = vld [vmem:[#allocation3 + $0x1d38] sm:$0xff]
    %v1156 = vld [vmem:[#allocation3 + $0x1d40] sm:$0xff]
    %v1157 = vld [vmem:[#allocation3 + $0x1d48] sm:$0xff]
    %v1158 = vld [vmem:[#allocation3 + $0x1d50] sm:$0xff]
    %v1159 = vld [vmem:[#allocation3 + $0x1d58] sm:$0xff]
    %v1160 = vld [vmem:[#allocation3 + $0x1d60] sm:$0xff]
    %v1161 = vld [vmem:[#allocation3 + $0x1d68] sm:$0xff]
    %v1162 = vld [vmem:[#allocation3 + $0x1d70] sm:$0xff]
    %v1163 = vld [vmem:[#allocation3 + $0x1d78] sm:$0xff]
    %v1164 = vld [vmem:[#allocation3 + $0x1d80] sm:$0xff]
    %v1165 = vld [vmem:[#allocation3 + $0x1d88] sm:$0xff]
    %v1166 = vld [vmem:[#allocation3 + $0x1d90] sm:$0xff]
    %v1167 = vld [vmem:[#allocation3 + $0x1d98] sm:$0xff]
    %v1168 = vld [vmem:[#allocation3 + $0x1da0] sm:$0xff]
    %v1169 = vld [vmem:[#allocation3 + $0x1da8] sm:$0xff]
    %v1170 = vld [vmem:[#allocation3 + $0x1db0] sm:$0xff]
    %v1171 = vld [vmem:[#allocation3 + $0x1db8] sm:$0xff]
    %v1172 = vld [vmem:[#allocation3 + $0x1dc0] sm:$0xff]
    %v1173 = vld [vmem:[#allocation3 + $0x1dc8] sm:$0xff]
    %v1174 = vld [vmem:[#allocation3 + $0x1dd0] sm:$0xff]
    %v1175 = vld [vmem:[#allocation3 + $0x1dd8] sm:$0xff]
    %v1176 = vld [vmem:[#allocation3 + $0x1de0] sm:$0xff]
    %v1177 = vld [vmem:[#allocation3 + $0x1de8] sm:$0xff]
    %v1178 = vld [vmem:[#allocation3 + $0x1df0] sm:$0xff]
    %v1179 = vld [vmem:[#allocation3 + $0x1df8] sm:$0xff]
    %v1180 = vld [vmem:[#allocation3 + $0x1e00] sm:$0xff]
    %v1181 = vld [vmem:[#allocation3 + $0x1e08] sm:$0xff]
    %v1182 = vld [vmem:[#allocation3 + $0x1e10] sm:$0xff]
    %v1183 = vld [vmem:[#allocation3 + $0x1e18] sm:$0xff]
    %v1184 = vld [vmem:[#allocation3 + $0x1e20] sm:$0xff]
    %v1185 = vld [vmem:[#allocation3 + $0x1e28] sm:$0xff]
    %v1186 = vld [vmem:[#allocation3 + $0x1e30] sm:$0xff]
    %v1187 = vld [vmem:[#allocation3 + $0x1e38] sm:$0xff]
    %v1188 = vld [vmem:[#allocation3 + $0x1e40] sm:$0xff]
    %v1189 = vld [vmem:[#allocation3 + $0x1e48] sm:$0xff]
    %v1190 = vld [vmem:[#allocation3 + $0x1e50] sm:$0xff]
    %v1191 = vld [vmem:[#allocation3 + $0x1e58] sm:$0xff]
    %v1192 = vld [vmem:[#allocation3 + $0x1e60] sm:$0xff]
    %v1193 = vld [vmem:[#allocation3 + $0x1e68] sm:$0xff]
    %v1194 = vld [vmem:[#allocation3 + $0x1e70] sm:$0xff]
    %v1195 = vld [vmem:[#allocation3 + $0x1e78] sm:$0xff]
    %v1196 = vld [vmem:[#allocation3 + $0x1e80] sm:$0xff]
    %v1197 = vld [vmem:[#allocation3 + $0x1e88] sm:$0xff]
    %v1198 = vld [vmem:[#allocation3 + $0x1e90] sm:$0xff]
    %v1199 = vld [vmem:[#allocation3 + $0x1e98] sm:$0xff]
    %v1200 = vld [vmem:[#allocation3 + $0x1ea0] sm:$0xff]
    %v1201 = vld [vmem:[#allocation3 + $0x1ea8] sm:$0xff]
    %v1202 = vld [vmem:[#allocation3 + $0x1eb0] sm:$0xff]
    %v1203 = vld [vmem:[#allocation3 + $0x1eb8] sm:$0xff]
    %v1204 = vld [vmem:[#allocation3 + $0x1ec0] sm:$0xff]
    %v1205 = vld [vmem:[#allocation3 + $0x1ec8] sm:$0xff]
    %v1206 = vld [vmem:[#allocation3 + $0x1ed0] sm:$0xff]
    %v1207 = vld [vmem:[#allocation3 + $0x1ed8] sm:$0xff]
    %v1208 = vld [vmem:[#allocation3 + $0x1ee0] sm:$0xff]
    %v1209 = vld [vmem:[#allocation3 + $0x1ee8] sm:$0xff]
    %v1210 = vld [vmem:[#allocation3 + $0x1ef0] sm:$0xff]
    %v1211 = vld [vmem:[#allocation3 + $0x1ef8] sm:$0xff]
    %v1212 = vld [vmem:[#allocation3 + $0x1f00] sm:$0xff]
    %v1213 = vld [vmem:[#allocation3 + $0x1f08] sm:$0xff]
    %v1214 = vld [vmem:[#allocation3 + $0x1f10] sm:$0xff]
    %v1215 = vld [vmem:[#allocation3 + $0x1f18] sm:$0xff]
    %v1216 = vld [vmem:[#allocation3 + $0x1f20] sm:$0xff]
    %v1217 = vld [vmem:[#allocation3 + $0x1f28] sm:$0xff]
    %v1218 = vld [vmem:[#allocation3 + $0x1f30] sm:$0xff]
    %v1219 = vld [vmem:[#allocation3 + $0x1f38] sm:$0xff]
    %v1220 = vld [vmem:[#allocation3 + $0x1f40] sm:$0xff]
    %v1221 = vld [vmem:[#allocation3 + $0x1f48] sm:$0xff]
    %v1222 = vld [vmem:[#allocation3 + $0x1f50] sm:$0xff]
    %v1223 = vld [vmem:[#allocation3 + $0x1f58] sm:$0xff]
    %v1224 = vld [vmem:[#allocation3 + $0x1f60] sm:$0xff]
    %v1225 = vld [vmem:[#allocation3 + $0x1f68] sm:$0xff]
    %v1226 = vld [vmem:[#allocation3 + $0x1f70] sm:$0xff]
    %v1227 = vld [vmem:[#allocation3 + $0x1f78] sm:$0xff]
    %v1228 = vld [vmem:[#allocation3 + $0x1f80] sm:$0xff]
    %v1229 = vld [vmem:[#allocation3 + $0x1f88] sm:$0xff]
    %v1230 = vld [vmem:[#allocation3 + $0x1f90] sm:$0xff]
    %v1231 = vld [vmem:[#allocation3 + $0x1f98] sm:$0xff]
    %v1232 = vld [vmem:[#allocation3 + $0x1fa0] sm:$0xff]
    %v1233 = vld [vmem:[#allocation3 + $0x1fa8] sm:$0xff]
    %v1234 = vld [vmem:[#allocation3 + $0x1fb0] sm:$0xff]
    %v1235 = vld [vmem:[#allocation3 + $0x1fb8] sm:$0xff]
    %v1236 = vld [vmem:[#allocation3 + $0x1fc0] sm:$0xff]
    %v1237 = vld [vmem:[#allocation3 + $0x1fc8] sm:$0xff]
    %v1238 = vld [vmem:[#allocation3 + $0x1fd0] sm:$0xff]
    %v1239 = vld [vmem:[#allocation3 + $0x1fd8] sm:$0xff]
    %v1240 = vld [vmem:[#allocation3 + $0x1fe0] sm:$0xff]
    %v1241 = vld [vmem:[#allocation3 + $0x1fe8] sm:$0xff]
    %v1242 = vld [vmem:[#allocation3 + $0x1ff0] sm:$0xff]
    %v1243 = vld [vmem:[#allocation3 + $0x1ff8] sm:$0xff]
    %v1244 = vld [vmem:[#allocation5] sm:$0xff]
    %v1246 = vlaneseq
    %v1247 = vshrl.u32 %v1246, 7
    %v1248 = vsub.s32 0, %v1247
    %v1249 = vrot.slane %v1244, %v1248
    %v1250 = vlaneseq
    %v1251 = vshrl.u32 %v1250, 7
    %v1252 = vsub.s32 1, %v1251
    %v1253 = vrot.slane %v1244, %v1252
    %v1254 = vlaneseq
    %v1255 = vshrl.u32 %v1254, 7
    %v1256 = vsub.s32 2, %v1255
    %v1257 = vrot.slane %v1244, %v1256
    %v1258 = vlaneseq
    %v1259 = vshrl.u32 %v1258, 7
    %v1260 = vsub.s32 3, %v1259
    %v1261 = vrot.slane %v1244, %v1260
    %v1262 = vlaneseq
    %v1263 = vshrl.u32 %v1262, 7
    %v1264 = vsub.s32 4, %v1263
    %v1265 = vrot.slane %v1244, %v1264
    %v1266 = vlaneseq
    %v1267 = vshrl.u32 %v1266, 7
    %v1268 = vsub.s32 5, %v1267
    %v1269 = vrot.slane %v1244, %v1268
    %v1270 = vlaneseq
    %v1271 = vshrl.u32 %v1270, 7
    %v1272 = vsub.s32 6, %v1271
    %v1273 = vrot.slane %v1244, %v1272
    %v1274 = vlaneseq
    %v1275 = vshrl.u32 %v1274, 7
    %v1276 = vsub.s32 7, %v1275
    %v1277 = vrot.slane %v1244, %v1276
    %v2310 = vunpack.c.l.b16 %v220
    %v2311 = vunpack.c.h.b16 %v220
    %v2312 = vunpack.c.l.b16 %v221
    %v2313 = vunpack.c.h.b16 %v221
    %v2314 = vunpack.c.l.b16 %v222
    %v2315 = vunpack.c.h.b16 %v222
    %v2316 = vunpack.c.l.b16 %v223
    %v2317 = vunpack.c.h.b16 %v223
    %v2318 = vunpack.c.l.b16 %v224
    %v2319 = vunpack.c.h.b16 %v224
    %v2320 = vunpack.c.l.b16 %v225
    %v2321 = vunpack.c.h.b16 %v225
    %v2322 = vunpack.c.l.b16 %v226
    %v2323 = vunpack.c.h.b16 %v226
    %v2324 = vunpack.c.l.b16 %v227
    %v2325 = vunpack.c.h.b16 %v227
    %v2326 = vunpack.c.l.b16 %v228
    %v2327 = vunpack.c.h.b16 %v228
    %v2328 = vunpack.c.l.b16 %v229
    %v2329 = vunpack.c.h.b16 %v229
    %v2330 = vunpack.c.l.b16 %v230
    %v2331 = vunpack.c.h.b16 %v230
    %v2332 = vunpack.c.l.b16 %v231
    %v2333 = vunpack.c.h.b16 %v231
    %v2334 = vunpack.c.l.b16 %v232
    %v2335 = vunpack.c.h.b16 %v232
    %v2336 = vunpack.c.l.b16 %v233
    %v2337 = vunpack.c.h.b16 %v233
    %v2338 = vunpack.c.l.b16 %v234
    %v2339 = vunpack.c.h.b16 %v234
    %v2340 = vunpack.c.l.b16 %v235
    %v2341 = vunpack.c.h.b16 %v235
    %v2342 = vunpack.c.l.b16 %v236
    %v2343 = vunpack.c.h.b16 %v236
    %v2344 = vunpack.c.l.b16 %v237
    %v2345 = vunpack.c.h.b16 %v237
    %v2346 = vunpack.c.l.b16 %v238
    %v2347 = vunpack.c.h.b16 %v238
    %v2348 = vunpack.c.l.b16 %v239
    %v2349 = vunpack.c.h.b16 %v239
    %v2350 = vunpack.c.l.b16 %v240
    %v2351 = vunpack.c.h.b16 %v240
    %v2352 = vunpack.c.l.b16 %v241
    %v2353 = vunpack.c.h.b16 %v241
    %v2354 = vunpack.c.l.b16 %v242
    %v2355 = vunpack.c.h.b16 %v242
    %v2356 = vunpack.c.l.b16 %v243
    %v2357 = vunpack.c.h.b16 %v243
    %v2358 = vunpack.c.l.b16 %v244
    %v2359 = vunpack.c.h.b16 %v244
    %v2360 = vunpack.c.l.b16 %v245
    %v2361 = vunpack.c.h.b16 %v245
    %v2362 = vunpack.c.l.b16 %v246
    %v2363 = vunpack.c.h.b16 %v246
    %v2364 = vunpack.c.l.b16 %v247
    %v2365 = vunpack.c.h.b16 %v247
    %v2366 = vunpack.c.l.b16 %v248
    %v2367 = vunpack.c.h.b16 %v248
    %v2368 = vunpack.c.l.b16 %v249
    %v2369 = vunpack.c.h.b16 %v249
    %v2370 = vunpack.c.l.b16 %v250
    %v2371 = vunpack.c.h.b16 %v250
    %v2372 = vunpack.c.l.b16 %v251
    %v2373 = vunpack.c.h.b16 %v251
    %v2374 = vunpack.c.l.b16 %v252
    %v2375 = vunpack.c.h.b16 %v252
    %v2376 = vunpack.c.l.b16 %v253
    %v2377 = vunpack.c.h.b16 %v253
    %v2378 = vunpack.c.l.b16 %v254
    %v2379 = vunpack.c.h.b16 %v254
    %v2380 = vunpack.c.l.b16 %v255
    %v2381 = vunpack.c.h.b16 %v255
    %v2382 = vunpack.c.l.b16 %v256
    %v2383 = vunpack.c.h.b16 %v256
    %v2384 = vunpack.c.l.b16 %v257
    %v2385 = vunpack.c.h.b16 %v257
    %v2386 = vunpack.c.l.b16 %v258
    %v2387 = vunpack.c.h.b16 %v258
    %v2388 = vunpack.c.l.b16 %v259
    %v2389 = vunpack.c.h.b16 %v259
    %v2390 = vunpack.c.l.b16 %v260
    %v2391 = vunpack.c.h.b16 %v260
    %v2392 = vunpack.c.l.b16 %v261
    %v2393 = vunpack.c.h.b16 %v261
    %v2394 = vunpack.c.l.b16 %v262
    %v2395 = vunpack.c.h.b16 %v262
    %v2396 = vunpack.c.l.b16 %v263
    %v2397 = vunpack.c.h.b16 %v263
    %v2398 = vunpack.c.l.b16 %v264
    %v2399 = vunpack.c.h.b16 %v264
    %v2400 = vunpack.c.l.b16 %v265
    %v2401 = vunpack.c.h.b16 %v265
    %v2402 = vunpack.c.l.b16 %v266
    %v2403 = vunpack.c.h.b16 %v266
    %v2404 = vunpack.c.l.b16 %v267
    %v2405 = vunpack.c.h.b16 %v267
    %v2406 = vunpack.c.l.b16 %v268
    %v2407 = vunpack.c.h.b16 %v268
    %v2408 = vunpack.c.l.b16 %v269
    %v2409 = vunpack.c.h.b16 %v269
    %v2410 = vunpack.c.l.b16 %v270
    %v2411 = vunpack.c.h.b16 %v270
    %v2412 = vunpack.c.l.b16 %v271
    %v2413 = vunpack.c.h.b16 %v271
    %v2414 = vunpack.c.l.b16 %v272
    %v2415 = vunpack.c.h.b16 %v272
    %v2416 = vunpack.c.l.b16 %v273
    %v2417 = vunpack.c.h.b16 %v273
    %v2418 = vunpack.c.l.b16 %v274
    %v2419 = vunpack.c.h.b16 %v274
    %v2420 = vunpack.c.l.b16 %v275
    %v2421 = vunpack.c.h.b16 %v275
    %v2422 = vunpack.c.l.b16 %v276
    %v2423 = vunpack.c.h.b16 %v276
    %v2424 = vunpack.c.l.b16 %v277
    %v2425 = vunpack.c.h.b16 %v277
    %v2426 = vunpack.c.l.b16 %v278
    %v2427 = vunpack.c.h.b16 %v278
    %v2428 = vunpack.c.l.b16 %v279
    %v2429 = vunpack.c.h.b16 %v279
    %v2430 = vunpack.c.l.b16 %v280
    %v2431 = vunpack.c.h.b16 %v280
    %v2432 = vunpack.c.l.b16 %v281
    %v2433 = vunpack.c.h.b16 %v281
    %v2434 = vunpack.c.l.b16 %v282
    %v2435 = vunpack.c.h.b16 %v282
    %v2436 = vunpack.c.l.b16 %v283
    %v2437 = vunpack.c.h.b16 %v283
    %v2438 = vunpack.c.l.b16 %v284
    %v2439 = vunpack.c.h.b16 %v284
    %v2440 = vunpack.c.l.b16 %v285
    %v2441 = vunpack.c.h.b16 %v285
    %v2442 = vunpack.c.l.b16 %v286
    %v2443 = vunpack.c.h.b16 %v286
    %v2444 = vunpack.c.l.b16 %v287
    %v2445 = vunpack.c.h.b16 %v287
    %v2446 = vunpack.c.l.b16 %v288
    %v2447 = vunpack.c.h.b16 %v288
    %v2448 = vunpack.c.l.b16 %v289
    %v2449 = vunpack.c.h.b16 %v289
    %v2450 = vunpack.c.l.b16 %v290
    %v2451 = vunpack.c.h.b16 %v290
    %v2452 = vunpack.c.l.b16 %v291
    %v2453 = vunpack.c.h.b16 %v291
    %v2454 = vunpack.c.l.b16 %v292
    %v2455 = vunpack.c.h.b16 %v292
    %v2456 = vunpack.c.l.b16 %v293
    %v2457 = vunpack.c.h.b16 %v293
    %v2458 = vunpack.c.l.b16 %v294
    %v2459 = vunpack.c.h.b16 %v294
    %v2460 = vunpack.c.l.b16 %v295
    %v2461 = vunpack.c.h.b16 %v295
    %v2462 = vunpack.c.l.b16 %v296
    %v2463 = vunpack.c.h.b16 %v296
    %v2464 = vunpack.c.l.b16 %v297
    %v2465 = vunpack.c.h.b16 %v297
    %v2466 = vunpack.c.l.b16 %v298
    %v2467 = vunpack.c.h.b16 %v298
    %v2468 = vunpack.c.l.b16 %v299
    %v2469 = vunpack.c.h.b16 %v299
    %v2470 = vunpack.c.l.b16 %v300
    %v2471 = vunpack.c.h.b16 %v300
    %v2472 = vunpack.c.l.b16 %v301
    %v2473 = vunpack.c.h.b16 %v301
    %v2474 = vunpack.c.l.b16 %v302
    %v2475 = vunpack.c.h.b16 %v302
    %v2476 = vunpack.c.l.b16 %v303
    %v2477 = vunpack.c.h.b16 %v303
    %v2478 = vunpack.c.l.b16 %v304
    %v2479 = vunpack.c.h.b16 %v304
    %v2480 = vunpack.c.l.b16 %v305
    %v2481 = vunpack.c.h.b16 %v305
    %v2482 = vunpack.c.l.b16 %v306
    %v2483 = vunpack.c.h.b16 %v306
    %v2484 = vunpack.c.l.b16 %v307
    %v2485 = vunpack.c.h.b16 %v307
    %v2486 = vunpack.c.l.b16 %v308
    %v2487 = vunpack.c.h.b16 %v308
    %v2488 = vunpack.c.l.b16 %v309
    %v2489 = vunpack.c.h.b16 %v309
    %v2490 = vunpack.c.l.b16 %v310
    %v2491 = vunpack.c.h.b16 %v310
    %v2492 = vunpack.c.l.b16 %v311
    %v2493 = vunpack.c.h.b16 %v311
    %v2494 = vunpack.c.l.b16 %v312
    %v2495 = vunpack.c.h.b16 %v312
    %v2496 = vunpack.c.l.b16 %v313
    %v2497 = vunpack.c.h.b16 %v313
    %v2498 = vunpack.c.l.b16 %v314
    %v2499 = vunpack.c.h.b16 %v314
    %v2500 = vunpack.c.l.b16 %v315
    %v2501 = vunpack.c.h.b16 %v315
    %v2502 = vunpack.c.l.b16 %v316
    %v2503 = vunpack.c.h.b16 %v316
    %v2504 = vunpack.c.l.b16 %v317
    %v2505 = vunpack.c.h.b16 %v317
    %v2506 = vunpack.c.l.b16 %v318
    %v2507 = vunpack.c.h.b16 %v318
    %v2508 = vunpack.c.l.b16 %v319
    %v2509 = vunpack.c.h.b16 %v319
    %v2510 = vunpack.c.l.b16 %v320
    %v2511 = vunpack.c.h.b16 %v320
    %v2512 = vunpack.c.l.b16 %v321
    %v2513 = vunpack.c.h.b16 %v321
    %v2514 = vunpack.c.l.b16 %v322
    %v2515 = vunpack.c.h.b16 %v322
    %v2516 = vunpack.c.l.b16 %v323
    %v2517 = vunpack.c.h.b16 %v323
    %v2518 = vunpack.c.l.b16 %v324
    %v2519 = vunpack.c.h.b16 %v324
    %v2520 = vunpack.c.l.b16 %v325
    %v2521 = vunpack.c.h.b16 %v325
    %v2522 = vunpack.c.l.b16 %v326
    %v2523 = vunpack.c.h.b16 %v326
    %v2524 = vunpack.c.l.b16 %v327
    %v2525 = vunpack.c.h.b16 %v327
    %v2526 = vunpack.c.l.b16 %v328
    %v2527 = vunpack.c.h.b16 %v328
    %v2528 = vunpack.c.l.b16 %v329
    %v2529 = vunpack.c.h.b16 %v329
    %v2530 = vunpack.c.l.b16 %v330
    %v2531 = vunpack.c.h.b16 %v330
    %v2532 = vunpack.c.l.b16 %v331
    %v2533 = vunpack.c.h.b16 %v331
    %v2534 = vunpack.c.l.b16 %v332
    %v2535 = vunpack.c.h.b16 %v332
    %v2536 = vunpack.c.l.b16 %v333
    %v2537 = vunpack.c.h.b16 %v333
    %v2538 = vunpack.c.l.b16 %v334
    %v2539 = vunpack.c.h.b16 %v334
    %v2540 = vunpack.c.l.b16 %v335
    %v2541 = vunpack.c.h.b16 %v335
    %v2542 = vunpack.c.l.b16 %v336
    %v2543 = vunpack.c.h.b16 %v336
    %v2544 = vunpack.c.l.b16 %v337
    %v2545 = vunpack.c.h.b16 %v337
    %v2546 = vunpack.c.l.b16 %v338
    %v2547 = vunpack.c.h.b16 %v338
    %v2548 = vunpack.c.l.b16 %v339
    %v2549 = vunpack.c.h.b16 %v339
    %v2550 = vunpack.c.l.b16 %v340
    %v2551 = vunpack.c.h.b16 %v340
    %v2552 = vunpack.c.l.b16 %v341
    %v2553 = vunpack.c.h.b16 %v341
    %v2554 = vunpack.c.l.b16 %v342
    %v2555 = vunpack.c.h.b16 %v342
    %v2556 = vunpack.c.l.b16 %v343
    %v2557 = vunpack.c.h.b16 %v343
    %v2558 = vunpack.c.l.b16 %v344
    %v2559 = vunpack.c.h.b16 %v344
    %v2560 = vunpack.c.l.b16 %v345
    %v2561 = vunpack.c.h.b16 %v345
    %v2562 = vunpack.c.l.b16 %v346
    %v2563 = vunpack.c.h.b16 %v346
    %v2564 = vunpack.c.l.b16 %v347
    %v2565 = vunpack.c.h.b16 %v347
    %v2566 = vunpack.c.l.b16 %v348
    %v2567 = vunpack.c.h.b16 %v348
    %v2568 = vunpack.c.l.b16 %v349
    %v2569 = vunpack.c.h.b16 %v349
    %v2570 = vunpack.c.l.b16 %v350
    %v2571 = vunpack.c.h.b16 %v350
    %v2572 = vunpack.c.l.b16 %v351
    %v2573 = vunpack.c.h.b16 %v351
    %v2574 = vunpack.c.l.b16 %v352
    %v2575 = vunpack.c.h.b16 %v352
    %v2576 = vunpack.c.l.b16 %v353
    %v2577 = vunpack.c.h.b16 %v353
    %v2578 = vunpack.c.l.b16 %v354
    %v2579 = vunpack.c.h.b16 %v354
    %v2580 = vunpack.c.l.b16 %v355
    %v2581 = vunpack.c.h.b16 %v355
    %v2582 = vunpack.c.l.b16 %v356
    %v2583 = vunpack.c.h.b16 %v356
    %v2584 = vunpack.c.l.b16 %v357
    %v2585 = vunpack.c.h.b16 %v357
    %v2586 = vunpack.c.l.b16 %v358
    %v2587 = vunpack.c.h.b16 %v358
    %v2588 = vunpack.c.l.b16 %v359
    %v2589 = vunpack.c.h.b16 %v359
    %v2590 = vunpack.c.l.b16 %v360
    %v2591 = vunpack.c.h.b16 %v360
    %v2592 = vunpack.c.l.b16 %v361
    %v2593 = vunpack.c.h.b16 %v361
    %v2594 = vunpack.c.l.b16 %v362
    %v2595 = vunpack.c.h.b16 %v362
    %v2596 = vunpack.c.l.b16 %v363
    %v2597 = vunpack.c.h.b16 %v363
    %v2598 = vunpack.c.l.b16 %v364
    %v2599 = vunpack.c.h.b16 %v364
    %v2600 = vunpack.c.l.b16 %v365
    %v2601 = vunpack.c.h.b16 %v365
    %v2602 = vunpack.c.l.b16 %v366
    %v2603 = vunpack.c.h.b16 %v366
    %v2604 = vunpack.c.l.b16 %v367
    %v2605 = vunpack.c.h.b16 %v367
    %v2606 = vunpack.c.l.b16 %v368
    %v2607 = vunpack.c.h.b16 %v368
    %v2608 = vunpack.c.l.b16 %v369
    %v2609 = vunpack.c.h.b16 %v369
    %v2610 = vunpack.c.l.b16 %v370
    %v2611 = vunpack.c.h.b16 %v370
    %v2612 = vunpack.c.l.b16 %v371
    %v2613 = vunpack.c.h.b16 %v371
    %v2614 = vunpack.c.l.b16 %v372
    %v2615 = vunpack.c.h.b16 %v372
    %v2616 = vunpack.c.l.b16 %v373
    %v2617 = vunpack.c.h.b16 %v373
    %v2618 = vunpack.c.l.b16 %v374
    %v2619 = vunpack.c.h.b16 %v374
    %v2620 = vunpack.c.l.b16 %v375
    %v2621 = vunpack.c.h.b16 %v375
    %v2622 = vunpack.c.l.b16 %v376
    %v2623 = vunpack.c.h.b16 %v376
    %v2624 = vunpack.c.l.b16 %v377
    %v2625 = vunpack.c.h.b16 %v377
    %v2626 = vunpack.c.l.b16 %v378
    %v2627 = vunpack.c.h.b16 %v378
    %v2628 = vunpack.c.l.b16 %v379
    %v2629 = vunpack.c.h.b16 %v379
    %v2630 = vunpack.c.l.b16 %v380
    %v2631 = vunpack.c.h.b16 %v380
    %v2632 = vunpack.c.l.b16 %v381
    %v2633 = vunpack.c.h.b16 %v381
    %v2634 = vunpack.c.l.b16 %v382
    %v2635 = vunpack.c.h.b16 %v382
    %v2636 = vunpack.c.l.b16 %v383
    %v2637 = vunpack.c.h.b16 %v383
    %v2638 = vunpack.c.l.b16 %v384
    %v2639 = vunpack.c.h.b16 %v384
    %v2640 = vunpack.c.l.b16 %v385
    %v2641 = vunpack.c.h.b16 %v385
    %v2642 = vunpack.c.l.b16 %v386
    %v2643 = vunpack.c.h.b16 %v386
    %v2644 = vunpack.c.l.b16 %v387
    %v2645 = vunpack.c.h.b16 %v387
    %v2646 = vunpack.c.l.b16 %v388
    %v2647 = vunpack.c.h.b16 %v388
    %v2648 = vunpack.c.l.b16 %v389
    %v2649 = vunpack.c.h.b16 %v389
    %v2650 = vunpack.c.l.b16 %v390
    %v2651 = vunpack.c.h.b16 %v390
    %v2652 = vunpack.c.l.b16 %v391
    %v2653 = vunpack.c.h.b16 %v391
    %v2654 = vunpack.c.l.b16 %v392
    %v2655 = vunpack.c.h.b16 %v392
    %v2656 = vunpack.c.l.b16 %v393
    %v2657 = vunpack.c.h.b16 %v393
    %v2658 = vunpack.c.l.b16 %v394
    %v2659 = vunpack.c.h.b16 %v394
    %v2660 = vunpack.c.l.b16 %v395
    %v2661 = vunpack.c.h.b16 %v395
    %v2662 = vunpack.c.l.b16 %v396
    %v2663 = vunpack.c.h.b16 %v396
    %v2664 = vunpack.c.l.b16 %v397
    %v2665 = vunpack.c.h.b16 %v397
    %v2666 = vunpack.c.l.b16 %v398
    %v2667 = vunpack.c.h.b16 %v398
    %v2668 = vunpack.c.l.b16 %v399
    %v2669 = vunpack.c.h.b16 %v399
    %v2670 = vunpack.c.l.b16 %v400
    %v2671 = vunpack.c.h.b16 %v400
    %v2672 = vunpack.c.l.b16 %v401
    %v2673 = vunpack.c.h.b16 %v401
    %v2674 = vunpack.c.l.b16 %v402
    %v2675 = vunpack.c.h.b16 %v402
    %v2676 = vunpack.c.l.b16 %v403
    %v2677 = vunpack.c.h.b16 %v403
    %v2678 = vunpack.c.l.b16 %v404
    %v2679 = vunpack.c.h.b16 %v404
    %v2680 = vunpack.c.l.b16 %v405
    %v2681 = vunpack.c.h.b16 %v405
    %v2682 = vunpack.c.l.b16 %v406
    %v2683 = vunpack.c.h.b16 %v406
    %v2684 = vunpack.c.l.b16 %v407
    %v2685 = vunpack.c.h.b16 %v407
    %v2686 = vunpack.c.l.b16 %v408
    %v2687 = vunpack.c.h.b16 %v408
    %v2688 = vunpack.c.l.b16 %v409
    %v2689 = vunpack.c.h.b16 %v409
    %v2690 = vunpack.c.l.b16 %v410
    %v2691 = vunpack.c.h.b16 %v410
    %v2692 = vunpack.c.l.b16 %v411
    %v2693 = vunpack.c.h.b16 %v411
    %v2694 = vunpack.c.l.b16 %v412
    %v2695 = vunpack.c.h.b16 %v412
    %v2696 = vunpack.c.l.b16 %v413
    %v2697 = vunpack.c.h.b16 %v413
    %v2698 = vunpack.c.l.b16 %v414
    %v2699 = vunpack.c.h.b16 %v414
    %v2700 = vunpack.c.l.b16 %v415
    %v2701 = vunpack.c.h.b16 %v415
    %v2702 = vunpack.c.l.b16 %v416
    %v2703 = vunpack.c.h.b16 %v416
    %v2704 = vunpack.c.l.b16 %v417
    %v2705 = vunpack.c.h.b16 %v417
    %v2706 = vunpack.c.l.b16 %v418
    %v2707 = vunpack.c.h.b16 %v418
    %v2708 = vunpack.c.l.b16 %v419
    %v2709 = vunpack.c.h.b16 %v419
    %v2710 = vunpack.c.l.b16 %v420
    %v2711 = vunpack.c.h.b16 %v420
    %v2712 = vunpack.c.l.b16 %v421
    %v2713 = vunpack.c.h.b16 %v421
    %v2714 = vunpack.c.l.b16 %v422
    %v2715 = vunpack.c.h.b16 %v422
    %v2716 = vunpack.c.l.b16 %v423
    %v2717 = vunpack.c.h.b16 %v423
    %v2718 = vunpack.c.l.b16 %v424
    %v2719 = vunpack.c.h.b16 %v424
    %v2720 = vunpack.c.l.b16 %v425
    %v2721 = vunpack.c.h.b16 %v425
    %v2722 = vunpack.c.l.b16 %v426
    %v2723 = vunpack.c.h.b16 %v426
    %v2724 = vunpack.c.l.b16 %v427
    %v2725 = vunpack.c.h.b16 %v427
    %v2726 = vunpack.c.l.b16 %v428
    %v2727 = vunpack.c.h.b16 %v428
    %v2728 = vunpack.c.l.b16 %v429
    %v2729 = vunpack.c.h.b16 %v429
    %v2730 = vunpack.c.l.b16 %v430
    %v2731 = vunpack.c.h.b16 %v430
    %v2732 = vunpack.c.l.b16 %v431
    %v2733 = vunpack.c.h.b16 %v431
    %v2734 = vunpack.c.l.b16 %v432
    %v2735 = vunpack.c.h.b16 %v432
    %v2736 = vunpack.c.l.b16 %v433
    %v2737 = vunpack.c.h.b16 %v433
    %v2738 = vunpack.c.l.b16 %v434
    %v2739 = vunpack.c.h.b16 %v434
    %v2740 = vunpack.c.l.b16 %v435
    %v2741 = vunpack.c.h.b16 %v435
    %v2742 = vunpack.c.l.b16 %v436
    %v2743 = vunpack.c.h.b16 %v436
    %v2744 = vunpack.c.l.b16 %v437
    %v2745 = vunpack.c.h.b16 %v437
    %v2746 = vunpack.c.l.b16 %v438
    %v2747 = vunpack.c.h.b16 %v438
    %v2748 = vunpack.c.l.b16 %v439
    %v2749 = vunpack.c.h.b16 %v439
    %v2750 = vunpack.c.l.b16 %v440
    %v2751 = vunpack.c.h.b16 %v440
    %v2752 = vunpack.c.l.b16 %v441
    %v2753 = vunpack.c.h.b16 %v441
    %v2754 = vunpack.c.l.b16 %v442
    %v2755 = vunpack.c.h.b16 %v442
    %v2756 = vunpack.c.l.b16 %v443
    %v2757 = vunpack.c.h.b16 %v443
    %v2758 = vunpack.c.l.b16 %v444
    %v2759 = vunpack.c.h.b16 %v444
    %v2760 = vunpack.c.l.b16 %v445
    %v2761 = vunpack.c.h.b16 %v445
    %v2762 = vunpack.c.l.b16 %v446
    %v2763 = vunpack.c.h.b16 %v446
    %v2764 = vunpack.c.l.b16 %v447
    %v2765 = vunpack.c.h.b16 %v447
    %v2766 = vunpack.c.l.b16 %v448
    %v2767 = vunpack.c.h.b16 %v448
    %v2768 = vunpack.c.l.b16 %v449
    %v2769 = vunpack.c.h.b16 %v449
    %v2770 = vunpack.c.l.b16 %v450
    %v2771 = vunpack.c.h.b16 %v450
    %v2772 = vunpack.c.l.b16 %v451
    %v2773 = vunpack.c.h.b16 %v451
    %v2774 = vunpack.c.l.b16 %v452
    %v2775 = vunpack.c.h.b16 %v452
    %v2776 = vunpack.c.l.b16 %v453
    %v2777 = vunpack.c.h.b16 %v453
    %v2778 = vunpack.c.l.b16 %v454
    %v2779 = vunpack.c.h.b16 %v454
    %v2780 = vunpack.c.l.b16 %v455
    %v2781 = vunpack.c.h.b16 %v455
    %v2782 = vunpack.c.l.b16 %v456
    %v2783 = vunpack.c.h.b16 %v456
    %v2784 = vunpack.c.l.b16 %v457
    %v2785 = vunpack.c.h.b16 %v457
    %v2786 = vunpack.c.l.b16 %v458
    %v2787 = vunpack.c.h.b16 %v458
    %v2788 = vunpack.c.l.b16 %v459
    %v2789 = vunpack.c.h.b16 %v459
    %v2790 = vunpack.c.l.b16 %v460
    %v2791 = vunpack.c.h.b16 %v460
    %v2792 = vunpack.c.l.b16 %v461
    %v2793 = vunpack.c.h.b16 %v461
    %v2794 = vunpack.c.l.b16 %v462
    %v2795 = vunpack.c.h.b16 %v462
    %v2796 = vunpack.c.l.b16 %v463
    %v2797 = vunpack.c.h.b16 %v463
    %v2798 = vunpack.c.l.b16 %v464
    %v2799 = vunpack.c.h.b16 %v464
    %v2800 = vunpack.c.l.b16 %v465
    %v2801 = vunpack.c.h.b16 %v465
    %v2802 = vunpack.c.l.b16 %v466
    %v2803 = vunpack.c.h.b16 %v466
    %v2804 = vunpack.c.l.b16 %v467
    %v2805 = vunpack.c.h.b16 %v467
    %v2806 = vunpack.c.l.b16 %v468
    %v2807 = vunpack.c.h.b16 %v468
    %v2808 = vunpack.c.l.b16 %v469
    %v2809 = vunpack.c.h.b16 %v469
    %v2810 = vunpack.c.l.b16 %v470
    %v2811 = vunpack.c.h.b16 %v470
    %v2812 = vunpack.c.l.b16 %v471
    %v2813 = vunpack.c.h.b16 %v471
    %v2814 = vunpack.c.l.b16 %v472
    %v2815 = vunpack.c.h.b16 %v472
    %v2816 = vunpack.c.l.b16 %v473
    %v2817 = vunpack.c.h.b16 %v473
    %v2818 = vunpack.c.l.b16 %v474
    %v2819 = vunpack.c.h.b16 %v474
    %v2820 = vunpack.c.l.b16 %v475
    %v2821 = vunpack.c.h.b16 %v475
    %v2822 = vunpack.c.l.b16 %v476
    %v2823 = vunpack.c.h.b16 %v476
    %v2824 = vunpack.c.l.b16 %v477
    %v2825 = vunpack.c.h.b16 %v477
    %v2826 = vunpack.c.l.b16 %v478
    %v2827 = vunpack.c.h.b16 %v478
    %v2828 = vunpack.c.l.b16 %v479
    %v2829 = vunpack.c.h.b16 %v479
    %v2830 = vunpack.c.l.b16 %v480
    %v2831 = vunpack.c.h.b16 %v480
    %v2832 = vunpack.c.l.b16 %v481
    %v2833 = vunpack.c.h.b16 %v481
    %v2834 = vunpack.c.l.b16 %v482
    %v2835 = vunpack.c.h.b16 %v482
    %v2836 = vunpack.c.l.b16 %v483
    %v2837 = vunpack.c.h.b16 %v483
    %v2838 = vunpack.c.l.b16 %v484
    %v2839 = vunpack.c.h.b16 %v484
    %v2840 = vunpack.c.l.b16 %v485
    %v2841 = vunpack.c.h.b16 %v485
    %v2842 = vunpack.c.l.b16 %v486
    %v2843 = vunpack.c.h.b16 %v486
    %v2844 = vunpack.c.l.b16 %v487
    %v2845 = vunpack.c.h.b16 %v487
    %v2846 = vunpack.c.l.b16 %v488
    %v2847 = vunpack.c.h.b16 %v488
    %v2848 = vunpack.c.l.b16 %v489
    %v2849 = vunpack.c.h.b16 %v489
    %v2850 = vunpack.c.l.b16 %v490
    %v2851 = vunpack.c.h.b16 %v490
    %v2852 = vunpack.c.l.b16 %v491
    %v2853 = vunpack.c.h.b16 %v491
    %v2854 = vunpack.c.l.b16 %v492
    %v2855 = vunpack.c.h.b16 %v492
    %v2856 = vunpack.c.l.b16 %v493
    %v2857 = vunpack.c.h.b16 %v493
    %v2858 = vunpack.c.l.b16 %v494
    %v2859 = vunpack.c.h.b16 %v494
    %v2860 = vunpack.c.l.b16 %v495
    %v2861 = vunpack.c.h.b16 %v495
    %v2862 = vunpack.c.l.b16 %v496
    %v2863 = vunpack.c.h.b16 %v496
    %v2864 = vunpack.c.l.b16 %v497
    %v2865 = vunpack.c.h.b16 %v497
    %v2866 = vunpack.c.l.b16 %v498
    %v2867 = vunpack.c.h.b16 %v498
    %v2868 = vunpack.c.l.b16 %v499
    %v2869 = vunpack.c.h.b16 %v499
    %v2870 = vunpack.c.l.b16 %v500
    %v2871 = vunpack.c.h.b16 %v500
    %v2872 = vunpack.c.l.b16 %v501
    %v2873 = vunpack.c.h.b16 %v501
    %v2874 = vunpack.c.l.b16 %v502
    %v2875 = vunpack.c.h.b16 %v502
    %v2876 = vunpack.c.l.b16 %v503
    %v2877 = vunpack.c.h.b16 %v503
    %v2878 = vunpack.c.l.b16 %v504
    %v2879 = vunpack.c.h.b16 %v504
    %v2880 = vunpack.c.l.b16 %v505
    %v2881 = vunpack.c.h.b16 %v505
    %v2882 = vunpack.c.l.b16 %v506
    %v2883 = vunpack.c.h.b16 %v506
    %v2884 = vunpack.c.l.b16 %v507
    %v2885 = vunpack.c.h.b16 %v507
    %v2886 = vunpack.c.l.b16 %v508
    %v2887 = vunpack.c.h.b16 %v508
    %v2888 = vunpack.c.l.b16 %v509
    %v2889 = vunpack.c.h.b16 %v509
    %v2890 = vunpack.c.l.b16 %v510
    %v2891 = vunpack.c.h.b16 %v510
    %v2892 = vunpack.c.l.b16 %v511
    %v2893 = vunpack.c.h.b16 %v511
    %v2894 = vunpack.c.l.b16 %v512
    %v2895 = vunpack.c.h.b16 %v512
    %v2896 = vunpack.c.l.b16 %v513
    %v2897 = vunpack.c.h.b16 %v513
    %v2898 = vunpack.c.l.b16 %v514
    %v2899 = vunpack.c.h.b16 %v514
    %v2900 = vunpack.c.l.b16 %v515
    %v2901 = vunpack.c.h.b16 %v515
    %v2902 = vunpack.c.l.b16 %v516
    %v2903 = vunpack.c.h.b16 %v516
    %v2904 = vunpack.c.l.b16 %v517
    %v2905 = vunpack.c.h.b16 %v517
    %v2906 = vunpack.c.l.b16 %v518
    %v2907 = vunpack.c.h.b16 %v518
    %v2908 = vunpack.c.l.b16 %v519
    %v2909 = vunpack.c.h.b16 %v519
    %v2910 = vunpack.c.l.b16 %v520
    %v2911 = vunpack.c.h.b16 %v520
    %v2912 = vunpack.c.l.b16 %v521
    %v2913 = vunpack.c.h.b16 %v521
    %v2914 = vunpack.c.l.b16 %v522
    %v2915 = vunpack.c.h.b16 %v522
    %v2916 = vunpack.c.l.b16 %v523
    %v2917 = vunpack.c.h.b16 %v523
    %v2918 = vunpack.c.l.b16 %v524
    %v2919 = vunpack.c.h.b16 %v524
    %v2920 = vunpack.c.l.b16 %v525
    %v2921 = vunpack.c.h.b16 %v525
    %v2922 = vunpack.c.l.b16 %v526
    %v2923 = vunpack.c.h.b16 %v526
    %v2924 = vunpack.c.l.b16 %v527
    %v2925 = vunpack.c.h.b16 %v527
    %v2926 = vunpack.c.l.b16 %v528
    %v2927 = vunpack.c.h.b16 %v528
    %v2928 = vunpack.c.l.b16 %v529
    %v2929 = vunpack.c.h.b16 %v529
    %v2930 = vunpack.c.l.b16 %v530
    %v2931 = vunpack.c.h.b16 %v530
    %v2932 = vunpack.c.l.b16 %v531
    %v2933 = vunpack.c.h.b16 %v531
    %v2934 = vunpack.c.l.b16 %v532
    %v2935 = vunpack.c.h.b16 %v532
    %v2936 = vunpack.c.l.b16 %v533
    %v2937 = vunpack.c.h.b16 %v533
    %v2938 = vunpack.c.l.b16 %v534
    %v2939 = vunpack.c.h.b16 %v534
    %v2940 = vunpack.c.l.b16 %v535
    %v2941 = vunpack.c.h.b16 %v535
    %v2942 = vunpack.c.l.b16 %v536
    %v2943 = vunpack.c.h.b16 %v536
    %v2944 = vunpack.c.l.b16 %v537
    %v2945 = vunpack.c.h.b16 %v537
    %v2946 = vunpack.c.l.b16 %v538
    %v2947 = vunpack.c.h.b16 %v538
    %v2948 = vunpack.c.l.b16 %v539
    %v2949 = vunpack.c.h.b16 %v539
    %v2950 = vunpack.c.l.b16 %v540
    %v2951 = vunpack.c.h.b16 %v540
    %v2952 = vunpack.c.l.b16 %v541
    %v2953 = vunpack.c.h.b16 %v541
    %v2954 = vunpack.c.l.b16 %v542
    %v2955 = vunpack.c.h.b16 %v542
    %v2956 = vunpack.c.l.b16 %v543
    %v2957 = vunpack.c.h.b16 %v543
    %v2958 = vunpack.c.l.b16 %v544
    %v2959 = vunpack.c.h.b16 %v544
    %v2960 = vunpack.c.l.b16 %v545
    %v2961 = vunpack.c.h.b16 %v545
    %v2962 = vunpack.c.l.b16 %v546
    %v2963 = vunpack.c.h.b16 %v546
    %v2964 = vunpack.c.l.b16 %v547
    %v2965 = vunpack.c.h.b16 %v547
    %v2966 = vunpack.c.l.b16 %v548
    %v2967 = vunpack.c.h.b16 %v548
    %v2968 = vunpack.c.l.b16 %v549
    %v2969 = vunpack.c.h.b16 %v549
    %v2970 = vunpack.c.l.b16 %v550
    %v2971 = vunpack.c.h.b16 %v550
    %v2972 = vunpack.c.l.b16 %v551
    %v2973 = vunpack.c.h.b16 %v551
    %v2974 = vunpack.c.l.b16 %v552
    %v2975 = vunpack.c.h.b16 %v552
    %v2976 = vunpack.c.l.b16 %v553
    %v2977 = vunpack.c.h.b16 %v553
    %v2978 = vunpack.c.l.b16 %v554
    %v2979 = vunpack.c.h.b16 %v554
    %v2980 = vunpack.c.l.b16 %v555
    %v2981 = vunpack.c.h.b16 %v555
    %v2982 = vunpack.c.l.b16 %v556
    %v2983 = vunpack.c.h.b16 %v556
    %v2984 = vunpack.c.l.b16 %v557
    %v2985 = vunpack.c.h.b16 %v557
    %v2986 = vunpack.c.l.b16 %v558
    %v2987 = vunpack.c.h.b16 %v558
    %v2988 = vunpack.c.l.b16 %v559
    %v2989 = vunpack.c.h.b16 %v559
    %v2990 = vunpack.c.l.b16 %v560
    %v2991 = vunpack.c.h.b16 %v560
    %v2992 = vunpack.c.l.b16 %v561
    %v2993 = vunpack.c.h.b16 %v561
    %v2994 = vunpack.c.l.b16 %v562
    %v2995 = vunpack.c.h.b16 %v562
    %v2996 = vunpack.c.l.b16 %v563
    %v2997 = vunpack.c.h.b16 %v563
    %v2998 = vunpack.c.l.b16 %v564
    %v2999 = vunpack.c.h.b16 %v564
    %v3000 = vunpack.c.l.b16 %v565
    %v3001 = vunpack.c.h.b16 %v565
    %v3002 = vunpack.c.l.b16 %v566
    %v3003 = vunpack.c.h.b16 %v566
    %v3004 = vunpack.c.l.b16 %v567
    %v3005 = vunpack.c.h.b16 %v567
    %v3006 = vunpack.c.l.b16 %v568
    %v3007 = vunpack.c.h.b16 %v568
    %v3008 = vunpack.c.l.b16 %v569
    %v3009 = vunpack.c.h.b16 %v569
    %v3010 = vunpack.c.l.b16 %v570
    %v3011 = vunpack.c.h.b16 %v570
    %v3012 = vunpack.c.l.b16 %v571
    %v3013 = vunpack.c.h.b16 %v571
    %v3014 = vunpack.c.l.b16 %v572
    %v3015 = vunpack.c.h.b16 %v572
    %v3016 = vunpack.c.l.b16 %v573
    %v3017 = vunpack.c.h.b16 %v573
    %v3018 = vunpack.c.l.b16 %v574
    %v3019 = vunpack.c.h.b16 %v574
    %v3020 = vunpack.c.l.b16 %v575
    %v3021 = vunpack.c.h.b16 %v575
    %v3022 = vunpack.c.l.b16 %v576
    %v3023 = vunpack.c.h.b16 %v576
    %v3024 = vunpack.c.l.b16 %v577
    %v3025 = vunpack.c.h.b16 %v577
    %v3026 = vunpack.c.l.b16 %v578
    %v3027 = vunpack.c.h.b16 %v578
    %v3028 = vunpack.c.l.b16 %v579
    %v3029 = vunpack.c.h.b16 %v579
    %v3030 = vunpack.c.l.b16 %v580
    %v3031 = vunpack.c.h.b16 %v580
    %v3032 = vunpack.c.l.b16 %v581
    %v3033 = vunpack.c.h.b16 %v581
    %v3034 = vunpack.c.l.b16 %v582
    %v3035 = vunpack.c.h.b16 %v582
    %v3036 = vunpack.c.l.b16 %v583
    %v3037 = vunpack.c.h.b16 %v583
    %v3038 = vunpack.c.l.b16 %v584
    %v3039 = vunpack.c.h.b16 %v584
    %v3040 = vunpack.c.l.b16 %v585
    %v3041 = vunpack.c.h.b16 %v585
    %v3042 = vunpack.c.l.b16 %v586
    %v3043 = vunpack.c.h.b16 %v586
    %v3044 = vunpack.c.l.b16 %v587
    %v3045 = vunpack.c.h.b16 %v587
    %v3046 = vunpack.c.l.b16 %v588
    %v3047 = vunpack.c.h.b16 %v588
    %v3048 = vunpack.c.l.b16 %v589
    %v3049 = vunpack.c.h.b16 %v589
    %v3050 = vunpack.c.l.b16 %v590
    %v3051 = vunpack.c.h.b16 %v590
    %v3052 = vunpack.c.l.b16 %v591
    %v3053 = vunpack.c.h.b16 %v591
    %v3054 = vunpack.c.l.b16 %v592
    %v3055 = vunpack.c.h.b16 %v592
    %v3056 = vunpack.c.l.b16 %v593
    %v3057 = vunpack.c.h.b16 %v593
    %v3058 = vunpack.c.l.b16 %v594
    %v3059 = vunpack.c.h.b16 %v594
    %v3060 = vunpack.c.l.b16 %v595
    %v3061 = vunpack.c.h.b16 %v595
    %v3062 = vunpack.c.l.b16 %v596
    %v3063 = vunpack.c.h.b16 %v596
    %v3064 = vunpack.c.l.b16 %v597
    %v3065 = vunpack.c.h.b16 %v597
    %v3066 = vunpack.c.l.b16 %v598
    %v3067 = vunpack.c.h.b16 %v598
    %v3068 = vunpack.c.l.b16 %v599
    %v3069 = vunpack.c.h.b16 %v599
    %v3070 = vunpack.c.l.b16 %v600
    %v3071 = vunpack.c.h.b16 %v600
    %v3072 = vunpack.c.l.b16 %v601
    %v3073 = vunpack.c.h.b16 %v601
    %v3074 = vunpack.c.l.b16 %v602
    %v3075 = vunpack.c.h.b16 %v602
    %v3076 = vunpack.c.l.b16 %v603
    %v3077 = vunpack.c.h.b16 %v603
    %v3078 = vunpack.c.l.b16 %v604
    %v3079 = vunpack.c.h.b16 %v604
    %v3080 = vunpack.c.l.b16 %v605
    %v3081 = vunpack.c.h.b16 %v605
    %v3082 = vunpack.c.l.b16 %v606
    %v3083 = vunpack.c.h.b16 %v606
    %v3084 = vunpack.c.l.b16 %v607
    %v3085 = vunpack.c.h.b16 %v607
    %v3086 = vunpack.c.l.b16 %v608
    %v3087 = vunpack.c.h.b16 %v608
    %v3088 = vunpack.c.l.b16 %v609
    %v3089 = vunpack.c.h.b16 %v609
    %v3090 = vunpack.c.l.b16 %v610
    %v3091 = vunpack.c.h.b16 %v610
    %v3092 = vunpack.c.l.b16 %v611
    %v3093 = vunpack.c.h.b16 %v611
    %v3094 = vunpack.c.l.b16 %v612
    %v3095 = vunpack.c.h.b16 %v612
    %v3096 = vunpack.c.l.b16 %v613
    %v3097 = vunpack.c.h.b16 %v613
    %v3098 = vunpack.c.l.b16 %v614
    %v3099 = vunpack.c.h.b16 %v614
    %v3100 = vunpack.c.l.b16 %v615
    %v3101 = vunpack.c.h.b16 %v615
    %v3102 = vunpack.c.l.b16 %v616
    %v3103 = vunpack.c.h.b16 %v616
    %v3104 = vunpack.c.l.b16 %v617
    %v3105 = vunpack.c.h.b16 %v617
    %v3106 = vunpack.c.l.b16 %v618
    %v3107 = vunpack.c.h.b16 %v618
    %v3108 = vunpack.c.l.b16 %v619
    %v3109 = vunpack.c.h.b16 %v619
    %v3110 = vunpack.c.l.b16 %v620
    %v3111 = vunpack.c.h.b16 %v620
    %v3112 = vunpack.c.l.b16 %v621
    %v3113 = vunpack.c.h.b16 %v621
    %v3114 = vunpack.c.l.b16 %v622
    %v3115 = vunpack.c.h.b16 %v622
    %v3116 = vunpack.c.l.b16 %v623
    %v3117 = vunpack.c.h.b16 %v623
    %v3118 = vunpack.c.l.b16 %v624
    %v3119 = vunpack.c.h.b16 %v624
    %v3120 = vunpack.c.l.b16 %v625
    %v3121 = vunpack.c.h.b16 %v625
    %v3122 = vunpack.c.l.b16 %v626
    %v3123 = vunpack.c.h.b16 %v626
    %v3124 = vunpack.c.l.b16 %v627
    %v3125 = vunpack.c.h.b16 %v627
    %v3126 = vunpack.c.l.b16 %v628
    %v3127 = vunpack.c.h.b16 %v628
    %v3128 = vunpack.c.l.b16 %v629
    %v3129 = vunpack.c.h.b16 %v629
    %v3130 = vunpack.c.l.b16 %v630
    %v3131 = vunpack.c.h.b16 %v630
    %v3132 = vunpack.c.l.b16 %v631
    %v3133 = vunpack.c.h.b16 %v631
    %v3134 = vunpack.c.l.b16 %v632
    %v3135 = vunpack.c.h.b16 %v632
    %v3136 = vunpack.c.l.b16 %v633
    %v3137 = vunpack.c.h.b16 %v633
    %v3138 = vunpack.c.l.b16 %v634
    %v3139 = vunpack.c.h.b16 %v634
    %v3140 = vunpack.c.l.b16 %v635
    %v3141 = vunpack.c.h.b16 %v635
    %v3142 = vunpack.c.l.b16 %v636
    %v3143 = vunpack.c.h.b16 %v636
    %v3144 = vunpack.c.l.b16 %v637
    %v3145 = vunpack.c.h.b16 %v637
    %v3146 = vunpack.c.l.b16 %v638
    %v3147 = vunpack.c.h.b16 %v638
    %v3148 = vunpack.c.l.b16 %v639
    %v3149 = vunpack.c.h.b16 %v639
    %v3150 = vunpack.c.l.b16 %v640
    %v3151 = vunpack.c.h.b16 %v640
    %v3152 = vunpack.c.l.b16 %v641
    %v3153 = vunpack.c.h.b16 %v641
    %v3154 = vunpack.c.l.b16 %v642
    %v3155 = vunpack.c.h.b16 %v642
    %v3156 = vunpack.c.l.b16 %v643
    %v3157 = vunpack.c.h.b16 %v643
    %v3158 = vunpack.c.l.b16 %v644
    %v3159 = vunpack.c.h.b16 %v644
    %v3160 = vunpack.c.l.b16 %v645
    %v3161 = vunpack.c.h.b16 %v645
    %v3162 = vunpack.c.l.b16 %v646
    %v3163 = vunpack.c.h.b16 %v646
    %v3164 = vunpack.c.l.b16 %v647
    %v3165 = vunpack.c.h.b16 %v647
    %v3166 = vunpack.c.l.b16 %v648
    %v3167 = vunpack.c.h.b16 %v648
    %v3168 = vunpack.c.l.b16 %v649
    %v3169 = vunpack.c.h.b16 %v649
    %v3170 = vunpack.c.l.b16 %v650
    %v3171 = vunpack.c.h.b16 %v650
    %v3172 = vunpack.c.l.b16 %v651
    %v3173 = vunpack.c.h.b16 %v651
    %v3174 = vunpack.c.l.b16 %v652
    %v3175 = vunpack.c.h.b16 %v652
    %v3176 = vunpack.c.l.b16 %v653
    %v3177 = vunpack.c.h.b16 %v653
    %v3178 = vunpack.c.l.b16 %v654
    %v3179 = vunpack.c.h.b16 %v654
    %v3180 = vunpack.c.l.b16 %v655
    %v3181 = vunpack.c.h.b16 %v655
    %v3182 = vunpack.c.l.b16 %v656
    %v3183 = vunpack.c.h.b16 %v656
    %v3184 = vunpack.c.l.b16 %v657
    %v3185 = vunpack.c.h.b16 %v657
    %v3186 = vunpack.c.l.b16 %v658
    %v3187 = vunpack.c.h.b16 %v658
    %v3188 = vunpack.c.l.b16 %v659
    %v3189 = vunpack.c.h.b16 %v659
    %v3190 = vunpack.c.l.b16 %v660
    %v3191 = vunpack.c.h.b16 %v660
    %v3192 = vunpack.c.l.b16 %v661
    %v3193 = vunpack.c.h.b16 %v661
    %v3194 = vunpack.c.l.b16 %v662
    %v3195 = vunpack.c.h.b16 %v662
    %v3196 = vunpack.c.l.b16 %v663
    %v3197 = vunpack.c.h.b16 %v663
    %v3198 = vunpack.c.l.b16 %v664
    %v3199 = vunpack.c.h.b16 %v664
    %v3200 = vunpack.c.l.b16 %v665
    %v3201 = vunpack.c.h.b16 %v665
    %v3202 = vunpack.c.l.b16 %v666
    %v3203 = vunpack.c.h.b16 %v666
    %v3204 = vunpack.c.l.b16 %v667
    %v3205 = vunpack.c.h.b16 %v667
    %v3206 = vunpack.c.l.b16 %v668
    %v3207 = vunpack.c.h.b16 %v668
    %v3208 = vunpack.c.l.b16 %v669
    %v3209 = vunpack.c.h.b16 %v669
    %v3210 = vunpack.c.l.b16 %v670
    %v3211 = vunpack.c.h.b16 %v670
    %v3212 = vunpack.c.l.b16 %v671
    %v3213 = vunpack.c.h.b16 %v671
    %v3214 = vunpack.c.l.b16 %v672
    %v3215 = vunpack.c.h.b16 %v672
    %v3216 = vunpack.c.l.b16 %v673
    %v3217 = vunpack.c.h.b16 %v673
    %v3218 = vunpack.c.l.b16 %v674
    %v3219 = vunpack.c.h.b16 %v674
    %v3220 = vunpack.c.l.b16 %v675
    %v3221 = vunpack.c.h.b16 %v675
    %v3222 = vunpack.c.l.b16 %v676
    %v3223 = vunpack.c.h.b16 %v676
    %v3224 = vunpack.c.l.b16 %v677
    %v3225 = vunpack.c.h.b16 %v677
    %v3226 = vunpack.c.l.b16 %v678
    %v3227 = vunpack.c.h.b16 %v678
    %v3228 = vunpack.c.l.b16 %v679
    %v3229 = vunpack.c.h.b16 %v679
    %v3230 = vunpack.c.l.b16 %v680
    %v3231 = vunpack.c.h.b16 %v680
    %v3232 = vunpack.c.l.b16 %v681
    %v3233 = vunpack.c.h.b16 %v681
    %v3234 = vunpack.c.l.b16 %v682
    %v3235 = vunpack.c.h.b16 %v682
    %v3236 = vunpack.c.l.b16 %v683
    %v3237 = vunpack.c.h.b16 %v683
    %v3238 = vunpack.c.l.b16 %v684
    %v3239 = vunpack.c.h.b16 %v684
    %v3240 = vunpack.c.l.b16 %v685
    %v3241 = vunpack.c.h.b16 %v685
    %v3242 = vunpack.c.l.b16 %v686
    %v3243 = vunpack.c.h.b16 %v686
    %v3244 = vunpack.c.l.b16 %v687
    %v3245 = vunpack.c.h.b16 %v687
    %v3246 = vunpack.c.l.b16 %v688
    %v3247 = vunpack.c.h.b16 %v688
    %v3248 = vunpack.c.l.b16 %v689
    %v3249 = vunpack.c.h.b16 %v689
    %v3250 = vunpack.c.l.b16 %v690
    %v3251 = vunpack.c.h.b16 %v690
    %v3252 = vunpack.c.l.b16 %v691
    %v3253 = vunpack.c.h.b16 %v691
    %v3254 = vunpack.c.l.b16 %v692
    %v3255 = vunpack.c.h.b16 %v692
    %v3256 = vunpack.c.l.b16 %v693
    %v3257 = vunpack.c.h.b16 %v693
    %v3258 = vunpack.c.l.b16 %v694
    %v3259 = vunpack.c.h.b16 %v694
    %v3260 = vunpack.c.l.b16 %v695
    %v3261 = vunpack.c.h.b16 %v695
    %v3262 = vunpack.c.l.b16 %v696
    %v3263 = vunpack.c.h.b16 %v696
    %v3264 = vunpack.c.l.b16 %v697
    %v3265 = vunpack.c.h.b16 %v697
    %v3266 = vunpack.c.l.b16 %v698
    %v3267 = vunpack.c.h.b16 %v698
    %v3268 = vunpack.c.l.b16 %v699
    %v3269 = vunpack.c.h.b16 %v699
    %v3270 = vunpack.c.l.b16 %v700
    %v3271 = vunpack.c.h.b16 %v700
    %v3272 = vunpack.c.l.b16 %v701
    %v3273 = vunpack.c.h.b16 %v701
    %v3274 = vunpack.c.l.b16 %v702
    %v3275 = vunpack.c.h.b16 %v702
    %v3276 = vunpack.c.l.b16 %v703
    %v3277 = vunpack.c.h.b16 %v703
    %v3278 = vunpack.c.l.b16 %v704
    %v3279 = vunpack.c.h.b16 %v704
    %v3280 = vunpack.c.l.b16 %v705
    %v3281 = vunpack.c.h.b16 %v705
    %v3282 = vunpack.c.l.b16 %v706
    %v3283 = vunpack.c.h.b16 %v706
    %v3284 = vunpack.c.l.b16 %v707
    %v3285 = vunpack.c.h.b16 %v707
    %v3286 = vunpack.c.l.b16 %v708
    %v3287 = vunpack.c.h.b16 %v708
    %v3288 = vunpack.c.l.b16 %v709
    %v3289 = vunpack.c.h.b16 %v709
    %v3290 = vunpack.c.l.b16 %v710
    %v3291 = vunpack.c.h.b16 %v710
    %v3292 = vunpack.c.l.b16 %v711
    %v3293 = vunpack.c.h.b16 %v711
    %v3294 = vunpack.c.l.b16 %v712
    %v3295 = vunpack.c.h.b16 %v712
    %v3296 = vunpack.c.l.b16 %v713
    %v3297 = vunpack.c.h.b16 %v713
    %v3298 = vunpack.c.l.b16 %v714
    %v3299 = vunpack.c.h.b16 %v714
    %v3300 = vunpack.c.l.b16 %v715
    %v3301 = vunpack.c.h.b16 %v715
    %v3302 = vunpack.c.l.b16 %v716
    %v3303 = vunpack.c.h.b16 %v716
    %v3304 = vunpack.c.l.b16 %v717
    %v3305 = vunpack.c.h.b16 %v717
    %v3306 = vunpack.c.l.b16 %v718
    %v3307 = vunpack.c.h.b16 %v718
    %v3308 = vunpack.c.l.b16 %v719
    %v3309 = vunpack.c.h.b16 %v719
    %v3310 = vunpack.c.l.b16 %v720
    %v3311 = vunpack.c.h.b16 %v720
    %v3312 = vunpack.c.l.b16 %v721
    %v3313 = vunpack.c.h.b16 %v721
    %v3314 = vunpack.c.l.b16 %v722
    %v3315 = vunpack.c.h.b16 %v722
    %v3316 = vunpack.c.l.b16 %v723
    %v3317 = vunpack.c.h.b16 %v723
    %v3318 = vunpack.c.l.b16 %v724
    %v3319 = vunpack.c.h.b16 %v724
    %v3320 = vunpack.c.l.b16 %v725
    %v3321 = vunpack.c.h.b16 %v725
    %v3322 = vunpack.c.l.b16 %v726
    %v3323 = vunpack.c.h.b16 %v726
    %v3324 = vunpack.c.l.b16 %v727
    %v3325 = vunpack.c.h.b16 %v727
    %v3326 = vunpack.c.l.b16 %v728
    %v3327 = vunpack.c.h.b16 %v728
    %v3328 = vunpack.c.l.b16 %v729
    %v3329 = vunpack.c.h.b16 %v729
    %v3330 = vunpack.c.l.b16 %v730
    %v3331 = vunpack.c.h.b16 %v730
    %v3332 = vunpack.c.l.b16 %v731
    %v3333 = vunpack.c.h.b16 %v731
    %v3334 = vunpack.c.l.b16 %v732
    %v3335 = vunpack.c.h.b16 %v732
    %v3336 = vunpack.c.l.b16 %v733
    %v3337 = vunpack.c.h.b16 %v733
    %v3338 = vunpack.c.l.b16 %v734
    %v3339 = vunpack.c.h.b16 %v734
    %v3340 = vunpack.c.l.b16 %v735
    %v3341 = vunpack.c.h.b16 %v735
    %v3342 = vunpack.c.l.b16 %v736
    %v3343 = vunpack.c.h.b16 %v736
    %v3344 = vunpack.c.l.b16 %v737
    %v3345 = vunpack.c.h.b16 %v737
    %v3346 = vunpack.c.l.b16 %v738
    %v3347 = vunpack.c.h.b16 %v738
    %v3348 = vunpack.c.l.b16 %v739
    %v3349 = vunpack.c.h.b16 %v739
    %v3350 = vunpack.c.l.b16 %v740
    %v3351 = vunpack.c.h.b16 %v740
    %v3352 = vunpack.c.l.b16 %v741
    %v3353 = vunpack.c.h.b16 %v741
    %v3354 = vunpack.c.l.b16 %v742
    %v3355 = vunpack.c.h.b16 %v742
    %v3356 = vunpack.c.l.b16 %v743
    %v3357 = vunpack.c.h.b16 %v743
    %v3358 = vunpack.c.l.b16 %v744
    %v3359 = vunpack.c.h.b16 %v744
    %v3360 = vunpack.c.l.b16 %v745
    %v3361 = vunpack.c.h.b16 %v745
    %v3362 = vunpack.c.l.b16 %v746
    %v3363 = vunpack.c.h.b16 %v746
    %v3364 = vunpack.c.l.b16 %v747
    %v3365 = vunpack.c.h.b16 %v747
    %v3366 = vunpack.c.l.b16 %v748
    %v3367 = vunpack.c.h.b16 %v748
    %v3368 = vunpack.c.l.b16 %v749
    %v3369 = vunpack.c.h.b16 %v749
    %v3370 = vunpack.c.l.b16 %v750
    %v3371 = vunpack.c.h.b16 %v750
    %v3372 = vunpack.c.l.b16 %v751
    %v3373 = vunpack.c.h.b16 %v751
    %v3374 = vunpack.c.l.b16 %v752
    %v3375 = vunpack.c.h.b16 %v752
    %v3376 = vunpack.c.l.b16 %v753
    %v3377 = vunpack.c.h.b16 %v753
    %v3378 = vunpack.c.l.b16 %v754
    %v3379 = vunpack.c.h.b16 %v754
    %v3380 = vunpack.c.l.b16 %v755
    %v3381 = vunpack.c.h.b16 %v755
    %v3382 = vunpack.c.l.b16 %v756
    %v3383 = vunpack.c.h.b16 %v756
    %v3384 = vunpack.c.l.b16 %v757
    %v3385 = vunpack.c.h.b16 %v757
    %v3386 = vunpack.c.l.b16 %v758
    %v3387 = vunpack.c.h.b16 %v758
    %v3388 = vunpack.c.l.b16 %v759
    %v3389 = vunpack.c.h.b16 %v759
    %v3390 = vunpack.c.l.b16 %v760
    %v3391 = vunpack.c.h.b16 %v760
    %v3392 = vunpack.c.l.b16 %v761
    %v3393 = vunpack.c.h.b16 %v761
    %v3394 = vunpack.c.l.b16 %v762
    %v3395 = vunpack.c.h.b16 %v762
    %v3396 = vunpack.c.l.b16 %v763
    %v3397 = vunpack.c.h.b16 %v763
    %v3398 = vunpack.c.l.b16 %v764
    %v3399 = vunpack.c.h.b16 %v764
    %v3400 = vunpack.c.l.b16 %v765
    %v3401 = vunpack.c.h.b16 %v765
    %v3402 = vunpack.c.l.b16 %v766
    %v3403 = vunpack.c.h.b16 %v766
    %v3404 = vunpack.c.l.b16 %v767
    %v3405 = vunpack.c.h.b16 %v767
    %v3406 = vunpack.c.l.b16 %v768
    %v3407 = vunpack.c.h.b16 %v768
    %v3408 = vunpack.c.l.b16 %v769
    %v3409 = vunpack.c.h.b16 %v769
    %v3410 = vunpack.c.l.b16 %v770
    %v3411 = vunpack.c.h.b16 %v770
    %v3412 = vunpack.c.l.b16 %v771
    %v3413 = vunpack.c.h.b16 %v771
    %v3414 = vunpack.c.l.b16 %v772
    %v3415 = vunpack.c.h.b16 %v772
    %v3416 = vunpack.c.l.b16 %v773
    %v3417 = vunpack.c.h.b16 %v773
    %v3418 = vunpack.c.l.b16 %v774
    %v3419 = vunpack.c.h.b16 %v774
    %v3420 = vunpack.c.l.b16 %v775
    %v3421 = vunpack.c.h.b16 %v775
    %v3422 = vunpack.c.l.b16 %v776
    %v3423 = vunpack.c.h.b16 %v776
    %v3424 = vunpack.c.l.b16 %v777
    %v3425 = vunpack.c.h.b16 %v777
    %v3426 = vunpack.c.l.b16 %v778
    %v3427 = vunpack.c.h.b16 %v778
    %v3428 = vunpack.c.l.b16 %v779
    %v3429 = vunpack.c.h.b16 %v779
    %v3430 = vunpack.c.l.b16 %v780
    %v3431 = vunpack.c.h.b16 %v780
    %v3432 = vunpack.c.l.b16 %v781
    %v3433 = vunpack.c.h.b16 %v781
    %v3434 = vunpack.c.l.b16 %v782
    %v3435 = vunpack.c.h.b16 %v782
    %v3436 = vunpack.c.l.b16 %v783
    %v3437 = vunpack.c.h.b16 %v783
    %v3438 = vunpack.c.l.b16 %v784
    %v3439 = vunpack.c.h.b16 %v784
    %v3440 = vunpack.c.l.b16 %v785
    %v3441 = vunpack.c.h.b16 %v785
    %v3442 = vunpack.c.l.b16 %v786
    %v3443 = vunpack.c.h.b16 %v786
    %v3444 = vunpack.c.l.b16 %v787
    %v3445 = vunpack.c.h.b16 %v787
    %v3446 = vunpack.c.l.b16 %v788
    %v3447 = vunpack.c.h.b16 %v788
    %v3448 = vunpack.c.l.b16 %v789
    %v3449 = vunpack.c.h.b16 %v789
    %v3450 = vunpack.c.l.b16 %v790
    %v3451 = vunpack.c.h.b16 %v790
    %v3452 = vunpack.c.l.b16 %v791
    %v3453 = vunpack.c.h.b16 %v791
    %v3454 = vunpack.c.l.b16 %v792
    %v3455 = vunpack.c.h.b16 %v792
    %v3456 = vunpack.c.l.b16 %v793
    %v3457 = vunpack.c.h.b16 %v793
    %v3458 = vunpack.c.l.b16 %v794
    %v3459 = vunpack.c.h.b16 %v794
    %v3460 = vunpack.c.l.b16 %v795
    %v3461 = vunpack.c.h.b16 %v795
    %v3462 = vunpack.c.l.b16 %v796
    %v3463 = vunpack.c.h.b16 %v796
    %v3464 = vunpack.c.l.b16 %v797
    %v3465 = vunpack.c.h.b16 %v797
    %v3466 = vunpack.c.l.b16 %v798
    %v3467 = vunpack.c.h.b16 %v798
    %v3468 = vunpack.c.l.b16 %v799
    %v3469 = vunpack.c.h.b16 %v799
    %v3470 = vunpack.c.l.b16 %v800
    %v3471 = vunpack.c.h.b16 %v800
    %v3472 = vunpack.c.l.b16 %v801
    %v3473 = vunpack.c.h.b16 %v801
    %v3474 = vunpack.c.l.b16 %v802
    %v3475 = vunpack.c.h.b16 %v802
    %v3476 = vunpack.c.l.b16 %v803
    %v3477 = vunpack.c.h.b16 %v803
    %v3478 = vunpack.c.l.b16 %v804
    %v3479 = vunpack.c.h.b16 %v804
    %v3480 = vunpack.c.l.b16 %v805
    %v3481 = vunpack.c.h.b16 %v805
    %v3482 = vunpack.c.l.b16 %v806
    %v3483 = vunpack.c.h.b16 %v806
    %v3484 = vunpack.c.l.b16 %v807
    %v3485 = vunpack.c.h.b16 %v807
    %v3486 = vunpack.c.l.b16 %v808
    %v3487 = vunpack.c.h.b16 %v808
    %v3488 = vunpack.c.l.b16 %v809
    %v3489 = vunpack.c.h.b16 %v809
    %v3490 = vunpack.c.l.b16 %v810
    %v3491 = vunpack.c.h.b16 %v810
    %v3492 = vunpack.c.l.b16 %v811
    %v3493 = vunpack.c.h.b16 %v811
    %v3494 = vunpack.c.l.b16 %v812
    %v3495 = vunpack.c.h.b16 %v812
    %v3496 = vunpack.c.l.b16 %v813
    %v3497 = vunpack.c.h.b16 %v813
    %v3498 = vunpack.c.l.b16 %v814
    %v3499 = vunpack.c.h.b16 %v814
    %v3500 = vunpack.c.l.b16 %v815
    %v3501 = vunpack.c.h.b16 %v815
    %v3502 = vunpack.c.l.b16 %v816
    %v3503 = vunpack.c.h.b16 %v816
    %v3504 = vunpack.c.l.b16 %v817
    %v3505 = vunpack.c.h.b16 %v817
    %v3506 = vunpack.c.l.b16 %v818
    %v3507 = vunpack.c.h.b16 %v818
    %v3508 = vunpack.c.l.b16 %v819
    %v3509 = vunpack.c.h.b16 %v819
    %v3510 = vunpack.c.l.b16 %v820
    %v3511 = vunpack.c.h.b16 %v820
    %v3512 = vunpack.c.l.b16 %v821
    %v3513 = vunpack.c.h.b16 %v821
    %v3514 = vunpack.c.l.b16 %v822
    %v3515 = vunpack.c.h.b16 %v822
    %v3516 = vunpack.c.l.b16 %v823
    %v3517 = vunpack.c.h.b16 %v823
    %v3518 = vunpack.c.l.b16 %v824
    %v3519 = vunpack.c.h.b16 %v824
    %v3520 = vunpack.c.l.b16 %v825
    %v3521 = vunpack.c.h.b16 %v825
    %v3522 = vunpack.c.l.b16 %v826
    %v3523 = vunpack.c.h.b16 %v826
    %v3524 = vunpack.c.l.b16 %v827
    %v3525 = vunpack.c.h.b16 %v827
    %v3526 = vunpack.c.l.b16 %v828
    %v3527 = vunpack.c.h.b16 %v828
    %v3528 = vunpack.c.l.b16 %v829
    %v3529 = vunpack.c.h.b16 %v829
    %v3530 = vunpack.c.l.b16 %v830
    %v3531 = vunpack.c.h.b16 %v830
    %v3532 = vunpack.c.l.b16 %v831
    %v3533 = vunpack.c.h.b16 %v831
    %v3534 = vunpack.c.l.b16 %v832
    %v3535 = vunpack.c.h.b16 %v832
    %v3536 = vunpack.c.l.b16 %v833
    %v3537 = vunpack.c.h.b16 %v833
    %v3538 = vunpack.c.l.b16 %v834
    %v3539 = vunpack.c.h.b16 %v834
    %v3540 = vunpack.c.l.b16 %v835
    %v3541 = vunpack.c.h.b16 %v835
    %v3542 = vunpack.c.l.b16 %v836
    %v3543 = vunpack.c.h.b16 %v836
    %v3544 = vunpack.c.l.b16 %v837
    %v3545 = vunpack.c.h.b16 %v837
    %v3546 = vunpack.c.l.b16 %v838
    %v3547 = vunpack.c.h.b16 %v838
    %v3548 = vunpack.c.l.b16 %v839
    %v3549 = vunpack.c.h.b16 %v839
    %v3550 = vunpack.c.l.b16 %v840
    %v3551 = vunpack.c.h.b16 %v840
    %v3552 = vunpack.c.l.b16 %v841
    %v3553 = vunpack.c.h.b16 %v841
    %v3554 = vunpack.c.l.b16 %v842
    %v3555 = vunpack.c.h.b16 %v842
    %v3556 = vunpack.c.l.b16 %v843
    %v3557 = vunpack.c.h.b16 %v843
    %v3558 = vunpack.c.l.b16 %v844
    %v3559 = vunpack.c.h.b16 %v844
    %v3560 = vunpack.c.l.b16 %v845
    %v3561 = vunpack.c.h.b16 %v845
    %v3562 = vunpack.c.l.b16 %v846
    %v3563 = vunpack.c.h.b16 %v846
    %v3564 = vunpack.c.l.b16 %v847
    %v3565 = vunpack.c.h.b16 %v847
    %v3566 = vunpack.c.l.b16 %v848
    %v3567 = vunpack.c.h.b16 %v848
    %v3568 = vunpack.c.l.b16 %v849
    %v3569 = vunpack.c.h.b16 %v849
    %v3570 = vunpack.c.l.b16 %v850
    %v3571 = vunpack.c.h.b16 %v850
    %v3572 = vunpack.c.l.b16 %v851
    %v3573 = vunpack.c.h.b16 %v851
    %v3574 = vunpack.c.l.b16 %v852
    %v3575 = vunpack.c.h.b16 %v852
    %v3576 = vunpack.c.l.b16 %v853
    %v3577 = vunpack.c.h.b16 %v853
    %v3578 = vunpack.c.l.b16 %v854
    %v3579 = vunpack.c.h.b16 %v854
    %v3580 = vunpack.c.l.b16 %v855
    %v3581 = vunpack.c.h.b16 %v855
    %v3582 = vunpack.c.l.b16 %v856
    %v3583 = vunpack.c.h.b16 %v856
    %v3584 = vunpack.c.l.b16 %v857
    %v3585 = vunpack.c.h.b16 %v857
    %v3586 = vunpack.c.l.b16 %v858
    %v3587 = vunpack.c.h.b16 %v858
    %v3588 = vunpack.c.l.b16 %v859
    %v3589 = vunpack.c.h.b16 %v859
    %v3590 = vunpack.c.l.b16 %v860
    %v3591 = vunpack.c.h.b16 %v860
    %v3592 = vunpack.c.l.b16 %v861
    %v3593 = vunpack.c.h.b16 %v861
    %v3594 = vunpack.c.l.b16 %v862
    %v3595 = vunpack.c.h.b16 %v862
    %v3596 = vunpack.c.l.b16 %v863
    %v3597 = vunpack.c.h.b16 %v863
    %v3598 = vunpack.c.l.b16 %v864
    %v3599 = vunpack.c.h.b16 %v864
    %v3600 = vunpack.c.l.b16 %v865
    %v3601 = vunpack.c.h.b16 %v865
    %v3602 = vunpack.c.l.b16 %v866
    %v3603 = vunpack.c.h.b16 %v866
    %v3604 = vunpack.c.l.b16 %v867
    %v3605 = vunpack.c.h.b16 %v867
    %v3606 = vunpack.c.l.b16 %v868
    %v3607 = vunpack.c.h.b16 %v868
    %v3608 = vunpack.c.l.b16 %v869
    %v3609 = vunpack.c.h.b16 %v869
    %v3610 = vunpack.c.l.b16 %v870
    %v3611 = vunpack.c.h.b16 %v870
    %v3612 = vunpack.c.l.b16 %v871
    %v3613 = vunpack.c.h.b16 %v871
    %v3614 = vunpack.c.l.b16 %v872
    %v3615 = vunpack.c.h.b16 %v872
    %v3616 = vunpack.c.l.b16 %v873
    %v3617 = vunpack.c.h.b16 %v873
    %v3618 = vunpack.c.l.b16 %v874
    %v3619 = vunpack.c.h.b16 %v874
    %v3620 = vunpack.c.l.b16 %v875
    %v3621 = vunpack.c.h.b16 %v875
    %v3622 = vunpack.c.l.b16 %v876
    %v3623 = vunpack.c.h.b16 %v876
    %v3624 = vunpack.c.l.b16 %v877
    %v3625 = vunpack.c.h.b16 %v877
    %v3626 = vunpack.c.l.b16 %v878
    %v3627 = vunpack.c.h.b16 %v878
    %v3628 = vunpack.c.l.b16 %v879
    %v3629 = vunpack.c.h.b16 %v879
    %v3630 = vunpack.c.l.b16 %v880
    %v3631 = vunpack.c.h.b16 %v880
    %v3632 = vunpack.c.l.b16 %v881
    %v3633 = vunpack.c.h.b16 %v881
    %v3634 = vunpack.c.l.b16 %v882
    %v3635 = vunpack.c.h.b16 %v882
    %v3636 = vunpack.c.l.b16 %v883
    %v3637 = vunpack.c.h.b16 %v883
    %v3638 = vunpack.c.l.b16 %v884
    %v3639 = vunpack.c.h.b16 %v884
    %v3640 = vunpack.c.l.b16 %v885
    %v3641 = vunpack.c.h.b16 %v885
    %v3642 = vunpack.c.l.b16 %v886
    %v3643 = vunpack.c.h.b16 %v886
    %v3644 = vunpack.c.l.b16 %v887
    %v3645 = vunpack.c.h.b16 %v887
    %v3646 = vunpack.c.l.b16 %v888
    %v3647 = vunpack.c.h.b16 %v888
    %v3648 = vunpack.c.l.b16 %v889
    %v3649 = vunpack.c.h.b16 %v889
    %v3650 = vunpack.c.l.b16 %v890
    %v3651 = vunpack.c.h.b16 %v890
    %v3652 = vunpack.c.l.b16 %v891
    %v3653 = vunpack.c.h.b16 %v891
    %v3654 = vunpack.c.l.b16 %v892
    %v3655 = vunpack.c.h.b16 %v892
    %v3656 = vunpack.c.l.b16 %v893
    %v3657 = vunpack.c.h.b16 %v893
    %v3658 = vunpack.c.l.b16 %v894
    %v3659 = vunpack.c.h.b16 %v894
    %v3660 = vunpack.c.l.b16 %v895
    %v3661 = vunpack.c.h.b16 %v895
    %v3662 = vunpack.c.l.b16 %v896
    %v3663 = vunpack.c.h.b16 %v896
    %v3664 = vunpack.c.l.b16 %v897
    %v3665 = vunpack.c.h.b16 %v897
    %v3666 = vunpack.c.l.b16 %v898
    %v3667 = vunpack.c.h.b16 %v898
    %v3668 = vunpack.c.l.b16 %v899
    %v3669 = vunpack.c.h.b16 %v899
    %v3670 = vunpack.c.l.b16 %v900
    %v3671 = vunpack.c.h.b16 %v900
    %v3672 = vunpack.c.l.b16 %v901
    %v3673 = vunpack.c.h.b16 %v901
    %v3674 = vunpack.c.l.b16 %v902
    %v3675 = vunpack.c.h.b16 %v902
    %v3676 = vunpack.c.l.b16 %v903
    %v3677 = vunpack.c.h.b16 %v903
    %v3678 = vunpack.c.l.b16 %v904
    %v3679 = vunpack.c.h.b16 %v904
    %v3680 = vunpack.c.l.b16 %v905
    %v3681 = vunpack.c.h.b16 %v905
    %v3682 = vunpack.c.l.b16 %v906
    %v3683 = vunpack.c.h.b16 %v906
    %v3684 = vunpack.c.l.b16 %v907
    %v3685 = vunpack.c.h.b16 %v907
    %v3686 = vunpack.c.l.b16 %v908
    %v3687 = vunpack.c.h.b16 %v908
    %v3688 = vunpack.c.l.b16 %v909
    %v3689 = vunpack.c.h.b16 %v909
    %v3690 = vunpack.c.l.b16 %v910
    %v3691 = vunpack.c.h.b16 %v910
    %v3692 = vunpack.c.l.b16 %v911
    %v3693 = vunpack.c.h.b16 %v911
    %v3694 = vunpack.c.l.b16 %v912
    %v3695 = vunpack.c.h.b16 %v912
    %v3696 = vunpack.c.l.b16 %v913
    %v3697 = vunpack.c.h.b16 %v913
    %v3698 = vunpack.c.l.b16 %v914
    %v3699 = vunpack.c.h.b16 %v914
    %v3700 = vunpack.c.l.b16 %v915
    %v3701 = vunpack.c.h.b16 %v915
    %v3702 = vunpack.c.l.b16 %v916
    %v3703 = vunpack.c.h.b16 %v916
    %v3704 = vunpack.c.l.b16 %v917
    %v3705 = vunpack.c.h.b16 %v917
    %v3706 = vunpack.c.l.b16 %v918
    %v3707 = vunpack.c.h.b16 %v918
    %v3708 = vunpack.c.l.b16 %v919
    %v3709 = vunpack.c.h.b16 %v919
    %v3710 = vunpack.c.l.b16 %v920
    %v3711 = vunpack.c.h.b16 %v920
    %v3712 = vunpack.c.l.b16 %v921
    %v3713 = vunpack.c.h.b16 %v921
    %v3714 = vunpack.c.l.b16 %v922
    %v3715 = vunpack.c.h.b16 %v922
    %v3716 = vunpack.c.l.b16 %v923
    %v3717 = vunpack.c.h.b16 %v923
    %v3718 = vunpack.c.l.b16 %v924
    %v3719 = vunpack.c.h.b16 %v924
    %v3720 = vunpack.c.l.b16 %v925
    %v3721 = vunpack.c.h.b16 %v925
    %v3722 = vunpack.c.l.b16 %v926
    %v3723 = vunpack.c.h.b16 %v926
    %v3724 = vunpack.c.l.b16 %v927
    %v3725 = vunpack.c.h.b16 %v927
    %v3726 = vunpack.c.l.b16 %v928
    %v3727 = vunpack.c.h.b16 %v928
    %v3728 = vunpack.c.l.b16 %v929
    %v3729 = vunpack.c.h.b16 %v929
    %v3730 = vunpack.c.l.b16 %v930
    %v3731 = vunpack.c.h.b16 %v930
    %v3732 = vunpack.c.l.b16 %v931
    %v3733 = vunpack.c.h.b16 %v931
    %v3734 = vunpack.c.l.b16 %v932
    %v3735 = vunpack.c.h.b16 %v932
    %v3736 = vunpack.c.l.b16 %v933
    %v3737 = vunpack.c.h.b16 %v933
    %v3738 = vunpack.c.l.b16 %v934
    %v3739 = vunpack.c.h.b16 %v934
    %v3740 = vunpack.c.l.b16 %v935
    %v3741 = vunpack.c.h.b16 %v935
    %v3742 = vunpack.c.l.b16 %v936
    %v3743 = vunpack.c.h.b16 %v936
    %v3744 = vunpack.c.l.b16 %v937
    %v3745 = vunpack.c.h.b16 %v937
    %v3746 = vunpack.c.l.b16 %v938
    %v3747 = vunpack.c.h.b16 %v938
    %v3748 = vunpack.c.l.b16 %v939
    %v3749 = vunpack.c.h.b16 %v939
    %v3750 = vunpack.c.l.b16 %v940
    %v3751 = vunpack.c.h.b16 %v940
    %v3752 = vunpack.c.l.b16 %v941
    %v3753 = vunpack.c.h.b16 %v941
    %v3754 = vunpack.c.l.b16 %v942
    %v3755 = vunpack.c.h.b16 %v942
    %v3756 = vunpack.c.l.b16 %v943
    %v3757 = vunpack.c.h.b16 %v943
    %v3758 = vunpack.c.l.b16 %v944
    %v3759 = vunpack.c.h.b16 %v944
    %v3760 = vunpack.c.l.b16 %v945
    %v3761 = vunpack.c.h.b16 %v945
    %v3762 = vunpack.c.l.b16 %v946
    %v3763 = vunpack.c.h.b16 %v946
    %v3764 = vunpack.c.l.b16 %v947
    %v3765 = vunpack.c.h.b16 %v947
    %v3766 = vunpack.c.l.b16 %v948
    %v3767 = vunpack.c.h.b16 %v948
    %v3768 = vunpack.c.l.b16 %v949
    %v3769 = vunpack.c.h.b16 %v949
    %v3770 = vunpack.c.l.b16 %v950
    %v3771 = vunpack.c.h.b16 %v950
    %v3772 = vunpack.c.l.b16 %v951
    %v3773 = vunpack.c.h.b16 %v951
    %v3774 = vunpack.c.l.b16 %v952
    %v3775 = vunpack.c.h.b16 %v952
    %v3776 = vunpack.c.l.b16 %v953
    %v3777 = vunpack.c.h.b16 %v953
    %v3778 = vunpack.c.l.b16 %v954
    %v3779 = vunpack.c.h.b16 %v954
    %v3780 = vunpack.c.l.b16 %v955
    %v3781 = vunpack.c.h.b16 %v955
    %v3782 = vunpack.c.l.b16 %v956
    %v3783 = vunpack.c.h.b16 %v956
    %v3784 = vunpack.c.l.b16 %v957
    %v3785 = vunpack.c.h.b16 %v957
    %v3786 = vunpack.c.l.b16 %v958
    %v3787 = vunpack.c.h.b16 %v958
    %v3788 = vunpack.c.l.b16 %v959
    %v3789 = vunpack.c.h.b16 %v959
    %v3790 = vunpack.c.l.b16 %v960
    %v3791 = vunpack.c.h.b16 %v960
    %v3792 = vunpack.c.l.b16 %v961
    %v3793 = vunpack.c.h.b16 %v961
    %v3794 = vunpack.c.l.b16 %v962
    %v3795 = vunpack.c.h.b16 %v962
    %v3796 = vunpack.c.l.b16 %v963
    %v3797 = vunpack.c.h.b16 %v963
    %v3798 = vunpack.c.l.b16 %v964
    %v3799 = vunpack.c.h.b16 %v964
    %v3800 = vunpack.c.l.b16 %v965
    %v3801 = vunpack.c.h.b16 %v965
    %v3802 = vunpack.c.l.b16 %v966
    %v3803 = vunpack.c.h.b16 %v966
    %v3804 = vunpack.c.l.b16 %v967
    %v3805 = vunpack.c.h.b16 %v967
    %v3806 = vunpack.c.l.b16 %v968
    %v3807 = vunpack.c.h.b16 %v968
    %v3808 = vunpack.c.l.b16 %v969
    %v3809 = vunpack.c.h.b16 %v969
    %v3810 = vunpack.c.l.b16 %v970
    %v3811 = vunpack.c.h.b16 %v970
    %v3812 = vunpack.c.l.b16 %v971
    %v3813 = vunpack.c.h.b16 %v971
    %v3814 = vunpack.c.l.b16 %v972
    %v3815 = vunpack.c.h.b16 %v972
    %v3816 = vunpack.c.l.b16 %v973
    %v3817 = vunpack.c.h.b16 %v973
    %v3818 = vunpack.c.l.b16 %v974
    %v3819 = vunpack.c.h.b16 %v974
    %v3820 = vunpack.c.l.b16 %v975
    %v3821 = vunpack.c.h.b16 %v975
    %v3822 = vunpack.c.l.b16 %v976
    %v3823 = vunpack.c.h.b16 %v976
    %v3824 = vunpack.c.l.b16 %v977
    %v3825 = vunpack.c.h.b16 %v977
    %v3826 = vunpack.c.l.b16 %v978
    %v3827 = vunpack.c.h.b16 %v978
    %v3828 = vunpack.c.l.b16 %v979
    %v3829 = vunpack.c.h.b16 %v979
    %v3830 = vunpack.c.l.b16 %v980
    %v3831 = vunpack.c.h.b16 %v980
    %v3832 = vunpack.c.l.b16 %v981
    %v3833 = vunpack.c.h.b16 %v981
    %v3834 = vunpack.c.l.b16 %v982
    %v3835 = vunpack.c.h.b16 %v982
    %v3836 = vunpack.c.l.b16 %v983
    %v3837 = vunpack.c.h.b16 %v983
    %v3838 = vunpack.c.l.b16 %v984
    %v3839 = vunpack.c.h.b16 %v984
    %v3840 = vunpack.c.l.b16 %v985
    %v3841 = vunpack.c.h.b16 %v985
    %v3842 = vunpack.c.l.b16 %v986
    %v3843 = vunpack.c.h.b16 %v986
    %v3844 = vunpack.c.l.b16 %v987
    %v3845 = vunpack.c.h.b16 %v987
    %v3846 = vunpack.c.l.b16 %v988
    %v3847 = vunpack.c.h.b16 %v988
    %v3848 = vunpack.c.l.b16 %v989
    %v3849 = vunpack.c.h.b16 %v989
    %v3850 = vunpack.c.l.b16 %v990
    %v3851 = vunpack.c.h.b16 %v990
    %v3852 = vunpack.c.l.b16 %v991
    %v3853 = vunpack.c.h.b16 %v991
    %v3854 = vunpack.c.l.b16 %v992
    %v3855 = vunpack.c.h.b16 %v992
    %v3856 = vunpack.c.l.b16 %v993
    %v3857 = vunpack.c.h.b16 %v993
    %v3858 = vunpack.c.l.b16 %v994
    %v3859 = vunpack.c.h.b16 %v994
    %v3860 = vunpack.c.l.b16 %v995
    %v3861 = vunpack.c.h.b16 %v995
    %v3862 = vunpack.c.l.b16 %v996
    %v3863 = vunpack.c.h.b16 %v996
    %v3864 = vunpack.c.l.b16 %v997
    %v3865 = vunpack.c.h.b16 %v997
    %v3866 = vunpack.c.l.b16 %v998
    %v3867 = vunpack.c.h.b16 %v998
    %v3868 = vunpack.c.l.b16 %v999
    %v3869 = vunpack.c.h.b16 %v999
    %v3870 = vunpack.c.l.b16 %v1000
    %v3871 = vunpack.c.h.b16 %v1000
    %v3872 = vunpack.c.l.b16 %v1001
    %v3873 = vunpack.c.h.b16 %v1001
    %v3874 = vunpack.c.l.b16 %v1002
    %v3875 = vunpack.c.h.b16 %v1002
    %v3876 = vunpack.c.l.b16 %v1003
    %v3877 = vunpack.c.h.b16 %v1003
    %v3878 = vunpack.c.l.b16 %v1004
    %v3879 = vunpack.c.h.b16 %v1004
    %v3880 = vunpack.c.l.b16 %v1005
    %v3881 = vunpack.c.h.b16 %v1005
    %v3882 = vunpack.c.l.b16 %v1006
    %v3883 = vunpack.c.h.b16 %v1006
    %v3884 = vunpack.c.l.b16 %v1007
    %v3885 = vunpack.c.h.b16 %v1007
    %v3886 = vunpack.c.l.b16 %v1008
    %v3887 = vunpack.c.h.b16 %v1008
    %v3888 = vunpack.c.l.b16 %v1009
    %v3889 = vunpack.c.h.b16 %v1009
    %v3890 = vunpack.c.l.b16 %v1010
    %v3891 = vunpack.c.h.b16 %v1010
    %v3892 = vunpack.c.l.b16 %v1011
    %v3893 = vunpack.c.h.b16 %v1011
    %v3894 = vunpack.c.l.b16 %v1012
    %v3895 = vunpack.c.h.b16 %v1012
    %v3896 = vunpack.c.l.b16 %v1013
    %v3897 = vunpack.c.h.b16 %v1013
    %v3898 = vunpack.c.l.b16 %v1014
    %v3899 = vunpack.c.h.b16 %v1014
    %v3900 = vunpack.c.l.b16 %v1015
    %v3901 = vunpack.c.h.b16 %v1015
    %v3902 = vunpack.c.l.b16 %v1016
    %v3903 = vunpack.c.h.b16 %v1016
    %v3904 = vunpack.c.l.b16 %v1017
    %v3905 = vunpack.c.h.b16 %v1017
    %v3906 = vunpack.c.l.b16 %v1018
    %v3907 = vunpack.c.h.b16 %v1018
    %v3908 = vunpack.c.l.b16 %v1019
    %v3909 = vunpack.c.h.b16 %v1019
    %v3910 = vunpack.c.l.b16 %v1020
    %v3911 = vunpack.c.h.b16 %v1020
    %v3912 = vunpack.c.l.b16 %v1021
    %v3913 = vunpack.c.h.b16 %v1021
    %v3914 = vunpack.c.l.b16 %v1022
    %v3915 = vunpack.c.h.b16 %v1022
    %v3916 = vunpack.c.l.b16 %v1023
    %v3917 = vunpack.c.h.b16 %v1023
    %v3918 = vunpack.c.l.b16 %v1024
    %v3919 = vunpack.c.h.b16 %v1024
    %v3920 = vunpack.c.l.b16 %v1025
    %v3921 = vunpack.c.h.b16 %v1025
    %v3922 = vunpack.c.l.b16 %v1026
    %v3923 = vunpack.c.h.b16 %v1026
    %v3924 = vunpack.c.l.b16 %v1027
    %v3925 = vunpack.c.h.b16 %v1027
    %v3926 = vunpack.c.l.b16 %v1028
    %v3927 = vunpack.c.h.b16 %v1028
    %v3928 = vunpack.c.l.b16 %v1029
    %v3929 = vunpack.c.h.b16 %v1029
    %v3930 = vunpack.c.l.b16 %v1030
    %v3931 = vunpack.c.h.b16 %v1030
    %v3932 = vunpack.c.l.b16 %v1031
    %v3933 = vunpack.c.h.b16 %v1031
    %v3934 = vunpack.c.l.b16 %v1032
    %v3935 = vunpack.c.h.b16 %v1032
    %v3936 = vunpack.c.l.b16 %v1033
    %v3937 = vunpack.c.h.b16 %v1033
    %v3938 = vunpack.c.l.b16 %v1034
    %v3939 = vunpack.c.h.b16 %v1034
    %v3940 = vunpack.c.l.b16 %v1035
    %v3941 = vunpack.c.h.b16 %v1035
    %v3942 = vunpack.c.l.b16 %v1036
    %v3943 = vunpack.c.h.b16 %v1036
    %v3944 = vunpack.c.l.b16 %v1037
    %v3945 = vunpack.c.h.b16 %v1037
    %v3946 = vunpack.c.l.b16 %v1038
    %v3947 = vunpack.c.h.b16 %v1038
    %v3948 = vunpack.c.l.b16 %v1039
    %v3949 = vunpack.c.h.b16 %v1039
    %v3950 = vunpack.c.l.b16 %v1040
    %v3951 = vunpack.c.h.b16 %v1040
    %v3952 = vunpack.c.l.b16 %v1041
    %v3953 = vunpack.c.h.b16 %v1041
    %v3954 = vunpack.c.l.b16 %v1042
    %v3955 = vunpack.c.h.b16 %v1042
    %v3956 = vunpack.c.l.b16 %v1043
    %v3957 = vunpack.c.h.b16 %v1043
    %v3958 = vunpack.c.l.b16 %v1044
    %v3959 = vunpack.c.h.b16 %v1044
    %v3960 = vunpack.c.l.b16 %v1045
    %v3961 = vunpack.c.h.b16 %v1045
    %v3962 = vunpack.c.l.b16 %v1046
    %v3963 = vunpack.c.h.b16 %v1046
    %v3964 = vunpack.c.l.b16 %v1047
    %v3965 = vunpack.c.h.b16 %v1047
    %v3966 = vunpack.c.l.b16 %v1048
    %v3967 = vunpack.c.h.b16 %v1048
    %v3968 = vunpack.c.l.b16 %v1049
    %v3969 = vunpack.c.h.b16 %v1049
    %v3970 = vunpack.c.l.b16 %v1050
    %v3971 = vunpack.c.h.b16 %v1050
    %v3972 = vunpack.c.l.b16 %v1051
    %v3973 = vunpack.c.h.b16 %v1051
    %v3974 = vunpack.c.l.b16 %v1052
    %v3975 = vunpack.c.h.b16 %v1052
    %v3976 = vunpack.c.l.b16 %v1053
    %v3977 = vunpack.c.h.b16 %v1053
    %v3978 = vunpack.c.l.b16 %v1054
    %v3979 = vunpack.c.h.b16 %v1054
    %v3980 = vunpack.c.l.b16 %v1055
    %v3981 = vunpack.c.h.b16 %v1055
    %v3982 = vunpack.c.l.b16 %v1056
    %v3983 = vunpack.c.h.b16 %v1056
    %v3984 = vunpack.c.l.b16 %v1057
    %v3985 = vunpack.c.h.b16 %v1057
    %v3986 = vunpack.c.l.b16 %v1058
    %v3987 = vunpack.c.h.b16 %v1058
    %v3988 = vunpack.c.l.b16 %v1059
    %v3989 = vunpack.c.h.b16 %v1059
    %v3990 = vunpack.c.l.b16 %v1060
    %v3991 = vunpack.c.h.b16 %v1060
    %v3992 = vunpack.c.l.b16 %v1061
    %v3993 = vunpack.c.h.b16 %v1061
    %v3994 = vunpack.c.l.b16 %v1062
    %v3995 = vunpack.c.h.b16 %v1062
    %v3996 = vunpack.c.l.b16 %v1063
    %v3997 = vunpack.c.h.b16 %v1063
    %v3998 = vunpack.c.l.b16 %v1064
    %v3999 = vunpack.c.h.b16 %v1064
    %v4000 = vunpack.c.l.b16 %v1065
    %v4001 = vunpack.c.h.b16 %v1065
    %v4002 = vunpack.c.l.b16 %v1066
    %v4003 = vunpack.c.h.b16 %v1066
    %v4004 = vunpack.c.l.b16 %v1067
    %v4005 = vunpack.c.h.b16 %v1067
    %v4006 = vunpack.c.l.b16 %v1068
    %v4007 = vunpack.c.h.b16 %v1068
    %v4008 = vunpack.c.l.b16 %v1069
    %v4009 = vunpack.c.h.b16 %v1069
    %v4010 = vunpack.c.l.b16 %v1070
    %v4011 = vunpack.c.h.b16 %v1070
    %v4012 = vunpack.c.l.b16 %v1071
    %v4013 = vunpack.c.h.b16 %v1071
    %v4014 = vunpack.c.l.b16 %v1072
    %v4015 = vunpack.c.h.b16 %v1072
    %v4016 = vunpack.c.l.b16 %v1073
    %v4017 = vunpack.c.h.b16 %v1073
    %v4018 = vunpack.c.l.b16 %v1074
    %v4019 = vunpack.c.h.b16 %v1074
    %v4020 = vunpack.c.l.b16 %v1075
    %v4021 = vunpack.c.h.b16 %v1075
    %v4022 = vunpack.c.l.b16 %v1076
    %v4023 = vunpack.c.h.b16 %v1076
    %v4024 = vunpack.c.l.b16 %v1077
    %v4025 = vunpack.c.h.b16 %v1077
    %v4026 = vunpack.c.l.b16 %v1078
    %v4027 = vunpack.c.h.b16 %v1078
    %v4028 = vunpack.c.l.b16 %v1079
    %v4029 = vunpack.c.h.b16 %v1079
    %v4030 = vunpack.c.l.b16 %v1080
    %v4031 = vunpack.c.h.b16 %v1080
    %v4032 = vunpack.c.l.b16 %v1081
    %v4033 = vunpack.c.h.b16 %v1081
    %v4034 = vunpack.c.l.b16 %v1082
    %v4035 = vunpack.c.h.b16 %v1082
    %v4036 = vunpack.c.l.b16 %v1083
    %v4037 = vunpack.c.h.b16 %v1083
    %v4038 = vunpack.c.l.b16 %v1084
    %v4039 = vunpack.c.h.b16 %v1084
    %v4040 = vunpack.c.l.b16 %v1085
    %v4041 = vunpack.c.h.b16 %v1085
    %v4042 = vunpack.c.l.b16 %v1086
    %v4043 = vunpack.c.h.b16 %v1086
    %v4044 = vunpack.c.l.b16 %v1087
    %v4045 = vunpack.c.h.b16 %v1087
    %v4046 = vunpack.c.l.b16 %v1088
    %v4047 = vunpack.c.h.b16 %v1088
    %v4048 = vunpack.c.l.b16 %v1089
    %v4049 = vunpack.c.h.b16 %v1089
    %v4050 = vunpack.c.l.b16 %v1090
    %v4051 = vunpack.c.h.b16 %v1090
    %v4052 = vunpack.c.l.b16 %v1091
    %v4053 = vunpack.c.h.b16 %v1091
    %v4054 = vunpack.c.l.b16 %v1092
    %v4055 = vunpack.c.h.b16 %v1092
    %v4056 = vunpack.c.l.b16 %v1093
    %v4057 = vunpack.c.h.b16 %v1093
    %v4058 = vunpack.c.l.b16 %v1094
    %v4059 = vunpack.c.h.b16 %v1094
    %v4060 = vunpack.c.l.b16 %v1095
    %v4061 = vunpack.c.h.b16 %v1095
    %v4062 = vunpack.c.l.b16 %v1096
    %v4063 = vunpack.c.h.b16 %v1096
    %v4064 = vunpack.c.l.b16 %v1097
    %v4065 = vunpack.c.h.b16 %v1097
    %v4066 = vunpack.c.l.b16 %v1098
    %v4067 = vunpack.c.h.b16 %v1098
    %v4068 = vunpack.c.l.b16 %v1099
    %v4069 = vunpack.c.h.b16 %v1099
    %v4070 = vunpack.c.l.b16 %v1100
    %v4071 = vunpack.c.h.b16 %v1100
    %v4072 = vunpack.c.l.b16 %v1101
    %v4073 = vunpack.c.h.b16 %v1101
    %v4074 = vunpack.c.l.b16 %v1102
    %v4075 = vunpack.c.h.b16 %v1102
    %v4076 = vunpack.c.l.b16 %v1103
    %v4077 = vunpack.c.h.b16 %v1103
    %v4078 = vunpack.c.l.b16 %v1104
    %v4079 = vunpack.c.h.b16 %v1104
    %v4080 = vunpack.c.l.b16 %v1105
    %v4081 = vunpack.c.h.b16 %v1105
    %v4082 = vunpack.c.l.b16 %v1106
    %v4083 = vunpack.c.h.b16 %v1106
    %v4084 = vunpack.c.l.b16 %v1107
    %v4085 = vunpack.c.h.b16 %v1107
    %v4086 = vunpack.c.l.b16 %v1108
    %v4087 = vunpack.c.h.b16 %v1108
    %v4088 = vunpack.c.l.b16 %v1109
    %v4089 = vunpack.c.h.b16 %v1109
    %v4090 = vunpack.c.l.b16 %v1110
    %v4091 = vunpack.c.h.b16 %v1110
    %v4092 = vunpack.c.l.b16 %v1111
    %v4093 = vunpack.c.h.b16 %v1111
    %v4094 = vunpack.c.l.b16 %v1112
    %v4095 = vunpack.c.h.b16 %v1112
    %v4096 = vunpack.c.l.b16 %v1113
    %v4097 = vunpack.c.h.b16 %v1113
    %v4098 = vunpack.c.l.b16 %v1114
    %v4099 = vunpack.c.h.b16 %v1114
    %v4100 = vunpack.c.l.b16 %v1115
    %v4101 = vunpack.c.h.b16 %v1115
    %v4102 = vunpack.c.l.b16 %v1116
    %v4103 = vunpack.c.h.b16 %v1116
    %v4104 = vunpack.c.l.b16 %v1117
    %v4105 = vunpack.c.h.b16 %v1117
    %v4106 = vunpack.c.l.b16 %v1118
    %v4107 = vunpack.c.h.b16 %v1118
    %v4108 = vunpack.c.l.b16 %v1119
    %v4109 = vunpack.c.h.b16 %v1119
    %v4110 = vunpack.c.l.b16 %v1120
    %v4111 = vunpack.c.h.b16 %v1120
    %v4112 = vunpack.c.l.b16 %v1121
    %v4113 = vunpack.c.h.b16 %v1121
    %v4114 = vunpack.c.l.b16 %v1122
    %v4115 = vunpack.c.h.b16 %v1122
    %v4116 = vunpack.c.l.b16 %v1123
    %v4117 = vunpack.c.h.b16 %v1123
    %v4118 = vunpack.c.l.b16 %v1124
    %v4119 = vunpack.c.h.b16 %v1124
    %v4120 = vunpack.c.l.b16 %v1125
    %v4121 = vunpack.c.h.b16 %v1125
    %v4122 = vunpack.c.l.b16 %v1126
    %v4123 = vunpack.c.h.b16 %v1126
    %v4124 = vunpack.c.l.b16 %v1127
    %v4125 = vunpack.c.h.b16 %v1127
    %v4126 = vunpack.c.l.b16 %v1128
    %v4127 = vunpack.c.h.b16 %v1128
    %v4128 = vunpack.c.l.b16 %v1129
    %v4129 = vunpack.c.h.b16 %v1129
    %v4130 = vunpack.c.l.b16 %v1130
    %v4131 = vunpack.c.h.b16 %v1130
    %v4132 = vunpack.c.l.b16 %v1131
    %v4133 = vunpack.c.h.b16 %v1131
    %v4134 = vunpack.c.l.b16 %v1132
    %v4135 = vunpack.c.h.b16 %v1132
    %v4136 = vunpack.c.l.b16 %v1133
    %v4137 = vunpack.c.h.b16 %v1133
    %v4138 = vunpack.c.l.b16 %v1134
    %v4139 = vunpack.c.h.b16 %v1134
    %v4140 = vunpack.c.l.b16 %v1135
    %v4141 = vunpack.c.h.b16 %v1135
    %v4142 = vunpack.c.l.b16 %v1136
    %v4143 = vunpack.c.h.b16 %v1136
    %v4144 = vunpack.c.l.b16 %v1137
    %v4145 = vunpack.c.h.b16 %v1137
    %v4146 = vunpack.c.l.b16 %v1138
    %v4147 = vunpack.c.h.b16 %v1138
    %v4148 = vunpack.c.l.b16 %v1139
    %v4149 = vunpack.c.h.b16 %v1139
    %v4150 = vunpack.c.l.b16 %v1140
    %v4151 = vunpack.c.h.b16 %v1140
    %v4152 = vunpack.c.l.b16 %v1141
    %v4153 = vunpack.c.h.b16 %v1141
    %v4154 = vunpack.c.l.b16 %v1142
    %v4155 = vunpack.c.h.b16 %v1142
    %v4156 = vunpack.c.l.b16 %v1143
    %v4157 = vunpack.c.h.b16 %v1143
    %v4158 = vunpack.c.l.b16 %v1144
    %v4159 = vunpack.c.h.b16 %v1144
    %v4160 = vunpack.c.l.b16 %v1145
    %v4161 = vunpack.c.h.b16 %v1145
    %v4162 = vunpack.c.l.b16 %v1146
    %v4163 = vunpack.c.h.b16 %v1146
    %v4164 = vunpack.c.l.b16 %v1147
    %v4165 = vunpack.c.h.b16 %v1147
    %v4166 = vunpack.c.l.b16 %v1148
    %v4167 = vunpack.c.h.b16 %v1148
    %v4168 = vunpack.c.l.b16 %v1149
    %v4169 = vunpack.c.h.b16 %v1149
    %v4170 = vunpack.c.l.b16 %v1150
    %v4171 = vunpack.c.h.b16 %v1150
    %v4172 = vunpack.c.l.b16 %v1151
    %v4173 = vunpack.c.h.b16 %v1151
    %v4174 = vunpack.c.l.b16 %v1152
    %v4175 = vunpack.c.h.b16 %v1152
    %v4176 = vunpack.c.l.b16 %v1153
    %v4177 = vunpack.c.h.b16 %v1153
    %v4178 = vunpack.c.l.b16 %v1154
    %v4179 = vunpack.c.h.b16 %v1154
    %v4180 = vunpack.c.l.b16 %v1155
    %v4181 = vunpack.c.h.b16 %v1155
    %v4182 = vunpack.c.l.b16 %v1156
    %v4183 = vunpack.c.h.b16 %v1156
    %v4184 = vunpack.c.l.b16 %v1157
    %v4185 = vunpack.c.h.b16 %v1157
    %v4186 = vunpack.c.l.b16 %v1158
    %v4187 = vunpack.c.h.b16 %v1158
    %v4188 = vunpack.c.l.b16 %v1159
    %v4189 = vunpack.c.h.b16 %v1159
    %v4190 = vunpack.c.l.b16 %v1160
    %v4191 = vunpack.c.h.b16 %v1160
    %v4192 = vunpack.c.l.b16 %v1161
    %v4193 = vunpack.c.h.b16 %v1161
    %v4194 = vunpack.c.l.b16 %v1162
    %v4195 = vunpack.c.h.b16 %v1162
    %v4196 = vunpack.c.l.b16 %v1163
    %v4197 = vunpack.c.h.b16 %v1163
    %v4198 = vunpack.c.l.b16 %v1164
    %v4199 = vunpack.c.h.b16 %v1164
    %v4200 = vunpack.c.l.b16 %v1165
    %v4201 = vunpack.c.h.b16 %v1165
    %v4202 = vunpack.c.l.b16 %v1166
    %v4203 = vunpack.c.h.b16 %v1166
    %v4204 = vunpack.c.l.b16 %v1167
    %v4205 = vunpack.c.h.b16 %v1167
    %v4206 = vunpack.c.l.b16 %v1168
    %v4207 = vunpack.c.h.b16 %v1168
    %v4208 = vunpack.c.l.b16 %v1169
    %v4209 = vunpack.c.h.b16 %v1169
    %v4210 = vunpack.c.l.b16 %v1170
    %v4211 = vunpack.c.h.b16 %v1170
    %v4212 = vunpack.c.l.b16 %v1171
    %v4213 = vunpack.c.h.b16 %v1171
    %v4214 = vunpack.c.l.b16 %v1172
    %v4215 = vunpack.c.h.b16 %v1172
    %v4216 = vunpack.c.l.b16 %v1173
    %v4217 = vunpack.c.h.b16 %v1173
    %v4218 = vunpack.c.l.b16 %v1174
    %v4219 = vunpack.c.h.b16 %v1174
    %v4220 = vunpack.c.l.b16 %v1175
    %v4221 = vunpack.c.h.b16 %v1175
    %v4222 = vunpack.c.l.b16 %v1176
    %v4223 = vunpack.c.h.b16 %v1176
    %v4224 = vunpack.c.l.b16 %v1177
    %v4225 = vunpack.c.h.b16 %v1177
    %v4226 = vunpack.c.l.b16 %v1178
    %v4227 = vunpack.c.h.b16 %v1178
    %v4228 = vunpack.c.l.b16 %v1179
    %v4229 = vunpack.c.h.b16 %v1179
    %v4230 = vunpack.c.l.b16 %v1180
    %v4231 = vunpack.c.h.b16 %v1180
    %v4232 = vunpack.c.l.b16 %v1181
    %v4233 = vunpack.c.h.b16 %v1181
    %v4234 = vunpack.c.l.b16 %v1182
    %v4235 = vunpack.c.h.b16 %v1182
    %v4236 = vunpack.c.l.b16 %v1183
    %v4237 = vunpack.c.h.b16 %v1183
    %v4238 = vunpack.c.l.b16 %v1184
    %v4239 = vunpack.c.h.b16 %v1184
    %v4240 = vunpack.c.l.b16 %v1185
    %v4241 = vunpack.c.h.b16 %v1185
    %v4242 = vunpack.c.l.b16 %v1186
    %v4243 = vunpack.c.h.b16 %v1186
    %v4244 = vunpack.c.l.b16 %v1187
    %v4245 = vunpack.c.h.b16 %v1187
    %v4246 = vunpack.c.l.b16 %v1188
    %v4247 = vunpack.c.h.b16 %v1188
    %v4248 = vunpack.c.l.b16 %v1189
    %v4249 = vunpack.c.h.b16 %v1189
    %v4250 = vunpack.c.l.b16 %v1190
    %v4251 = vunpack.c.h.b16 %v1190
    %v4252 = vunpack.c.l.b16 %v1191
    %v4253 = vunpack.c.h.b16 %v1191
    %v4254 = vunpack.c.l.b16 %v1192
    %v4255 = vunpack.c.h.b16 %v1192
    %v4256 = vunpack.c.l.b16 %v1193
    %v4257 = vunpack.c.h.b16 %v1193
    %v4258 = vunpack.c.l.b16 %v1194
    %v4259 = vunpack.c.h.b16 %v1194
    %v4260 = vunpack.c.l.b16 %v1195
    %v4261 = vunpack.c.h.b16 %v1195
    %v4262 = vunpack.c.l.b16 %v1196
    %v4263 = vunpack.c.h.b16 %v1196
    %v4264 = vunpack.c.l.b16 %v1197
    %v4265 = vunpack.c.h.b16 %v1197
    %v4266 = vunpack.c.l.b16 %v1198
    %v4267 = vunpack.c.h.b16 %v1198
    %v4268 = vunpack.c.l.b16 %v1199
    %v4269 = vunpack.c.h.b16 %v1199
    %v4270 = vunpack.c.l.b16 %v1200
    %v4271 = vunpack.c.h.b16 %v1200
    %v4272 = vunpack.c.l.b16 %v1201
    %v4273 = vunpack.c.h.b16 %v1201
    %v4274 = vunpack.c.l.b16 %v1202
    %v4275 = vunpack.c.h.b16 %v1202
    %v4276 = vunpack.c.l.b16 %v1203
    %v4277 = vunpack.c.h.b16 %v1203
    %v4278 = vunpack.c.l.b16 %v1204
    %v4279 = vunpack.c.h.b16 %v1204
    %v4280 = vunpack.c.l.b16 %v1205
    %v4281 = vunpack.c.h.b16 %v1205
    %v4282 = vunpack.c.l.b16 %v1206
    %v4283 = vunpack.c.h.b16 %v1206
    %v4284 = vunpack.c.l.b16 %v1207
    %v4285 = vunpack.c.h.b16 %v1207
    %v4286 = vunpack.c.l.b16 %v1208
    %v4287 = vunpack.c.h.b16 %v1208
    %v4288 = vunpack.c.l.b16 %v1209
    %v4289 = vunpack.c.h.b16 %v1209
    %v4290 = vunpack.c.l.b16 %v1210
    %v4291 = vunpack.c.h.b16 %v1210
    %v4292 = vunpack.c.l.b16 %v1211
    %v4293 = vunpack.c.h.b16 %v1211
    %v4294 = vunpack.c.l.b16 %v1212
    %v4295 = vunpack.c.h.b16 %v1212
    %v4296 = vunpack.c.l.b16 %v1213
    %v4297 = vunpack.c.h.b16 %v1213
    %v4298 = vunpack.c.l.b16 %v1214
    %v4299 = vunpack.c.h.b16 %v1214
    %v4300 = vunpack.c.l.b16 %v1215
    %v4301 = vunpack.c.h.b16 %v1215
    %v4302 = vunpack.c.l.b16 %v1216
    %v4303 = vunpack.c.h.b16 %v1216
    %v4304 = vunpack.c.l.b16 %v1217
    %v4305 = vunpack.c.h.b16 %v1217
    %v4306 = vunpack.c.l.b16 %v1218
    %v4307 = vunpack.c.h.b16 %v1218
    %v4308 = vunpack.c.l.b16 %v1219
    %v4309 = vunpack.c.h.b16 %v1219
    %v4310 = vunpack.c.l.b16 %v1220
    %v4311 = vunpack.c.h.b16 %v1220
    %v4312 = vunpack.c.l.b16 %v1221
    %v4313 = vunpack.c.h.b16 %v1221
    %v4314 = vunpack.c.l.b16 %v1222
    %v4315 = vunpack.c.h.b16 %v1222
    %v4316 = vunpack.c.l.b16 %v1223
    %v4317 = vunpack.c.h.b16 %v1223
    %v4318 = vunpack.c.l.b16 %v1224
    %v4319 = vunpack.c.h.b16 %v1224
    %v4320 = vunpack.c.l.b16 %v1225
    %v4321 = vunpack.c.h.b16 %v1225
    %v4322 = vunpack.c.l.b16 %v1226
    %v4323 = vunpack.c.h.b16 %v1226
    %v4324 = vunpack.c.l.b16 %v1227
    %v4325 = vunpack.c.h.b16 %v1227
    %v4326 = vunpack.c.l.b16 %v1228
    %v4327 = vunpack.c.h.b16 %v1228
    %v4328 = vunpack.c.l.b16 %v1229
    %v4329 = vunpack.c.h.b16 %v1229
    %v4330 = vunpack.c.l.b16 %v1230
    %v4331 = vunpack.c.h.b16 %v1230
    %v4332 = vunpack.c.l.b16 %v1231
    %v4333 = vunpack.c.h.b16 %v1231
    %v4334 = vunpack.c.l.b16 %v1232
    %v4335 = vunpack.c.h.b16 %v1232
    %v4336 = vunpack.c.l.b16 %v1233
    %v4337 = vunpack.c.h.b16 %v1233
    %v4338 = vunpack.c.l.b16 %v1234
    %v4339 = vunpack.c.h.b16 %v1234
    %v4340 = vunpack.c.l.b16 %v1235
    %v4341 = vunpack.c.h.b16 %v1235
    %v4342 = vunpack.c.l.b16 %v1236
    %v4343 = vunpack.c.h.b16 %v1236
    %v4344 = vunpack.c.l.b16 %v1237
    %v4345 = vunpack.c.h.b16 %v1237
    %v4346 = vunpack.c.l.b16 %v1238
    %v4347 = vunpack.c.h.b16 %v1238
    %v4348 = vunpack.c.l.b16 %v1239
    %v4349 = vunpack.c.h.b16 %v1239
    %v4350 = vunpack.c.l.b16 %v1240
    %v4351 = vunpack.c.h.b16 %v1240
    %v4352 = vunpack.c.l.b16 %v1241
    %v4353 = vunpack.c.h.b16 %v1241
    %v4354 = vunpack.c.l.b16 %v1242
    %v4355 = vunpack.c.h.b16 %v1242
    %v4356 = vunpack.c.l.b16 %v1243
    %v4357 = vunpack.c.h.b16 %v1243
    %v4358 = vpack.c.b16 %v2318, %v2310
    %v4359 = vpack.c.b16 %v2319, %v2311
    %v4360 = vpack.c.b16 %v2320, %v2312
    %v4361 = vpack.c.b16 %v2321, %v2313
    %v4362 = vpack.c.b16 %v2322, %v2314
    %v4363 = vpack.c.b16 %v2323, %v2315
    %v4364 = vpack.c.b16 %v2324, %v2316
    %v4365 = vpack.c.b16 %v2325, %v2317
    %v4366 = vpack.c.b16 %v2334, %v2326
    %v4367 = vpack.c.b16 %v2335, %v2327
    %v4368 = vpack.c.b16 %v2336, %v2328
    %v4369 = vpack.c.b16 %v2337, %v2329
    %v4370 = vpack.c.b16 %v2338, %v2330
    %v4371 = vpack.c.b16 %v2339, %v2331
    %v4372 = vpack.c.b16 %v2340, %v2332
    %v4373 = vpack.c.b16 %v2341, %v2333
    %v4374 = vpack.c.b16 %v2350, %v2342
    %v4375 = vpack.c.b16 %v2351, %v2343
    %v4376 = vpack.c.b16 %v2352, %v2344
    %v4377 = vpack.c.b16 %v2353, %v2345
    %v4378 = vpack.c.b16 %v2354, %v2346
    %v4379 = vpack.c.b16 %v2355, %v2347
    %v4380 = vpack.c.b16 %v2356, %v2348
    %v4381 = vpack.c.b16 %v2357, %v2349
    %v4382 = vpack.c.b16 %v2366, %v2358
    %v4383 = vpack.c.b16 %v2367, %v2359
    %v4384 = vpack.c.b16 %v2368, %v2360
    %v4385 = vpack.c.b16 %v2369, %v2361
    %v4386 = vpack.c.b16 %v2370, %v2362
    %v4387 = vpack.c.b16 %v2371, %v2363
    %v4388 = vpack.c.b16 %v2372, %v2364
    %v4389 = vpack.c.b16 %v2373, %v2365
    %v4390 = vpack.c.b16 %v2382, %v2374
    %v4391 = vpack.c.b16 %v2383, %v2375
    %v4392 = vpack.c.b16 %v2384, %v2376
    %v4393 = vpack.c.b16 %v2385, %v2377
    %v4394 = vpack.c.b16 %v2386, %v2378
    %v4395 = vpack.c.b16 %v2387, %v2379
    %v4396 = vpack.c.b16 %v2388, %v2380
    %v4397 = vpack.c.b16 %v2389, %v2381
    %v4398 = vpack.c.b16 %v2398, %v2390
    %v4399 = vpack.c.b16 %v2399, %v2391
    %v4400 = vpack.c.b16 %v2400, %v2392
    %v4401 = vpack.c.b16 %v2401, %v2393
    %v4402 = vpack.c.b16 %v2402, %v2394
    %v4403 = vpack.c.b16 %v2403, %v2395
    %v4404 = vpack.c.b16 %v2404, %v2396
    %v4405 = vpack.c.b16 %v2405, %v2397
    %v4406 = vpack.c.b16 %v2414, %v2406
    %v4407 = vpack.c.b16 %v2415, %v2407
    %v4408 = vpack.c.b16 %v2416, %v2408
    %v4409 = vpack.c.b16 %v2417, %v2409
    %v4410 = vpack.c.b16 %v2418, %v2410
    %v4411 = vpack.c.b16 %v2419, %v2411
    %v4412 = vpack.c.b16 %v2420, %v2412
    %v4413 = vpack.c.b16 %v2421, %v2413
    %v4414 = vpack.c.b16 %v2430, %v2422
    %v4415 = vpack.c.b16 %v2431, %v2423
    %v4416 = vpack.c.b16 %v2432, %v2424
    %v4417 = vpack.c.b16 %v2433, %v2425
    %v4418 = vpack.c.b16 %v2434, %v2426
    %v4419 = vpack.c.b16 %v2435, %v2427
    %v4420 = vpack.c.b16 %v2436, %v2428
    %v4421 = vpack.c.b16 %v2437, %v2429
    %v4422 = vpack.c.b16 %v2446, %v2438
    %v4423 = vpack.c.b16 %v2447, %v2439
    %v4424 = vpack.c.b16 %v2448, %v2440
    %v4425 = vpack.c.b16 %v2449, %v2441
    %v4426 = vpack.c.b16 %v2450, %v2442
    %v4427 = vpack.c.b16 %v2451, %v2443
    %v4428 = vpack.c.b16 %v2452, %v2444
    %v4429 = vpack.c.b16 %v2453, %v2445
    %v4430 = vpack.c.b16 %v2462, %v2454
    %v4431 = vpack.c.b16 %v2463, %v2455
    %v4432 = vpack.c.b16 %v2464, %v2456
    %v4433 = vpack.c.b16 %v2465, %v2457
    %v4434 = vpack.c.b16 %v2466, %v2458
    %v4435 = vpack.c.b16 %v2467, %v2459
    %v4436 = vpack.c.b16 %v2468, %v2460
    %v4437 = vpack.c.b16 %v2469, %v2461
    %v4438 = vpack.c.b16 %v2478, %v2470
    %v4439 = vpack.c.b16 %v2479, %v2471
    %v4440 = vpack.c.b16 %v2480, %v2472
    %v4441 = vpack.c.b16 %v2481, %v2473
    %v4442 = vpack.c.b16 %v2482, %v2474
    %v4443 = vpack.c.b16 %v2483, %v2475
    %v4444 = vpack.c.b16 %v2484, %v2476
    %v4445 = vpack.c.b16 %v2485, %v2477
    %v4446 = vpack.c.b16 %v2494, %v2486
    %v4447 = vpack.c.b16 %v2495, %v2487
    %v4448 = vpack.c.b16 %v2496, %v2488
    %v4449 = vpack.c.b16 %v2497, %v2489
    %v4450 = vpack.c.b16 %v2498, %v2490
    %v4451 = vpack.c.b16 %v2499, %v2491
    %v4452 = vpack.c.b16 %v2500, %v2492
    %v4453 = vpack.c.b16 %v2501, %v2493
    %v4454 = vpack.c.b16 %v2510, %v2502
    %v4455 = vpack.c.b16 %v2511, %v2503
    %v4456 = vpack.c.b16 %v2512, %v2504
    %v4457 = vpack.c.b16 %v2513, %v2505
    %v4458 = vpack.c.b16 %v2514, %v2506
    %v4459 = vpack.c.b16 %v2515, %v2507
    %v4460 = vpack.c.b16 %v2516, %v2508
    %v4461 = vpack.c.b16 %v2517, %v2509
    %v4462 = vpack.c.b16 %v2526, %v2518
    %v4463 = vpack.c.b16 %v2527, %v2519
    %v4464 = vpack.c.b16 %v2528, %v2520
    %v4465 = vpack.c.b16 %v2529, %v2521
    %v4466 = vpack.c.b16 %v2530, %v2522
    %v4467 = vpack.c.b16 %v2531, %v2523
    %v4468 = vpack.c.b16 %v2532, %v2524
    %v4469 = vpack.c.b16 %v2533, %v2525
    %v4470 = vpack.c.b16 %v2542, %v2534
    %v4471 = vpack.c.b16 %v2543, %v2535
    %v4472 = vpack.c.b16 %v2544, %v2536
    %v4473 = vpack.c.b16 %v2545, %v2537
    %v4474 = vpack.c.b16 %v2546, %v2538
    %v4475 = vpack.c.b16 %v2547, %v2539
    %v4476 = vpack.c.b16 %v2548, %v2540
    %v4477 = vpack.c.b16 %v2549, %v2541
    %v4478 = vpack.c.b16 %v2558, %v2550
    %v4479 = vpack.c.b16 %v2559, %v2551
    %v4480 = vpack.c.b16 %v2560, %v2552
    %v4481 = vpack.c.b16 %v2561, %v2553
    %v4482 = vpack.c.b16 %v2562, %v2554
    %v4483 = vpack.c.b16 %v2563, %v2555
    %v4484 = vpack.c.b16 %v2564, %v2556
    %v4485 = vpack.c.b16 %v2565, %v2557
    %v4486 = vpack.c.b16 %v2574, %v2566
    %v4487 = vpack.c.b16 %v2575, %v2567
    %v4488 = vpack.c.b16 %v2576, %v2568
    %v4489 = vpack.c.b16 %v2577, %v2569
    %v4490 = vpack.c.b16 %v2578, %v2570
    %v4491 = vpack.c.b16 %v2579, %v2571
    %v4492 = vpack.c.b16 %v2580, %v2572
    %v4493 = vpack.c.b16 %v2581, %v2573
    %v4494 = vpack.c.b16 %v2590, %v2582
    %v4495 = vpack.c.b16 %v2591, %v2583
    %v4496 = vpack.c.b16 %v2592, %v2584
    %v4497 = vpack.c.b16 %v2593, %v2585
    %v4498 = vpack.c.b16 %v2594, %v2586
    %v4499 = vpack.c.b16 %v2595, %v2587
    %v4500 = vpack.c.b16 %v2596, %v2588
    %v4501 = vpack.c.b16 %v2597, %v2589
    %v4502 = vpack.c.b16 %v2606, %v2598
    %v4503 = vpack.c.b16 %v2607, %v2599
    %v4504 = vpack.c.b16 %v2608, %v2600
    %v4505 = vpack.c.b16 %v2609, %v2601
    %v4506 = vpack.c.b16 %v2610, %v2602
    %v4507 = vpack.c.b16 %v2611, %v2603
    %v4508 = vpack.c.b16 %v2612, %v2604
    %v4509 = vpack.c.b16 %v2613, %v2605
    %v4510 = vpack.c.b16 %v2622, %v2614
    %v4511 = vpack.c.b16 %v2623, %v2615
    %v4512 = vpack.c.b16 %v2624, %v2616
    %v4513 = vpack.c.b16 %v2625, %v2617
    %v4514 = vpack.c.b16 %v2626, %v2618
    %v4515 = vpack.c.b16 %v2627, %v2619
    %v4516 = vpack.c.b16 %v2628, %v2620
    %v4517 = vpack.c.b16 %v2629, %v2621
    %v4518 = vpack.c.b16 %v2638, %v2630
    %v4519 = vpack.c.b16 %v2639, %v2631
    %v4520 = vpack.c.b16 %v2640, %v2632
    %v4521 = vpack.c.b16 %v2641, %v2633
    %v4522 = vpack.c.b16 %v2642, %v2634
    %v4523 = vpack.c.b16 %v2643, %v2635
    %v4524 = vpack.c.b16 %v2644, %v2636
    %v4525 = vpack.c.b16 %v2645, %v2637
    %v4526 = vpack.c.b16 %v2654, %v2646
    %v4527 = vpack.c.b16 %v2655, %v2647
    %v4528 = vpack.c.b16 %v2656, %v2648
    %v4529 = vpack.c.b16 %v2657, %v2649
    %v4530 = vpack.c.b16 %v2658, %v2650
    %v4531 = vpack.c.b16 %v2659, %v2651
    %v4532 = vpack.c.b16 %v2660, %v2652
    %v4533 = vpack.c.b16 %v2661, %v2653
    %v4534 = vpack.c.b16 %v2670, %v2662
    %v4535 = vpack.c.b16 %v2671, %v2663
    %v4536 = vpack.c.b16 %v2672, %v2664
    %v4537 = vpack.c.b16 %v2673, %v2665
    %v4538 = vpack.c.b16 %v2674, %v2666
    %v4539 = vpack.c.b16 %v2675, %v2667
    %v4540 = vpack.c.b16 %v2676, %v2668
    %v4541 = vpack.c.b16 %v2677, %v2669
    %v4542 = vpack.c.b16 %v2686, %v2678
    %v4543 = vpack.c.b16 %v2687, %v2679
    %v4544 = vpack.c.b16 %v2688, %v2680
    %v4545 = vpack.c.b16 %v2689, %v2681
    %v4546 = vpack.c.b16 %v2690, %v2682
    %v4547 = vpack.c.b16 %v2691, %v2683
    %v4548 = vpack.c.b16 %v2692, %v2684
    %v4549 = vpack.c.b16 %v2693, %v2685
    %v4550 = vpack.c.b16 %v2702, %v2694
    %v4551 = vpack.c.b16 %v2703, %v2695
    %v4552 = vpack.c.b16 %v2704, %v2696
    %v4553 = vpack.c.b16 %v2705, %v2697
    %v4554 = vpack.c.b16 %v2706, %v2698
    %v4555 = vpack.c.b16 %v2707, %v2699
    %v4556 = vpack.c.b16 %v2708, %v2700
    %v4557 = vpack.c.b16 %v2709, %v2701
    %v4558 = vpack.c.b16 %v2718, %v2710
    %v4559 = vpack.c.b16 %v2719, %v2711
    %v4560 = vpack.c.b16 %v2720, %v2712
    %v4561 = vpack.c.b16 %v2721, %v2713
    %v4562 = vpack.c.b16 %v2722, %v2714
    %v4563 = vpack.c.b16 %v2723, %v2715
    %v4564 = vpack.c.b16 %v2724, %v2716
    %v4565 = vpack.c.b16 %v2725, %v2717
    %v4566 = vpack.c.b16 %v2734, %v2726
    %v4567 = vpack.c.b16 %v2735, %v2727
    %v4568 = vpack.c.b16 %v2736, %v2728
    %v4569 = vpack.c.b16 %v2737, %v2729
    %v4570 = vpack.c.b16 %v2738, %v2730
    %v4571 = vpack.c.b16 %v2739, %v2731
    %v4572 = vpack.c.b16 %v2740, %v2732
    %v4573 = vpack.c.b16 %v2741, %v2733
    %v4574 = vpack.c.b16 %v2750, %v2742
    %v4575 = vpack.c.b16 %v2751, %v2743
    %v4576 = vpack.c.b16 %v2752, %v2744
    %v4577 = vpack.c.b16 %v2753, %v2745
    %v4578 = vpack.c.b16 %v2754, %v2746
    %v4579 = vpack.c.b16 %v2755, %v2747
    %v4580 = vpack.c.b16 %v2756, %v2748
    %v4581 = vpack.c.b16 %v2757, %v2749
    %v4582 = vpack.c.b16 %v2766, %v2758
    %v4583 = vpack.c.b16 %v2767, %v2759
    %v4584 = vpack.c.b16 %v2768, %v2760
    %v4585 = vpack.c.b16 %v2769, %v2761
    %v4586 = vpack.c.b16 %v2770, %v2762
    %v4587 = vpack.c.b16 %v2771, %v2763
    %v4588 = vpack.c.b16 %v2772, %v2764
    %v4589 = vpack.c.b16 %v2773, %v2765
    %v4590 = vpack.c.b16 %v2782, %v2774
    %v4591 = vpack.c.b16 %v2783, %v2775
    %v4592 = vpack.c.b16 %v2784, %v2776
    %v4593 = vpack.c.b16 %v2785, %v2777
    %v4594 = vpack.c.b16 %v2786, %v2778
    %v4595 = vpack.c.b16 %v2787, %v2779
    %v4596 = vpack.c.b16 %v2788, %v2780
    %v4597 = vpack.c.b16 %v2789, %v2781
    %v4598 = vpack.c.b16 %v2798, %v2790
    %v4599 = vpack.c.b16 %v2799, %v2791
    %v4600 = vpack.c.b16 %v2800, %v2792
    %v4601 = vpack.c.b16 %v2801, %v2793
    %v4602 = vpack.c.b16 %v2802, %v2794
    %v4603 = vpack.c.b16 %v2803, %v2795
    %v4604 = vpack.c.b16 %v2804, %v2796
    %v4605 = vpack.c.b16 %v2805, %v2797
    %v4606 = vpack.c.b16 %v2814, %v2806
    %v4607 = vpack.c.b16 %v2815, %v2807
    %v4608 = vpack.c.b16 %v2816, %v2808
    %v4609 = vpack.c.b16 %v2817, %v2809
    %v4610 = vpack.c.b16 %v2818, %v2810
    %v4611 = vpack.c.b16 %v2819, %v2811
    %v4612 = vpack.c.b16 %v2820, %v2812
    %v4613 = vpack.c.b16 %v2821, %v2813
    %v4614 = vpack.c.b16 %v2830, %v2822
    %v4615 = vpack.c.b16 %v2831, %v2823
    %v4616 = vpack.c.b16 %v2832, %v2824
    %v4617 = vpack.c.b16 %v2833, %v2825
    %v4618 = vpack.c.b16 %v2834, %v2826
    %v4619 = vpack.c.b16 %v2835, %v2827
    %v4620 = vpack.c.b16 %v2836, %v2828
    %v4621 = vpack.c.b16 %v2837, %v2829
    %v4622 = vpack.c.b16 %v2846, %v2838
    %v4623 = vpack.c.b16 %v2847, %v2839
    %v4624 = vpack.c.b16 %v2848, %v2840
    %v4625 = vpack.c.b16 %v2849, %v2841
    %v4626 = vpack.c.b16 %v2850, %v2842
    %v4627 = vpack.c.b16 %v2851, %v2843
    %v4628 = vpack.c.b16 %v2852, %v2844
    %v4629 = vpack.c.b16 %v2853, %v2845
    %v4630 = vpack.c.b16 %v2862, %v2854
    %v4631 = vpack.c.b16 %v2863, %v2855
    %v4632 = vpack.c.b16 %v2864, %v2856
    %v4633 = vpack.c.b16 %v2865, %v2857
    %v4634 = vpack.c.b16 %v2866, %v2858
    %v4635 = vpack.c.b16 %v2867, %v2859
    %v4636 = vpack.c.b16 %v2868, %v2860
    %v4637 = vpack.c.b16 %v2869, %v2861
    %v4638 = vpack.c.b16 %v2878, %v2870
    %v4639 = vpack.c.b16 %v2879, %v2871
    %v4640 = vpack.c.b16 %v2880, %v2872
    %v4641 = vpack.c.b16 %v2881, %v2873
    %v4642 = vpack.c.b16 %v2882, %v2874
    %v4643 = vpack.c.b16 %v2883, %v2875
    %v4644 = vpack.c.b16 %v2884, %v2876
    %v4645 = vpack.c.b16 %v2885, %v2877
    %v4646 = vpack.c.b16 %v2894, %v2886
    %v4647 = vpack.c.b16 %v2895, %v2887
    %v4648 = vpack.c.b16 %v2896, %v2888
    %v4649 = vpack.c.b16 %v2897, %v2889
    %v4650 = vpack.c.b16 %v2898, %v2890
    %v4651 = vpack.c.b16 %v2899, %v2891
    %v4652 = vpack.c.b16 %v2900, %v2892
    %v4653 = vpack.c.b16 %v2901, %v2893
    %v4654 = vpack.c.b16 %v2910, %v2902
    %v4655 = vpack.c.b16 %v2911, %v2903
    %v4656 = vpack.c.b16 %v2912, %v2904
    %v4657 = vpack.c.b16 %v2913, %v2905
    %v4658 = vpack.c.b16 %v2914, %v2906
    %v4659 = vpack.c.b16 %v2915, %v2907
    %v4660 = vpack.c.b16 %v2916, %v2908
    %v4661 = vpack.c.b16 %v2917, %v2909
    %v4662 = vpack.c.b16 %v2926, %v2918
    %v4663 = vpack.c.b16 %v2927, %v2919
    %v4664 = vpack.c.b16 %v2928, %v2920
    %v4665 = vpack.c.b16 %v2929, %v2921
    %v4666 = vpack.c.b16 %v2930, %v2922
    %v4667 = vpack.c.b16 %v2931, %v2923
    %v4668 = vpack.c.b16 %v2932, %v2924
    %v4669 = vpack.c.b16 %v2933, %v2925
    %v4670 = vpack.c.b16 %v2942, %v2934
    %v4671 = vpack.c.b16 %v2943, %v2935
    %v4672 = vpack.c.b16 %v2944, %v2936
    %v4673 = vpack.c.b16 %v2945, %v2937
    %v4674 = vpack.c.b16 %v2946, %v2938
    %v4675 = vpack.c.b16 %v2947, %v2939
    %v4676 = vpack.c.b16 %v2948, %v2940
    %v4677 = vpack.c.b16 %v2949, %v2941
    %v4678 = vpack.c.b16 %v2958, %v2950
    %v4679 = vpack.c.b16 %v2959, %v2951
    %v4680 = vpack.c.b16 %v2960, %v2952
    %v4681 = vpack.c.b16 %v2961, %v2953
    %v4682 = vpack.c.b16 %v2962, %v2954
    %v4683 = vpack.c.b16 %v2963, %v2955
    %v4684 = vpack.c.b16 %v2964, %v2956
    %v4685 = vpack.c.b16 %v2965, %v2957
    %v4686 = vpack.c.b16 %v2974, %v2966
    %v4687 = vpack.c.b16 %v2975, %v2967
    %v4688 = vpack.c.b16 %v2976, %v2968
    %v4689 = vpack.c.b16 %v2977, %v2969
    %v4690 = vpack.c.b16 %v2978, %v2970
    %v4691 = vpack.c.b16 %v2979, %v2971
    %v4692 = vpack.c.b16 %v2980, %v2972
    %v4693 = vpack.c.b16 %v2981, %v2973
    %v4694 = vpack.c.b16 %v2990, %v2982
    %v4695 = vpack.c.b16 %v2991, %v2983
    %v4696 = vpack.c.b16 %v2992, %v2984
    %v4697 = vpack.c.b16 %v2993, %v2985
    %v4698 = vpack.c.b16 %v2994, %v2986
    %v4699 = vpack.c.b16 %v2995, %v2987
    %v4700 = vpack.c.b16 %v2996, %v2988
    %v4701 = vpack.c.b16 %v2997, %v2989
    %v4702 = vpack.c.b16 %v3006, %v2998
    %v4703 = vpack.c.b16 %v3007, %v2999
    %v4704 = vpack.c.b16 %v3008, %v3000
    %v4705 = vpack.c.b16 %v3009, %v3001
    %v4706 = vpack.c.b16 %v3010, %v3002
    %v4707 = vpack.c.b16 %v3011, %v3003
    %v4708 = vpack.c.b16 %v3012, %v3004
    %v4709 = vpack.c.b16 %v3013, %v3005
    %v4710 = vpack.c.b16 %v3022, %v3014
    %v4711 = vpack.c.b16 %v3023, %v3015
    %v4712 = vpack.c.b16 %v3024, %v3016
    %v4713 = vpack.c.b16 %v3025, %v3017
    %v4714 = vpack.c.b16 %v3026, %v3018
    %v4715 = vpack.c.b16 %v3027, %v3019
    %v4716 = vpack.c.b16 %v3028, %v3020
    %v4717 = vpack.c.b16 %v3029, %v3021
    %v4718 = vpack.c.b16 %v3038, %v3030
    %v4719 = vpack.c.b16 %v3039, %v3031
    %v4720 = vpack.c.b16 %v3040, %v3032
    %v4721 = vpack.c.b16 %v3041, %v3033
    %v4722 = vpack.c.b16 %v3042, %v3034
    %v4723 = vpack.c.b16 %v3043, %v3035
    %v4724 = vpack.c.b16 %v3044, %v3036
    %v4725 = vpack.c.b16 %v3045, %v3037
    %v4726 = vpack.c.b16 %v3054, %v3046
    %v4727 = vpack.c.b16 %v3055, %v3047
    %v4728 = vpack.c.b16 %v3056, %v3048
    %v4729 = vpack.c.b16 %v3057, %v3049
    %v4730 = vpack.c.b16 %v3058, %v3050
    %v4731 = vpack.c.b16 %v3059, %v3051
    %v4732 = vpack.c.b16 %v3060, %v3052
    %v4733 = vpack.c.b16 %v3061, %v3053
    %v4734 = vpack.c.b16 %v3070, %v3062
    %v4735 = vpack.c.b16 %v3071, %v3063
    %v4736 = vpack.c.b16 %v3072, %v3064
    %v4737 = vpack.c.b16 %v3073, %v3065
    %v4738 = vpack.c.b16 %v3074, %v3066
    %v4739 = vpack.c.b16 %v3075, %v3067
    %v4740 = vpack.c.b16 %v3076, %v3068
    %v4741 = vpack.c.b16 %v3077, %v3069
    %v4742 = vpack.c.b16 %v3086, %v3078
    %v4743 = vpack.c.b16 %v3087, %v3079
    %v4744 = vpack.c.b16 %v3088, %v3080
    %v4745 = vpack.c.b16 %v3089, %v3081
    %v4746 = vpack.c.b16 %v3090, %v3082
    %v4747 = vpack.c.b16 %v3091, %v3083
    %v4748 = vpack.c.b16 %v3092, %v3084
    %v4749 = vpack.c.b16 %v3093, %v3085
    %v4750 = vpack.c.b16 %v3102, %v3094
    %v4751 = vpack.c.b16 %v3103, %v3095
    %v4752 = vpack.c.b16 %v3104, %v3096
    %v4753 = vpack.c.b16 %v3105, %v3097
    %v4754 = vpack.c.b16 %v3106, %v3098
    %v4755 = vpack.c.b16 %v3107, %v3099
    %v4756 = vpack.c.b16 %v3108, %v3100
    %v4757 = vpack.c.b16 %v3109, %v3101
    %v4758 = vpack.c.b16 %v3118, %v3110
    %v4759 = vpack.c.b16 %v3119, %v3111
    %v4760 = vpack.c.b16 %v3120, %v3112
    %v4761 = vpack.c.b16 %v3121, %v3113
    %v4762 = vpack.c.b16 %v3122, %v3114
    %v4763 = vpack.c.b16 %v3123, %v3115
    %v4764 = vpack.c.b16 %v3124, %v3116
    %v4765 = vpack.c.b16 %v3125, %v3117
    %v4766 = vpack.c.b16 %v3134, %v3126
    %v4767 = vpack.c.b16 %v3135, %v3127
    %v4768 = vpack.c.b16 %v3136, %v3128
    %v4769 = vpack.c.b16 %v3137, %v3129
    %v4770 = vpack.c.b16 %v3138, %v3130
    %v4771 = vpack.c.b16 %v3139, %v3131
    %v4772 = vpack.c.b16 %v3140, %v3132
    %v4773 = vpack.c.b16 %v3141, %v3133
    %v4774 = vpack.c.b16 %v3150, %v3142
    %v4775 = vpack.c.b16 %v3151, %v3143
    %v4776 = vpack.c.b16 %v3152, %v3144
    %v4777 = vpack.c.b16 %v3153, %v3145
    %v4778 = vpack.c.b16 %v3154, %v3146
    %v4779 = vpack.c.b16 %v3155, %v3147
    %v4780 = vpack.c.b16 %v3156, %v3148
    %v4781 = vpack.c.b16 %v3157, %v3149
    %v4782 = vpack.c.b16 %v3166, %v3158
    %v4783 = vpack.c.b16 %v3167, %v3159
    %v4784 = vpack.c.b16 %v3168, %v3160
    %v4785 = vpack.c.b16 %v3169, %v3161
    %v4786 = vpack.c.b16 %v3170, %v3162
    %v4787 = vpack.c.b16 %v3171, %v3163
    %v4788 = vpack.c.b16 %v3172, %v3164
    %v4789 = vpack.c.b16 %v3173, %v3165
    %v4790 = vpack.c.b16 %v3182, %v3174
    %v4791 = vpack.c.b16 %v3183, %v3175
    %v4792 = vpack.c.b16 %v3184, %v3176
    %v4793 = vpack.c.b16 %v3185, %v3177
    %v4794 = vpack.c.b16 %v3186, %v3178
    %v4795 = vpack.c.b16 %v3187, %v3179
    %v4796 = vpack.c.b16 %v3188, %v3180
    %v4797 = vpack.c.b16 %v3189, %v3181
    %v4798 = vpack.c.b16 %v3198, %v3190
    %v4799 = vpack.c.b16 %v3199, %v3191
    %v4800 = vpack.c.b16 %v3200, %v3192
    %v4801 = vpack.c.b16 %v3201, %v3193
    %v4802 = vpack.c.b16 %v3202, %v3194
    %v4803 = vpack.c.b16 %v3203, %v3195
    %v4804 = vpack.c.b16 %v3204, %v3196
    %v4805 = vpack.c.b16 %v3205, %v3197
    %v4806 = vpack.c.b16 %v3214, %v3206
    %v4807 = vpack.c.b16 %v3215, %v3207
    %v4808 = vpack.c.b16 %v3216, %v3208
    %v4809 = vpack.c.b16 %v3217, %v3209
    %v4810 = vpack.c.b16 %v3218, %v3210
    %v4811 = vpack.c.b16 %v3219, %v3211
    %v4812 = vpack.c.b16 %v3220, %v3212
    %v4813 = vpack.c.b16 %v3221, %v3213
    %v4814 = vpack.c.b16 %v3230, %v3222
    %v4815 = vpack.c.b16 %v3231, %v3223
    %v4816 = vpack.c.b16 %v3232, %v3224
    %v4817 = vpack.c.b16 %v3233, %v3225
    %v4818 = vpack.c.b16 %v3234, %v3226
    %v4819 = vpack.c.b16 %v3235, %v3227
    %v4820 = vpack.c.b16 %v3236, %v3228
    %v4821 = vpack.c.b16 %v3237, %v3229
    %v4822 = vpack.c.b16 %v3246, %v3238
    %v4823 = vpack.c.b16 %v3247, %v3239
    %v4824 = vpack.c.b16 %v3248, %v3240
    %v4825 = vpack.c.b16 %v3249, %v3241
    %v4826 = vpack.c.b16 %v3250, %v3242
    %v4827 = vpack.c.b16 %v3251, %v3243
    %v4828 = vpack.c.b16 %v3252, %v3244
    %v4829 = vpack.c.b16 %v3253, %v3245
    %v4830 = vpack.c.b16 %v3262, %v3254
    %v4831 = vpack.c.b16 %v3263, %v3255
    %v4832 = vpack.c.b16 %v3264, %v3256
    %v4833 = vpack.c.b16 %v3265, %v3257
    %v4834 = vpack.c.b16 %v3266, %v3258
    %v4835 = vpack.c.b16 %v3267, %v3259
    %v4836 = vpack.c.b16 %v3268, %v3260
    %v4837 = vpack.c.b16 %v3269, %v3261
    %v4838 = vpack.c.b16 %v3278, %v3270
    %v4839 = vpack.c.b16 %v3279, %v3271
    %v4840 = vpack.c.b16 %v3280, %v3272
    %v4841 = vpack.c.b16 %v3281, %v3273
    %v4842 = vpack.c.b16 %v3282, %v3274
    %v4843 = vpack.c.b16 %v3283, %v3275
    %v4844 = vpack.c.b16 %v3284, %v3276
    %v4845 = vpack.c.b16 %v3285, %v3277
    %v4846 = vpack.c.b16 %v3294, %v3286
    %v4847 = vpack.c.b16 %v3295, %v3287
    %v4848 = vpack.c.b16 %v3296, %v3288
    %v4849 = vpack.c.b16 %v3297, %v3289
    %v4850 = vpack.c.b16 %v3298, %v3290
    %v4851 = vpack.c.b16 %v3299, %v3291
    %v4852 = vpack.c.b16 %v3300, %v3292
    %v4853 = vpack.c.b16 %v3301, %v3293
    %v4854 = vpack.c.b16 %v3310, %v3302
    %v4855 = vpack.c.b16 %v3311, %v3303
    %v4856 = vpack.c.b16 %v3312, %v3304
    %v4857 = vpack.c.b16 %v3313, %v3305
    %v4858 = vpack.c.b16 %v3314, %v3306
    %v4859 = vpack.c.b16 %v3315, %v3307
    %v4860 = vpack.c.b16 %v3316, %v3308
    %v4861 = vpack.c.b16 %v3317, %v3309
    %v4862 = vpack.c.b16 %v3326, %v3318
    %v4863 = vpack.c.b16 %v3327, %v3319
    %v4864 = vpack.c.b16 %v3328, %v3320
    %v4865 = vpack.c.b16 %v3329, %v3321
    %v4866 = vpack.c.b16 %v3330, %v3322
    %v4867 = vpack.c.b16 %v3331, %v3323
    %v4868 = vpack.c.b16 %v3332, %v3324
    %v4869 = vpack.c.b16 %v3333, %v3325
    %v4870 = vpack.c.b16 %v3342, %v3334
    %v4871 = vpack.c.b16 %v3343, %v3335
    %v4872 = vpack.c.b16 %v3344, %v3336
    %v4873 = vpack.c.b16 %v3345, %v3337
    %v4874 = vpack.c.b16 %v3346, %v3338
    %v4875 = vpack.c.b16 %v3347, %v3339
    %v4876 = vpack.c.b16 %v3348, %v3340
    %v4877 = vpack.c.b16 %v3349, %v3341
    %v4878 = vpack.c.b16 %v3358, %v3350
    %v4879 = vpack.c.b16 %v3359, %v3351
    %v4880 = vpack.c.b16 %v3360, %v3352
    %v4881 = vpack.c.b16 %v3361, %v3353
    %v4882 = vpack.c.b16 %v3362, %v3354
    %v4883 = vpack.c.b16 %v3363, %v3355
    %v4884 = vpack.c.b16 %v3364, %v3356
    %v4885 = vpack.c.b16 %v3365, %v3357
    %v4886 = vpack.c.b16 %v3374, %v3366
    %v4887 = vpack.c.b16 %v3375, %v3367
    %v4888 = vpack.c.b16 %v3376, %v3368
    %v4889 = vpack.c.b16 %v3377, %v3369
    %v4890 = vpack.c.b16 %v3378, %v3370
    %v4891 = vpack.c.b16 %v3379, %v3371
    %v4892 = vpack.c.b16 %v3380, %v3372
    %v4893 = vpack.c.b16 %v3381, %v3373
    %v4894 = vpack.c.b16 %v3390, %v3382
    %v4895 = vpack.c.b16 %v3391, %v3383
    %v4896 = vpack.c.b16 %v3392, %v3384
    %v4897 = vpack.c.b16 %v3393, %v3385
    %v4898 = vpack.c.b16 %v3394, %v3386
    %v4899 = vpack.c.b16 %v3395, %v3387
    %v4900 = vpack.c.b16 %v3396, %v3388
    %v4901 = vpack.c.b16 %v3397, %v3389
    %v4902 = vpack.c.b16 %v3406, %v3398
    %v4903 = vpack.c.b16 %v3407, %v3399
    %v4904 = vpack.c.b16 %v3408, %v3400
    %v4905 = vpack.c.b16 %v3409, %v3401
    %v4906 = vpack.c.b16 %v3410, %v3402
    %v4907 = vpack.c.b16 %v3411, %v3403
    %v4908 = vpack.c.b16 %v3412, %v3404
    %v4909 = vpack.c.b16 %v3413, %v3405
    %v4910 = vpack.c.b16 %v3422, %v3414
    %v4911 = vpack.c.b16 %v3423, %v3415
    %v4912 = vpack.c.b16 %v3424, %v3416
    %v4913 = vpack.c.b16 %v3425, %v3417
    %v4914 = vpack.c.b16 %v3426, %v3418
    %v4915 = vpack.c.b16 %v3427, %v3419
    %v4916 = vpack.c.b16 %v3428, %v3420
    %v4917 = vpack.c.b16 %v3429, %v3421
    %v4918 = vpack.c.b16 %v3438, %v3430
    %v4919 = vpack.c.b16 %v3439, %v3431
    %v4920 = vpack.c.b16 %v3440, %v3432
    %v4921 = vpack.c.b16 %v3441, %v3433
    %v4922 = vpack.c.b16 %v3442, %v3434
    %v4923 = vpack.c.b16 %v3443, %v3435
    %v4924 = vpack.c.b16 %v3444, %v3436
    %v4925 = vpack.c.b16 %v3445, %v3437
    %v4926 = vpack.c.b16 %v3454, %v3446
    %v4927 = vpack.c.b16 %v3455, %v3447
    %v4928 = vpack.c.b16 %v3456, %v3448
    %v4929 = vpack.c.b16 %v3457, %v3449
    %v4930 = vpack.c.b16 %v3458, %v3450
    %v4931 = vpack.c.b16 %v3459, %v3451
    %v4932 = vpack.c.b16 %v3460, %v3452
    %v4933 = vpack.c.b16 %v3461, %v3453
    %v4934 = vpack.c.b16 %v3470, %v3462
    %v4935 = vpack.c.b16 %v3471, %v3463
    %v4936 = vpack.c.b16 %v3472, %v3464
    %v4937 = vpack.c.b16 %v3473, %v3465
    %v4938 = vpack.c.b16 %v3474, %v3466
    %v4939 = vpack.c.b16 %v3475, %v3467
    %v4940 = vpack.c.b16 %v3476, %v3468
    %v4941 = vpack.c.b16 %v3477, %v3469
    %v4942 = vpack.c.b16 %v3486, %v3478
    %v4943 = vpack.c.b16 %v3487, %v3479
    %v4944 = vpack.c.b16 %v3488, %v3480
    %v4945 = vpack.c.b16 %v3489, %v3481
    %v4946 = vpack.c.b16 %v3490, %v3482
    %v4947 = vpack.c.b16 %v3491, %v3483
    %v4948 = vpack.c.b16 %v3492, %v3484
    %v4949 = vpack.c.b16 %v3493, %v3485
    %v4950 = vpack.c.b16 %v3502, %v3494
    %v4951 = vpack.c.b16 %v3503, %v3495
    %v4952 = vpack.c.b16 %v3504, %v3496
    %v4953 = vpack.c.b16 %v3505, %v3497
    %v4954 = vpack.c.b16 %v3506, %v3498
    %v4955 = vpack.c.b16 %v3507, %v3499
    %v4956 = vpack.c.b16 %v3508, %v3500
    %v4957 = vpack.c.b16 %v3509, %v3501
    %v4958 = vpack.c.b16 %v3518, %v3510
    %v4959 = vpack.c.b16 %v3519, %v3511
    %v4960 = vpack.c.b16 %v3520, %v3512
    %v4961 = vpack.c.b16 %v3521, %v3513
    %v4962 = vpack.c.b16 %v3522, %v3514
    %v4963 = vpack.c.b16 %v3523, %v3515
    %v4964 = vpack.c.b16 %v3524, %v3516
    %v4965 = vpack.c.b16 %v3525, %v3517
    %v4966 = vpack.c.b16 %v3534, %v3526
    %v4967 = vpack.c.b16 %v3535, %v3527
    %v4968 = vpack.c.b16 %v3536, %v3528
    %v4969 = vpack.c.b16 %v3537, %v3529
    %v4970 = vpack.c.b16 %v3538, %v3530
    %v4971 = vpack.c.b16 %v3539, %v3531
    %v4972 = vpack.c.b16 %v3540, %v3532
    %v4973 = vpack.c.b16 %v3541, %v3533
    %v4974 = vpack.c.b16 %v3550, %v3542
    %v4975 = vpack.c.b16 %v3551, %v3543
    %v4976 = vpack.c.b16 %v3552, %v3544
    %v4977 = vpack.c.b16 %v3553, %v3545
    %v4978 = vpack.c.b16 %v3554, %v3546
    %v4979 = vpack.c.b16 %v3555, %v3547
    %v4980 = vpack.c.b16 %v3556, %v3548
    %v4981 = vpack.c.b16 %v3557, %v3549
    %v4982 = vpack.c.b16 %v3566, %v3558
    %v4983 = vpack.c.b16 %v3567, %v3559
    %v4984 = vpack.c.b16 %v3568, %v3560
    %v4985 = vpack.c.b16 %v3569, %v3561
    %v4986 = vpack.c.b16 %v3570, %v3562
    %v4987 = vpack.c.b16 %v3571, %v3563
    %v4988 = vpack.c.b16 %v3572, %v3564
    %v4989 = vpack.c.b16 %v3573, %v3565
    %v4990 = vpack.c.b16 %v3582, %v3574
    %v4991 = vpack.c.b16 %v3583, %v3575
    %v4992 = vpack.c.b16 %v3584, %v3576
    %v4993 = vpack.c.b16 %v3585, %v3577
    %v4994 = vpack.c.b16 %v3586, %v3578
    %v4995 = vpack.c.b16 %v3587, %v3579
    %v4996 = vpack.c.b16 %v3588, %v3580
    %v4997 = vpack.c.b16 %v3589, %v3581
    %v4998 = vpack.c.b16 %v3598, %v3590
    %v4999 = vpack.c.b16 %v3599, %v3591
    %v5000 = vpack.c.b16 %v3600, %v3592
    %v5001 = vpack.c.b16 %v3601, %v3593
    %v5002 = vpack.c.b16 %v3602, %v3594
    %v5003 = vpack.c.b16 %v3603, %v3595
    %v5004 = vpack.c.b16 %v3604, %v3596
    %v5005 = vpack.c.b16 %v3605, %v3597
    %v5006 = vpack.c.b16 %v3614, %v3606
    %v5007 = vpack.c.b16 %v3615, %v3607
    %v5008 = vpack.c.b16 %v3616, %v3608
    %v5009 = vpack.c.b16 %v3617, %v3609
    %v5010 = vpack.c.b16 %v3618, %v3610
    %v5011 = vpack.c.b16 %v3619, %v3611
    %v5012 = vpack.c.b16 %v3620, %v3612
    %v5013 = vpack.c.b16 %v3621, %v3613
    %v5014 = vpack.c.b16 %v3630, %v3622
    %v5015 = vpack.c.b16 %v3631, %v3623
    %v5016 = vpack.c.b16 %v3632, %v3624
    %v5017 = vpack.c.b16 %v3633, %v3625
    %v5018 = vpack.c.b16 %v3634, %v3626
    %v5019 = vpack.c.b16 %v3635, %v3627
    %v5020 = vpack.c.b16 %v3636, %v3628
    %v5021 = vpack.c.b16 %v3637, %v3629
    %v5022 = vpack.c.b16 %v3646, %v3638
    %v5023 = vpack.c.b16 %v3647, %v3639
    %v5024 = vpack.c.b16 %v3648, %v3640
    %v5025 = vpack.c.b16 %v3649, %v3641
    %v5026 = vpack.c.b16 %v3650, %v3642
    %v5027 = vpack.c.b16 %v3651, %v3643
    %v5028 = vpack.c.b16 %v3652, %v3644
    %v5029 = vpack.c.b16 %v3653, %v3645
    %v5030 = vpack.c.b16 %v3662, %v3654
    %v5031 = vpack.c.b16 %v3663, %v3655
    %v5032 = vpack.c.b16 %v3664, %v3656
    %v5033 = vpack.c.b16 %v3665, %v3657
    %v5034 = vpack.c.b16 %v3666, %v3658
    %v5035 = vpack.c.b16 %v3667, %v3659
    %v5036 = vpack.c.b16 %v3668, %v3660
    %v5037 = vpack.c.b16 %v3669, %v3661
    %v5038 = vpack.c.b16 %v3678, %v3670
    %v5039 = vpack.c.b16 %v3679, %v3671
    %v5040 = vpack.c.b16 %v3680, %v3672
    %v5041 = vpack.c.b16 %v3681, %v3673
    %v5042 = vpack.c.b16 %v3682, %v3674
    %v5043 = vpack.c.b16 %v3683, %v3675
    %v5044 = vpack.c.b16 %v3684, %v3676
    %v5045 = vpack.c.b16 %v3685, %v3677
    %v5046 = vpack.c.b16 %v3694, %v3686
    %v5047 = vpack.c.b16 %v3695, %v3687
    %v5048 = vpack.c.b16 %v3696, %v3688
    %v5049 = vpack.c.b16 %v3697, %v3689
    %v5050 = vpack.c.b16 %v3698, %v3690
    %v5051 = vpack.c.b16 %v3699, %v3691
    %v5052 = vpack.c.b16 %v3700, %v3692
    %v5053 = vpack.c.b16 %v3701, %v3693
    %v5054 = vpack.c.b16 %v3710, %v3702
    %v5055 = vpack.c.b16 %v3711, %v3703
    %v5056 = vpack.c.b16 %v3712, %v3704
    %v5057 = vpack.c.b16 %v3713, %v3705
    %v5058 = vpack.c.b16 %v3714, %v3706
    %v5059 = vpack.c.b16 %v3715, %v3707
    %v5060 = vpack.c.b16 %v3716, %v3708
    %v5061 = vpack.c.b16 %v3717, %v3709
    %v5062 = vpack.c.b16 %v3726, %v3718
    %v5063 = vpack.c.b16 %v3727, %v3719
    %v5064 = vpack.c.b16 %v3728, %v3720
    %v5065 = vpack.c.b16 %v3729, %v3721
    %v5066 = vpack.c.b16 %v3730, %v3722
    %v5067 = vpack.c.b16 %v3731, %v3723
    %v5068 = vpack.c.b16 %v3732, %v3724
    %v5069 = vpack.c.b16 %v3733, %v3725
    %v5070 = vpack.c.b16 %v3742, %v3734
    %v5071 = vpack.c.b16 %v3743, %v3735
    %v5072 = vpack.c.b16 %v3744, %v3736
    %v5073 = vpack.c.b16 %v3745, %v3737
    %v5074 = vpack.c.b16 %v3746, %v3738
    %v5075 = vpack.c.b16 %v3747, %v3739
    %v5076 = vpack.c.b16 %v3748, %v3740
    %v5077 = vpack.c.b16 %v3749, %v3741
    %v5078 = vpack.c.b16 %v3758, %v3750
    %v5079 = vpack.c.b16 %v3759, %v3751
    %v5080 = vpack.c.b16 %v3760, %v3752
    %v5081 = vpack.c.b16 %v3761, %v3753
    %v5082 = vpack.c.b16 %v3762, %v3754
    %v5083 = vpack.c.b16 %v3763, %v3755
    %v5084 = vpack.c.b16 %v3764, %v3756
    %v5085 = vpack.c.b16 %v3765, %v3757
    %v5086 = vpack.c.b16 %v3774, %v3766
    %v5087 = vpack.c.b16 %v3775, %v3767
    %v5088 = vpack.c.b16 %v3776, %v3768
    %v5089 = vpack.c.b16 %v3777, %v3769
    %v5090 = vpack.c.b16 %v3778, %v3770
    %v5091 = vpack.c.b16 %v3779, %v3771
    %v5092 = vpack.c.b16 %v3780, %v3772
    %v5093 = vpack.c.b16 %v3781, %v3773
    %v5094 = vpack.c.b16 %v3790, %v3782
    %v5095 = vpack.c.b16 %v3791, %v3783
    %v5096 = vpack.c.b16 %v3792, %v3784
    %v5097 = vpack.c.b16 %v3793, %v3785
    %v5098 = vpack.c.b16 %v3794, %v3786
    %v5099 = vpack.c.b16 %v3795, %v3787
    %v5100 = vpack.c.b16 %v3796, %v3788
    %v5101 = vpack.c.b16 %v3797, %v3789
    %v5102 = vpack.c.b16 %v3806, %v3798
    %v5103 = vpack.c.b16 %v3807, %v3799
    %v5104 = vpack.c.b16 %v3808, %v3800
    %v5105 = vpack.c.b16 %v3809, %v3801
    %v5106 = vpack.c.b16 %v3810, %v3802
    %v5107 = vpack.c.b16 %v3811, %v3803
    %v5108 = vpack.c.b16 %v3812, %v3804
    %v5109 = vpack.c.b16 %v3813, %v3805
    %v5110 = vpack.c.b16 %v3822, %v3814
    %v5111 = vpack.c.b16 %v3823, %v3815
    %v5112 = vpack.c.b16 %v3824, %v3816
    %v5113 = vpack.c.b16 %v3825, %v3817
    %v5114 = vpack.c.b16 %v3826, %v3818
    %v5115 = vpack.c.b16 %v3827, %v3819
    %v5116 = vpack.c.b16 %v3828, %v3820
    %v5117 = vpack.c.b16 %v3829, %v3821
    %v5118 = vpack.c.b16 %v3838, %v3830
    %v5119 = vpack.c.b16 %v3839, %v3831
    %v5120 = vpack.c.b16 %v3840, %v3832
    %v5121 = vpack.c.b16 %v3841, %v3833
    %v5122 = vpack.c.b16 %v3842, %v3834
    %v5123 = vpack.c.b16 %v3843, %v3835
    %v5124 = vpack.c.b16 %v3844, %v3836
    %v5125 = vpack.c.b16 %v3845, %v3837
    %v5126 = vpack.c.b16 %v3854, %v3846
    %v5127 = vpack.c.b16 %v3855, %v3847
    %v5128 = vpack.c.b16 %v3856, %v3848
    %v5129 = vpack.c.b16 %v3857, %v3849
    %v5130 = vpack.c.b16 %v3858, %v3850
    %v5131 = vpack.c.b16 %v3859, %v3851
    %v5132 = vpack.c.b16 %v3860, %v3852
    %v5133 = vpack.c.b16 %v3861, %v3853
    %v5134 = vpack.c.b16 %v3870, %v3862
    %v5135 = vpack.c.b16 %v3871, %v3863
    %v5136 = vpack.c.b16 %v3872, %v3864
    %v5137 = vpack.c.b16 %v3873, %v3865
    %v5138 = vpack.c.b16 %v3874, %v3866
    %v5139 = vpack.c.b16 %v3875, %v3867
    %v5140 = vpack.c.b16 %v3876, %v3868
    %v5141 = vpack.c.b16 %v3877, %v3869
    %v5142 = vpack.c.b16 %v3886, %v3878
    %v5143 = vpack.c.b16 %v3887, %v3879
    %v5144 = vpack.c.b16 %v3888, %v3880
    %v5145 = vpack.c.b16 %v3889, %v3881
    %v5146 = vpack.c.b16 %v3890, %v3882
    %v5147 = vpack.c.b16 %v3891, %v3883
    %v5148 = vpack.c.b16 %v3892, %v3884
    %v5149 = vpack.c.b16 %v3893, %v3885
    %v5150 = vpack.c.b16 %v3902, %v3894
    %v5151 = vpack.c.b16 %v3903, %v3895
    %v5152 = vpack.c.b16 %v3904, %v3896
    %v5153 = vpack.c.b16 %v3905, %v3897
    %v5154 = vpack.c.b16 %v3906, %v3898
    %v5155 = vpack.c.b16 %v3907, %v3899
    %v5156 = vpack.c.b16 %v3908, %v3900
    %v5157 = vpack.c.b16 %v3909, %v3901
    %v5158 = vpack.c.b16 %v3918, %v3910
    %v5159 = vpack.c.b16 %v3919, %v3911
    %v5160 = vpack.c.b16 %v3920, %v3912
    %v5161 = vpack.c.b16 %v3921, %v3913
    %v5162 = vpack.c.b16 %v3922, %v3914
    %v5163 = vpack.c.b16 %v3923, %v3915
    %v5164 = vpack.c.b16 %v3924, %v3916
    %v5165 = vpack.c.b16 %v3925, %v3917
    %v5166 = vpack.c.b16 %v3934, %v3926
    %v5167 = vpack.c.b16 %v3935, %v3927
    %v5168 = vpack.c.b16 %v3936, %v3928
    %v5169 = vpack.c.b16 %v3937, %v3929
    %v5170 = vpack.c.b16 %v3938, %v3930
    %v5171 = vpack.c.b16 %v3939, %v3931
    %v5172 = vpack.c.b16 %v3940, %v3932
    %v5173 = vpack.c.b16 %v3941, %v3933
    %v5174 = vpack.c.b16 %v3950, %v3942
    %v5175 = vpack.c.b16 %v3951, %v3943
    %v5176 = vpack.c.b16 %v3952, %v3944
    %v5177 = vpack.c.b16 %v3953, %v3945
    %v5178 = vpack.c.b16 %v3954, %v3946
    %v5179 = vpack.c.b16 %v3955, %v3947
    %v5180 = vpack.c.b16 %v3956, %v3948
    %v5181 = vpack.c.b16 %v3957, %v3949
    %v5182 = vpack.c.b16 %v3966, %v3958
    %v5183 = vpack.c.b16 %v3967, %v3959
    %v5184 = vpack.c.b16 %v3968, %v3960
    %v5185 = vpack.c.b16 %v3969, %v3961
    %v5186 = vpack.c.b16 %v3970, %v3962
    %v5187 = vpack.c.b16 %v3971, %v3963
    %v5188 = vpack.c.b16 %v3972, %v3964
    %v5189 = vpack.c.b16 %v3973, %v3965
    %v5190 = vpack.c.b16 %v3982, %v3974
    %v5191 = vpack.c.b16 %v3983, %v3975
    %v5192 = vpack.c.b16 %v3984, %v3976
    %v5193 = vpack.c.b16 %v3985, %v3977
    %v5194 = vpack.c.b16 %v3986, %v3978
    %v5195 = vpack.c.b16 %v3987, %v3979
    %v5196 = vpack.c.b16 %v3988, %v3980
    %v5197 = vpack.c.b16 %v3989, %v3981
    %v5198 = vpack.c.b16 %v3998, %v3990
    %v5199 = vpack.c.b16 %v3999, %v3991
    %v5200 = vpack.c.b16 %v4000, %v3992
    %v5201 = vpack.c.b16 %v4001, %v3993
    %v5202 = vpack.c.b16 %v4002, %v3994
    %v5203 = vpack.c.b16 %v4003, %v3995
    %v5204 = vpack.c.b16 %v4004, %v3996
    %v5205 = vpack.c.b16 %v4005, %v3997
    %v5206 = vpack.c.b16 %v4014, %v4006
    %v5207 = vpack.c.b16 %v4015, %v4007
    %v5208 = vpack.c.b16 %v4016, %v4008
    %v5209 = vpack.c.b16 %v4017, %v4009
    %v5210 = vpack.c.b16 %v4018, %v4010
    %v5211 = vpack.c.b16 %v4019, %v4011
    %v5212 = vpack.c.b16 %v4020, %v4012
    %v5213 = vpack.c.b16 %v4021, %v4013
    %v5214 = vpack.c.b16 %v4030, %v4022
    %v5215 = vpack.c.b16 %v4031, %v4023
    %v5216 = vpack.c.b16 %v4032, %v4024
    %v5217 = vpack.c.b16 %v4033, %v4025
    %v5218 = vpack.c.b16 %v4034, %v4026
    %v5219 = vpack.c.b16 %v4035, %v4027
    %v5220 = vpack.c.b16 %v4036, %v4028
    %v5221 = vpack.c.b16 %v4037, %v4029
    %v5222 = vpack.c.b16 %v4046, %v4038
    %v5223 = vpack.c.b16 %v4047, %v4039
    %v5224 = vpack.c.b16 %v4048, %v4040
    %v5225 = vpack.c.b16 %v4049, %v4041
    %v5226 = vpack.c.b16 %v4050, %v4042
    %v5227 = vpack.c.b16 %v4051, %v4043
    %v5228 = vpack.c.b16 %v4052, %v4044
    %v5229 = vpack.c.b16 %v4053, %v4045
    %v5230 = vpack.c.b16 %v4062, %v4054
    %v5231 = vpack.c.b16 %v4063, %v4055
    %v5232 = vpack.c.b16 %v4064, %v4056
    %v5233 = vpack.c.b16 %v4065, %v4057
    %v5234 = vpack.c.b16 %v4066, %v4058
    %v5235 = vpack.c.b16 %v4067, %v4059
    %v5236 = vpack.c.b16 %v4068, %v4060
    %v5237 = vpack.c.b16 %v4069, %v4061
    %v5238 = vpack.c.b16 %v4078, %v4070
    %v5239 = vpack.c.b16 %v4079, %v4071
    %v5240 = vpack.c.b16 %v4080, %v4072
    %v5241 = vpack.c.b16 %v4081, %v4073
    %v5242 = vpack.c.b16 %v4082, %v4074
    %v5243 = vpack.c.b16 %v4083, %v4075
    %v5244 = vpack.c.b16 %v4084, %v4076
    %v5245 = vpack.c.b16 %v4085, %v4077
    %v5246 = vpack.c.b16 %v4094, %v4086
    %v5247 = vpack.c.b16 %v4095, %v4087
    %v5248 = vpack.c.b16 %v4096, %v4088
    %v5249 = vpack.c.b16 %v4097, %v4089
    %v5250 = vpack.c.b16 %v4098, %v4090
    %v5251 = vpack.c.b16 %v4099, %v4091
    %v5252 = vpack.c.b16 %v4100, %v4092
    %v5253 = vpack.c.b16 %v4101, %v4093
    %v5254 = vpack.c.b16 %v4110, %v4102
    %v5255 = vpack.c.b16 %v4111, %v4103
    %v5256 = vpack.c.b16 %v4112, %v4104
    %v5257 = vpack.c.b16 %v4113, %v4105
    %v5258 = vpack.c.b16 %v4114, %v4106
    %v5259 = vpack.c.b16 %v4115, %v4107
    %v5260 = vpack.c.b16 %v4116, %v4108
    %v5261 = vpack.c.b16 %v4117, %v4109
    %v5262 = vpack.c.b16 %v4126, %v4118
    %v5263 = vpack.c.b16 %v4127, %v4119
    %v5264 = vpack.c.b16 %v4128, %v4120
    %v5265 = vpack.c.b16 %v4129, %v4121
    %v5266 = vpack.c.b16 %v4130, %v4122
    %v5267 = vpack.c.b16 %v4131, %v4123
    %v5268 = vpack.c.b16 %v4132, %v4124
    %v5269 = vpack.c.b16 %v4133, %v4125
    %v5270 = vpack.c.b16 %v4142, %v4134
    %v5271 = vpack.c.b16 %v4143, %v4135
    %v5272 = vpack.c.b16 %v4144, %v4136
    %v5273 = vpack.c.b16 %v4145, %v4137
    %v5274 = vpack.c.b16 %v4146, %v4138
    %v5275 = vpack.c.b16 %v4147, %v4139
    %v5276 = vpack.c.b16 %v4148, %v4140
    %v5277 = vpack.c.b16 %v4149, %v4141
    %v5278 = vpack.c.b16 %v4158, %v4150
    %v5279 = vpack.c.b16 %v4159, %v4151
    %v5280 = vpack.c.b16 %v4160, %v4152
    %v5281 = vpack.c.b16 %v4161, %v4153
    %v5282 = vpack.c.b16 %v4162, %v4154
    %v5283 = vpack.c.b16 %v4163, %v4155
    %v5284 = vpack.c.b16 %v4164, %v4156
    %v5285 = vpack.c.b16 %v4165, %v4157
    %v5286 = vpack.c.b16 %v4174, %v4166
    %v5287 = vpack.c.b16 %v4175, %v4167
    %v5288 = vpack.c.b16 %v4176, %v4168
    %v5289 = vpack.c.b16 %v4177, %v4169
    %v5290 = vpack.c.b16 %v4178, %v4170
    %v5291 = vpack.c.b16 %v4179, %v4171
    %v5292 = vpack.c.b16 %v4180, %v4172
    %v5293 = vpack.c.b16 %v4181, %v4173
    %v5294 = vpack.c.b16 %v4190, %v4182
    %v5295 = vpack.c.b16 %v4191, %v4183
    %v5296 = vpack.c.b16 %v4192, %v4184
    %v5297 = vpack.c.b16 %v4193, %v4185
    %v5298 = vpack.c.b16 %v4194, %v4186
    %v5299 = vpack.c.b16 %v4195, %v4187
    %v5300 = vpack.c.b16 %v4196, %v4188
    %v5301 = vpack.c.b16 %v4197, %v4189
    %v5302 = vpack.c.b16 %v4206, %v4198
    %v5303 = vpack.c.b16 %v4207, %v4199
    %v5304 = vpack.c.b16 %v4208, %v4200
    %v5305 = vpack.c.b16 %v4209, %v4201
    %v5306 = vpack.c.b16 %v4210, %v4202
    %v5307 = vpack.c.b16 %v4211, %v4203
    %v5308 = vpack.c.b16 %v4212, %v4204
    %v5309 = vpack.c.b16 %v4213, %v4205
    %v5310 = vpack.c.b16 %v4222, %v4214
    %v5311 = vpack.c.b16 %v4223, %v4215
    %v5312 = vpack.c.b16 %v4224, %v4216
    %v5313 = vpack.c.b16 %v4225, %v4217
    %v5314 = vpack.c.b16 %v4226, %v4218
    %v5315 = vpack.c.b16 %v4227, %v4219
    %v5316 = vpack.c.b16 %v4228, %v4220
    %v5317 = vpack.c.b16 %v4229, %v4221
    %v5318 = vpack.c.b16 %v4238, %v4230
    %v5319 = vpack.c.b16 %v4239, %v4231
    %v5320 = vpack.c.b16 %v4240, %v4232
    %v5321 = vpack.c.b16 %v4241, %v4233
    %v5322 = vpack.c.b16 %v4242, %v4234
    %v5323 = vpack.c.b16 %v4243, %v4235
    %v5324 = vpack.c.b16 %v4244, %v4236
    %v5325 = vpack.c.b16 %v4245, %v4237
    %v5326 = vpack.c.b16 %v4254, %v4246
    %v5327 = vpack.c.b16 %v4255, %v4247
    %v5328 = vpack.c.b16 %v4256, %v4248
    %v5329 = vpack.c.b16 %v4257, %v4249
    %v5330 = vpack.c.b16 %v4258, %v4250
    %v5331 = vpack.c.b16 %v4259, %v4251
    %v5332 = vpack.c.b16 %v4260, %v4252
    %v5333 = vpack.c.b16 %v4261, %v4253
    %v5334 = vpack.c.b16 %v4270, %v4262
    %v5335 = vpack.c.b16 %v4271, %v4263
    %v5336 = vpack.c.b16 %v4272, %v4264
    %v5337 = vpack.c.b16 %v4273, %v4265
    %v5338 = vpack.c.b16 %v4274, %v4266
    %v5339 = vpack.c.b16 %v4275, %v4267
    %v5340 = vpack.c.b16 %v4276, %v4268
    %v5341 = vpack.c.b16 %v4277, %v4269
    %v5342 = vpack.c.b16 %v4286, %v4278
    %v5343 = vpack.c.b16 %v4287, %v4279
    %v5344 = vpack.c.b16 %v4288, %v4280
    %v5345 = vpack.c.b16 %v4289, %v4281
    %v5346 = vpack.c.b16 %v4290, %v4282
    %v5347 = vpack.c.b16 %v4291, %v4283
    %v5348 = vpack.c.b16 %v4292, %v4284
    %v5349 = vpack.c.b16 %v4293, %v4285
    %v5350 = vpack.c.b16 %v4302, %v4294
    %v5351 = vpack.c.b16 %v4303, %v4295
    %v5352 = vpack.c.b16 %v4304, %v4296
    %v5353 = vpack.c.b16 %v4305, %v4297
    %v5354 = vpack.c.b16 %v4306, %v4298
    %v5355 = vpack.c.b16 %v4307, %v4299
    %v5356 = vpack.c.b16 %v4308, %v4300
    %v5357 = vpack.c.b16 %v4309, %v4301
    %v5358 = vpack.c.b16 %v4318, %v4310
    %v5359 = vpack.c.b16 %v4319, %v4311
    %v5360 = vpack.c.b16 %v4320, %v4312
    %v5361 = vpack.c.b16 %v4321, %v4313
    %v5362 = vpack.c.b16 %v4322, %v4314
    %v5363 = vpack.c.b16 %v4323, %v4315
    %v5364 = vpack.c.b16 %v4324, %v4316
    %v5365 = vpack.c.b16 %v4325, %v4317
    %v5366 = vpack.c.b16 %v4334, %v4326
    %v5367 = vpack.c.b16 %v4335, %v4327
    %v5368 = vpack.c.b16 %v4336, %v4328
    %v5369 = vpack.c.b16 %v4337, %v4329
    %v5370 = vpack.c.b16 %v4338, %v4330
    %v5371 = vpack.c.b16 %v4339, %v4331
    %v5372 = vpack.c.b16 %v4340, %v4332
    %v5373 = vpack.c.b16 %v4341, %v4333
    %v5374 = vpack.c.b16 %v4350, %v4342
    %v5375 = vpack.c.b16 %v4351, %v4343
    %v5376 = vpack.c.b16 %v4352, %v4344
    %v5377 = vpack.c.b16 %v4353, %v4345
    %v5378 = vpack.c.b16 %v4354, %v4346
    %v5379 = vpack.c.b16 %v4355, %v4347
    %v5380 = vpack.c.b16 %v4356, %v4348
    %v5381 = vpack.c.b16 %v4357, %v4349
    %6406 = vmatprep.subr.bf16.mxu0 %v4359
    %6407 = vmatpush1.bf16.msra.mxu0 %v4358
    %6408 = vmatprep.subr.bf16.mxu0 %v4367
    %6409 = vmatpush1.bf16.msra.mxu0 %v4366
    %6410 = vmatprep.subr.bf16.mxu0 %v4375
    %6411 = vmatpush1.bf16.msra.mxu0 %v4374
    %6412 = vmatprep.subr.bf16.mxu0 %v4383
    %6413 = vmatpush1.bf16.msra.mxu0 %v4382
    %6414 = vmatprep.subr.bf16.mxu0 %v4391
    %6415 = vmatpush1.bf16.msra.mxu0 %v4390
    %6416 = vmatprep.subr.bf16.mxu0 %v4399
    %6417 = vmatpush1.bf16.msra.mxu0 %v4398
    %6418 = vmatprep.subr.bf16.mxu0 %v4407
    %6419 = vmatpush1.bf16.msra.mxu0 %v4406
    %6420 = vmatprep.subr.bf16.mxu0 %v4415
    %6421 = vmatpush1.bf16.msra.mxu0 %v4414
    %6422 = vmatprep.subr.bf16.mxu0 %v4423
    %6423 = vmatpush1.bf16.msra.mxu0 %v4422
    %6424 = vmatprep.subr.bf16.mxu0 %v4431
    %6425 = vmatpush1.bf16.msra.mxu0 %v4430
    %6426 = vmatprep.subr.bf16.mxu0 %v4439
    %6427 = vmatpush1.bf16.msra.mxu0 %v4438
    %6428 = vmatprep.subr.bf16.mxu0 %v4447
    %6429 = vmatpush1.bf16.msra.mxu0 %v4446
    %6430 = vmatprep.subr.bf16.mxu0 %v4455
    %6431 = vmatpush1.bf16.msra.mxu0 %v4454
    %6432 = vmatprep.subr.bf16.mxu0 %v4463
    %6433 = vmatpush1.bf16.msra.mxu0 %v4462
    %6434 = vmatprep.subr.bf16.mxu0 %v4471
    %6435 = vmatpush1.bf16.msra.mxu0 %v4470
    %6436 = vmatprep.subr.bf16.mxu0 %v4479
    %6437 = vmatpush1.bf16.msra.mxu0 %v4478
    %6438 = vmatprep.mubr.bf16.mxu0 %v205
    %6439 = vmatmul.mubr.bf16.gmra.mrb[0].mxu0 %v204
    %v6440 = vpop.f32.mrb[0].mxu0
    %v6441 = vadd.f32 %v1249, %v6440
    %v6442 = vpop.f32.mrb[0].mxu0
    %v6443 = vadd.f32 %v1253, %v6442
    %v6444 = vpop.f32.mrb[0].mxu0
    %v6445 = vpop.f32.mrb[0].mxu0
    %6446 = vdwg.mxu0
    %6447 = vmatprep.subr.bf16.mxu0 %v4487
    %6448 = vmatpush1.bf16.msra.mxu0 %v4486
    %6449 = vmatprep.subr.bf16.mxu0 %v4495
    %6450 = vmatpush1.bf16.msra.mxu0 %v4494
    %6451 = vmatprep.subr.bf16.mxu0 %v4503
    %6452 = vmatpush1.bf16.msra.mxu0 %v4502
    %6453 = vmatprep.subr.bf16.mxu0 %v4511
    %6454 = vmatpush1.bf16.msra.mxu0 %v4510
    %6455 = vmatprep.subr.bf16.mxu0 %v4519
    %6456 = vmatpush1.bf16.msra.mxu0 %v4518
    %6457 = vmatprep.subr.bf16.mxu0 %v4527
    %6458 = vmatpush1.bf16.msra.mxu0 %v4526
    %6459 = vmatprep.subr.bf16.mxu0 %v4535
    %6460 = vmatpush1.bf16.msra.mxu0 %v4534
    %6461 = vmatprep.subr.bf16.mxu0 %v4543
    %6462 = vmatpush1.bf16.msra.mxu0 %v4542
    %6463 = vmatprep.subr.bf16.mxu0 %v4551
    %6464 = vmatpush1.bf16.msra.mxu0 %v4550
    %6465 = vmatprep.subr.bf16.mxu0 %v4559
    %6466 = vmatpush1.bf16.msra.mxu0 %v4558
    %6467 = vmatprep.subr.bf16.mxu0 %v4567
    %6468 = vmatpush1.bf16.msra.mxu0 %v4566
    %6469 = vmatprep.subr.bf16.mxu0 %v4575
    %6470 = vmatpush1.bf16.msra.mxu0 %v4574
    %6471 = vmatprep.subr.bf16.mxu0 %v4583
    %6472 = vmatpush1.bf16.msra.mxu0 %v4582
    %6473 = vmatprep.subr.bf16.mxu0 %v4591
    %6474 = vmatpush1.bf16.msra.mxu0 %v4590
    %6475 = vmatprep.subr.bf16.mxu0 %v4599
    %6476 = vmatpush1.bf16.msra.mxu0 %v4598
    %6477 = vmatprep.subr.bf16.mxu0 %v4607
    %6478 = vmatpush1.bf16.msra.mxu0 %v4606
    %6479 = vmatprep.mubr.bf16.mxu0 %v207
    %6480 = vmatmul.mubr.bf16.gmra.mrb[0].mxu0 %v206
    %v6481 = vpop.f32.mrb[0].mxu0
    %v6482 = vadd.f32 %v6441, %v6481
    %v6483 = vpop.f32.mrb[0].mxu0
    %v6484 = vadd.f32 %v6443, %v6483
    %v6485 = vpop.f32.mrb[0].mxu0
    %v6486 = vpop.f32.mrb[0].mxu0
    %6487 = vdwg.mxu0
    %6488 = vmatprep.subr.bf16.mxu0 %v4615
    %6489 = vmatpush1.bf16.msra.mxu0 %v4614
    %6490 = vmatprep.subr.bf16.mxu0 %v4623
    %6491 = vmatpush1.bf16.msra.mxu0 %v4622
    %6492 = vmatprep.subr.bf16.mxu0 %v4631
    %6493 = vmatpush1.bf16.msra.mxu0 %v4630
    %6494 = vmatprep.subr.bf16.mxu0 %v4639
    %6495 = vmatpush1.bf16.msra.mxu0 %v4638
    %6496 = vmatprep.subr.bf16.mxu0 %v4647
    %6497 = vmatpush1.bf16.msra.mxu0 %v4646
    %6498 = vmatprep.subr.bf16.mxu0 %v4655
    %6499 = vmatpush1.bf16.msra.mxu0 %v4654
    %6500 = vmatprep.subr.bf16.mxu0 %v4663
    %6501 = vmatpush1.bf16.msra.mxu0 %v4662
    %6502 = vmatprep.subr.bf16.mxu0 %v4671
    %6503 = vmatpush1.bf16.msra.mxu0 %v4670
    %6504 = vmatprep.subr.bf16.mxu0 %v4679
    %6505 = vmatpush1.bf16.msra.mxu0 %v4678
    %6506 = vmatprep.subr.bf16.mxu0 %v4687
    %6507 = vmatpush1.bf16.msra.mxu0 %v4686
    %6508 = vmatprep.subr.bf16.mxu0 %v4695
    %6509 = vmatpush1.bf16.msra.mxu0 %v4694
    %6510 = vmatprep.subr.bf16.mxu0 %v4703
    %6511 = vmatpush1.bf16.msra.mxu0 %v4702
    %6512 = vmatprep.subr.bf16.mxu0 %v4711
    %6513 = vmatpush1.bf16.msra.mxu0 %v4710
    %6514 = vmatprep.subr.bf16.mxu0 %v4719
    %6515 = vmatpush1.bf16.msra.mxu0 %v4718
    %6516 = vmatprep.subr.bf16.mxu0 %v4727
    %6517 = vmatpush1.bf16.msra.mxu0 %v4726
    %6518 = vmatprep.subr.bf16.mxu0 %v4735
    %6519 = vmatpush1.bf16.msra.mxu0 %v4734
    %6520 = vmatprep.mubr.bf16.mxu0 %v209
    %6521 = vmatmul.mubr.bf16.gmra.mrb[0].mxu0 %v208
    %v6522 = vpop.f32.mrb[0].mxu0
    %v6523 = vadd.f32 %v6482, %v6522
    %v6524 = vpop.f32.mrb[0].mxu0
    %v6525 = vadd.f32 %v6484, %v6524
    %v6526 = vpop.f32.mrb[0].mxu0
    %v6527 = vpop.f32.mrb[0].mxu0
    %6528 = vdwg.mxu0
    %6529 = vmatprep.subr.bf16.mxu0 %v4743
    %6530 = vmatpush1.bf16.msra.mxu0 %v4742
    %6531 = vmatprep.subr.bf16.mxu0 %v4751
    %6532 = vmatpush1.bf16.msra.mxu0 %v4750
    %6533 = vmatprep.subr.bf16.mxu0 %v4759
    %6534 = vmatpush1.bf16.msra.mxu0 %v4758
    %6535 = vmatprep.subr.bf16.mxu0 %v4767
    %6536 = vmatpush1.bf16.msra.mxu0 %v4766
    %6537 = vmatprep.subr.bf16.mxu0 %v4775
    %6538 = vmatpush1.bf16.msra.mxu0 %v4774
    %6539 = vmatprep.subr.bf16.mxu0 %v4783
    %6540 = vmatpush1.bf16.msra.mxu0 %v4782
    %6541 = vmatprep.subr.bf16.mxu0 %v4791
    %6542 = vmatpush1.bf16.msra.mxu0 %v4790
    %6543 = vmatprep.subr.bf16.mxu0 %v4799
    %6544 = vmatpush1.bf16.msra.mxu0 %v4798
    %6545 = vmatprep.subr.bf16.mxu0 %v4807
    %6546 = vmatpush1.bf16.msra.mxu0 %v4806
    %6547 = vmatprep.subr.bf16.mxu0 %v4815
    %6548 = vmatpush1.bf16.msra.mxu0 %v4814
    %6549 = vmatprep.subr.bf16.mxu0 %v4823
    %6550 = vmatpush1.bf16.msra.mxu0 %v4822
    %6551 = vmatprep.subr.bf16.mxu0 %v4831
    %6552 = vmatpush1.bf16.msra.mxu0 %v4830
    %6553 = vmatprep.subr.bf16.mxu0 %v4839
    %6554 = vmatpush1.bf16.msra.mxu0 %v4838
    %6555 = vmatprep.subr.bf16.mxu0 %v4847
    %6556 = vmatpush1.bf16.msra.mxu0 %v4846
    %6557 = vmatprep.subr.bf16.mxu0 %v4855
    %6558 = vmatpush1.bf16.msra.mxu0 %v4854
    %6559 = vmatprep.subr.bf16.mxu0 %v4863
    %6560 = vmatpush1.bf16.msra.mxu0 %v4862
    %6561 = vmatprep.mubr.bf16.mxu0 %v211
    %6562 = vmatmul.mubr.bf16.gmra.mrb[0].mxu0 %v210
    %v6563 = vpop.f32.mrb[0].mxu0
    %v6564 = vadd.f32 %v6523, %v6563
    %v6565 = vpop.f32.mrb[0].mxu0
    %v6566 = vadd.f32 %v6525, %v6565
    %v6567 = vpop.f32.mrb[0].mxu0
    %v6568 = vpop.f32.mrb[0].mxu0
    %6569 = vdwg.mxu0
    %6570 = vmatprep.subr.bf16.mxu0 %v4871
    %6571 = vmatpush1.bf16.msra.mxu0 %v4870
    %6572 = vmatprep.subr.bf16.mxu0 %v4879
    %6573 = vmatpush1.bf16.msra.mxu0 %v4878
    %6574 = vmatprep.subr.bf16.mxu0 %v4887
    %6575 = vmatpush1.bf16.msra.mxu0 %v4886
    %6576 = vmatprep.subr.bf16.mxu0 %v4895
    %6577 = vmatpush1.bf16.msra.mxu0 %v4894
    %6578 = vmatprep.subr.bf16.mxu0 %v4903
    %6579 = vmatpush1.bf16.msra.mxu0 %v4902
    %6580 = vmatprep.subr.bf16.mxu0 %v4911
    %6581 = vmatpush1.bf16.msra.mxu0 %v4910
    %6582 = vmatprep.subr.bf16.mxu0 %v4919
    %6583 = vmatpush1.bf16.msra.mxu0 %v4918
    %6584 = vmatprep.subr.bf16.mxu0 %v4927
    %6585 = vmatpush1.bf16.msra.mxu0 %v4926
    %6586 = vmatprep.subr.bf16.mxu0 %v4935
    %6587 = vmatpush1.bf16.msra.mxu0 %v4934
    %6588 = vmatprep.subr.bf16.mxu0 %v4943
    %6589 = vmatpush1.bf16.msra.mxu0 %v4942
    %6590 = vmatprep.subr.bf16.mxu0 %v4951
    %6591 = vmatpush1.bf16.msra.mxu0 %v4950
    %6592 = vmatprep.subr.bf16.mxu0 %v4959
    %6593 = vmatpush1.bf16.msra.mxu0 %v4958
    %6594 = vmatprep.subr.bf16.mxu0 %v4967
    %6595 = vmatpush1.bf16.msra.mxu0 %v4966
    %6596 = vmatprep.subr.bf16.mxu0 %v4975
    %6597 = vmatpush1.bf16.msra.mxu0 %v4974
    %6598 = vmatprep.subr.bf16.mxu0 %v4983
    %6599 = vmatpush1.bf16.msra.mxu0 %v4982
    %6600 = vmatprep.subr.bf16.mxu0 %v4991
    %6601 = vmatpush1.bf16.msra.mxu0 %v4990
    %6602 = vmatprep.mubr.bf16.mxu0 %v213
    %6603 = vmatmul.mubr.bf16.gmra.mrb[0].mxu0 %v212
    %v6604 = vpop.f32.mrb[0].mxu0
    %v6605 = vadd.f32 %v6564, %v6604
    %v6606 = vpop.f32.mrb[0].mxu0
    %v6607 = vadd.f32 %v6566, %v6606
    %v6608 = vpop.f32.mrb[0].mxu0
    %v6609 = vpop.f32.mrb[0].mxu0
    %6610 = vdwg.mxu0
    %6611 = vmatprep.subr.bf16.mxu0 %v4999
    %6612 = vmatpush1.bf16.msra.mxu0 %v4998
    %6613 = vmatprep.subr.bf16.mxu0 %v5007
    %6614 = vmatpush1.bf16.msra.mxu0 %v5006
    %6615 = vmatprep.subr.bf16.mxu0 %v5015
    %6616 = vmatpush1.bf16.msra.mxu0 %v5014
    %6617 = vmatprep.subr.bf16.mxu0 %v5023
    %6618 = vmatpush1.bf16.msra.mxu0 %v5022
    %6619 = vmatprep.subr.bf16.mxu0 %v5031
    %6620 = vmatpush1.bf16.msra.mxu0 %v5030
    %6621 = vmatprep.subr.bf16.mxu0 %v5039
    %6622 = vmatpush1.bf16.msra.mxu0 %v5038
    %6623 = vmatprep.subr.bf16.mxu0 %v5047
    %6624 = vmatpush1.bf16.msra.mxu0 %v5046
    %6625 = vmatprep.subr.bf16.mxu0 %v5055
    %6626 = vmatpush1.bf16.msra.mxu0 %v5054
    %6627 = vmatprep.subr.bf16.mxu0 %v5063
    %6628 = vmatpush1.bf16.msra.mxu0 %v5062
    %6629 = vmatprep.subr.bf16.mxu0 %v5071
    %6630 = vmatpush1.bf16.msra.mxu0 %v5070
    %6631 = vmatprep.subr.bf16.mxu0 %v5079
    %6632 = vmatpush1.bf16.msra.mxu0 %v5078
    %6633 = vmatprep.subr.bf16.mxu0 %v5087
    %6634 = vmatpush1.bf16.msra.mxu0 %v5086
    %6635 = vmatprep.subr.bf16.mxu0 %v5095
    %6636 = vmatpush1.bf16.msra.mxu0 %v5094
    %6637 = vmatprep.subr.bf16.mxu0 %v5103
    %6638 = vmatpush1.bf16.msra.mxu0 %v5102
    %6639 = vmatprep.subr.bf16.mxu0 %v5111
    %6640 = vmatpush1.bf16.msra.mxu0 %v5110
    %6641 = vmatprep.subr.bf16.mxu0 %v5119
    %6642 = vmatpush1.bf16.msra.mxu0 %v5118
    %6643 = vmatprep.mubr.bf16.mxu0 %v215
    %6644 = vmatmul.mubr.bf16.gmra.mrb[0].mxu0 %v214
    %v6645 = vpop.f32.mrb[0].mxu0
    %v6646 = vadd.f32 %v6605, %v6645
    %v6647 = vpop.f32.mrb[0].mxu0
    %v6648 = vadd.f32 %v6607, %v6647
    %v6649 = vpop.f32.mrb[0].mxu0
    %v6650 = vpop.f32.mrb[0].mxu0
    %6651 = vdwg.mxu0
    %6652 = vmatprep.subr.bf16.mxu0 %v5127
    %6653 = vmatpush1.bf16.msra.mxu0 %v5126
    %6654 = vmatprep.subr.bf16.mxu0 %v5135
    %6655 = vmatpush1.bf16.msra.mxu0 %v5134
    %6656 = vmatprep.subr.bf16.mxu0 %v5143
    %6657 = vmatpush1.bf16.msra.mxu0 %v5142
    %6658 = vmatprep.subr.bf16.mxu0 %v5151
    %6659 = vmatpush1.bf16.msra.mxu0 %v5150
    %6660 = vmatprep.subr.bf16.mxu0 %v5159
    %6661 = vmatpush1.bf16.msra.mxu0 %v5158
    %6662 = vmatprep.subr.bf16.mxu0 %v5167
    %6663 = vmatpush1.bf16.msra.mxu0 %v5166
    %6664 = vmatprep.subr.bf16.mxu0 %v5175
    %6665 = vmatpush1.bf16.msra.mxu0 %v5174
    %6666 = vmatprep.subr.bf16.mxu0 %v5183
    %6667 = vmatpush1.bf16.msra.mxu0 %v5182
    %6668 = vmatprep.subr.bf16.mxu0 %v5191
    %6669 = vmatpush1.bf16.msra.mxu0 %v5190
    %6670 = vmatprep.subr.bf16.mxu0 %v5199
    %6671 = vmatpush1.bf16.msra.mxu0 %v5198
    %6672 = vmatprep.subr.bf16.mxu0 %v5207
    %6673 = vmatpush1.bf16.msra.mxu0 %v5206
    %6674 = vmatprep.subr.bf16.mxu0 %v5215
    %6675 = vmatpush1.bf16.msra.mxu0 %v5214
    %6676 = vmatprep.subr.bf16.mxu0 %v5223
    %6677 = vmatpush1.bf16.msra.mxu0 %v5222
    %6678 = vmatprep.subr.bf16.mxu0 %v5231
    %6679 = vmatpush1.bf16.msra.mxu0 %v5230
    %6680 = vmatprep.subr.bf16.mxu0 %v5239
    %6681 = vmatpush1.bf16.msra.mxu0 %v5238
    %6682 = vmatprep.subr.bf16.mxu0 %v5247
    %6683 = vmatpush1.bf16.msra.mxu0 %v5246
    %6684 = vmatprep.mubr.bf16.mxu0 %v217
    %6685 = vmatmul.mubr.bf16.gmra.mrb[0].mxu0 %v216
    %v6686 = vpop.f32.mrb[0].mxu0
    %v6687 = vadd.f32 %v6646, %v6686
    %v6688 = vpop.f32.mrb[0].mxu0
    %v6689 = vadd.f32 %v6648, %v6688
    %v6690 = vpop.f32.mrb[0].mxu0
    %v6691 = vpop.f32.mrb[0].mxu0
    %6692 = vdwg.mxu0
    %6693 = vmatprep.subr.bf16.mxu0 %v5255
    %6694 = vmatpush1.bf16.msra.mxu0 %v5254
    %6695 = vmatprep.subr.bf16.mxu0 %v5263
    %6696 = vmatpush1.bf16.msra.mxu0 %v5262
    %6697 = vmatprep.subr.bf16.mxu0 %v5271
    %6698 = vmatpush1.bf16.msra.mxu0 %v5270
    %6699 = vmatprep.subr.bf16.mxu0 %v5279
    %6700 = vmatpush1.bf16.msra.mxu0 %v5278
    %6701 = vmatprep.subr.bf16.mxu0 %v5287
    %6702 = vmatpush1.bf16.msra.mxu0 %v5286
    %6703 = vmatprep.subr.bf16.mxu0 %v5295
    %6704 = vmatpush1.bf16.msra.mxu0 %v5294
    %6705 = vmatprep.subr.bf16.mxu0 %v5303
    %6706 = vmatpush1.bf16.msra.mxu0 %v5302
    %6707 = vmatprep.subr.bf16.mxu0 %v5311
    %6708 = vmatpush1.bf16.msra.mxu0 %v5310
    %6709 = vmatprep.subr.bf16.mxu0 %v5319
    %6710 = vmatpush1.bf16.msra.mxu0 %v5318
    %6711 = vmatprep.subr.bf16.mxu0 %v5327
    %6712 = vmatpush1.bf16.msra.mxu0 %v5326
    %6713 = vmatprep.subr.bf16.mxu0 %v5335
    %6714 = vmatpush1.bf16.msra.mxu0 %v5334
    %6715 = vmatprep.subr.bf16.mxu0 %v5343
    %6716 = vmatpush1.bf16.msra.mxu0 %v5342
    %6717 = vmatprep.subr.bf16.mxu0 %v5351
    %6718 = vmatpush1.bf16.msra.mxu0 %v5350
    %6719 = vmatprep.subr.bf16.mxu0 %v5359
    %6720 = vmatpush1.bf16.msra.mxu0 %v5358
    %6721 = vmatprep.subr.bf16.mxu0 %v5367
    %6722 = vmatpush1.bf16.msra.mxu0 %v5366
    %6723 = vmatprep.subr.bf16.mxu0 %v5375
    %6724 = vmatpush1.bf16.msra.mxu0 %v5374
    %6725 = vmatprep.mubr.bf16.mxu0 %v219
    %6726 = vmatmul.mubr.bf16.gmra.mrb[0].mxu0 %v218
    %v6727 = vpop.f32.mrb[0].mxu0
    %v6728 = vadd.f32 %v6687, %v6727
    %v6729 = vpop.f32.mrb[0].mxu0
    %v6730 = vadd.f32 %v6689, %v6729
    %v6731 = vpop.f32.mrb[0].mxu0
    %v6732 = vpop.f32.mrb[0].mxu0
    %6733 = vdwg.mxu0
    %6734 = vmatprep.subr.bf16.mxu0 %v4361
    %6735 = vmatpush1.bf16.msra.mxu0 %v4360
    %6736 = vmatprep.subr.bf16.mxu0 %v4369
    %6737 = vmatpush1.bf16.msra.mxu0 %v4368
    %6738 = vmatprep.subr.bf16.mxu0 %v4377
    %6739 = vmatpush1.bf16.msra.mxu0 %v4376
    %6740 = vmatprep.subr.bf16.mxu0 %v4385
    %6741 = vmatpush1.bf16.msra.mxu0 %v4384
    %6742 = vmatprep.subr.bf16.mxu0 %v4393
    %6743 = vmatpush1.bf16.msra.mxu0 %v4392
    %6744 = vmatprep.subr.bf16.mxu0 %v4401
    %6745 = vmatpush1.bf16.msra.mxu0 %v4400
    %6746 = vmatprep.subr.bf16.mxu0 %v4409
    %6747 = vmatpush1.bf16.msra.mxu0 %v4408
    %6748 = vmatprep.subr.bf16.mxu0 %v4417
    %6749 = vmatpush1.bf16.msra.mxu0 %v4416
    %6750 = vmatprep.subr.bf16.mxu0 %v4425
    %6751 = vmatpush1.bf16.msra.mxu0 %v4424
    %6752 = vmatprep.subr.bf16.mxu0 %v4433
    %6753 = vmatpush1.bf16.msra.mxu0 %v4432
    %6754 = vmatprep.subr.bf16.mxu0 %v4441
    %6755 = vmatpush1.bf16.msra.mxu0 %v4440
    %6756 = vmatprep.subr.bf16.mxu0 %v4449
    %6757 = vmatpush1.bf16.msra.mxu0 %v4448
    %6758 = vmatprep.subr.bf16.mxu0 %v4457
    %6759 = vmatpush1.bf16.msra.mxu0 %v4456
    %6760 = vmatprep.subr.bf16.mxu0 %v4465
    %6761 = vmatpush1.bf16.msra.mxu0 %v4464
    %6762 = vmatprep.subr.bf16.mxu0 %v4473
    %6763 = vmatpush1.bf16.msra.mxu0 %v4472
    %6764 = vmatprep.subr.bf16.mxu0 %v4481
    %6765 = vmatpush1.bf16.msra.mxu0 %v4480
    %6766 = vmatprep.mubr.bf16.mxu0 %v205
    %6767 = vmatmul.mubr.bf16.gmra.mrb[0].mxu0 %v204
    %v6768 = vpop.f32.mrb[0].mxu0
    %v6769 = vadd.f32 %v1257, %v6768
    %v6770 = vpop.f32.mrb[0].mxu0
    %v6771 = vadd.f32 %v1261, %v6770
    %v6772 = vpop.f32.mrb[0].mxu0
    %v6773 = vpop.f32.mrb[0].mxu0
    %6774 = vdwg.mxu0
    %6775 = vmatprep.subr.bf16.mxu0 %v4489
    %6776 = vmatpush1.bf16.msra.mxu0 %v4488
    %6777 = vmatprep.subr.bf16.mxu0 %v4497
    %6778 = vmatpush1.bf16.msra.mxu0 %v4496
    %6779 = vmatprep.subr.bf16.mxu0 %v4505
    %6780 = vmatpush1.bf16.msra.mxu0 %v4504
    %6781 = vmatprep.subr.bf16.mxu0 %v4513
    %6782 = vmatpush1.bf16.msra.mxu0 %v4512
    %6783 = vmatprep.subr.bf16.mxu0 %v4521
    %6784 = vmatpush1.bf16.msra.mxu0 %v4520
    %6785 = vmatprep.subr.bf16.mxu0 %v4529
    %6786 = vmatpush1.bf16.msra.mxu0 %v4528
    %6787 = vmatprep.subr.bf16.mxu0 %v4537
    %6788 = vmatpush1.bf16.msra.mxu0 %v4536
    %6789 = vmatprep.subr.bf16.mxu0 %v4545
    %6790 = vmatpush1.bf16.msra.mxu0 %v4544
    %6791 = vmatprep.subr.bf16.mxu0 %v4553
    %6792 = vmatpush1.bf16.msra.mxu0 %v4552
    %6793 = vmatprep.subr.bf16.mxu0 %v4561
    %6794 = vmatpush1.bf16.msra.mxu0 %v4560
    %6795 = vmatprep.subr.bf16.mxu0 %v4569
    %6796 = vmatpush1.bf16.msra.mxu0 %v4568
    %6797 = vmatprep.subr.bf16.mxu0 %v4577
    %6798 = vmatpush1.bf16.msra.mxu0 %v4576
    %6799 = vmatprep.subr.bf16.mxu0 %v4585
    %6800 = vmatpush1.bf16.msra.mxu0 %v4584
    %6801 = vmatprep.subr.bf16.mxu0 %v4593
    %6802 = vmatpush1.bf16.msra.mxu0 %v4592
    %6803 = vmatprep.subr.bf16.mxu0 %v4601
    %6804 = vmatpush1.bf16.msra.mxu0 %v4600
    %6805 = vmatprep.subr.bf16.mxu0 %v4609
    %6806 = vmatpush1.bf16.msra.mxu0 %v4608
    %6807 = vmatprep.mubr.bf16.mxu0 %v207
    %6808 = vmatmul.mubr.bf16.gmra.mrb[0].mxu0 %v206
    %v6809 = vpop.f32.mrb[0].mxu0
    %v6810 = vadd.f32 %v6769, %v6809
    %v6811 = vpop.f32.mrb[0].mxu0
    %v6812 = vadd.f32 %v6771, %v6811
    %v6813 = vpop.f32.mrb[0].mxu0
    %v6814 = vpop.f32.mrb[0].mxu0
    %6815 = vdwg.mxu0
    %6816 = vmatprep.subr.bf16.mxu0 %v4617
    %6817 = vmatpush1.bf16.msra.mxu0 %v4616
    %6818 = vmatprep.subr.bf16.mxu0 %v4625
    %6819 = vmatpush1.bf16.msra.mxu0 %v4624
    %6820 = vmatprep.subr.bf16.mxu0 %v4633
    %6821 = vmatpush1.bf16.msra.mxu0 %v4632
    %6822 = vmatprep.subr.bf16.mxu0 %v4641
    %6823 = vmatpush1.bf16.msra.mxu0 %v4640
    %6824 = vmatprep.subr.bf16.mxu0 %v4649
    %6825 = vmatpush1.bf16.msra.mxu0 %v4648
    %6826 = vmatprep.subr.bf16.mxu0 %v4657
    %6827 = vmatpush1.bf16.msra.mxu0 %v4656
    %6828 = vmatprep.subr.bf16.mxu0 %v4665
    %6829 = vmatpush1.bf16.msra.mxu0 %v4664
    %6830 = vmatprep.subr.bf16.mxu0 %v4673
    %6831 = vmatpush1.bf16.msra.mxu0 %v4672
    %6832 = vmatprep.subr.bf16.mxu0 %v4681
    %6833 = vmatpush1.bf16.msra.mxu0 %v4680
    %6834 = vmatprep.subr.bf16.mxu0 %v4689
    %6835 = vmatpush1.bf16.msra.mxu0 %v4688
    %6836 = vmatprep.subr.bf16.mxu0 %v4697
    %6837 = vmatpush1.bf16.msra.mxu0 %v4696
    %6838 = vmatprep.subr.bf16.mxu0 %v4705
    %6839 = vmatpush1.bf16.msra.mxu0 %v4704
    %6840 = vmatprep.subr.bf16.mxu0 %v4713
    %6841 = vmatpush1.bf16.msra.mxu0 %v4712
    %6842 = vmatprep.subr.bf16.mxu0 %v4721
    %6843 = vmatpush1.bf16.msra.mxu0 %v4720
    %6844 = vmatprep.subr.bf16.mxu0 %v4729
    %6845 = vmatpush1.bf16.msra.mxu0 %v4728
    %6846 = vmatprep.subr.bf16.mxu0 %v4737
    %6847 = vmatpush1.bf16.msra.mxu0 %v4736
    %6848 = vmatprep.mubr.bf16.mxu0 %v209
    %6849 = vmatmul.mubr.bf16.gmra.mrb[0].mxu0 %v208
    %v6850 = vpop.f32.mrb[0].mxu0
    %v6851 = vadd.f32 %v6810, %v6850
    %v6852 = vpop.f32.mrb[0].mxu0
    %v6853 = vadd.f32 %v6812, %v6852
    %v6854 = vpop.f32.mrb[0].mxu0
    %v6855 = vpop.f32.mrb[0].mxu0
    %6856 = vdwg.mxu0
    %6857 = vmatprep.subr.bf16.mxu0 %v4745
    %6858 = vmatpush1.bf16.msra.mxu0 %v4744
    %6859 = vmatprep.subr.bf16.mxu0 %v4753
    %6860 = vmatpush1.bf16.msra.mxu0 %v4752
    %6861 = vmatprep.subr.bf16.mxu0 %v4761
    %6862 = vmatpush1.bf16.msra.mxu0 %v4760
    %6863 = vmatprep.subr.bf16.mxu0 %v4769
    %6864 = vmatpush1.bf16.msra.mxu0 %v4768
    %6865 = vmatprep.subr.bf16.mxu0 %v4777
    %6866 = vmatpush1.bf16.msra.mxu0 %v4776
    %6867 = vmatprep.subr.bf16.mxu0 %v4785
    %6868 = vmatpush1.bf16.msra.mxu0 %v4784
    %6869 = vmatprep.subr.bf16.mxu0 %v4793
    %6870 = vmatpush1.bf16.msra.mxu0 %v4792
    %6871 = vmatprep.subr.bf16.mxu0 %v4801
    %6872 = vmatpush1.bf16.msra.mxu0 %v4800
    %6873 = vmatprep.subr.bf16.mxu0 %v4809
    %6874 = vmatpush1.bf16.msra.mxu0 %v4808
    %6875 = vmatprep.subr.bf16.mxu0 %v4817
    %6876 = vmatpush1.bf16.msra.mxu0 %v4816
    %6877 = vmatprep.subr.bf16.mxu0 %v4825
    %6878 = vmatpush1.bf16.msra.mxu0 %v4824
    %6879 = vmatprep.subr.bf16.mxu0 %v4833
    %6880 = vmatpush1.bf16.msra.mxu0 %v4832
    %6881 = vmatprep.subr.bf16.mxu0 %v4841
    %6882 = vmatpush1.bf16.msra.mxu0 %v4840
    %6883 = vmatprep.subr.bf16.mxu0 %v4849
    %6884 = vmatpush1.bf16.msra.mxu0 %v4848
    %6885 = vmatprep.subr.bf16.mxu0 %v4857
    %6886 = vmatpush1.bf16.msra.mxu0 %v4856
    %6887 = vmatprep.subr.bf16.mxu0 %v4865
    %6888 = vmatpush1.bf16.msra.mxu0 %v4864
    %6889 = vmatprep.mubr.bf16.mxu0 %v211
    %6890 = vmatmul.mubr.bf16.gmra.mrb[0].mxu0 %v210
    %v6891 = vpop.f32.mrb[0].mxu0
    %v6892 = vadd.f32 %v6851, %v6891
    %v6893 = vpop.f32.mrb[0].mxu0
    %v6894 = vadd.f32 %v6853, %v6893
    %v6895 = vpop.f32.mrb[0].mxu0
    %v6896 = vpop.f32.mrb[0].mxu0
    %6897 = vdwg.mxu0
    %6898 = vmatprep.subr.bf16.mxu0 %v4873
    %6899 = vmatpush1.bf16.msra.mxu0 %v4872
    %6900 = vmatprep.subr.bf16.mxu0 %v4881
    %6901 = vmatpush1.bf16.msra.mxu0 %v4880
    %6902 = vmatprep.subr.bf16.mxu0 %v4889
    %6903 = vmatpush1.bf16.msra.mxu0 %v4888
    %6904 = vmatprep.subr.bf16.mxu0 %v4897
    %6905 = vmatpush1.bf16.msra.mxu0 %v4896
    %6906 = vmatprep.subr.bf16.mxu0 %v4905
    %6907 = vmatpush1.bf16.msra.mxu0 %v4904
    %6908 = vmatprep.subr.bf16.mxu0 %v4913
    %6909 = vmatpush1.bf16.msra.mxu0 %v4912
    %6910 = vmatprep.subr.bf16.mxu0 %v4921
    %6911 = vmatpush1.bf16.msra.mxu0 %v4920
    %6912 = vmatprep.subr.bf16.mxu0 %v4929
    %6913 = vmatpush1.bf16.msra.mxu0 %v4928
    %6914 = vmatprep.subr.bf16.mxu0 %v4937
    %6915 = vmatpush1.bf16.msra.mxu0 %v4936
    %6916 = vmatprep.subr.bf16.mxu0 %v4945
    %6917 = vmatpush1.bf16.msra.mxu0 %v4944
    %6918 = vmatprep.subr.bf16.mxu0 %v4953
    %6919 = vmatpush1.bf16.msra.mxu0 %v4952
    %6920 = vmatprep.subr.bf16.mxu0 %v4961
    %6921 = vmatpush1.bf16.msra.mxu0 %v4960
    %6922 = vmatprep.subr.bf16.mxu0 %v4969
    %6923 = vmatpush1.bf16.msra.mxu0 %v4968
    %6924 = vmatprep.subr.bf16.mxu0 %v4977
    %6925 = vmatpush1.bf16.msra.mxu0 %v4976
    %6926 = vmatprep.subr.bf16.mxu0 %v4985
    %6927 = vmatpush1.bf16.msra.mxu0 %v4984
    %6928 = vmatprep.subr.bf16.mxu0 %v4993
    %6929 = vmatpush1.bf16.msra.mxu0 %v4992
    %6930 = vmatprep.mubr.bf16.mxu0 %v213
    %6931 = vmatmul.mubr.bf16.gmra.mrb[0].mxu0 %v212
    %v6932 = vpop.f32.mrb[0].mxu0
    %v6933 = vadd.f32 %v6892, %v6932
    %v6934 = vpop.f32.mrb[0].mxu0
    %v6935 = vadd.f32 %v6894, %v6934
    %v6936 = vpop.f32.mrb[0].mxu0
    %v6937 = vpop.f32.mrb[0].mxu0
    %6938 = vdwg.mxu0
    %6939 = vmatprep.subr.bf16.mxu0 %v5001
    %6940 = vmatpush1.bf16.msra.mxu0 %v5000
    %6941 = vmatprep.subr.bf16.mxu0 %v5009
    %6942 = vmatpush1.bf16.msra.mxu0 %v5008
    %6943 = vmatprep.subr.bf16.mxu0 %v5017
    %6944 = vmatpush1.bf16.msra.mxu0 %v5016
    %6945 = vmatprep.subr.bf16.mxu0 %v5025
    %6946 = vmatpush1.bf16.msra.mxu0 %v5024
    %6947 = vmatprep.subr.bf16.mxu0 %v5033
    %6948 = vmatpush1.bf16.msra.mxu0 %v5032
    %6949 = vmatprep.subr.bf16.mxu0 %v5041
    %6950 = vmatpush1.bf16.msra.mxu0 %v5040
    %6951 = vmatprep.subr.bf16.mxu0 %v5049
    %6952 = vmatpush1.bf16.msra.mxu0 %v5048
    %6953 = vmatprep.subr.bf16.mxu0 %v5057
    %6954 = vmatpush1.bf16.msra.mxu0 %v5056
    %6955 = vmatprep.subr.bf16.mxu0 %v5065
    %6956 = vmatpush1.bf16.msra.mxu0 %v5064
    %6957 = vmatprep.subr.bf16.mxu0 %v5073
    %6958 = vmatpush1.bf16.msra.mxu0 %v5072
    %6959 = vmatprep.subr.bf16.mxu0 %v5081
    %6960 = vmatpush1.bf16.msra.mxu0 %v5080
    %6961 = vmatprep.subr.bf16.mxu0 %v5089
    %6962 = vmatpush1.bf16.msra.mxu0 %v5088
    %6963 = vmatprep.subr.bf16.mxu0 %v5097
    %6964 = vmatpush1.bf16.msra.mxu0 %v5096
    %6965 = vmatprep.subr.bf16.mxu0 %v5105
    %6966 = vmatpush1.bf16.msra.mxu0 %v5104
    %6967 = vmatprep.subr.bf16.mxu0 %v5113
    %6968 = vmatpush1.bf16.msra.mxu0 %v5112
    %6969 = vmatprep.subr.bf16.mxu0 %v5121
    %6970 = vmatpush1.bf16.msra.mxu0 %v5120
    %6971 = vmatprep.mubr.bf16.mxu0 %v215
    %6972 = vmatmul.mubr.bf16.gmra.mrb[0].mxu0 %v214
    %v6973 = vpop.f32.mrb[0].mxu0
    %v6974 = vadd.f32 %v6933, %v6973
    %v6975 = vpop.f32.mrb[0].mxu0
    %v6976 = vadd.f32 %v6935, %v6975
    %v6977 = vpop.f32.mrb[0].mxu0
    %v6978 = vpop.f32.mrb[0].mxu0
    %6979 = vdwg.mxu0
    %6980 = vmatprep.subr.bf16.mxu0 %v5129
    %6981 = vmatpush1.bf16.msra.mxu0 %v5128
    %6982 = vmatprep.subr.bf16.mxu0 %v5137
    %6983 = vmatpush1.bf16.msra.mxu0 %v5136
    %6984 = vmatprep.subr.bf16.mxu0 %v5145
    %6985 = vmatpush1.bf16.msra.mxu0 %v5144
    %6986 = vmatprep.subr.bf16.mxu0 %v5153
    %6987 = vmatpush1.bf16.msra.mxu0 %v5152
    %6988 = vmatprep.subr.bf16.mxu0 %v5161
    %6989 = vmatpush1.bf16.msra.mxu0 %v5160
    %6990 = vmatprep.subr.bf16.mxu0 %v5169
    %6991 = vmatpush1.bf16.msra.mxu0 %v5168
    %6992 = vmatprep.subr.bf16.mxu0 %v5177
    %6993 = vmatpush1.bf16.msra.mxu0 %v5176
    %6994 = vmatprep.subr.bf16.mxu0 %v5185
    %6995 = vmatpush1.bf16.msra.mxu0 %v5184
    %6996 = vmatprep.subr.bf16.mxu0 %v5193
    %6997 = vmatpush1.bf16.msra.mxu0 %v5192
    %6998 = vmatprep.subr.bf16.mxu0 %v5201
    %6999 = vmatpush1.bf16.msra.mxu0 %v5200
    %7000 = vmatprep.subr.bf16.mxu0 %v5209
    %7001 = vmatpush1.bf16.msra.mxu0 %v5208
    %7002 = vmatprep.subr.bf16.mxu0 %v5217
    %7003 = vmatpush1.bf16.msra.mxu0 %v5216
    %7004 = vmatprep.subr.bf16.mxu0 %v5225
    %7005 = vmatpush1.bf16.msra.mxu0 %v5224
    %7006 = vmatprep.subr.bf16.mxu0 %v5233
    %7007 = vmatpush1.bf16.msra.mxu0 %v5232
    %7008 = vmatprep.subr.bf16.mxu0 %v5241
    %7009 = vmatpush1.bf16.msra.mxu0 %v5240
    %7010 = vmatprep.subr.bf16.mxu0 %v5249
    %7011 = vmatpush1.bf16.msra.mxu0 %v5248
    %7012 = vmatprep.mubr.bf16.mxu0 %v217
    %7013 = vmatmul.mubr.bf16.gmra.mrb[0].mxu0 %v216
    %v7014 = vpop.f32.mrb[0].mxu0
    %v7015 = vadd.f32 %v6974, %v7014
    %v7016 = vpop.f32.mrb[0].mxu0
    %v7017 = vadd.f32 %v6976, %v7016
    %v7018 = vpop.f32.mrb[0].mxu0
    %v7019 = vpop.f32.mrb[0].mxu0
    %7020 = vdwg.mxu0
    %7021 = vmatprep.subr.bf16.mxu0 %v5257
    %7022 = vmatpush1.bf16.msra.mxu0 %v5256
    %7023 = vmatprep.subr.bf16.mxu0 %v5265
    %7024 = vmatpush1.bf16.msra.mxu0 %v5264
    %7025 = vmatprep.subr.bf16.mxu0 %v5273
    %7026 = vmatpush1.bf16.msra.mxu0 %v5272
    %7027 = vmatprep.subr.bf16.mxu0 %v5281
    %7028 = vmatpush1.bf16.msra.mxu0 %v5280
    %7029 = vmatprep.subr.bf16.mxu0 %v5289
    %7030 = vmatpush1.bf16.msra.mxu0 %v5288
    %7031 = vmatprep.subr.bf16.mxu0 %v5297
    %7032 = vmatpush1.bf16.msra.mxu0 %v5296
    %7033 = vmatprep.subr.bf16.mxu0 %v5305
    %7034 = vmatpush1.bf16.msra.mxu0 %v5304
    %7035 = vmatprep.subr.bf16.mxu0 %v5313
    %7036 = vmatpush1.bf16.msra.mxu0 %v5312
    %7037 = vmatprep.subr.bf16.mxu0 %v5321
    %7038 = vmatpush1.bf16.msra.mxu0 %v5320
    %7039 = vmatprep.subr.bf16.mxu0 %v5329
    %7040 = vmatpush1.bf16.msra.mxu0 %v5328
    %7041 = vmatprep.subr.bf16.mxu0 %v5337
    %7042 = vmatpush1.bf16.msra.mxu0 %v5336
    %7043 = vmatprep.subr.bf16.mxu0 %v5345
    %7044 = vmatpush1.bf16.msra.mxu0 %v5344
    %7045 = vmatprep.subr.bf16.mxu0 %v5353
    %7046 = vmatpush1.bf16.msra.mxu0 %v5352
    %7047 = vmatprep.subr.bf16.mxu0 %v5361
    %7048 = vmatpush1.bf16.msra.mxu0 %v5360
    %7049 = vmatprep.subr.bf16.mxu0 %v5369
    %7050 = vmatpush1.bf16.msra.mxu0 %v5368
    %7051 = vmatprep.subr.bf16.mxu0 %v5377
    %7052 = vmatpush1.bf16.msra.mxu0 %v5376
    %7053 = vmatprep.mubr.bf16.mxu0 %v219
    %7054 = vmatmul.mubr.bf16.gmra.mrb[0].mxu0 %v218
    %v7055 = vpop.f32.mrb[0].mxu0
    %v7056 = vadd.f32 %v7015, %v7055
    %v7057 = vpop.f32.mrb[0].mxu0
    %v7058 = vadd.f32 %v7017, %v7057
    %v7059 = vpop.f32.mrb[0].mxu0
    %v7060 = vpop.f32.mrb[0].mxu0
    %7061 = vdwg.mxu0
    %7062 = vmatprep.subr.bf16.mxu0 %v4363
    %7063 = vmatpush1.bf16.msra.mxu0 %v4362
    %7064 = vmatprep.subr.bf16.mxu0 %v4371
    %7065 = vmatpush1.bf16.msra.mxu0 %v4370
    %7066 = vmatprep.subr.bf16.mxu0 %v4379
    %7067 = vmatpush1.bf16.msra.mxu0 %v4378
    %7068 = vmatprep.subr.bf16.mxu0 %v4387
    %7069 = vmatpush1.bf16.msra.mxu0 %v4386
    %7070 = vmatprep.subr.bf16.mxu0 %v4395
    %7071 = vmatpush1.bf16.msra.mxu0 %v4394
    %7072 = vmatprep.subr.bf16.mxu0 %v4403
    %7073 = vmatpush1.bf16.msra.mxu0 %v4402
    %7074 = vmatprep.subr.bf16.mxu0 %v4411
    %7075 = vmatpush1.bf16.msra.mxu0 %v4410
    %7076 = vmatprep.subr.bf16.mxu0 %v4419
    %7077 = vmatpush1.bf16.msra.mxu0 %v4418
    %7078 = vmatprep.subr.bf16.mxu0 %v4427
    %7079 = vmatpush1.bf16.msra.mxu0 %v4426
    %7080 = vmatprep.subr.bf16.mxu0 %v4435
    %7081 = vmatpush1.bf16.msra.mxu0 %v4434
    %7082 = vmatprep.subr.bf16.mxu0 %v4443
    %7083 = vmatpush1.bf16.msra.mxu0 %v4442
    %7084 = vmatprep.subr.bf16.mxu0 %v4451
    %7085 = vmatpush1.bf16.msra.mxu0 %v4450
    %7086 = vmatprep.subr.bf16.mxu0 %v4459
    %7087 = vmatpush1.bf16.msra.mxu0 %v4458
    %7088 = vmatprep.subr.bf16.mxu0 %v4467
    %7089 = vmatpush1.bf16.msra.mxu0 %v4466
    %7090 = vmatprep.subr.bf16.mxu0 %v4475
    %7091 = vmatpush1.bf16.msra.mxu0 %v4474
    %7092 = vmatprep.subr.bf16.mxu0 %v4483
    %7093 = vmatpush1.bf16.msra.mxu0 %v4482
    %7094 = vmatprep.mubr.bf16.mxu0 %v205
    %7095 = vmatmul.mubr.bf16.gmra.mrb[0].mxu0 %v204
    %v7096 = vpop.f32.mrb[0].mxu0
    %v7097 = vadd.f32 %v1265, %v7096
    %v7098 = vpop.f32.mrb[0].mxu0
    %v7099 = vadd.f32 %v1269, %v7098
    %v7100 = vpop.f32.mrb[0].mxu0
    %v7101 = vpop.f32.mrb[0].mxu0
    %7102 = vdwg.mxu0
    %7103 = vmatprep.subr.bf16.mxu0 %v4491
    %7104 = vmatpush1.bf16.msra.mxu0 %v4490
    %7105 = vmatprep.subr.bf16.mxu0 %v4499
    %7106 = vmatpush1.bf16.msra.mxu0 %v4498
    %7107 = vmatprep.subr.bf16.mxu0 %v4507
    %7108 = vmatpush1.bf16.msra.mxu0 %v4506
    %7109 = vmatprep.subr.bf16.mxu0 %v4515
    %7110 = vmatpush1.bf16.msra.mxu0 %v4514
    %7111 = vmatprep.subr.bf16.mxu0 %v4523
    %7112 = vmatpush1.bf16.msra.mxu0 %v4522
    %7113 = vmatprep.subr.bf16.mxu0 %v4531
    %7114 = vmatpush1.bf16.msra.mxu0 %v4530
    %7115 = vmatprep.subr.bf16.mxu0 %v4539
    %7116 = vmatpush1.bf16.msra.mxu0 %v4538
    %7117 = vmatprep.subr.bf16.mxu0 %v4547
    %7118 = vmatpush1.bf16.msra.mxu0 %v4546
    %7119 = vmatprep.subr.bf16.mxu0 %v4555
    %7120 = vmatpush1.bf16.msra.mxu0 %v4554
    %7121 = vmatprep.subr.bf16.mxu0 %v4563
    %7122 = vmatpush1.bf16.msra.mxu0 %v4562
    %7123 = vmatprep.subr.bf16.mxu0 %v4571
    %7124 = vmatpush1.bf16.msra.mxu0 %v4570
    %7125 = vmatprep.subr.bf16.mxu0 %v4579
    %7126 = vmatpush1.bf16.msra.mxu0 %v4578
    %7127 = vmatprep.subr.bf16.mxu0 %v4587
    %7128 = vmatpush1.bf16.msra.mxu0 %v4586
    %7129 = vmatprep.subr.bf16.mxu0 %v4595
    %7130 = vmatpush1.bf16.msra.mxu0 %v4594
    %7131 = vmatprep.subr.bf16.mxu0 %v4603
    %7132 = vmatpush1.bf16.msra.mxu0 %v4602
    %7133 = vmatprep.subr.bf16.mxu0 %v4611
    %7134 = vmatpush1.bf16.msra.mxu0 %v4610
    %7135 = vmatprep.mubr.bf16.mxu0 %v207
    %7136 = vmatmul.mubr.bf16.gmra.mrb[0].mxu0 %v206
    %v7137 = vpop.f32.mrb[0].mxu0
    %v7138 = vadd.f32 %v7097, %v7137
    %v7139 = vpop.f32.mrb[0].mxu0
    %v7140 = vadd.f32 %v7099, %v7139
    %v7141 = vpop.f32.mrb[0].mxu0
    %v7142 = vpop.f32.mrb[0].mxu0
    %7143 = vdwg.mxu0
    %7144 = vmatprep.subr.bf16.mxu0 %v4619
    %7145 = vmatpush1.bf16.msra.mxu0 %v4618
    %7146 = vmatprep.subr.bf16.mxu0 %v4627
    %7147 = vmatpush1.bf16.msra.mxu0 %v4626
    %7148 = vmatprep.subr.bf16.mxu0 %v4635
    %7149 = vmatpush1.bf16.msra.mxu0 %v4634
    %7150 = vmatprep.subr.bf16.mxu0 %v4643
    %7151 = vmatpush1.bf16.msra.mxu0 %v4642
    %7152 = vmatprep.subr.bf16.mxu0 %v4651
    %7153 = vmatpush1.bf16.msra.mxu0 %v4650
    %7154 = vmatprep.subr.bf16.mxu0 %v4659
    %7155 = vmatpush1.bf16.msra.mxu0 %v4658
    %7156 = vmatprep.subr.bf16.mxu0 %v4667
    %7157 = vmatpush1.bf16.msra.mxu0 %v4666
    %7158 = vmatprep.subr.bf16.mxu0 %v4675
    %7159 = vmatpush1.bf16.msra.mxu0 %v4674
    %7160 = vmatprep.subr.bf16.mxu0 %v4683
    %7161 = vmatpush1.bf16.msra.mxu0 %v4682
    %7162 = vmatprep.subr.bf16.mxu0 %v4691
    %7163 = vmatpush1.bf16.msra.mxu0 %v4690
    %7164 = vmatprep.subr.bf16.mxu0 %v4699
    %7165 = vmatpush1.bf16.msra.mxu0 %v4698
    %7166 = vmatprep.subr.bf16.mxu0 %v4707
    %7167 = vmatpush1.bf16.msra.mxu0 %v4706
    %7168 = vmatprep.subr.bf16.mxu0 %v4715
    %7169 = vmatpush1.bf16.msra.mxu0 %v4714
    %7170 = vmatprep.subr.bf16.mxu0 %v4723
    %7171 = vmatpush1.bf16.msra.mxu0 %v4722
    %7172 = vmatprep.subr.bf16.mxu0 %v4731
    %7173 = vmatpush1.bf16.msra.mxu0 %v4730
    %7174 = vmatprep.subr.bf16.mxu0 %v4739
    %7175 = vmatpush1.bf16.msra.mxu0 %v4738
    %7176 = vmatprep.mubr.bf16.mxu0 %v209
    %7177 = vmatmul.mubr.bf16.gmra.mrb[0].mxu0 %v208
    %v7178 = vpop.f32.mrb[0].mxu0
    %v7179 = vadd.f32 %v7138, %v7178
    %v7180 = vpop.f32.mrb[0].mxu0
    %v7181 = vadd.f32 %v7140, %v7180
    %v7182 = vpop.f32.mrb[0].mxu0
    %v7183 = vpop.f32.mrb[0].mxu0
    %7184 = vdwg.mxu0
    %7185 = vmatprep.subr.bf16.mxu0 %v4747
    %7186 = vmatpush1.bf16.msra.mxu0 %v4746
    %7187 = vmatprep.subr.bf16.mxu0 %v4755
    %7188 = vmatpush1.bf16.msra.mxu0 %v4754
    %7189 = vmatprep.subr.bf16.mxu0 %v4763
    %7190 = vmatpush1.bf16.msra.mxu0 %v4762
    %7191 = vmatprep.subr.bf16.mxu0 %v4771
    %7192 = vmatpush1.bf16.msra.mxu0 %v4770
    %7193 = vmatprep.subr.bf16.mxu0 %v4779
    %7194 = vmatpush1.bf16.msra.mxu0 %v4778
    %7195 = vmatprep.subr.bf16.mxu0 %v4787
    %7196 = vmatpush1.bf16.msra.mxu0 %v4786
    %7197 = vmatprep.subr.bf16.mxu0 %v4795
    %7198 = vmatpush1.bf16.msra.mxu0 %v4794
    %7199 = vmatprep.subr.bf16.mxu0 %v4803
    %7200 = vmatpush1.bf16.msra.mxu0 %v4802
    %7201 = vmatprep.subr.bf16.mxu0 %v4811
    %7202 = vmatpush1.bf16.msra.mxu0 %v4810
    %7203 = vmatprep.subr.bf16.mxu0 %v4819
    %7204 = vmatpush1.bf16.msra.mxu0 %v4818
    %7205 = vmatprep.subr.bf16.mxu0 %v4827
    %7206 = vmatpush1.bf16.msra.mxu0 %v4826
    %7207 = vmatprep.subr.bf16.mxu0 %v4835
    %7208 = vmatpush1.bf16.msra.mxu0 %v4834
    %7209 = vmatprep.subr.bf16.mxu0 %v4843
    %7210 = vmatpush1.bf16.msra.mxu0 %v4842
    %7211 = vmatprep.subr.bf16.mxu0 %v4851
    %7212 = vmatpush1.bf16.msra.mxu0 %v4850
    %7213 = vmatprep.subr.bf16.mxu0 %v4859
    %7214 = vmatpush1.bf16.msra.mxu0 %v4858
    %7215 = vmatprep.subr.bf16.mxu0 %v4867
    %7216 = vmatpush1.bf16.msra.mxu0 %v4866
    %7217 = vmatprep.mubr.bf16.mxu0 %v211
    %7218 = vmatmul.mubr.bf16.gmra.mrb[0].mxu0 %v210
    %v7219 = vpop.f32.mrb[0].mxu0
    %v7220 = vadd.f32 %v7179, %v7219
    %v7221 = vpop.f32.mrb[0].mxu0
    %v7222 = vadd.f32 %v7181, %v7221
    %v7223 = vpop.f32.mrb[0].mxu0
    %v7224 = vpop.f32.mrb[0].mxu0
    %7225 = vdwg.mxu0
    %7226 = vmatprep.subr.bf16.mxu0 %v4875
    %7227 = vmatpush1.bf16.msra.mxu0 %v4874
    %7228 = vmatprep.subr.bf16.mxu0 %v4883
    %7229 = vmatpush1.bf16.msra.mxu0 %v4882
    %7230 = vmatprep.subr.bf16.mxu0 %v4891
    %7231 = vmatpush1.bf16.msra.mxu0 %v4890
    %7232 = vmatprep.subr.bf16.mxu0 %v4899
    %7233 = vmatpush1.bf16.msra.mxu0 %v4898
    %7234 = vmatprep.subr.bf16.mxu0 %v4907
    %7235 = vmatpush1.bf16.msra.mxu0 %v4906
    %7236 = vmatprep.subr.bf16.mxu0 %v4915
    %7237 = vmatpush1.bf16.msra.mxu0 %v4914
    %7238 = vmatprep.subr.bf16.mxu0 %v4923
    %7239 = vmatpush1.bf16.msra.mxu0 %v4922
    %7240 = vmatprep.subr.bf16.mxu0 %v4931
    %7241 = vmatpush1.bf16.msra.mxu0 %v4930
    %7242 = vmatprep.subr.bf16.mxu0 %v4939
    %7243 = vmatpush1.bf16.msra.mxu0 %v4938
    %7244 = vmatprep.subr.bf16.mxu0 %v4947
    %7245 = vmatpush1.bf16.msra.mxu0 %v4946
    %7246 = vmatprep.subr.bf16.mxu0 %v4955
    %7247 = vmatpush1.bf16.msra.mxu0 %v4954
    %7248 = vmatprep.subr.bf16.mxu0 %v4963
    %7249 = vmatpush1.bf16.msra.mxu0 %v4962
    %7250 = vmatprep.subr.bf16.mxu0 %v4971
    %7251 = vmatpush1.bf16.msra.mxu0 %v4970
    %7252 = vmatprep.subr.bf16.mxu0 %v4979
    %7253 = vmatpush1.bf16.msra.mxu0 %v4978
    %7254 = vmatprep.subr.bf16.mxu0 %v4987
    %7255 = vmatpush1.bf16.msra.mxu0 %v4986
    %7256 = vmatprep.subr.bf16.mxu0 %v4995
    %7257 = vmatpush1.bf16.msra.mxu0 %v4994
    %7258 = vmatprep.mubr.bf16.mxu0 %v213
    %7259 = vmatmul.mubr.bf16.gmra.mrb[0].mxu0 %v212
    %v7260 = vpop.f32.mrb[0].mxu0
    %v7261 = vadd.f32 %v7220, %v7260
    %v7262 = vpop.f32.mrb[0].mxu0
    %v7263 = vadd.f32 %v7222, %v7262
    %v7264 = vpop.f32.mrb[0].mxu0
    %v7265 = vpop.f32.mrb[0].mxu0
    %7266 = vdwg.mxu0
    %7267 = vmatprep.subr.bf16.mxu0 %v5003
    %7268 = vmatpush1.bf16.msra.mxu0 %v5002
    %7269 = vmatprep.subr.bf16.mxu0 %v5011
    %7270 = vmatpush1.bf16.msra.mxu0 %v5010
    %7271 = vmatprep.subr.bf16.mxu0 %v5019
    %7272 = vmatpush1.bf16.msra.mxu0 %v5018
    %7273 = vmatprep.subr.bf16.mxu0 %v5027
    %7274 = vmatpush1.bf16.msra.mxu0 %v5026
    %7275 = vmatprep.subr.bf16.mxu0 %v5035
    %7276 = vmatpush1.bf16.msra.mxu0 %v5034
    %7277 = vmatprep.subr.bf16.mxu0 %v5043
    %7278 = vmatpush1.bf16.msra.mxu0 %v5042
    %7279 = vmatprep.subr.bf16.mxu0 %v5051
    %7280 = vmatpush1.bf16.msra.mxu0 %v5050
    %7281 = vmatprep.subr.bf16.mxu0 %v5059
    %7282 = vmatpush1.bf16.msra.mxu0 %v5058
    %7283 = vmatprep.subr.bf16.mxu0 %v5067
    %7284 = vmatpush1.bf16.msra.mxu0 %v5066
    %7285 = vmatprep.subr.bf16.mxu0 %v5075
    %7286 = vmatpush1.bf16.msra.mxu0 %v5074
    %7287 = vmatprep.subr.bf16.mxu0 %v5083
    %7288 = vmatpush1.bf16.msra.mxu0 %v5082
    %7289 = vmatprep.subr.bf16.mxu0 %v5091
    %7290 = vmatpush1.bf16.msra.mxu0 %v5090
    %7291 = vmatprep.subr.bf16.mxu0 %v5099
    %7292 = vmatpush1.bf16.msra.mxu0 %v5098
    %7293 = vmatprep.subr.bf16.mxu0 %v5107
    %7294 = vmatpush1.bf16.msra.mxu0 %v5106
    %7295 = vmatprep.subr.bf16.mxu0 %v5115
    %7296 = vmatpush1.bf16.msra.mxu0 %v5114
    %7297 = vmatprep.subr.bf16.mxu0 %v5123
    %7298 = vmatpush1.bf16.msra.mxu0 %v5122
    %7299 = vmatprep.mubr.bf16.mxu0 %v215
    %7300 = vmatmul.mubr.bf16.gmra.mrb[0].mxu0 %v214
    %v7301 = vpop.f32.mrb[0].mxu0
    %v7302 = vadd.f32 %v7261, %v7301
    %v7303 = vpop.f32.mrb[0].mxu0
    %v7304 = vadd.f32 %v7263, %v7303
    %v7305 = vpop.f32.mrb[0].mxu0
    %v7306 = vpop.f32.mrb[0].mxu0
    %7307 = vdwg.mxu0
    %7308 = vmatprep.subr.bf16.mxu0 %v5131
    %7309 = vmatpush1.bf16.msra.mxu0 %v5130
    %7310 = vmatprep.subr.bf16.mxu0 %v5139
    %7311 = vmatpush1.bf16.msra.mxu0 %v5138
    %7312 = vmatprep.subr.bf16.mxu0 %v5147
    %7313 = vmatpush1.bf16.msra.mxu0 %v5146
    %7314 = vmatprep.subr.bf16.mxu0 %v5155
    %7315 = vmatpush1.bf16.msra.mxu0 %v5154
    %7316 = vmatprep.subr.bf16.mxu0 %v5163
    %7317 = vmatpush1.bf16.msra.mxu0 %v5162
    %7318 = vmatprep.subr.bf16.mxu0 %v5171
    %7319 = vmatpush1.bf16.msra.mxu0 %v5170
    %7320 = vmatprep.subr.bf16.mxu0 %v5179
    %7321 = vmatpush1.bf16.msra.mxu0 %v5178
    %7322 = vmatprep.subr.bf16.mxu0 %v5187
    %7323 = vmatpush1.bf16.msra.mxu0 %v5186
    %7324 = vmatprep.subr.bf16.mxu0 %v5195
    %7325 = vmatpush1.bf16.msra.mxu0 %v5194
    %7326 = vmatprep.subr.bf16.mxu0 %v5203
    %7327 = vmatpush1.bf16.msra.mxu0 %v5202
    %7328 = vmatprep.subr.bf16.mxu0 %v5211
    %7329 = vmatpush1.bf16.msra.mxu0 %v5210
    %7330 = vmatprep.subr.bf16.mxu0 %v5219
    %7331 = vmatpush1.bf16.msra.mxu0 %v5218
    %7332 = vmatprep.subr.bf16.mxu0 %v5227
    %7333 = vmatpush1.bf16.msra.mxu0 %v5226
    %7334 = vmatprep.subr.bf16.mxu0 %v5235
    %7335 = vmatpush1.bf16.msra.mxu0 %v5234
    %7336 = vmatprep.subr.bf16.mxu0 %v5243
    %7337 = vmatpush1.bf16.msra.mxu0 %v5242
    %7338 = vmatprep.subr.bf16.mxu0 %v5251
    %7339 = vmatpush1.bf16.msra.mxu0 %v5250
    %7340 = vmatprep.mubr.bf16.mxu0 %v217
    %7341 = vmatmul.mubr.bf16.gmra.mrb[0].mxu0 %v216
    %v7342 = vpop.f32.mrb[0].mxu0
    %v7343 = vadd.f32 %v7302, %v7342
    %v7344 = vpop.f32.mrb[0].mxu0
    %v7345 = vadd.f32 %v7304, %v7344
    %v7346 = vpop.f32.mrb[0].mxu0
    %v7347 = vpop.f32.mrb[0].mxu0
    %7348 = vdwg.mxu0
    %7349 = vmatprep.subr.bf16.mxu0 %v5259
    %7350 = vmatpush1.bf16.msra.mxu0 %v5258
    %7351 = vmatprep.subr.bf16.mxu0 %v5267
    %7352 = vmatpush1.bf16.msra.mxu0 %v5266
    %7353 = vmatprep.subr.bf16.mxu0 %v5275
    %7354 = vmatpush1.bf16.msra.mxu0 %v5274
    %7355 = vmatprep.subr.bf16.mxu0 %v5283
    %7356 = vmatpush1.bf16.msra.mxu0 %v5282
    %7357 = vmatprep.subr.bf16.mxu0 %v5291
    %7358 = vmatpush1.bf16.msra.mxu0 %v5290
    %7359 = vmatprep.subr.bf16.mxu0 %v5299
    %7360 = vmatpush1.bf16.msra.mxu0 %v5298
    %7361 = vmatprep.subr.bf16.mxu0 %v5307
    %7362 = vmatpush1.bf16.msra.mxu0 %v5306
    %7363 = vmatprep.subr.bf16.mxu0 %v5315
    %7364 = vmatpush1.bf16.msra.mxu0 %v5314
    %7365 = vmatprep.subr.bf16.mxu0 %v5323
    %7366 = vmatpush1.bf16.msra.mxu0 %v5322
    %7367 = vmatprep.subr.bf16.mxu0 %v5331
    %7368 = vmatpush1.bf16.msra.mxu0 %v5330
    %7369 = vmatprep.subr.bf16.mxu0 %v5339
    %7370 = vmatpush1.bf16.msra.mxu0 %v5338
    %7371 = vmatprep.subr.bf16.mxu0 %v5347
    %7372 = vmatpush1.bf16.msra.mxu0 %v5346
    %7373 = vmatprep.subr.bf16.mxu0 %v5355
    %7374 = vmatpush1.bf16.msra.mxu0 %v5354
    %7375 = vmatprep.subr.bf16.mxu0 %v5363
    %7376 = vmatpush1.bf16.msra.mxu0 %v5362
    %7377 = vmatprep.subr.bf16.mxu0 %v5371
    %7378 = vmatpush1.bf16.msra.mxu0 %v5370
    %7379 = vmatprep.subr.bf16.mxu0 %v5379
    %7380 = vmatpush1.bf16.msra.mxu0 %v5378
    %7381 = vmatprep.mubr.bf16.mxu0 %v219
    %7382 = vmatmul.mubr.bf16.gmra.mrb[0].mxu0 %v218
    %v7383 = vpop.f32.mrb[0].mxu0
    %v7384 = vadd.f32 %v7343, %v7383
    %v7385 = vpop.f32.mrb[0].mxu0
    %v7386 = vadd.f32 %v7345, %v7385
    %v7387 = vpop.f32.mrb[0].mxu0
    %v7388 = vpop.f32.mrb[0].mxu0
    %7389 = vdwg.mxu0
    %7390 = vmatprep.subr.bf16.mxu0 %v4365
    %7391 = vmatpush1.bf16.msra.mxu0 %v4364
    %7392 = vmatprep.subr.bf16.mxu0 %v4373
    %7393 = vmatpush1.bf16.msra.mxu0 %v4372
    %7394 = vmatprep.subr.bf16.mxu0 %v4381
    %7395 = vmatpush1.bf16.msra.mxu0 %v4380
    %7396 = vmatprep.subr.bf16.mxu0 %v4389
    %7397 = vmatpush1.bf16.msra.mxu0 %v4388
    %7398 = vmatprep.subr.bf16.mxu0 %v4397
    %7399 = vmatpush1.bf16.msra.mxu0 %v4396
    %7400 = vmatprep.subr.bf16.mxu0 %v4405
    %7401 = vmatpush1.bf16.msra.mxu0 %v4404
    %7402 = vmatprep.subr.bf16.mxu0 %v4413
    %7403 = vmatpush1.bf16.msra.mxu0 %v4412
    %7404 = vmatprep.subr.bf16.mxu0 %v4421
    %7405 = vmatpush1.bf16.msra.mxu0 %v4420
    %7406 = vmatprep.subr.bf16.mxu0 %v4429
    %7407 = vmatpush1.bf16.msra.mxu0 %v4428
    %7408 = vmatprep.subr.bf16.mxu0 %v4437
    %7409 = vmatpush1.bf16.msra.mxu0 %v4436
    %7410 = vmatprep.subr.bf16.mxu0 %v4445
    %7411 = vmatpush1.bf16.msra.mxu0 %v4444
    %7412 = vmatprep.subr.bf16.mxu0 %v4453
    %7413 = vmatpush1.bf16.msra.mxu0 %v4452
    %7414 = vmatprep.subr.bf16.mxu0 %v4461
    %7415 = vmatpush1.bf16.msra.mxu0 %v4460
    %7416 = vmatprep.subr.bf16.mxu0 %v4469
    %7417 = vmatpush1.bf16.msra.mxu0 %v4468
    %7418 = vmatprep.subr.bf16.mxu0 %v4477
    %7419 = vmatpush1.bf16.msra.mxu0 %v4476
    %7420 = vmatprep.subr.bf16.mxu0 %v4485
    %7421 = vmatpush1.bf16.msra.mxu0 %v4484
    %7422 = vmatprep.mubr.bf16.mxu0 %v205
    %7423 = vmatmul.mubr.bf16.gmra.mrb[0].mxu0 %v204
    %v7424 = vpop.f32.mrb[0].mxu0
    %v7425 = vadd.f32 %v1273, %v7424
    %v7426 = vpop.f32.mrb[0].mxu0
    %v7427 = vadd.f32 %v1277, %v7426
    %v7428 = vpop.f32.mrb[0].mxu0
    %v7429 = vpop.f32.mrb[0].mxu0
    %7430 = vdwg.mxu0
    %7431 = vmatprep.subr.bf16.mxu0 %v4493
    %7432 = vmatpush1.bf16.msra.mxu0 %v4492
    %7433 = vmatprep.subr.bf16.mxu0 %v4501
    %7434 = vmatpush1.bf16.msra.mxu0 %v4500
    %7435 = vmatprep.subr.bf16.mxu0 %v4509
    %7436 = vmatpush1.bf16.msra.mxu0 %v4508
    %7437 = vmatprep.subr.bf16.mxu0 %v4517
    %7438 = vmatpush1.bf16.msra.mxu0 %v4516
    %7439 = vmatprep.subr.bf16.mxu0 %v4525
    %7440 = vmatpush1.bf16.msra.mxu0 %v4524
    %7441 = vmatprep.subr.bf16.mxu0 %v4533
    %7442 = vmatpush1.bf16.msra.mxu0 %v4532
    %7443 = vmatprep.subr.bf16.mxu0 %v4541
    %7444 = vmatpush1.bf16.msra.mxu0 %v4540
    %7445 = vmatprep.subr.bf16.mxu0 %v4549
    %7446 = vmatpush1.bf16.msra.mxu0 %v4548
    %7447 = vmatprep.subr.bf16.mxu0 %v4557
    %7448 = vmatpush1.bf16.msra.mxu0 %v4556
    %7449 = vmatprep.subr.bf16.mxu0 %v4565
    %7450 = vmatpush1.bf16.msra.mxu0 %v4564
    %7451 = vmatprep.subr.bf16.mxu0 %v4573
    %7452 = vmatpush1.bf16.msra.mxu0 %v4572
    %7453 = vmatprep.subr.bf16.mxu0 %v4581
    %7454 = vmatpush1.bf16.msra.mxu0 %v4580
    %7455 = vmatprep.subr.bf16.mxu0 %v4589
    %7456 = vmatpush1.bf16.msra.mxu0 %v4588
    %7457 = vmatprep.subr.bf16.mxu0 %v4597
    %7458 = vmatpush1.bf16.msra.mxu0 %v4596
    %7459 = vmatprep.subr.bf16.mxu0 %v4605
    %7460 = vmatpush1.bf16.msra.mxu0 %v4604
    %7461 = vmatprep.subr.bf16.mxu0 %v4613
    %7462 = vmatpush1.bf16.msra.mxu0 %v4612
    %7463 = vmatprep.mubr.bf16.mxu0 %v207
    %7464 = vmatmul.mubr.bf16.gmra.mrb[0].mxu0 %v206
    %v7465 = vpop.f32.mrb[0].mxu0
    %v7466 = vadd.f32 %v7425, %v7465
    %v7467 = vpop.f32.mrb[0].mxu0
    %v7468 = vadd.f32 %v7427, %v7467
    %v7469 = vpop.f32.mrb[0].mxu0
    %v7470 = vpop.f32.mrb[0].mxu0
    %7471 = vdwg.mxu0
    %7472 = vmatprep.subr.bf16.mxu0 %v4621
    %7473 = vmatpush1.bf16.msra.mxu0 %v4620
    %7474 = vmatprep.subr.bf16.mxu0 %v4629
    %7475 = vmatpush1.bf16.msra.mxu0 %v4628
    %7476 = vmatprep.subr.bf16.mxu0 %v4637
    %7477 = vmatpush1.bf16.msra.mxu0 %v4636
    %7478 = vmatprep.subr.bf16.mxu0 %v4645
    %7479 = vmatpush1.bf16.msra.mxu0 %v4644
    %7480 = vmatprep.subr.bf16.mxu0 %v4653
    %7481 = vmatpush1.bf16.msra.mxu0 %v4652
    %7482 = vmatprep.subr.bf16.mxu0 %v4661
    %7483 = vmatpush1.bf16.msra.mxu0 %v4660
    %7484 = vmatprep.subr.bf16.mxu0 %v4669
    %7485 = vmatpush1.bf16.msra.mxu0 %v4668
    %7486 = vmatprep.subr.bf16.mxu0 %v4677
    %7487 = vmatpush1.bf16.msra.mxu0 %v4676
    %7488 = vmatprep.subr.bf16.mxu0 %v4685
    %7489 = vmatpush1.bf16.msra.mxu0 %v4684
    %7490 = vmatprep.subr.bf16.mxu0 %v4693
    %7491 = vmatpush1.bf16.msra.mxu0 %v4692
    %7492 = vmatprep.subr.bf16.mxu0 %v4701
    %7493 = vmatpush1.bf16.msra.mxu0 %v4700
    %7494 = vmatprep.subr.bf16.mxu0 %v4709
    %7495 = vmatpush1.bf16.msra.mxu0 %v4708
    %7496 = vmatprep.subr.bf16.mxu0 %v4717
    %7497 = vmatpush1.bf16.msra.mxu0 %v4716
    %7498 = vmatprep.subr.bf16.mxu0 %v4725
    %7499 = vmatpush1.bf16.msra.mxu0 %v4724
    %7500 = vmatprep.subr.bf16.mxu0 %v4733
    %7501 = vmatpush1.bf16.msra.mxu0 %v4732
    %7502 = vmatprep.subr.bf16.mxu0 %v4741
    %7503 = vmatpush1.bf16.msra.mxu0 %v4740
    %7504 = vmatprep.mubr.bf16.mxu0 %v209
    %7505 = vmatmul.mubr.bf16.gmra.mrb[0].mxu0 %v208
    %v7506 = vpop.f32.mrb[0].mxu0
    %v7507 = vadd.f32 %v7466, %v7506
    %v7508 = vpop.f32.mrb[0].mxu0
    %v7509 = vadd.f32 %v7468, %v7508
    %v7510 = vpop.f32.mrb[0].mxu0
    %v7511 = vpop.f32.mrb[0].mxu0
    %7512 = vdwg.mxu0
    %7513 = vmatprep.subr.bf16.mxu0 %v4749
    %7514 = vmatpush1.bf16.msra.mxu0 %v4748
    %7515 = vmatprep.subr.bf16.mxu0 %v4757
    %7516 = vmatpush1.bf16.msra.mxu0 %v4756
    %7517 = vmatprep.subr.bf16.mxu0 %v4765
    %7518 = vmatpush1.bf16.msra.mxu0 %v4764
    %7519 = vmatprep.subr.bf16.mxu0 %v4773
    %7520 = vmatpush1.bf16.msra.mxu0 %v4772
    %7521 = vmatprep.subr.bf16.mxu0 %v4781
    %7522 = vmatpush1.bf16.msra.mxu0 %v4780
    %7523 = vmatprep.subr.bf16.mxu0 %v4789
    %7524 = vmatpush1.bf16.msra.mxu0 %v4788
    %7525 = vmatprep.subr.bf16.mxu0 %v4797
    %7526 = vmatpush1.bf16.msra.mxu0 %v4796
    %7527 = vmatprep.subr.bf16.mxu0 %v4805
    %7528 = vmatpush1.bf16.msra.mxu0 %v4804
    %7529 = vmatprep.subr.bf16.mxu0 %v4813
    %7530 = vmatpush1.bf16.msra.mxu0 %v4812
    %7531 = vmatprep.subr.bf16.mxu0 %v4821
    %7532 = vmatpush1.bf16.msra.mxu0 %v4820
    %7533 = vmatprep.subr.bf16.mxu0 %v4829
    %7534 = vmatpush1.bf16.msra.mxu0 %v4828
    %7535 = vmatprep.subr.bf16.mxu0 %v4837
    %7536 = vmatpush1.bf16.msra.mxu0 %v4836
    %7537 = vmatprep.subr.bf16.mxu0 %v4845
    %7538 = vmatpush1.bf16.msra.mxu0 %v4844
    %7539 = vmatprep.subr.bf16.mxu0 %v4853
    %7540 = vmatpush1.bf16.msra.mxu0 %v4852
    %7541 = vmatprep.subr.bf16.mxu0 %v4861
    %7542 = vmatpush1.bf16.msra.mxu0 %v4860
    %7543 = vmatprep.subr.bf16.mxu0 %v4869
    %7544 = vmatpush1.bf16.msra.mxu0 %v4868
    %7545 = vmatprep.mubr.bf16.mxu0 %v211
    %7546 = vmatmul.mubr.bf16.gmra.mrb[0].mxu0 %v210
    %v7547 = vpop.f32.mrb[0].mxu0
    %v7548 = vadd.f32 %v7507, %v7547
    %v7549 = vpop.f32.mrb[0].mxu0
    %v7550 = vadd.f32 %v7509, %v7549
    %v7551 = vpop.f32.mrb[0].mxu0
    %v7552 = vpop.f32.mrb[0].mxu0
    %7553 = vdwg.mxu0
    %7554 = vmatprep.subr.bf16.mxu0 %v4877
    %7555 = vmatpush1.bf16.msra.mxu0 %v4876
    %7556 = vmatprep.subr.bf16.mxu0 %v4885
    %7557 = vmatpush1.bf16.msra.mxu0 %v4884
    %7558 = vmatprep.subr.bf16.mxu0 %v4893
    %7559 = vmatpush1.bf16.msra.mxu0 %v4892
    %7560 = vmatprep.subr.bf16.mxu0 %v4901
    %7561 = vmatpush1.bf16.msra.mxu0 %v4900
    %7562 = vmatprep.subr.bf16.mxu0 %v4909
    %7563 = vmatpush1.bf16.msra.mxu0 %v4908
    %7564 = vmatprep.subr.bf16.mxu0 %v4917
    %7565 = vmatpush1.bf16.msra.mxu0 %v4916
    %7566 = vmatprep.subr.bf16.mxu0 %v4925
    %7567 = vmatpush1.bf16.msra.mxu0 %v4924
    %7568 = vmatprep.subr.bf16.mxu0 %v4933
    %7569 = vmatpush1.bf16.msra.mxu0 %v4932
    %7570 = vmatprep.subr.bf16.mxu0 %v4941
    %7571 = vmatpush1.bf16.msra.mxu0 %v4940
    %7572 = vmatprep.subr.bf16.mxu0 %v4949
    %7573 = vmatpush1.bf16.msra.mxu0 %v4948
    %7574 = vmatprep.subr.bf16.mxu0 %v4957
    %7575 = vmatpush1.bf16.msra.mxu0 %v4956
    %7576 = vmatprep.subr.bf16.mxu0 %v4965
    %7577 = vmatpush1.bf16.msra.mxu0 %v4964
    %7578 = vmatprep.subr.bf16.mxu0 %v4973
    %7579 = vmatpush1.bf16.msra.mxu0 %v4972
    %7580 = vmatprep.subr.bf16.mxu0 %v4981
    %7581 = vmatpush1.bf16.msra.mxu0 %v4980
    %7582 = vmatprep.subr.bf16.mxu0 %v4989
    %7583 = vmatpush1.bf16.msra.mxu0 %v4988
    %7584 = vmatprep.subr.bf16.mxu0 %v4997
    %7585 = vmatpush1.bf16.msra.mxu0 %v4996
    %7586 = vmatprep.mubr.bf16.mxu0 %v213
    %7587 = vmatmul.mubr.bf16.gmra.mrb[0].mxu0 %v212
    %v7588 = vpop.f32.mrb[0].mxu0
    %v7589 = vadd.f32 %v7548, %v7588
    %v7590 = vpop.f32.mrb[0].mxu0
    %v7591 = vadd.f32 %v7550, %v7590
    %v7592 = vpop.f32.mrb[0].mxu0
    %v7593 = vpop.f32.mrb[0].mxu0
    %7594 = vdwg.mxu0
    %7595 = vmatprep.subr.bf16.mxu0 %v5005
    %7596 = vmatpush1.bf16.msra.mxu0 %v5004
    %7597 = vmatprep.subr.bf16.mxu0 %v5013
    %7598 = vmatpush1.bf16.msra.mxu0 %v5012
    %7599 = vmatprep.subr.bf16.mxu0 %v5021
    %7600 = vmatpush1.bf16.msra.mxu0 %v5020
    %7601 = vmatprep.subr.bf16.mxu0 %v5029
    %7602 = vmatpush1.bf16.msra.mxu0 %v5028
    %7603 = vmatprep.subr.bf16.mxu0 %v5037
    %7604 = vmatpush1.bf16.msra.mxu0 %v5036
    %7605 = vmatprep.subr.bf16.mxu0 %v5045
    %7606 = vmatpush1.bf16.msra.mxu0 %v5044
    %7607 = vmatprep.subr.bf16.mxu0 %v5053
    %7608 = vmatpush1.bf16.msra.mxu0 %v5052
    %7609 = vmatprep.subr.bf16.mxu0 %v5061
    %7610 = vmatpush1.bf16.msra.mxu0 %v5060
    %7611 = vmatprep.subr.bf16.mxu0 %v5069
    %7612 = vmatpush1.bf16.msra.mxu0 %v5068
    %7613 = vmatprep.subr.bf16.mxu0 %v5077
    %7614 = vmatpush1.bf16.msra.mxu0 %v5076
    %7615 = vmatprep.subr.bf16.mxu0 %v5085
    %7616 = vmatpush1.bf16.msra.mxu0 %v5084
    %7617 = vmatprep.subr.bf16.mxu0 %v5093
    %7618 = vmatpush1.bf16.msra.mxu0 %v5092
    %7619 = vmatprep.subr.bf16.mxu0 %v5101
    %7620 = vmatpush1.bf16.msra.mxu0 %v5100
    %7621 = vmatprep.subr.bf16.mxu0 %v5109
    %7622 = vmatpush1.bf16.msra.mxu0 %v5108
    %7623 = vmatprep.subr.bf16.mxu0 %v5117
    %7624 = vmatpush1.bf16.msra.mxu0 %v5116
    %7625 = vmatprep.subr.bf16.mxu0 %v5125
    %7626 = vmatpush1.bf16.msra.mxu0 %v5124
    %7627 = vmatprep.mubr.bf16.mxu0 %v215
    %7628 = vmatmul.mubr.bf16.gmra.mrb[0].mxu0 %v214
    %v7629 = vpop.f32.mrb[0].mxu0
    %v7630 = vadd.f32 %v7589, %v7629
    %v7631 = vpop.f32.mrb[0].mxu0
    %v7632 = vadd.f32 %v7591, %v7631
    %v7633 = vpop.f32.mrb[0].mxu0
    %v7634 = vpop.f32.mrb[0].mxu0
    %7635 = vdwg.mxu0
    %7636 = vmatprep.subr.bf16.mxu0 %v5133
    %7637 = vmatpush1.bf16.msra.mxu0 %v5132
    %7638 = vmatprep.subr.bf16.mxu0 %v5141
    %7639 = vmatpush1.bf16.msra.mxu0 %v5140
    %7640 = vmatprep.subr.bf16.mxu0 %v5149
    %7641 = vmatpush1.bf16.msra.mxu0 %v5148
    %7642 = vmatprep.subr.bf16.mxu0 %v5157
    %7643 = vmatpush1.bf16.msra.mxu0 %v5156
    %7644 = vmatprep.subr.bf16.mxu0 %v5165
    %7645 = vmatpush1.bf16.msra.mxu0 %v5164
    %7646 = vmatprep.subr.bf16.mxu0 %v5173
    %7647 = vmatpush1.bf16.msra.mxu0 %v5172
    %7648 = vmatprep.subr.bf16.mxu0 %v5181
    %7649 = vmatpush1.bf16.msra.mxu0 %v5180
    %7650 = vmatprep.subr.bf16.mxu0 %v5189
    %7651 = vmatpush1.bf16.msra.mxu0 %v5188
    %7652 = vmatprep.subr.bf16.mxu0 %v5197
    %7653 = vmatpush1.bf16.msra.mxu0 %v5196
    %7654 = vmatprep.subr.bf16.mxu0 %v5205
    %7655 = vmatpush1.bf16.msra.mxu0 %v5204
    %7656 = vmatprep.subr.bf16.mxu0 %v5213
    %7657 = vmatpush1.bf16.msra.mxu0 %v5212
    %7658 = vmatprep.subr.bf16.mxu0 %v5221
    %7659 = vmatpush1.bf16.msra.mxu0 %v5220
    %7660 = vmatprep.subr.bf16.mxu0 %v5229
    %7661 = vmatpush1.bf16.msra.mxu0 %v5228
    %7662 = vmatprep.subr.bf16.mxu0 %v5237
    %7663 = vmatpush1.bf16.msra.mxu0 %v5236
    %7664 = vmatprep.subr.bf16.mxu0 %v5245
    %7665 = vmatpush1.bf16.msra.mxu0 %v5244
    %7666 = vmatprep.subr.bf16.mxu0 %v5253
    %7667 = vmatpush1.bf16.msra.mxu0 %v5252
    %7668 = vmatprep.mubr.bf16.mxu0 %v217
    %7669 = vmatmul.mubr.bf16.gmra.mrb[0].mxu0 %v216
    %v7670 = vpop.f32.mrb[0].mxu0
    %v7671 = vadd.f32 %v7630, %v7670
    %v7672 = vpop.f32.mrb[0].mxu0
    %v7673 = vadd.f32 %v7632, %v7672
    %v7674 = vpop.f32.mrb[0].mxu0
    %v7675 = vpop.f32.mrb[0].mxu0
    %7676 = vdwg.mxu0
    %7677 = vmatprep.subr.bf16.mxu0 %v5261
    %7678 = vmatpush1.bf16.msra.mxu0 %v5260
    %7679 = vmatprep.subr.bf16.mxu0 %v5269
    %7680 = vmatpush1.bf16.msra.mxu0 %v5268
    %7681 = vmatprep.subr.bf16.mxu0 %v5277
    %7682 = vmatpush1.bf16.msra.mxu0 %v5276
    %7683 = vmatprep.subr.bf16.mxu0 %v5285
    %7684 = vmatpush1.bf16.msra.mxu0 %v5284
    %7685 = vmatprep.subr.bf16.mxu0 %v5293
    %7686 = vmatpush1.bf16.msra.mxu0 %v5292
    %7687 = vmatprep.subr.bf16.mxu0 %v5301
    %7688 = vmatpush1.bf16.msra.mxu0 %v5300
    %7689 = vmatprep.subr.bf16.mxu0 %v5309
    %7690 = vmatpush1.bf16.msra.mxu0 %v5308
    %7691 = vmatprep.subr.bf16.mxu0 %v5317
    %7692 = vmatpush1.bf16.msra.mxu0 %v5316
    %7693 = vmatprep.subr.bf16.mxu0 %v5325
    %7694 = vmatpush1.bf16.msra.mxu0 %v5324
    %7695 = vmatprep.subr.bf16.mxu0 %v5333
    %7696 = vmatpush1.bf16.msra.mxu0 %v5332
    %7697 = vmatprep.subr.bf16.mxu0 %v5341
    %7698 = vmatpush1.bf16.msra.mxu0 %v5340
    %7699 = vmatprep.subr.bf16.mxu0 %v5349
    %7700 = vmatpush1.bf16.msra.mxu0 %v5348
    %7701 = vmatprep.subr.bf16.mxu0 %v5357
    %7702 = vmatpush1.bf16.msra.mxu0 %v5356
    %7703 = vmatprep.subr.bf16.mxu0 %v5365
    %7704 = vmatpush1.bf16.msra.mxu0 %v5364
    %7705 = vmatprep.subr.bf16.mxu0 %v5373
    %7706 = vmatpush1.bf16.msra.mxu0 %v5372
    %7707 = vmatprep.subr.bf16.mxu0 %v5381
    %7708 = vmatpush1.bf16.msra.mxu0 %v5380
    %7709 = vmatprep.mubr.bf16.mxu0 %v219
    %7710 = vmatmul.mubr.bf16.gmra.mrb[0].mxu0 %v218
    %v7711 = vpop.f32.mrb[0].mxu0
    %v7712 = vadd.f32 %v7671, %v7711
    %v7713 = vpop.f32.mrb[0].mxu0
    %v7714 = vadd.f32 %v7673, %v7713
    %v7715 = vpop.f32.mrb[0].mxu0
    %v7716 = vpop.f32.mrb[0].mxu0
    %7717 = vdwg.mxu0
    %v7718 = vmax.f32 %v6728, 0.0
    %v7719 = vmax.f32 %v6730, 0.0
    %v7720 = vmax.f32 %v7056, 0.0
    %v7721 = vmax.f32 %v7058, 0.0
    %v7722 = vmax.f32 %v7384, 0.0
    %v7723 = vmax.f32 %v7386, 0.0
    %v7724 = vmax.f32 %v7712, 0.0
    %v7725 = vmax.f32 %v7714, 0.0
    %v7726 = vpack.c.bf16 %v7718, %v7718
    %v7727 = vpack.c.bf16 %v7719, %v7719
    %v7728 = vpack.c.bf16 %v7720, %v7720
    %v7729 = vpack.c.bf16 %v7721, %v7721
    %v7730 = vpack.c.bf16 %v7722, %v7722
    %v7731 = vpack.c.bf16 %v7723, %v7723
    %v7732 = vpack.c.bf16 %v7724, %v7724
    %v7733 = vpack.c.bf16 %v7725, %v7725
    %v7734 = vld [vmem:[#allocation7] sm:$0xff]
    %v7735 = vld [vmem:[#allocation7 + $0x8] sm:$0xff]
    %v7736 = vld [vmem:[#allocation7 + $0x10] sm:$0xff]
    %v7737 = vld [vmem:[#allocation7 + $0x18] sm:$0xff]
    %v7738 = vld [vmem:[#allocation7 + $0x20] sm:$0xff]
    %v7739 = vld [vmem:[#allocation7 + $0x28] sm:$0xff]
    %v7740 = vld [vmem:[#allocation7 + $0x30] sm:$0xff]
    %v7741 = vld [vmem:[#allocation7 + $0x38] sm:$0xff]
    %v7742 = vld [vmem:[#allocation7 + $0x40] sm:$0xff]
    %v7743 = vld [vmem:[#allocation7 + $0x48] sm:$0xff]
    %v7744 = vld [vmem:[#allocation7 + $0x50] sm:$0xff]
    %v7745 = vld [vmem:[#allocation7 + $0x58] sm:$0xff]
    %v7746 = vld [vmem:[#allocation7 + $0x60] sm:$0xff]
    %v7747 = vld [vmem:[#allocation7 + $0x68] sm:$0xff]
    %v7748 = vld [vmem:[#allocation7 + $0x70] sm:$0xff]
    %v7749 = vld [vmem:[#allocation7 + $0x78] sm:$0xff]
    %v7750 = vld [vmem:[#allocation7 + $0x80] sm:$0xff]
    %v7751 = vld [vmem:[#allocation7 + $0x88] sm:$0xff]
    %v7752 = vld [vmem:[#allocation7 + $0x90] sm:$0xff]
    %v7753 = vld [vmem:[#allocation7 + $0x98] sm:$0xff]
    %v7754 = vld [vmem:[#allocation7 + $0xa0] sm:$0xff]
    %v7755 = vld [vmem:[#allocation7 + $0xa8] sm:$0xff]
    %v7756 = vld [vmem:[#allocation7 + $0xb0] sm:$0xff]
    %v7757 = vld [vmem:[#allocation7 + $0xb8] sm:$0xff]
    %v7758 = vld [vmem:[#allocation7 + $0xc0] sm:$0xff]
    %v7759 = vld [vmem:[#allocation7 + $0xc8] sm:$0xff]
    %v7760 = vld [vmem:[#allocation7 + $0xd0] sm:$0xff]
    %v7761 = vld [vmem:[#allocation7 + $0xd8] sm:$0xff]
    %v7762 = vld [vmem:[#allocation7 + $0xe0] sm:$0xff]
    %v7763 = vld [vmem:[#allocation7 + $0xe8] sm:$0xff]
    %v7764 = vld [vmem:[#allocation7 + $0xf0] sm:$0xff]
    %v7765 = vld [vmem:[#allocation7 + $0xf8] sm:$0xff]
    %v7766 = vld [vmem:[#allocation7 + $0x100] sm:$0xff]
    %v7767 = vld [vmem:[#allocation7 + $0x108] sm:$0xff]
    %v7768 = vld [vmem:[#allocation7 + $0x110] sm:$0xff]
    %v7769 = vld [vmem:[#allocation7 + $0x118] sm:$0xff]
    %v7770 = vld [vmem:[#allocation7 + $0x120] sm:$0xff]
    %v7771 = vld [vmem:[#allocation7 + $0x128] sm:$0xff]
    %v7772 = vld [vmem:[#allocation7 + $0x130] sm:$0xff]
    %v7773 = vld [vmem:[#allocation7 + $0x138] sm:$0xff]
    %v7774 = vld [vmem:[#allocation7 + $0x140] sm:$0xff]
    %v7775 = vld [vmem:[#allocation7 + $0x148] sm:$0xff]
    %v7776 = vld [vmem:[#allocation7 + $0x150] sm:$0xff]
    %v7777 = vld [vmem:[#allocation7 + $0x158] sm:$0xff]
    %v7778 = vld [vmem:[#allocation7 + $0x160] sm:$0xff]
    %v7779 = vld [vmem:[#allocation7 + $0x168] sm:$0xff]
    %v7780 = vld [vmem:[#allocation7 + $0x170] sm:$0xff]
    %v7781 = vld [vmem:[#allocation7 + $0x178] sm:$0xff]
    %v7782 = vld [vmem:[#allocation7 + $0x180] sm:$0xff]
    %v7783 = vld [vmem:[#allocation7 + $0x188] sm:$0xff]
    %v7784 = vld [vmem:[#allocation7 + $0x190] sm:$0xff]
    %v7785 = vld [vmem:[#allocation7 + $0x198] sm:$0xff]
    %v7786 = vld [vmem:[#allocation7 + $0x1a0] sm:$0xff]
    %v7787 = vld [vmem:[#allocation7 + $0x1a8] sm:$0xff]
    %v7788 = vld [vmem:[#allocation7 + $0x1b0] sm:$0xff]
    %v7789 = vld [vmem:[#allocation7 + $0x1b8] sm:$0xff]
    %v7790 = vld [vmem:[#allocation7 + $0x1c0] sm:$0xff]
    %v7791 = vld [vmem:[#allocation7 + $0x1c8] sm:$0xff]
    %v7792 = vld [vmem:[#allocation7 + $0x1d0] sm:$0xff]
    %v7793 = vld [vmem:[#allocation7 + $0x1d8] sm:$0xff]
    %v7794 = vld [vmem:[#allocation7 + $0x1e0] sm:$0xff]
    %v7795 = vld [vmem:[#allocation7 + $0x1e8] sm:$0xff]
    %v7796 = vld [vmem:[#allocation7 + $0x1f0] sm:$0xff]
    %v7797 = vld [vmem:[#allocation7 + $0x1f8] sm:$0xff]
    %v7798 = vld [vmem:[#allocation7 + $0x200] sm:$0xff]
    %v7799 = vld [vmem:[#allocation7 + $0x208] sm:$0xff]
    %v7800 = vld [vmem:[#allocation7 + $0x210] sm:$0xff]
    %v7801 = vld [vmem:[#allocation7 + $0x218] sm:$0xff]
    %v7802 = vld [vmem:[#allocation7 + $0x220] sm:$0xff]
    %v7803 = vld [vmem:[#allocation7 + $0x228] sm:$0xff]
    %v7804 = vld [vmem:[#allocation7 + $0x230] sm:$0xff]
    %v7805 = vld [vmem:[#allocation7 + $0x238] sm:$0xff]
    %v7806 = vld [vmem:[#allocation7 + $0x240] sm:$0xff]
    %v7807 = vld [vmem:[#allocation7 + $0x248] sm:$0xff]
    %v7808 = vld [vmem:[#allocation7 + $0x250] sm:$0xff]
    %v7809 = vld [vmem:[#allocation7 + $0x258] sm:$0xff]
    %v7810 = vld [vmem:[#allocation7 + $0x260] sm:$0xff]
    %v7811 = vld [vmem:[#allocation7 + $0x268] sm:$0xff]
    %v7812 = vld [vmem:[#allocation7 + $0x270] sm:$0xff]
    %v7813 = vld [vmem:[#allocation7 + $0x278] sm:$0xff]
    %v7814 = vld [vmem:[#allocation7 + $0x280] sm:$0xff]
    %v7815 = vld [vmem:[#allocation7 + $0x288] sm:$0xff]
    %v7816 = vld [vmem:[#allocation7 + $0x290] sm:$0xff]
    %v7817 = vld [vmem:[#allocation7 + $0x298] sm:$0xff]
    %v7818 = vld [vmem:[#allocation7 + $0x2a0] sm:$0xff]
    %v7819 = vld [vmem:[#allocation7 + $0x2a8] sm:$0xff]
    %v7820 = vld [vmem:[#allocation7 + $0x2b0] sm:$0xff]
    %v7821 = vld [vmem:[#allocation7 + $0x2b8] sm:$0xff]
    %v7822 = vld [vmem:[#allocation7 + $0x2c0] sm:$0xff]
    %v7823 = vld [vmem:[#allocation7 + $0x2c8] sm:$0xff]
    %v7824 = vld [vmem:[#allocation7 + $0x2d0] sm:$0xff]
    %v7825 = vld [vmem:[#allocation7 + $0x2d8] sm:$0xff]
    %v7826 = vld [vmem:[#allocation7 + $0x2e0] sm:$0xff]
    %v7827 = vld [vmem:[#allocation7 + $0x2e8] sm:$0xff]
    %v7828 = vld [vmem:[#allocation7 + $0x2f0] sm:$0xff]
    %v7829 = vld [vmem:[#allocation7 + $0x2f8] sm:$0xff]
    %v7830 = vld [vmem:[#allocation7 + $0x300] sm:$0xff]
    %v7831 = vld [vmem:[#allocation7 + $0x308] sm:$0xff]
    %v7832 = vld [vmem:[#allocation7 + $0x310] sm:$0xff]
    %v7833 = vld [vmem:[#allocation7 + $0x318] sm:$0xff]
    %v7834 = vld [vmem:[#allocation7 + $0x320] sm:$0xff]
    %v7835 = vld [vmem:[#allocation7 + $0x328] sm:$0xff]
    %v7836 = vld [vmem:[#allocation7 + $0x330] sm:$0xff]
    %v7837 = vld [vmem:[#allocation7 + $0x338] sm:$0xff]
    %v7838 = vld [vmem:[#allocation7 + $0x340] sm:$0xff]
    %v7839 = vld [vmem:[#allocation7 + $0x348] sm:$0xff]
    %v7840 = vld [vmem:[#allocation7 + $0x350] sm:$0xff]
    %v7841 = vld [vmem:[#allocation7 + $0x358] sm:$0xff]
    %v7842 = vld [vmem:[#allocation7 + $0x360] sm:$0xff]
    %v7843 = vld [vmem:[#allocation7 + $0x368] sm:$0xff]
    %v7844 = vld [vmem:[#allocation7 + $0x370] sm:$0xff]
    %v7845 = vld [vmem:[#allocation7 + $0x378] sm:$0xff]
    %v7846 = vld [vmem:[#allocation7 + $0x380] sm:$0xff]
    %v7847 = vld [vmem:[#allocation7 + $0x388] sm:$0xff]
    %v7848 = vld [vmem:[#allocation7 + $0x390] sm:$0xff]
    %v7849 = vld [vmem:[#allocation7 + $0x398] sm:$0xff]
    %v7850 = vld [vmem:[#allocation7 + $0x3a0] sm:$0xff]
    %v7851 = vld [vmem:[#allocation7 + $0x3a8] sm:$0xff]
    %v7852 = vld [vmem:[#allocation7 + $0x3b0] sm:$0xff]
    %v7853 = vld [vmem:[#allocation7 + $0x3b8] sm:$0xff]
    %v7854 = vld [vmem:[#allocation7 + $0x3c0] sm:$0xff]
    %v7855 = vld [vmem:[#allocation7 + $0x3c8] sm:$0xff]
    %v7856 = vld [vmem:[#allocation7 + $0x3d0] sm:$0xff]
    %v7857 = vld [vmem:[#allocation7 + $0x3d8] sm:$0xff]
    %v7858 = vld [vmem:[#allocation7 + $0x3e0] sm:$0xff]
    %v7859 = vld [vmem:[#allocation7 + $0x3e8] sm:$0xff]
    %v7860 = vld [vmem:[#allocation7 + $0x3f0] sm:$0xff]
    %v7861 = vld [vmem:[#allocation7 + $0x3f8] sm:$0xff]
    %v7862 = vld [vmem:[#allocation7 + $0x400] sm:$0xff]
    %v7863 = vld [vmem:[#allocation7 + $0x408] sm:$0xff]
    %v7864 = vld [vmem:[#allocation7 + $0x410] sm:$0xff]
    %v7865 = vld [vmem:[#allocation7 + $0x418] sm:$0xff]
    %v7866 = vld [vmem:[#allocation7 + $0x420] sm:$0xff]
    %v7867 = vld [vmem:[#allocation7 + $0x428] sm:$0xff]
    %v7868 = vld [vmem:[#allocation7 + $0x430] sm:$0xff]
    %v7869 = vld [vmem:[#allocation7 + $0x438] sm:$0xff]
    %v7870 = vld [vmem:[#allocation7 + $0x440] sm:$0xff]
    %v7871 = vld [vmem:[#allocation7 + $0x448] sm:$0xff]
    %v7872 = vld [vmem:[#allocation7 + $0x450] sm:$0xff]
    %v7873 = vld [vmem:[#allocation7 + $0x458] sm:$0xff]
    %v7874 = vld [vmem:[#allocation7 + $0x460] sm:$0xff]
    %v7875 = vld [vmem:[#allocation7 + $0x468] sm:$0xff]
    %v7876 = vld [vmem:[#allocation7 + $0x470] sm:$0xff]
    %v7877 = vld [vmem:[#allocation7 + $0x478] sm:$0xff]
    %v7878 = vld [vmem:[#allocation7 + $0x480] sm:$0xff]
    %v7879 = vld [vmem:[#allocation7 + $0x488] sm:$0xff]
    %v7880 = vld [vmem:[#allocation7 + $0x490] sm:$0xff]
    %v7881 = vld [vmem:[#allocation7 + $0x498] sm:$0xff]
    %v7882 = vld [vmem:[#allocation7 + $0x4a0] sm:$0xff]
    %v7883 = vld [vmem:[#allocation7 + $0x4a8] sm:$0xff]
    %v7884 = vld [vmem:[#allocation7 + $0x4b0] sm:$0xff]
    %v7885 = vld [vmem:[#allocation7 + $0x4b8] sm:$0xff]
    %v7886 = vld [vmem:[#allocation7 + $0x4c0] sm:$0xff]
    %v7887 = vld [vmem:[#allocation7 + $0x4c8] sm:$0xff]
    %v7888 = vld [vmem:[#allocation7 + $0x4d0] sm:$0xff]
    %v7889 = vld [vmem:[#allocation7 + $0x4d8] sm:$0xff]
    %v7890 = vld [vmem:[#allocation7 + $0x4e0] sm:$0xff]
    %v7891 = vld [vmem:[#allocation7 + $0x4e8] sm:$0xff]
    %v7892 = vld [vmem:[#allocation7 + $0x4f0] sm:$0xff]
    %v7893 = vld [vmem:[#allocation7 + $0x4f8] sm:$0xff]
    %v7894 = vld [vmem:[#allocation7 + $0x500] sm:$0xff]
    %v7895 = vld [vmem:[#allocation7 + $0x508] sm:$0xff]
    %v7896 = vld [vmem:[#allocation7 + $0x510] sm:$0xff]
    %v7897 = vld [vmem:[#allocation7 + $0x518] sm:$0xff]
    %v7898 = vld [vmem:[#allocation7 + $0x520] sm:$0xff]
    %v7899 = vld [vmem:[#allocation7 + $0x528] sm:$0xff]
    %v7900 = vld [vmem:[#allocation7 + $0x530] sm:$0xff]
    %v7901 = vld [vmem:[#allocation7 + $0x538] sm:$0xff]
    %v7902 = vld [vmem:[#allocation7 + $0x540] sm:$0xff]
    %v7903 = vld [vmem:[#allocation7 + $0x548] sm:$0xff]
    %v7904 = vld [vmem:[#allocation7 + $0x550] sm:$0xff]
    %v7905 = vld [vmem:[#allocation7 + $0x558] sm:$0xff]
    %v7906 = vld [vmem:[#allocation7 + $0x560] sm:$0xff]
    %v7907 = vld [vmem:[#allocation7 + $0x568] sm:$0xff]
    %v7908 = vld [vmem:[#allocation7 + $0x570] sm:$0xff]
    %v7909 = vld [vmem:[#allocation7 + $0x578] sm:$0xff]
    %v7910 = vld [vmem:[#allocation7 + $0x580] sm:$0xff]
    %v7911 = vld [vmem:[#allocation7 + $0x588] sm:$0xff]
    %v7912 = vld [vmem:[#allocation7 + $0x590] sm:$0xff]
    %v7913 = vld [vmem:[#allocation7 + $0x598] sm:$0xff]
    %v7914 = vld [vmem:[#allocation7 + $0x5a0] sm:$0xff]
    %v7915 = vld [vmem:[#allocation7 + $0x5a8] sm:$0xff]
    %v7916 = vld [vmem:[#allocation7 + $0x5b0] sm:$0xff]
    %v7917 = vld [vmem:[#allocation7 + $0x5b8] sm:$0xff]
    %v7918 = vld [vmem:[#allocation7 + $0x5c0] sm:$0xff]
    %v7919 = vld [vmem:[#allocation7 + $0x5c8] sm:$0xff]
    %v7920 = vld [vmem:[#allocation7 + $0x5d0] sm:$0xff]
    %v7921 = vld [vmem:[#allocation7 + $0x5d8] sm:$0xff]
    %v7922 = vld [vmem:[#allocation7 + $0x5e0] sm:$0xff]
    %v7923 = vld [vmem:[#allocation7 + $0x5e8] sm:$0xff]
    %v7924 = vld [vmem:[#allocation7 + $0x5f0] sm:$0xff]
    %v7925 = vld [vmem:[#allocation7 + $0x5f8] sm:$0xff]
    %v7926 = vld [vmem:[#allocation7 + $0x600] sm:$0xff]
    %v7927 = vld [vmem:[#allocation7 + $0x608] sm:$0xff]
    %v7928 = vld [vmem:[#allocation7 + $0x610] sm:$0xff]
    %v7929 = vld [vmem:[#allocation7 + $0x618] sm:$0xff]
    %v7930 = vld [vmem:[#allocation7 + $0x620] sm:$0xff]
    %v7931 = vld [vmem:[#allocation7 + $0x628] sm:$0xff]
    %v7932 = vld [vmem:[#allocation7 + $0x630] sm:$0xff]
    %v7933 = vld [vmem:[#allocation7 + $0x638] sm:$0xff]
    %v7934 = vld [vmem:[#allocation7 + $0x640] sm:$0xff]
    %v7935 = vld [vmem:[#allocation7 + $0x648] sm:$0xff]
    %v7936 = vld [vmem:[#allocation7 + $0x650] sm:$0xff]
    %v7937 = vld [vmem:[#allocation7 + $0x658] sm:$0xff]
    %v7938 = vld [vmem:[#allocation7 + $0x660] sm:$0xff]
    %v7939 = vld [vmem:[#allocation7 + $0x668] sm:$0xff]
    %v7940 = vld [vmem:[#allocation7 + $0x670] sm:$0xff]
    %v7941 = vld [vmem:[#allocation7 + $0x678] sm:$0xff]
    %v7942 = vld [vmem:[#allocation7 + $0x680] sm:$0xff]
    %v7943 = vld [vmem:[#allocation7 + $0x688] sm:$0xff]
    %v7944 = vld [vmem:[#allocation7 + $0x690] sm:$0xff]
    %v7945 = vld [vmem:[#allocation7 + $0x698] sm:$0xff]
    %v7946 = vld [vmem:[#allocation7 + $0x6a0] sm:$0xff]
    %v7947 = vld [vmem:[#allocation7 + $0x6a8] sm:$0xff]
    %v7948 = vld [vmem:[#allocation7 + $0x6b0] sm:$0xff]
    %v7949 = vld [vmem:[#allocation7 + $0x6b8] sm:$0xff]
    %v7950 = vld [vmem:[#allocation7 + $0x6c0] sm:$0xff]
    %v7951 = vld [vmem:[#allocation7 + $0x6c8] sm:$0xff]
    %v7952 = vld [vmem:[#allocation7 + $0x6d0] sm:$0xff]
    %v7953 = vld [vmem:[#allocation7 + $0x6d8] sm:$0xff]
    %v7954 = vld [vmem:[#allocation7 + $0x6e0] sm:$0xff]
    %v7955 = vld [vmem:[#allocation7 + $0x6e8] sm:$0xff]
    %v7956 = vld [vmem:[#allocation7 + $0x6f0] sm:$0xff]
    %v7957 = vld [vmem:[#allocation7 + $0x6f8] sm:$0xff]
    %v7958 = vld [vmem:[#allocation7 + $0x700] sm:$0xff]
    %v7959 = vld [vmem:[#allocation7 + $0x708] sm:$0xff]
    %v7960 = vld [vmem:[#allocation7 + $0x710] sm:$0xff]
    %v7961 = vld [vmem:[#allocation7 + $0x718] sm:$0xff]
    %v7962 = vld [vmem:[#allocation7 + $0x720] sm:$0xff]
    %v7963 = vld [vmem:[#allocation7 + $0x728] sm:$0xff]
    %v7964 = vld [vmem:[#allocation7 + $0x730] sm:$0xff]
    %v7965 = vld [vmem:[#allocation7 + $0x738] sm:$0xff]
    %v7966 = vld [vmem:[#allocation7 + $0x740] sm:$0xff]
    %v7967 = vld [vmem:[#allocation7 + $0x748] sm:$0xff]
    %v7968 = vld [vmem:[#allocation7 + $0x750] sm:$0xff]
    %v7969 = vld [vmem:[#allocation7 + $0x758] sm:$0xff]
    %v7970 = vld [vmem:[#allocation7 + $0x760] sm:$0xff]
    %v7971 = vld [vmem:[#allocation7 + $0x768] sm:$0xff]
    %v7972 = vld [vmem:[#allocation7 + $0x770] sm:$0xff]
    %v7973 = vld [vmem:[#allocation7 + $0x778] sm:$0xff]
    %v7974 = vld [vmem:[#allocation7 + $0x780] sm:$0xff]
    %v7975 = vld [vmem:[#allocation7 + $0x788] sm:$0xff]
    %v7976 = vld [vmem:[#allocation7 + $0x790] sm:$0xff]
    %v7977 = vld [vmem:[#allocation7 + $0x798] sm:$0xff]
    %v7978 = vld [vmem:[#allocation7 + $0x7a0] sm:$0xff]
    %v7979 = vld [vmem:[#allocation7 + $0x7a8] sm:$0xff]
    %v7980 = vld [vmem:[#allocation7 + $0x7b0] sm:$0xff]
    %v7981 = vld [vmem:[#allocation7 + $0x7b8] sm:$0xff]
    %v7982 = vld [vmem:[#allocation7 + $0x7c0] sm:$0xff]
    %v7983 = vld [vmem:[#allocation7 + $0x7c8] sm:$0xff]
    %v7984 = vld [vmem:[#allocation7 + $0x7d0] sm:$0xff]
    %v7985 = vld [vmem:[#allocation7 + $0x7d8] sm:$0xff]
    %v7986 = vld [vmem:[#allocation7 + $0x7e0] sm:$0xff]
    %v7987 = vld [vmem:[#allocation7 + $0x7e8] sm:$0xff]
    %v7988 = vld [vmem:[#allocation7 + $0x7f0] sm:$0xff]
    %v7989 = vld [vmem:[#allocation7 + $0x7f8] sm:$0xff]
    %v7990 = vld [vmem:[#allocation8] sm:$0xf]
    %v7992 = vlaneseq
    %v7993 = vshrl.u32 %v7992, 7
    %v7994 = vsub.s32 0, %v7993
    %v7995 = vrot.slane %v7990, %v7994
    %v7996 = vlaneseq
    %v7997 = vshrl.u32 %v7996, 7
    %v7998 = vsub.s32 1, %v7997
    %v7999 = vrot.slane %v7990, %v7998
    %v8000 = vlaneseq
    %v8001 = vshrl.u32 %v8000, 7
    %v8002 = vsub.s32 2, %v8001
    %v8003 = vrot.slane %v7990, %v8002
    %v8004 = vlaneseq
    %v8005 = vshrl.u32 %v8004, 7
    %v8006 = vsub.s32 3, %v8005
    %v8007 = vrot.slane %v7990, %v8006
    %v8268 = vunpack.c.l.b16 %v7734
    %v8269 = vunpack.c.h.b16 %v7734
    %v8270 = vunpack.c.l.b16 %v7735
    %v8271 = vunpack.c.h.b16 %v7735
    %v8272 = vunpack.c.l.b16 %v7736
    %v8273 = vunpack.c.h.b16 %v7736
    %v8274 = vunpack.c.l.b16 %v7737
    %v8275 = vunpack.c.h.b16 %v7737
    %v8276 = vunpack.c.l.b16 %v7738
    %v8277 = vunpack.c.h.b16 %v7738
    %v8278 = vunpack.c.l.b16 %v7739
    %v8279 = vunpack.c.h.b16 %v7739
    %v8280 = vunpack.c.l.b16 %v7740
    %v8281 = vunpack.c.h.b16 %v7740
    %v8282 = vunpack.c.l.b16 %v7741
    %v8283 = vunpack.c.h.b16 %v7741
    %v8284 = vunpack.c.l.b16 %v7742
    %v8285 = vunpack.c.h.b16 %v7742
    %v8286 = vunpack.c.l.b16 %v7743
    %v8287 = vunpack.c.h.b16 %v7743
    %v8288 = vunpack.c.l.b16 %v7744
    %v8289 = vunpack.c.h.b16 %v7744
    %v8290 = vunpack.c.l.b16 %v7745
    %v8291 = vunpack.c.h.b16 %v7745
    %v8292 = vunpack.c.l.b16 %v7746
    %v8293 = vunpack.c.h.b16 %v7746
    %v8294 = vunpack.c.l.b16 %v7747
    %v8295 = vunpack.c.h.b16 %v7747
    %v8296 = vunpack.c.l.b16 %v7748
    %v8297 = vunpack.c.h.b16 %v7748
    %v8298 = vunpack.c.l.b16 %v7749
    %v8299 = vunpack.c.h.b16 %v7749
    %v8300 = vunpack.c.l.b16 %v7750
    %v8301 = vunpack.c.h.b16 %v7750
    %v8302 = vunpack.c.l.b16 %v7751
    %v8303 = vunpack.c.h.b16 %v7751
    %v8304 = vunpack.c.l.b16 %v7752
    %v8305 = vunpack.c.h.b16 %v7752
    %v8306 = vunpack.c.l.b16 %v7753
    %v8307 = vunpack.c.h.b16 %v7753
    %v8308 = vunpack.c.l.b16 %v7754
    %v8309 = vunpack.c.h.b16 %v7754
    %v8310 = vunpack.c.l.b16 %v7755
    %v8311 = vunpack.c.h.b16 %v7755
    %v8312 = vunpack.c.l.b16 %v7756
    %v8313 = vunpack.c.h.b16 %v7756
    %v8314 = vunpack.c.l.b16 %v7757
    %v8315 = vunpack.c.h.b16 %v7757
    %v8316 = vunpack.c.l.b16 %v7758
    %v8317 = vunpack.c.h.b16 %v7758
    %v8318 = vunpack.c.l.b16 %v7759
    %v8319 = vunpack.c.h.b16 %v7759
    %v8320 = vunpack.c.l.b16 %v7760
    %v8321 = vunpack.c.h.b16 %v7760
    %v8322 = vunpack.c.l.b16 %v7761
    %v8323 = vunpack.c.h.b16 %v7761
    %v8324 = vunpack.c.l.b16 %v7762
    %v8325 = vunpack.c.h.b16 %v7762
    %v8326 = vunpack.c.l.b16 %v7763
    %v8327 = vunpack.c.h.b16 %v7763
    %v8328 = vunpack.c.l.b16 %v7764
    %v8329 = vunpack.c.h.b16 %v7764
    %v8330 = vunpack.c.l.b16 %v7765
    %v8331 = vunpack.c.h.b16 %v7765
    %v8332 = vunpack.c.l.b16 %v7766
    %v8333 = vunpack.c.h.b16 %v7766
    %v8334 = vunpack.c.l.b16 %v7767
    %v8335 = vunpack.c.h.b16 %v7767
    %v8336 = vunpack.c.l.b16 %v7768
    %v8337 = vunpack.c.h.b16 %v7768
    %v8338 = vunpack.c.l.b16 %v7769
    %v8339 = vunpack.c.h.b16 %v7769
    %v8340 = vunpack.c.l.b16 %v7770
    %v8341 = vunpack.c.h.b16 %v7770
    %v8342 = vunpack.c.l.b16 %v7771
    %v8343 = vunpack.c.h.b16 %v7771
    %v8344 = vunpack.c.l.b16 %v7772
    %v8345 = vunpack.c.h.b16 %v7772
    %v8346 = vunpack.c.l.b16 %v7773
    %v8347 = vunpack.c.h.b16 %v7773
    %v8348 = vunpack.c.l.b16 %v7774
    %v8349 = vunpack.c.h.b16 %v7774
    %v8350 = vunpack.c.l.b16 %v7775
    %v8351 = vunpack.c.h.b16 %v7775
    %v8352 = vunpack.c.l.b16 %v7776
    %v8353 = vunpack.c.h.b16 %v7776
    %v8354 = vunpack.c.l.b16 %v7777
    %v8355 = vunpack.c.h.b16 %v7777
    %v8356 = vunpack.c.l.b16 %v7778
    %v8357 = vunpack.c.h.b16 %v7778
    %v8358 = vunpack.c.l.b16 %v7779
    %v8359 = vunpack.c.h.b16 %v7779
    %v8360 = vunpack.c.l.b16 %v7780
    %v8361 = vunpack.c.h.b16 %v7780
    %v8362 = vunpack.c.l.b16 %v7781
    %v8363 = vunpack.c.h.b16 %v7781
    %v8364 = vunpack.c.l.b16 %v7782
    %v8365 = vunpack.c.h.b16 %v7782
    %v8366 = vunpack.c.l.b16 %v7783
    %v8367 = vunpack.c.h.b16 %v7783
    %v8368 = vunpack.c.l.b16 %v7784
    %v8369 = vunpack.c.h.b16 %v7784
    %v8370 = vunpack.c.l.b16 %v7785
    %v8371 = vunpack.c.h.b16 %v7785
    %v8372 = vunpack.c.l.b16 %v7786
    %v8373 = vunpack.c.h.b16 %v7786
    %v8374 = vunpack.c.l.b16 %v7787
    %v8375 = vunpack.c.h.b16 %v7787
    %v8376 = vunpack.c.l.b16 %v7788
    %v8377 = vunpack.c.h.b16 %v7788
    %v8378 = vunpack.c.l.b16 %v7789
    %v8379 = vunpack.c.h.b16 %v7789
    %v8380 = vunpack.c.l.b16 %v7790
    %v8381 = vunpack.c.h.b16 %v7790
    %v8382 = vunpack.c.l.b16 %v7791
    %v8383 = vunpack.c.h.b16 %v7791
    %v8384 = vunpack.c.l.b16 %v7792
    %v8385 = vunpack.c.h.b16 %v7792
    %v8386 = vunpack.c.l.b16 %v7793
    %v8387 = vunpack.c.h.b16 %v7793
    %v8388 = vunpack.c.l.b16 %v7794
    %v8389 = vunpack.c.h.b16 %v7794
    %v8390 = vunpack.c.l.b16 %v7795
    %v8391 = vunpack.c.h.b16 %v7795
    %v8392 = vunpack.c.l.b16 %v7796
    %v8393 = vunpack.c.h.b16 %v7796
    %v8394 = vunpack.c.l.b16 %v7797
    %v8395 = vunpack.c.h.b16 %v7797
    %v8396 = vunpack.c.l.b16 %v7798
    %v8397 = vunpack.c.h.b16 %v7798
    %v8398 = vunpack.c.l.b16 %v7799
    %v8399 = vunpack.c.h.b16 %v7799
    %v8400 = vunpack.c.l.b16 %v7800
    %v8401 = vunpack.c.h.b16 %v7800
    %v8402 = vunpack.c.l.b16 %v7801
    %v8403 = vunpack.c.h.b16 %v7801
    %v8404 = vunpack.c.l.b16 %v7802
    %v8405 = vunpack.c.h.b16 %v7802
    %v8406 = vunpack.c.l.b16 %v7803
    %v8407 = vunpack.c.h.b16 %v7803
    %v8408 = vunpack.c.l.b16 %v7804
    %v8409 = vunpack.c.h.b16 %v7804
    %v8410 = vunpack.c.l.b16 %v7805
    %v8411 = vunpack.c.h.b16 %v7805
    %v8412 = vunpack.c.l.b16 %v7806
    %v8413 = vunpack.c.h.b16 %v7806
    %v8414 = vunpack.c.l.b16 %v7807
    %v8415 = vunpack.c.h.b16 %v7807
    %v8416 = vunpack.c.l.b16 %v7808
    %v8417 = vunpack.c.h.b16 %v7808
    %v8418 = vunpack.c.l.b16 %v7809
    %v8419 = vunpack.c.h.b16 %v7809
    %v8420 = vunpack.c.l.b16 %v7810
    %v8421 = vunpack.c.h.b16 %v7810
    %v8422 = vunpack.c.l.b16 %v7811
    %v8423 = vunpack.c.h.b16 %v7811
    %v8424 = vunpack.c.l.b16 %v7812
    %v8425 = vunpack.c.h.b16 %v7812
    %v8426 = vunpack.c.l.b16 %v7813
    %v8427 = vunpack.c.h.b16 %v7813
    %v8428 = vunpack.c.l.b16 %v7814
    %v8429 = vunpack.c.h.b16 %v7814
    %v8430 = vunpack.c.l.b16 %v7815
    %v8431 = vunpack.c.h.b16 %v7815
    %v8432 = vunpack.c.l.b16 %v7816
    %v8433 = vunpack.c.h.b16 %v7816
    %v8434 = vunpack.c.l.b16 %v7817
    %v8435 = vunpack.c.h.b16 %v7817
    %v8436 = vunpack.c.l.b16 %v7818
    %v8437 = vunpack.c.h.b16 %v7818
    %v8438 = vunpack.c.l.b16 %v7819
    %v8439 = vunpack.c.h.b16 %v7819
    %v8440 = vunpack.c.l.b16 %v7820
    %v8441 = vunpack.c.h.b16 %v7820
    %v8442 = vunpack.c.l.b16 %v7821
    %v8443 = vunpack.c.h.b16 %v7821
    %v8444 = vunpack.c.l.b16 %v7822
    %v8445 = vunpack.c.h.b16 %v7822
    %v8446 = vunpack.c.l.b16 %v7823
    %v8447 = vunpack.c.h.b16 %v7823
    %v8448 = vunpack.c.l.b16 %v7824
    %v8449 = vunpack.c.h.b16 %v7824
    %v8450 = vunpack.c.l.b16 %v7825
    %v8451 = vunpack.c.h.b16 %v7825
    %v8452 = vunpack.c.l.b16 %v7826
    %v8453 = vunpack.c.h.b16 %v7826
    %v8454 = vunpack.c.l.b16 %v7827
    %v8455 = vunpack.c.h.b16 %v7827
    %v8456 = vunpack.c.l.b16 %v7828
    %v8457 = vunpack.c.h.b16 %v7828
    %v8458 = vunpack.c.l.b16 %v7829
    %v8459 = vunpack.c.h.b16 %v7829
    %v8460 = vunpack.c.l.b16 %v7830
    %v8461 = vunpack.c.h.b16 %v7830
    %v8462 = vunpack.c.l.b16 %v7831
    %v8463 = vunpack.c.h.b16 %v7831
    %v8464 = vunpack.c.l.b16 %v7832
    %v8465 = vunpack.c.h.b16 %v7832
    %v8466 = vunpack.c.l.b16 %v7833
    %v8467 = vunpack.c.h.b16 %v7833
    %v8468 = vunpack.c.l.b16 %v7834
    %v8469 = vunpack.c.h.b16 %v7834
    %v8470 = vunpack.c.l.b16 %v7835
    %v8471 = vunpack.c.h.b16 %v7835
    %v8472 = vunpack.c.l.b16 %v7836
    %v8473 = vunpack.c.h.b16 %v7836
    %v8474 = vunpack.c.l.b16 %v7837
    %v8475 = vunpack.c.h.b16 %v7837
    %v8476 = vunpack.c.l.b16 %v7838
    %v8477 = vunpack.c.h.b16 %v7838
    %v8478 = vunpack.c.l.b16 %v7839
    %v8479 = vunpack.c.h.b16 %v7839
    %v8480 = vunpack.c.l.b16 %v7840
    %v8481 = vunpack.c.h.b16 %v7840
    %v8482 = vunpack.c.l.b16 %v7841
    %v8483 = vunpack.c.h.b16 %v7841
    %v8484 = vunpack.c.l.b16 %v7842
    %v8485 = vunpack.c.h.b16 %v7842
    %v8486 = vunpack.c.l.b16 %v7843
    %v8487 = vunpack.c.h.b16 %v7843
    %v8488 = vunpack.c.l.b16 %v7844
    %v8489 = vunpack.c.h.b16 %v7844
    %v8490 = vunpack.c.l.b16 %v7845
    %v8491 = vunpack.c.h.b16 %v7845
    %v8492 = vunpack.c.l.b16 %v7846
    %v8493 = vunpack.c.h.b16 %v7846
    %v8494 = vunpack.c.l.b16 %v7847
    %v8495 = vunpack.c.h.b16 %v7847
    %v8496 = vunpack.c.l.b16 %v7848
    %v8497 = vunpack.c.h.b16 %v7848
    %v8498 = vunpack.c.l.b16 %v7849
    %v8499 = vunpack.c.h.b16 %v7849
    %v8500 = vunpack.c.l.b16 %v7850
    %v8501 = vunpack.c.h.b16 %v7850
    %v8502 = vunpack.c.l.b16 %v7851
    %v8503 = vunpack.c.h.b16 %v7851
    %v8504 = vunpack.c.l.b16 %v7852
    %v8505 = vunpack.c.h.b16 %v7852
    %v8506 = vunpack.c.l.b16 %v7853
    %v8507 = vunpack.c.h.b16 %v7853
    %v8508 = vunpack.c.l.b16 %v7854
    %v8509 = vunpack.c.h.b16 %v7854
    %v8510 = vunpack.c.l.b16 %v7855
    %v8511 = vunpack.c.h.b16 %v7855
    %v8512 = vunpack.c.l.b16 %v7856
    %v8513 = vunpack.c.h.b16 %v7856
    %v8514 = vunpack.c.l.b16 %v7857
    %v8515 = vunpack.c.h.b16 %v7857
    %v8516 = vunpack.c.l.b16 %v7858
    %v8517 = vunpack.c.h.b16 %v7858
    %v8518 = vunpack.c.l.b16 %v7859
    %v8519 = vunpack.c.h.b16 %v7859
    %v8520 = vunpack.c.l.b16 %v7860
    %v8521 = vunpack.c.h.b16 %v7860
    %v8522 = vunpack.c.l.b16 %v7861
    %v8523 = vunpack.c.h.b16 %v7861
    %v8524 = vunpack.c.l.b16 %v7862
    %v8525 = vunpack.c.h.b16 %v7862
    %v8526 = vunpack.c.l.b16 %v7863
    %v8527 = vunpack.c.h.b16 %v7863
    %v8528 = vunpack.c.l.b16 %v7864
    %v8529 = vunpack.c.h.b16 %v7864
    %v8530 = vunpack.c.l.b16 %v7865
    %v8531 = vunpack.c.h.b16 %v7865
    %v8532 = vunpack.c.l.b16 %v7866
    %v8533 = vunpack.c.h.b16 %v7866
    %v8534 = vunpack.c.l.b16 %v7867
    %v8535 = vunpack.c.h.b16 %v7867
    %v8536 = vunpack.c.l.b16 %v7868
    %v8537 = vunpack.c.h.b16 %v7868
    %v8538 = vunpack.c.l.b16 %v7869
    %v8539 = vunpack.c.h.b16 %v7869
    %v8540 = vunpack.c.l.b16 %v7870
    %v8541 = vunpack.c.h.b16 %v7870
    %v8542 = vunpack.c.l.b16 %v7871
    %v8543 = vunpack.c.h.b16 %v7871
    %v8544 = vunpack.c.l.b16 %v7872
    %v8545 = vunpack.c.h.b16 %v7872
    %v8546 = vunpack.c.l.b16 %v7873
    %v8547 = vunpack.c.h.b16 %v7873
    %v8548 = vunpack.c.l.b16 %v7874
    %v8549 = vunpack.c.h.b16 %v7874
    %v8550 = vunpack.c.l.b16 %v7875
    %v8551 = vunpack.c.h.b16 %v7875
    %v8552 = vunpack.c.l.b16 %v7876
    %v8553 = vunpack.c.h.b16 %v7876
    %v8554 = vunpack.c.l.b16 %v7877
    %v8555 = vunpack.c.h.b16 %v7877
    %v8556 = vunpack.c.l.b16 %v7878
    %v8557 = vunpack.c.h.b16 %v7878
    %v8558 = vunpack.c.l.b16 %v7879
    %v8559 = vunpack.c.h.b16 %v7879
    %v8560 = vunpack.c.l.b16 %v7880
    %v8561 = vunpack.c.h.b16 %v7880
    %v8562 = vunpack.c.l.b16 %v7881
    %v8563 = vunpack.c.h.b16 %v7881
    %v8564 = vunpack.c.l.b16 %v7882
    %v8565 = vunpack.c.h.b16 %v7882
    %v8566 = vunpack.c.l.b16 %v7883
    %v8567 = vunpack.c.h.b16 %v7883
    %v8568 = vunpack.c.l.b16 %v7884
    %v8569 = vunpack.c.h.b16 %v7884
    %v8570 = vunpack.c.l.b16 %v7885
    %v8571 = vunpack.c.h.b16 %v7885
    %v8572 = vunpack.c.l.b16 %v7886
    %v8573 = vunpack.c.h.b16 %v7886
    %v8574 = vunpack.c.l.b16 %v7887
    %v8575 = vunpack.c.h.b16 %v7887
    %v8576 = vunpack.c.l.b16 %v7888
    %v8577 = vunpack.c.h.b16 %v7888
    %v8578 = vunpack.c.l.b16 %v7889
    %v8579 = vunpack.c.h.b16 %v7889
    %v8580 = vunpack.c.l.b16 %v7890
    %v8581 = vunpack.c.h.b16 %v7890
    %v8582 = vunpack.c.l.b16 %v7891
    %v8583 = vunpack.c.h.b16 %v7891
    %v8584 = vunpack.c.l.b16 %v7892
    %v8585 = vunpack.c.h.b16 %v7892
    %v8586 = vunpack.c.l.b16 %v7893
    %v8587 = vunpack.c.h.b16 %v7893
    %v8588 = vunpack.c.l.b16 %v7894
    %v8589 = vunpack.c.h.b16 %v7894
    %v8590 = vunpack.c.l.b16 %v7895
    %v8591 = vunpack.c.h.b16 %v7895
    %v8592 = vunpack.c.l.b16 %v7896
    %v8593 = vunpack.c.h.b16 %v7896
    %v8594 = vunpack.c.l.b16 %v7897
    %v8595 = vunpack.c.h.b16 %v7897
    %v8596 = vunpack.c.l.b16 %v7898
    %v8597 = vunpack.c.h.b16 %v7898
    %v8598 = vunpack.c.l.b16 %v7899
    %v8599 = vunpack.c.h.b16 %v7899
    %v8600 = vunpack.c.l.b16 %v7900
    %v8601 = vunpack.c.h.b16 %v7900
    %v8602 = vunpack.c.l.b16 %v7901
    %v8603 = vunpack.c.h.b16 %v7901
    %v8604 = vunpack.c.l.b16 %v7902
    %v8605 = vunpack.c.h.b16 %v7902
    %v8606 = vunpack.c.l.b16 %v7903
    %v8607 = vunpack.c.h.b16 %v7903
    %v8608 = vunpack.c.l.b16 %v7904
    %v8609 = vunpack.c.h.b16 %v7904
    %v8610 = vunpack.c.l.b16 %v7905
    %v8611 = vunpack.c.h.b16 %v7905
    %v8612 = vunpack.c.l.b16 %v7906
    %v8613 = vunpack.c.h.b16 %v7906
    %v8614 = vunpack.c.l.b16 %v7907
    %v8615 = vunpack.c.h.b16 %v7907
    %v8616 = vunpack.c.l.b16 %v7908
    %v8617 = vunpack.c.h.b16 %v7908
    %v8618 = vunpack.c.l.b16 %v7909
    %v8619 = vunpack.c.h.b16 %v7909
    %v8620 = vunpack.c.l.b16 %v7910
    %v8621 = vunpack.c.h.b16 %v7910
    %v8622 = vunpack.c.l.b16 %v7911
    %v8623 = vunpack.c.h.b16 %v7911
    %v8624 = vunpack.c.l.b16 %v7912
    %v8625 = vunpack.c.h.b16 %v7912
    %v8626 = vunpack.c.l.b16 %v7913
    %v8627 = vunpack.c.h.b16 %v7913
    %v8628 = vunpack.c.l.b16 %v7914
    %v8629 = vunpack.c.h.b16 %v7914
    %v8630 = vunpack.c.l.b16 %v7915
    %v8631 = vunpack.c.h.b16 %v7915
    %v8632 = vunpack.c.l.b16 %v7916
    %v8633 = vunpack.c.h.b16 %v7916
    %v8634 = vunpack.c.l.b16 %v7917
    %v8635 = vunpack.c.h.b16 %v7917
    %v8636 = vunpack.c.l.b16 %v7918
    %v8637 = vunpack.c.h.b16 %v7918
    %v8638 = vunpack.c.l.b16 %v7919
    %v8639 = vunpack.c.h.b16 %v7919
    %v8640 = vunpack.c.l.b16 %v7920
    %v8641 = vunpack.c.h.b16 %v7920
    %v8642 = vunpack.c.l.b16 %v7921
    %v8643 = vunpack.c.h.b16 %v7921
    %v8644 = vunpack.c.l.b16 %v7922
    %v8645 = vunpack.c.h.b16 %v7922
    %v8646 = vunpack.c.l.b16 %v7923
    %v8647 = vunpack.c.h.b16 %v7923
    %v8648 = vunpack.c.l.b16 %v7924
    %v8649 = vunpack.c.h.b16 %v7924
    %v8650 = vunpack.c.l.b16 %v7925
    %v8651 = vunpack.c.h.b16 %v7925
    %v8652 = vunpack.c.l.b16 %v7926
    %v8653 = vunpack.c.h.b16 %v7926
    %v8654 = vunpack.c.l.b16 %v7927
    %v8655 = vunpack.c.h.b16 %v7927
    %v8656 = vunpack.c.l.b16 %v7928
    %v8657 = vunpack.c.h.b16 %v7928
    %v8658 = vunpack.c.l.b16 %v7929
    %v8659 = vunpack.c.h.b16 %v7929
    %v8660 = vunpack.c.l.b16 %v7930
    %v8661 = vunpack.c.h.b16 %v7930
    %v8662 = vunpack.c.l.b16 %v7931
    %v8663 = vunpack.c.h.b16 %v7931
    %v8664 = vunpack.c.l.b16 %v7932
    %v8665 = vunpack.c.h.b16 %v7932
    %v8666 = vunpack.c.l.b16 %v7933
    %v8667 = vunpack.c.h.b16 %v7933
    %v8668 = vunpack.c.l.b16 %v7934
    %v8669 = vunpack.c.h.b16 %v7934
    %v8670 = vunpack.c.l.b16 %v7935
    %v8671 = vunpack.c.h.b16 %v7935
    %v8672 = vunpack.c.l.b16 %v7936
    %v8673 = vunpack.c.h.b16 %v7936
    %v8674 = vunpack.c.l.b16 %v7937
    %v8675 = vunpack.c.h.b16 %v7937
    %v8676 = vunpack.c.l.b16 %v7938
    %v8677 = vunpack.c.h.b16 %v7938
    %v8678 = vunpack.c.l.b16 %v7939
    %v8679 = vunpack.c.h.b16 %v7939
    %v8680 = vunpack.c.l.b16 %v7940
    %v8681 = vunpack.c.h.b16 %v7940
    %v8682 = vunpack.c.l.b16 %v7941
    %v8683 = vunpack.c.h.b16 %v7941
    %v8684 = vunpack.c.l.b16 %v7942
    %v8685 = vunpack.c.h.b16 %v7942
    %v8686 = vunpack.c.l.b16 %v7943
    %v8687 = vunpack.c.h.b16 %v7943
    %v8688 = vunpack.c.l.b16 %v7944
    %v8689 = vunpack.c.h.b16 %v7944
    %v8690 = vunpack.c.l.b16 %v7945
    %v8691 = vunpack.c.h.b16 %v7945
    %v8692 = vunpack.c.l.b16 %v7946
    %v8693 = vunpack.c.h.b16 %v7946
    %v8694 = vunpack.c.l.b16 %v7947
    %v8695 = vunpack.c.h.b16 %v7947
    %v8696 = vunpack.c.l.b16 %v7948
    %v8697 = vunpack.c.h.b16 %v7948
    %v8698 = vunpack.c.l.b16 %v7949
    %v8699 = vunpack.c.h.b16 %v7949
    %v8700 = vunpack.c.l.b16 %v7950
    %v8701 = vunpack.c.h.b16 %v7950
    %v8702 = vunpack.c.l.b16 %v7951
    %v8703 = vunpack.c.h.b16 %v7951
    %v8704 = vunpack.c.l.b16 %v7952
    %v8705 = vunpack.c.h.b16 %v7952
    %v8706 = vunpack.c.l.b16 %v7953
    %v8707 = vunpack.c.h.b16 %v7953
    %v8708 = vunpack.c.l.b16 %v7954
    %v8709 = vunpack.c.h.b16 %v7954
    %v8710 = vunpack.c.l.b16 %v7955
    %v8711 = vunpack.c.h.b16 %v7955
    %v8712 = vunpack.c.l.b16 %v7956
    %v8713 = vunpack.c.h.b16 %v7956
    %v8714 = vunpack.c.l.b16 %v7957
    %v8715 = vunpack.c.h.b16 %v7957
    %v8716 = vunpack.c.l.b16 %v7958
    %v8717 = vunpack.c.h.b16 %v7958
    %v8718 = vunpack.c.l.b16 %v7959
    %v8719 = vunpack.c.h.b16 %v7959
    %v8720 = vunpack.c.l.b16 %v7960
    %v8721 = vunpack.c.h.b16 %v7960
    %v8722 = vunpack.c.l.b16 %v7961
    %v8723 = vunpack.c.h.b16 %v7961
    %v8724 = vunpack.c.l.b16 %v7962
    %v8725 = vunpack.c.h.b16 %v7962
    %v8726 = vunpack.c.l.b16 %v7963
    %v8727 = vunpack.c.h.b16 %v7963
    %v8728 = vunpack.c.l.b16 %v7964
    %v8729 = vunpack.c.h.b16 %v7964
    %v8730 = vunpack.c.l.b16 %v7965
    %v8731 = vunpack.c.h.b16 %v7965
    %v8732 = vunpack.c.l.b16 %v7966
    %v8733 = vunpack.c.h.b16 %v7966
    %v8734 = vunpack.c.l.b16 %v7967
    %v8735 = vunpack.c.h.b16 %v7967
    %v8736 = vunpack.c.l.b16 %v7968
    %v8737 = vunpack.c.h.b16 %v7968
    %v8738 = vunpack.c.l.b16 %v7969
    %v8739 = vunpack.c.h.b16 %v7969
    %v8740 = vunpack.c.l.b16 %v7970
    %v8741 = vunpack.c.h.b16 %v7970
    %v8742 = vunpack.c.l.b16 %v7971
    %v8743 = vunpack.c.h.b16 %v7971
    %v8744 = vunpack.c.l.b16 %v7972
    %v8745 = vunpack.c.h.b16 %v7972
    %v8746 = vunpack.c.l.b16 %v7973
    %v8747 = vunpack.c.h.b16 %v7973
    %v8748 = vunpack.c.l.b16 %v7974
    %v8749 = vunpack.c.h.b16 %v7974
    %v8750 = vunpack.c.l.b16 %v7975
    %v8751 = vunpack.c.h.b16 %v7975
    %v8752 = vunpack.c.l.b16 %v7976
    %v8753 = vunpack.c.h.b16 %v7976
    %v8754 = vunpack.c.l.b16 %v7977
    %v8755 = vunpack.c.h.b16 %v7977
    %v8756 = vunpack.c.l.b16 %v7978
    %v8757 = vunpack.c.h.b16 %v7978
    %v8758 = vunpack.c.l.b16 %v7979
    %v8759 = vunpack.c.h.b16 %v7979
    %v8760 = vunpack.c.l.b16 %v7980
    %v8761 = vunpack.c.h.b16 %v7980
    %v8762 = vunpack.c.l.b16 %v7981
    %v8763 = vunpack.c.h.b16 %v7981
    %v8764 = vunpack.c.l.b16 %v7982
    %v8765 = vunpack.c.h.b16 %v7982
    %v8766 = vunpack.c.l.b16 %v7983
    %v8767 = vunpack.c.h.b16 %v7983
    %v8768 = vunpack.c.l.b16 %v7984
    %v8769 = vunpack.c.h.b16 %v7984
    %v8770 = vunpack.c.l.b16 %v7985
    %v8771 = vunpack.c.h.b16 %v7985
    %v8772 = vunpack.c.l.b16 %v7986
    %v8773 = vunpack.c.h.b16 %v7986
    %v8774 = vunpack.c.l.b16 %v7987
    %v8775 = vunpack.c.h.b16 %v7987
    %v8776 = vunpack.c.l.b16 %v7988
    %v8777 = vunpack.c.h.b16 %v7988
    %v8778 = vunpack.c.l.b16 %v7989
    %v8779 = vunpack.c.h.b16 %v7989
    %v8780 = vpack.c.b16 %v8272, %v8268
    %v8781 = vpack.c.b16 %v8273, %v8269
    %v8782 = vpack.c.b16 %v8274, %v8270
    %v8783 = vpack.c.b16 %v8275, %v8271
    %v8784 = vpack.c.b16 %v8280, %v8276
    %v8785 = vpack.c.b16 %v8281, %v8277
    %v8786 = vpack.c.b16 %v8282, %v8278
    %v8787 = vpack.c.b16 %v8283, %v8279
    %v8788 = vpack.c.b16 %v8288, %v8284
    %v8789 = vpack.c.b16 %v8289, %v8285
    %v8790 = vpack.c.b16 %v8290, %v8286
    %v8791 = vpack.c.b16 %v8291, %v8287
    %v8792 = vpack.c.b16 %v8296, %v8292
    %v8793 = vpack.c.b16 %v8297, %v8293
    %v8794 = vpack.c.b16 %v8298, %v8294
    %v8795 = vpack.c.b16 %v8299, %v8295
    %v8796 = vpack.c.b16 %v8304, %v8300
    %v8797 = vpack.c.b16 %v8305, %v8301
    %v8798 = vpack.c.b16 %v8306, %v8302
    %v8799 = vpack.c.b16 %v8307, %v8303
    %v8800 = vpack.c.b16 %v8312, %v8308
    %v8801 = vpack.c.b16 %v8313, %v8309
    %v8802 = vpack.c.b16 %v8314, %v8310
    %v8803 = vpack.c.b16 %v8315, %v8311
    %v8804 = vpack.c.b16 %v8320, %v8316
    %v8805 = vpack.c.b16 %v8321, %v8317
    %v8806 = vpack.c.b16 %v8322, %v8318
    %v8807 = vpack.c.b16 %v8323, %v8319
    %v8808 = vpack.c.b16 %v8328, %v8324
    %v8809 = vpack.c.b16 %v8329, %v8325
    %v8810 = vpack.c.b16 %v8330, %v8326
    %v8811 = vpack.c.b16 %v8331, %v8327
    %v8812 = vpack.c.b16 %v8336, %v8332
    %v8813 = vpack.c.b16 %v8337, %v8333
    %v8814 = vpack.c.b16 %v8338, %v8334
    %v8815 = vpack.c.b16 %v8339, %v8335
    %v8816 = vpack.c.b16 %v8344, %v8340
    %v8817 = vpack.c.b16 %v8345, %v8341
    %v8818 = vpack.c.b16 %v8346, %v8342
    %v8819 = vpack.c.b16 %v8347, %v8343
    %v8820 = vpack.c.b16 %v8352, %v8348
    %v8821 = vpack.c.b16 %v8353, %v8349
    %v8822 = vpack.c.b16 %v8354, %v8350
    %v8823 = vpack.c.b16 %v8355, %v8351
    %v8824 = vpack.c.b16 %v8360, %v8356
    %v8825 = vpack.c.b16 %v8361, %v8357
    %v8826 = vpack.c.b16 %v8362, %v8358
    %v8827 = vpack.c.b16 %v8363, %v8359
    %v8828 = vpack.c.b16 %v8368, %v8364
    %v8829 = vpack.c.b16 %v8369, %v8365
    %v8830 = vpack.c.b16 %v8370, %v8366
    %v8831 = vpack.c.b16 %v8371, %v8367
    %v8832 = vpack.c.b16 %v8376, %v8372
    %v8833 = vpack.c.b16 %v8377, %v8373
    %v8834 = vpack.c.b16 %v8378, %v8374
    %v8835 = vpack.c.b16 %v8379, %v8375
    %v8836 = vpack.c.b16 %v8384, %v8380
    %v8837 = vpack.c.b16 %v8385, %v8381
    %v8838 = vpack.c.b16 %v8386, %v8382
    %v8839 = vpack.c.b16 %v8387, %v8383
    %v8840 = vpack.c.b16 %v8392, %v8388
    %v8841 = vpack.c.b16 %v8393, %v8389
    %v8842 = vpack.c.b16 %v8394, %v8390
    %v8843 = vpack.c.b16 %v8395, %v8391
    %v8844 = vpack.c.b16 %v8400, %v8396
    %v8845 = vpack.c.b16 %v8401, %v8397
    %v8846 = vpack.c.b16 %v8402, %v8398
    %v8847 = vpack.c.b16 %v8403, %v8399
    %v8848 = vpack.c.b16 %v8408, %v8404
    %v8849 = vpack.c.b16 %v8409, %v8405
    %v8850 = vpack.c.b16 %v8410, %v8406
    %v8851 = vpack.c.b16 %v8411, %v8407
    %v8852 = vpack.c.b16 %v8416, %v8412
    %v8853 = vpack.c.b16 %v8417, %v8413
    %v8854 = vpack.c.b16 %v8418, %v8414
    %v8855 = vpack.c.b16 %v8419, %v8415
    %v8856 = vpack.c.b16 %v8424, %v8420
    %v8857 = vpack.c.b16 %v8425, %v8421
    %v8858 = vpack.c.b16 %v8426, %v8422
    %v8859 = vpack.c.b16 %v8427, %v8423
    %v8860 = vpack.c.b16 %v8432, %v8428
    %v8861 = vpack.c.b16 %v8433, %v8429
    %v8862 = vpack.c.b16 %v8434, %v8430
    %v8863 = vpack.c.b16 %v8435, %v8431
    %v8864 = vpack.c.b16 %v8440, %v8436
    %v8865 = vpack.c.b16 %v8441, %v8437
    %v8866 = vpack.c.b16 %v8442, %v8438
    %v8867 = vpack.c.b16 %v8443, %v8439
    %v8868 = vpack.c.b16 %v8448, %v8444
    %v8869 = vpack.c.b16 %v8449, %v8445
    %v8870 = vpack.c.b16 %v8450, %v8446
    %v8871 = vpack.c.b16 %v8451, %v8447
    %v8872 = vpack.c.b16 %v8456, %v8452
    %v8873 = vpack.c.b16 %v8457, %v8453
    %v8874 = vpack.c.b16 %v8458, %v8454
    %v8875 = vpack.c.b16 %v8459, %v8455
    %v8876 = vpack.c.b16 %v8464, %v8460
    %v8877 = vpack.c.b16 %v8465, %v8461
    %v8878 = vpack.c.b16 %v8466, %v8462
    %v8879 = vpack.c.b16 %v8467, %v8463
    %v8880 = vpack.c.b16 %v8472, %v8468
    %v8881 = vpack.c.b16 %v8473, %v8469
    %v8882 = vpack.c.b16 %v8474, %v8470
    %v8883 = vpack.c.b16 %v8475, %v8471
    %v8884 = vpack.c.b16 %v8480, %v8476
    %v8885 = vpack.c.b16 %v8481, %v8477
    %v8886 = vpack.c.b16 %v8482, %v8478
    %v8887 = vpack.c.b16 %v8483, %v8479
    %v8888 = vpack.c.b16 %v8488, %v8484
    %v8889 = vpack.c.b16 %v8489, %v8485
    %v8890 = vpack.c.b16 %v8490, %v8486
    %v8891 = vpack.c.b16 %v8491, %v8487
    %v8892 = vpack.c.b16 %v8496, %v8492
    %v8893 = vpack.c.b16 %v8497, %v8493
    %v8894 = vpack.c.b16 %v8498, %v8494
    %v8895 = vpack.c.b16 %v8499, %v8495
    %v8896 = vpack.c.b16 %v8504, %v8500
    %v8897 = vpack.c.b16 %v8505, %v8501
    %v8898 = vpack.c.b16 %v8506, %v8502
    %v8899 = vpack.c.b16 %v8507, %v8503
    %v8900 = vpack.c.b16 %v8512, %v8508
    %v8901 = vpack.c.b16 %v8513, %v8509
    %v8902 = vpack.c.b16 %v8514, %v8510
    %v8903 = vpack.c.b16 %v8515, %v8511
    %v8904 = vpack.c.b16 %v8520, %v8516
    %v8905 = vpack.c.b16 %v8521, %v8517
    %v8906 = vpack.c.b16 %v8522, %v8518
    %v8907 = vpack.c.b16 %v8523, %v8519
    %v8908 = vpack.c.b16 %v8528, %v8524
    %v8909 = vpack.c.b16 %v8529, %v8525
    %v8910 = vpack.c.b16 %v8530, %v8526
    %v8911 = vpack.c.b16 %v8531, %v8527
    %v8912 = vpack.c.b16 %v8536, %v8532
    %v8913 = vpack.c.b16 %v8537, %v8533
    %v8914 = vpack.c.b16 %v8538, %v8534
    %v8915 = vpack.c.b16 %v8539, %v8535
    %v8916 = vpack.c.b16 %v8544, %v8540
    %v8917 = vpack.c.b16 %v8545, %v8541
    %v8918 = vpack.c.b16 %v8546, %v8542
    %v8919 = vpack.c.b16 %v8547, %v8543
    %v8920 = vpack.c.b16 %v8552, %v8548
    %v8921 = vpack.c.b16 %v8553, %v8549
    %v8922 = vpack.c.b16 %v8554, %v8550
    %v8923 = vpack.c.b16 %v8555, %v8551
    %v8924 = vpack.c.b16 %v8560, %v8556
    %v8925 = vpack.c.b16 %v8561, %v8557
    %v8926 = vpack.c.b16 %v8562, %v8558
    %v8927 = vpack.c.b16 %v8563, %v8559
    %v8928 = vpack.c.b16 %v8568, %v8564
    %v8929 = vpack.c.b16 %v8569, %v8565
    %v8930 = vpack.c.b16 %v8570, %v8566
    %v8931 = vpack.c.b16 %v8571, %v8567
    %v8932 = vpack.c.b16 %v8576, %v8572
    %v8933 = vpack.c.b16 %v8577, %v8573
    %v8934 = vpack.c.b16 %v8578, %v8574
    %v8935 = vpack.c.b16 %v8579, %v8575
    %v8936 = vpack.c.b16 %v8584, %v8580
    %v8937 = vpack.c.b16 %v8585, %v8581
    %v8938 = vpack.c.b16 %v8586, %v8582
    %v8939 = vpack.c.b16 %v8587, %v8583
    %v8940 = vpack.c.b16 %v8592, %v8588
    %v8941 = vpack.c.b16 %v8593, %v8589
    %v8942 = vpack.c.b16 %v8594, %v8590
    %v8943 = vpack.c.b16 %v8595, %v8591
    %v8944 = vpack.c.b16 %v8600, %v8596
    %v8945 = vpack.c.b16 %v8601, %v8597
    %v8946 = vpack.c.b16 %v8602, %v8598
    %v8947 = vpack.c.b16 %v8603, %v8599
    %v8948 = vpack.c.b16 %v8608, %v8604
    %v8949 = vpack.c.b16 %v8609, %v8605
    %v8950 = vpack.c.b16 %v8610, %v8606
    %v8951 = vpack.c.b16 %v8611, %v8607
    %v8952 = vpack.c.b16 %v8616, %v8612
    %v8953 = vpack.c.b16 %v8617, %v8613
    %v8954 = vpack.c.b16 %v8618, %v8614
    %v8955 = vpack.c.b16 %v8619, %v8615
    %v8956 = vpack.c.b16 %v8624, %v8620
    %v8957 = vpack.c.b16 %v8625, %v8621
    %v8958 = vpack.c.b16 %v8626, %v8622
    %v8959 = vpack.c.b16 %v8627, %v8623
    %v8960 = vpack.c.b16 %v8632, %v8628
    %v8961 = vpack.c.b16 %v8633, %v8629
    %v8962 = vpack.c.b16 %v8634, %v8630
    %v8963 = vpack.c.b16 %v8635, %v8631
    %v8964 = vpack.c.b16 %v8640, %v8636
    %v8965 = vpack.c.b16 %v8641, %v8637
    %v8966 = vpack.c.b16 %v8642, %v8638
    %v8967 = vpack.c.b16 %v8643, %v8639
    %v8968 = vpack.c.b16 %v8648, %v8644
    %v8969 = vpack.c.b16 %v8649, %v8645
    %v8970 = vpack.c.b16 %v8650, %v8646
    %v8971 = vpack.c.b16 %v8651, %v8647
    %v8972 = vpack.c.b16 %v8656, %v8652
    %v8973 = vpack.c.b16 %v8657, %v8653
    %v8974 = vpack.c.b16 %v8658, %v8654
    %v8975 = vpack.c.b16 %v8659, %v8655
    %v8976 = vpack.c.b16 %v8664, %v8660
    %v8977 = vpack.c.b16 %v8665, %v8661
    %v8978 = vpack.c.b16 %v8666, %v8662
    %v8979 = vpack.c.b16 %v8667, %v8663
    %v8980 = vpack.c.b16 %v8672, %v8668
    %v8981 = vpack.c.b16 %v8673, %v8669
    %v8982 = vpack.c.b16 %v8674, %v8670
    %v8983 = vpack.c.b16 %v8675, %v8671
    %v8984 = vpack.c.b16 %v8680, %v8676
    %v8985 = vpack.c.b16 %v8681, %v8677
    %v8986 = vpack.c.b16 %v8682, %v8678
    %v8987 = vpack.c.b16 %v8683, %v8679
    %v8988 = vpack.c.b16 %v8688, %v8684
    %v8989 = vpack.c.b16 %v8689, %v8685
    %v8990 = vpack.c.b16 %v8690, %v8686
    %v8991 = vpack.c.b16 %v8691, %v8687
    %v8992 = vpack.c.b16 %v8696, %v8692
    %v8993 = vpack.c.b16 %v8697, %v8693
    %v8994 = vpack.c.b16 %v8698, %v8694
    %v8995 = vpack.c.b16 %v8699, %v8695
    %v8996 = vpack.c.b16 %v8704, %v8700
    %v8997 = vpack.c.b16 %v8705, %v8701
    %v8998 = vpack.c.b16 %v8706, %v8702
    %v8999 = vpack.c.b16 %v8707, %v8703
    %v9000 = vpack.c.b16 %v8712, %v8708
    %v9001 = vpack.c.b16 %v8713, %v8709
    %v9002 = vpack.c.b16 %v8714, %v8710
    %v9003 = vpack.c.b16 %v8715, %v8711
    %v9004 = vpack.c.b16 %v8720, %v8716
    %v9005 = vpack.c.b16 %v8721, %v8717
    %v9006 = vpack.c.b16 %v8722, %v8718
    %v9007 = vpack.c.b16 %v8723, %v8719
    %v9008 = vpack.c.b16 %v8728, %v8724
    %v9009 = vpack.c.b16 %v8729, %v8725
    %v9010 = vpack.c.b16 %v8730, %v8726
    %v9011 = vpack.c.b16 %v8731, %v8727
    %v9012 = vpack.c.b16 %v8736, %v8732
    %v9013 = vpack.c.b16 %v8737, %v8733
    %v9014 = vpack.c.b16 %v8738, %v8734
    %v9015 = vpack.c.b16 %v8739, %v8735
    %v9016 = vpack.c.b16 %v8744, %v8740
    %v9017 = vpack.c.b16 %v8745, %v8741
    %v9018 = vpack.c.b16 %v8746, %v8742
    %v9019 = vpack.c.b16 %v8747, %v8743
    %v9020 = vpack.c.b16 %v8752, %v8748
    %v9021 = vpack.c.b16 %v8753, %v8749
    %v9022 = vpack.c.b16 %v8754, %v8750
    %v9023 = vpack.c.b16 %v8755, %v8751
    %v9024 = vpack.c.b16 %v8760, %v8756
    %v9025 = vpack.c.b16 %v8761, %v8757
    %v9026 = vpack.c.b16 %v8762, %v8758
    %v9027 = vpack.c.b16 %v8763, %v8759
    %v9028 = vpack.c.b16 %v8768, %v8764
    %v9029 = vpack.c.b16 %v8769, %v8765
    %v9030 = vpack.c.b16 %v8770, %v8766
    %v9031 = vpack.c.b16 %v8771, %v8767
    %v9032 = vpack.c.b16 %v8776, %v8772
    %v9033 = vpack.c.b16 %v8777, %v8773
    %v9034 = vpack.c.b16 %v8778, %v8774
    %v9035 = vpack.c.b16 %v8779, %v8775
    %9292 = vmatprep.subr.bf16.mxu0 %v8781
    %9293 = vmatpush1.bf16.msra.mxu0 %v8780
    %9294 = vmatprep.subr.bf16.mxu0 %v8785
    %9295 = vmatpush1.bf16.msra.mxu0 %v8784
    %9296 = vmatprep.subr.bf16.mxu0 %v8789
    %9297 = vmatpush1.bf16.msra.mxu0 %v8788
    %9298 = vmatprep.subr.bf16.mxu0 %v8793
    %9299 = vmatpush1.bf16.msra.mxu0 %v8792
    %9300 = vmatprep.subr.bf16.mxu0 %v8797
    %9301 = vmatpush1.bf16.msra.mxu0 %v8796
    %9302 = vmatprep.subr.bf16.mxu0 %v8801
    %9303 = vmatpush1.bf16.msra.mxu0 %v8800
    %9304 = vmatprep.subr.bf16.mxu0 %v8805
    %9305 = vmatpush1.bf16.msra.mxu0 %v8804
    %9306 = vmatprep.subr.bf16.mxu0 %v8809
    %9307 = vmatpush1.bf16.msra.mxu0 %v8808
    %9308 = vmatprep.subr.bf16.mxu0 %v8813
    %9309 = vmatpush1.bf16.msra.mxu0 %v8812
    %9310 = vmatprep.subr.bf16.mxu0 %v8817
    %9311 = vmatpush1.bf16.msra.mxu0 %v8816
    %9312 = vmatprep.subr.bf16.mxu0 %v8821
    %9313 = vmatpush1.bf16.msra.mxu0 %v8820
    %9314 = vmatprep.subr.bf16.mxu0 %v8825
    %9315 = vmatpush1.bf16.msra.mxu0 %v8824
    %9316 = vmatprep.subr.bf16.mxu0 %v8829
    %9317 = vmatpush1.bf16.msra.mxu0 %v8828
    %9318 = vmatprep.subr.bf16.mxu0 %v8833
    %9319 = vmatpush1.bf16.msra.mxu0 %v8832
    %9320 = vmatprep.subr.bf16.mxu0 %v8837
    %9321 = vmatpush1.bf16.msra.mxu0 %v8836
    %9322 = vmatprep.subr.bf16.mxu0 %v8841
    %9323 = vmatpush1.bf16.msra.mxu0 %v8840
    %9324 = vmatprep.mubr.bf16.mxu0 %v7727
    %9325 = vmatmul.mubr.bf16.gmra.mrb[0].mxu0 %v7726
    %v9326 = vpop.f32.mrb[0].mxu0
    %v9327 = vadd.f32 %v7995, %v9326
    %v9328 = vpop.f32.mrb[0].mxu0
    %v9329 = vadd.f32 %v7999, %v9328
    %v9330 = vpop.f32.mrb[0].mxu0
    %v9331 = vpop.f32.mrb[0].mxu0
    %9332 = vdwg.mxu0
    %9333 = vmatprep.subr.bf16.mxu0 %v8845
    %9334 = vmatpush1.bf16.msra.mxu0 %v8844
    %9335 = vmatprep.subr.bf16.mxu0 %v8849
    %9336 = vmatpush1.bf16.msra.mxu0 %v8848
    %9337 = vmatprep.subr.bf16.mxu0 %v8853
    %9338 = vmatpush1.bf16.msra.mxu0 %v8852
    %9339 = vmatprep.subr.bf16.mxu0 %v8857
    %9340 = vmatpush1.bf16.msra.mxu0 %v8856
    %9341 = vmatprep.subr.bf16.mxu0 %v8861
    %9342 = vmatpush1.bf16.msra.mxu0 %v8860
    %9343 = vmatprep.subr.bf16.mxu0 %v8865
    %9344 = vmatpush1.bf16.msra.mxu0 %v8864
    %9345 = vmatprep.subr.bf16.mxu0 %v8869
    %9346 = vmatpush1.bf16.msra.mxu0 %v8868
    %9347 = vmatprep.subr.bf16.mxu0 %v8873
    %9348 = vmatpush1.bf16.msra.mxu0 %v8872
    %9349 = vmatprep.subr.bf16.mxu0 %v8877
    %9350 = vmatpush1.bf16.msra.mxu0 %v8876
    %9351 = vmatprep.subr.bf16.mxu0 %v8881
    %9352 = vmatpush1.bf16.msra.mxu0 %v8880
    %9353 = vmatprep.subr.bf16.mxu0 %v8885
    %9354 = vmatpush1.bf16.msra.mxu0 %v8884
    %9355 = vmatprep.subr.bf16.mxu0 %v8889
    %9356 = vmatpush1.bf16.msra.mxu0 %v8888
    %9357 = vmatprep.subr.bf16.mxu0 %v8893
    %9358 = vmatpush1.bf16.msra.mxu0 %v8892
    %9359 = vmatprep.subr.bf16.mxu0 %v8897
    %9360 = vmatpush1.bf16.msra.mxu0 %v8896
    %9361 = vmatprep.subr.bf16.mxu0 %v8901
    %9362 = vmatpush1.bf16.msra.mxu0 %v8900
    %9363 = vmatprep.subr.bf16.mxu0 %v8905
    %9364 = vmatpush1.bf16.msra.mxu0 %v8904
    %9365 = vmatprep.mubr.bf16.mxu0 %v7729
    %9366 = vmatmul.mubr.bf16.gmra.mrb[0].mxu0 %v7728
    %v9367 = vpop.f32.mrb[0].mxu0
    %v9368 = vadd.f32 %v9327, %v9367
    %v9369 = vpop.f32.mrb[0].mxu0
    %v9370 = vadd.f32 %v9329, %v9369
    %v9371 = vpop.f32.mrb[0].mxu0
    %v9372 = vpop.f32.mrb[0].mxu0
    %9373 = vdwg.mxu0
    %9374 = vmatprep.subr.bf16.mxu0 %v8909
    %9375 = vmatpush1.bf16.msra.mxu0 %v8908
    %9376 = vmatprep.subr.bf16.mxu0 %v8913
    %9377 = vmatpush1.bf16.msra.mxu0 %v8912
    %9378 = vmatprep.subr.bf16.mxu0 %v8917
    %9379 = vmatpush1.bf16.msra.mxu0 %v8916
    %9380 = vmatprep.subr.bf16.mxu0 %v8921
    %9381 = vmatpush1.bf16.msra.mxu0 %v8920
    %9382 = vmatprep.subr.bf16.mxu0 %v8925
    %9383 = vmatpush1.bf16.msra.mxu0 %v8924
    %9384 = vmatprep.subr.bf16.mxu0 %v8929
    %9385 = vmatpush1.bf16.msra.mxu0 %v8928
    %9386 = vmatprep.subr.bf16.mxu0 %v8933
    %9387 = vmatpush1.bf16.msra.mxu0 %v8932
    %9388 = vmatprep.subr.bf16.mxu0 %v8937
    %9389 = vmatpush1.bf16.msra.mxu0 %v8936
    %9390 = vmatprep.subr.bf16.mxu0 %v8941
    %9391 = vmatpush1.bf16.msra.mxu0 %v8940
    %9392 = vmatprep.subr.bf16.mxu0 %v8945
    %9393 = vmatpush1.bf16.msra.mxu0 %v8944
    %9394 = vmatprep.subr.bf16.mxu0 %v8949
    %9395 = vmatpush1.bf16.msra.mxu0 %v8948
    %9396 = vmatprep.subr.bf16.mxu0 %v8953
    %9397 = vmatpush1.bf16.msra.mxu0 %v8952
    %9398 = vmatprep.subr.bf16.mxu0 %v8957
    %9399 = vmatpush1.bf16.msra.mxu0 %v8956
    %9400 = vmatprep.subr.bf16.mxu0 %v8961
    %9401 = vmatpush1.bf16.msra.mxu0 %v8960
    %9402 = vmatprep.subr.bf16.mxu0 %v8965
    %9403 = vmatpush1.bf16.msra.mxu0 %v8964
    %9404 = vmatprep.subr.bf16.mxu0 %v8969
    %9405 = vmatpush1.bf16.msra.mxu0 %v8968
    %9406 = vmatprep.mubr.bf16.mxu0 %v7731
    %9407 = vmatmul.mubr.bf16.gmra.mrb[0].mxu0 %v7730
    %v9408 = vpop.f32.mrb[0].mxu0
    %v9409 = vadd.f32 %v9368, %v9408
    %v9410 = vpop.f32.mrb[0].mxu0
    %v9411 = vadd.f32 %v9370, %v9410
    %v9412 = vpop.f32.mrb[0].mxu0
    %v9413 = vpop.f32.mrb[0].mxu0
    %9414 = vdwg.mxu0
    %9415 = vmatprep.subr.bf16.mxu0 %v8973
    %9416 = vmatpush1.bf16.msra.mxu0 %v8972
    %9417 = vmatprep.subr.bf16.mxu0 %v8977
    %9418 = vmatpush1.bf16.msra.mxu0 %v8976
    %9419 = vmatprep.subr.bf16.mxu0 %v8981
    %9420 = vmatpush1.bf16.msra.mxu0 %v8980
    %9421 = vmatprep.subr.bf16.mxu0 %v8985
    %9422 = vmatpush1.bf16.msra.mxu0 %v8984
    %9423 = vmatprep.subr.bf16.mxu0 %v8989
    %9424 = vmatpush1.bf16.msra.mxu0 %v8988
    %9425 = vmatprep.subr.bf16.mxu0 %v8993
    %9426 = vmatpush1.bf16.msra.mxu0 %v8992
    %9427 = vmatprep.subr.bf16.mxu0 %v8997
    %9428 = vmatpush1.bf16.msra.mxu0 %v8996
    %9429 = vmatprep.subr.bf16.mxu0 %v9001
    %9430 = vmatpush1.bf16.msra.mxu0 %v9000
    %9431 = vmatprep.subr.bf16.mxu0 %v9005
    %9432 = vmatpush1.bf16.msra.mxu0 %v9004
    %9433 = vmatprep.subr.bf16.mxu0 %v9009
    %9434 = vmatpush1.bf16.msra.mxu0 %v9008
    %9435 = vmatprep.subr.bf16.mxu0 %v9013
    %9436 = vmatpush1.bf16.msra.mxu0 %v9012
    %9437 = vmatprep.subr.bf16.mxu0 %v9017
    %9438 = vmatpush1.bf16.msra.mxu0 %v9016
    %9439 = vmatprep.subr.bf16.mxu0 %v9021
    %9440 = vmatpush1.bf16.msra.mxu0 %v9020
    %9441 = vmatprep.subr.bf16.mxu0 %v9025
    %9442 = vmatpush1.bf16.msra.mxu0 %v9024
    %9443 = vmatprep.subr.bf16.mxu0 %v9029
    %9444 = vmatpush1.bf16.msra.mxu0 %v9028
    %9445 = vmatprep.subr.bf16.mxu0 %v9033
    %9446 = vmatpush1.bf16.msra.mxu0 %v9032
    %9447 = vmatprep.mubr.bf16.mxu0 %v7733
    %9448 = vmatmul.mubr.bf16.gmra.mrb[0].mxu0 %v7732
    %v9449 = vpop.f32.mrb[0].mxu0
    %v9450 = vadd.f32 %v9409, %v9449
    %v9451 = vpop.f32.mrb[0].mxu0
    %v9452 = vadd.f32 %v9411, %v9451
    %v9453 = vpop.f32.mrb[0].mxu0
    %v9454 = vpop.f32.mrb[0].mxu0
    %9455 = vdwg.mxu0
    %9456 = vmatprep.subr.bf16.mxu0 %v8783
    %9457 = vmatpush1.bf16.msra.mxu0 %v8782
    %9458 = vmatprep.subr.bf16.mxu0 %v8787
    %9459 = vmatpush1.bf16.msra.mxu0 %v8786
    %9460 = vmatprep.subr.bf16.mxu0 %v8791
    %9461 = vmatpush1.bf16.msra.mxu0 %v8790
    %9462 = vmatprep.subr.bf16.mxu0 %v8795
    %9463 = vmatpush1.bf16.msra.mxu0 %v8794
    %9464 = vmatprep.subr.bf16.mxu0 %v8799
    %9465 = vmatpush1.bf16.msra.mxu0 %v8798
    %9466 = vmatprep.subr.bf16.mxu0 %v8803
    %9467 = vmatpush1.bf16.msra.mxu0 %v8802
    %9468 = vmatprep.subr.bf16.mxu0 %v8807
    %9469 = vmatpush1.bf16.msra.mxu0 %v8806
    %9470 = vmatprep.subr.bf16.mxu0 %v8811
    %9471 = vmatpush1.bf16.msra.mxu0 %v8810
    %9472 = vmatprep.subr.bf16.mxu0 %v8815
    %9473 = vmatpush1.bf16.msra.mxu0 %v8814
    %9474 = vmatprep.subr.bf16.mxu0 %v8819
    %9475 = vmatpush1.bf16.msra.mxu0 %v8818
    %9476 = vmatprep.subr.bf16.mxu0 %v8823
    %9477 = vmatpush1.bf16.msra.mxu0 %v8822
    %9478 = vmatprep.subr.bf16.mxu0 %v8827
    %9479 = vmatpush1.bf16.msra.mxu0 %v8826
    %9480 = vmatprep.subr.bf16.mxu0 %v8831
    %9481 = vmatpush1.bf16.msra.mxu0 %v8830
    %9482 = vmatprep.subr.bf16.mxu0 %v8835
    %9483 = vmatpush1.bf16.msra.mxu0 %v8834
    %9484 = vmatprep.subr.bf16.mxu0 %v8839
    %9485 = vmatpush1.bf16.msra.mxu0 %v8838
    %9486 = vmatprep.subr.bf16.mxu0 %v8843
    %9487 = vmatpush1.bf16.msra.mxu0 %v8842
    %9488 = vmatprep.mubr.bf16.mxu0 %v7727
    %9489 = vmatmul.mubr.bf16.gmra.mrb[0].mxu0 %v7726
    %v9490 = vpop.f32.mrb[0].mxu0
    %v9491 = vadd.f32 %v8003, %v9490
    %v9492 = vpop.f32.mrb[0].mxu0
    %v9493 = vadd.f32 %v8007, %v9492
    %v9494 = vpop.f32.mrb[0].mxu0
    %v9495 = vpop.f32.mrb[0].mxu0
    %9496 = vdwg.mxu0
    %9497 = vmatprep.subr.bf16.mxu0 %v8847
    %9498 = vmatpush1.bf16.msra.mxu0 %v8846
    %9499 = vmatprep.subr.bf16.mxu0 %v8851
    %9500 = vmatpush1.bf16.msra.mxu0 %v8850
    %9501 = vmatprep.subr.bf16.mxu0 %v8855
    %9502 = vmatpush1.bf16.msra.mxu0 %v8854
    %9503 = vmatprep.subr.bf16.mxu0 %v8859
    %9504 = vmatpush1.bf16.msra.mxu0 %v8858
    %9505 = vmatprep.subr.bf16.mxu0 %v8863
    %9506 = vmatpush1.bf16.msra.mxu0 %v8862
    %9507 = vmatprep.subr.bf16.mxu0 %v8867
    %9508 = vmatpush1.bf16.msra.mxu0 %v8866
    %9509 = vmatprep.subr.bf16.mxu0 %v8871
    %9510 = vmatpush1.bf16.msra.mxu0 %v8870
    %9511 = vmatprep.subr.bf16.mxu0 %v8875
    %9512 = vmatpush1.bf16.msra.mxu0 %v8874
    %9513 = vmatprep.subr.bf16.mxu0 %v8879
    %9514 = vmatpush1.bf16.msra.mxu0 %v8878
    %9515 = vmatprep.subr.bf16.mxu0 %v8883
    %9516 = vmatpush1.bf16.msra.mxu0 %v8882
    %9517 = vmatprep.subr.bf16.mxu0 %v8887
    %9518 = vmatpush1.bf16.msra.mxu0 %v8886
    %9519 = vmatprep.subr.bf16.mxu0 %v8891
    %9520 = vmatpush1.bf16.msra.mxu0 %v8890
    %9521 = vmatprep.subr.bf16.mxu0 %v8895
    %9522 = vmatpush1.bf16.msra.mxu0 %v8894
    %9523 = vmatprep.subr.bf16.mxu0 %v8899
    %9524 = vmatpush1.bf16.msra.mxu0 %v8898
    %9525 = vmatprep.subr.bf16.mxu0 %v8903
    %9526 = vmatpush1.bf16.msra.mxu0 %v8902
    %9527 = vmatprep.subr.bf16.mxu0 %v8907
    %9528 = vmatpush1.bf16.msra.mxu0 %v8906
    %9529 = vmatprep.mubr.bf16.mxu0 %v7729
    %9530 = vmatmul.mubr.bf16.gmra.mrb[0].mxu0 %v7728
    %v9531 = vpop.f32.mrb[0].mxu0
    %v9532 = vadd.f32 %v9491, %v9531
    %v9533 = vpop.f32.mrb[0].mxu0
    %v9534 = vadd.f32 %v9493, %v9533
    %v9535 = vpop.f32.mrb[0].mxu0
    %v9536 = vpop.f32.mrb[0].mxu0
    %9537 = vdwg.mxu0
    %9538 = vmatprep.subr.bf16.mxu0 %v8911
    %9539 = vmatpush1.bf16.msra.mxu0 %v8910
    %9540 = vmatprep.subr.bf16.mxu0 %v8915
    %9541 = vmatpush1.bf16.msra.mxu0 %v8914
    %9542 = vmatprep.subr.bf16.mxu0 %v8919
    %9543 = vmatpush1.bf16.msra.mxu0 %v8918
    %9544 = vmatprep.subr.bf16.mxu0 %v8923
    %9545 = vmatpush1.bf16.msra.mxu0 %v8922
    %9546 = vmatprep.subr.bf16.mxu0 %v8927
    %9547 = vmatpush1.bf16.msra.mxu0 %v8926
    %9548 = vmatprep.subr.bf16.mxu0 %v8931
    %9549 = vmatpush1.bf16.msra.mxu0 %v8930
    %9550 = vmatprep.subr.bf16.mxu0 %v8935
    %9551 = vmatpush1.bf16.msra.mxu0 %v8934
    %9552 = vmatprep.subr.bf16.mxu0 %v8939
    %9553 = vmatpush1.bf16.msra.mxu0 %v8938
    %9554 = vmatprep.subr.bf16.mxu0 %v8943
    %9555 = vmatpush1.bf16.msra.mxu0 %v8942
    %9556 = vmatprep.subr.bf16.mxu0 %v8947
    %9557 = vmatpush1.bf16.msra.mxu0 %v8946
    %9558 = vmatprep.subr.bf16.mxu0 %v8951
    %9559 = vmatpush1.bf16.msra.mxu0 %v8950
    %9560 = vmatprep.subr.bf16.mxu0 %v8955
    %9561 = vmatpush1.bf16.msra.mxu0 %v8954
    %9562 = vmatprep.subr.bf16.mxu0 %v8959
    %9563 = vmatpush1.bf16.msra.mxu0 %v8958
    %9564 = vmatprep.subr.bf16.mxu0 %v8963
    %9565 = vmatpush1.bf16.msra.mxu0 %v8962
    %9566 = vmatprep.subr.bf16.mxu0 %v8967
    %9567 = vmatpush1.bf16.msra.mxu0 %v8966
    %9568 = vmatprep.subr.bf16.mxu0 %v8971
    %9569 = vmatpush1.bf16.msra.mxu0 %v8970
    %9570 = vmatprep.mubr.bf16.mxu0 %v7731
    %9571 = vmatmul.mubr.bf16.gmra.mrb[0].mxu0 %v7730
    %v9572 = vpop.f32.mrb[0].mxu0
    %v9573 = vadd.f32 %v9532, %v9572
    %v9574 = vpop.f32.mrb[0].mxu0
    %v9575 = vadd.f32 %v9534, %v9574
    %v9576 = vpop.f32.mrb[0].mxu0
    %v9577 = vpop.f32.mrb[0].mxu0
    %9578 = vdwg.mxu0
    %9579 = vmatprep.subr.bf16.mxu0 %v8975
    %9580 = vmatpush1.bf16.msra.mxu0 %v8974
    %9581 = vmatprep.subr.bf16.mxu0 %v8979
    %9582 = vmatpush1.bf16.msra.mxu0 %v8978
    %9583 = vmatprep.subr.bf16.mxu0 %v8983
    %9584 = vmatpush1.bf16.msra.mxu0 %v8982
    %9585 = vmatprep.subr.bf16.mxu0 %v8987
    %9586 = vmatpush1.bf16.msra.mxu0 %v8986
    %9587 = vmatprep.subr.bf16.mxu0 %v8991
    %9588 = vmatpush1.bf16.msra.mxu0 %v8990
    %9589 = vmatprep.subr.bf16.mxu0 %v8995
    %9590 = vmatpush1.bf16.msra.mxu0 %v8994
    %9591 = vmatprep.subr.bf16.mxu0 %v8999
    %9592 = vmatpush1.bf16.msra.mxu0 %v8998
    %9593 = vmatprep.subr.bf16.mxu0 %v9003
    %9594 = vmatpush1.bf16.msra.mxu0 %v9002
    %9595 = vmatprep.subr.bf16.mxu0 %v9007
    %9596 = vmatpush1.bf16.msra.mxu0 %v9006
    %9597 = vmatprep.subr.bf16.mxu0 %v9011
    %9598 = vmatpush1.bf16.msra.mxu0 %v9010
    %9599 = vmatprep.subr.bf16.mxu0 %v9015
    %9600 = vmatpush1.bf16.msra.mxu0 %v9014
    %9601 = vmatprep.subr.bf16.mxu0 %v9019
    %9602 = vmatpush1.bf16.msra.mxu0 %v9018
    %9603 = vmatprep.subr.bf16.mxu0 %v9023
    %9604 = vmatpush1.bf16.msra.mxu0 %v9022
    %9605 = vmatprep.subr.bf16.mxu0 %v9027
    %9606 = vmatpush1.bf16.msra.mxu0 %v9026
    %9607 = vmatprep.subr.bf16.mxu0 %v9031
    %9608 = vmatpush1.bf16.msra.mxu0 %v9030
    %9609 = vmatprep.subr.bf16.mxu0 %v9035
    %9610 = vmatpush1.bf16.msra.mxu0 %v9034
    %9611 = vmatprep.mubr.bf16.mxu0 %v7733
    %9612 = vmatmul.mubr.bf16.gmra.mrb[0].mxu0 %v7732
    %v9613 = vpop.f32.mrb[0].mxu0
    %v9614 = vadd.f32 %v9573, %v9613
    %v9615 = vpop.f32.mrb[0].mxu0
    %v9616 = vadd.f32 %v9575, %v9615
    %v9617 = vpop.f32.mrb[0].mxu0
    %v9618 = vpop.f32.mrb[0].mxu0
    %9619 = vdwg.mxu0
    %v9620 = vmax.f32 %v9450, 0.0
    %v9621 = vmax.f32 %v9452, 0.0
    %v9622 = vmax.f32 %v9614, 0.0
    %v9623 = vmax.f32 %v9616, 0.0
    %v9624 = vpack.c.bf16 %v9620, %v9620
    %v9625 = vpack.c.bf16 %v9621, %v9621
    %v9626 = vpack.c.bf16 %v9622, %v9622
    %v9627 = vpack.c.bf16 %v9623, %v9623
    %v9628 = vld [vmem:[#allocation10] sm:$0xff]
    %v9629 = vld [vmem:[#allocation10 + $0x8] sm:$0xff]
    %v9630 = vld [vmem:[#allocation10 + $0x10] sm:$0xff]
    %v9631 = vld [vmem:[#allocation10 + $0x18] sm:$0xff]
    %v9632 = vld [vmem:[#allocation10 + $0x20] sm:$0xff]
    %v9633 = vld [vmem:[#allocation10 + $0x28] sm:$0xff]
    %v9634 = vld [vmem:[#allocation10 + $0x30] sm:$0xff]
    %v9635 = vld [vmem:[#allocation10 + $0x38] sm:$0xff]
    %v9636 = vld [vmem:[#allocation10 + $0x40] sm:$0xff]
    %v9637 = vld [vmem:[#allocation10 + $0x48] sm:$0xff]
    %v9638 = vld [vmem:[#allocation10 + $0x50] sm:$0xff]
    %v9639 = vld [vmem:[#allocation10 + $0x58] sm:$0xff]
    %v9640 = vld [vmem:[#allocation10 + $0x60] sm:$0xff]
    %v9641 = vld [vmem:[#allocation10 + $0x68] sm:$0xff]
    %v9642 = vld [vmem:[#allocation10 + $0x70] sm:$0xff]
    %v9643 = vld [vmem:[#allocation10 + $0x78] sm:$0xff]
    %v9644 = vld [vmem:[#allocation10 + $0x80] sm:$0xff]
    %v9645 = vld [vmem:[#allocation10 + $0x88] sm:$0xff]
    %v9646 = vld [vmem:[#allocation10 + $0x90] sm:$0xff]
    %v9647 = vld [vmem:[#allocation10 + $0x98] sm:$0xff]
    %v9648 = vld [vmem:[#allocation10 + $0xa0] sm:$0xff]
    %v9649 = vld [vmem:[#allocation10 + $0xa8] sm:$0xff]
    %v9650 = vld [vmem:[#allocation10 + $0xb0] sm:$0xff]
    %v9651 = vld [vmem:[#allocation10 + $0xb8] sm:$0xff]
    %v9652 = vld [vmem:[#allocation10 + $0xc0] sm:$0xff]
    %v9653 = vld [vmem:[#allocation10 + $0xc8] sm:$0xff]
    %v9654 = vld [vmem:[#allocation10 + $0xd0] sm:$0xff]
    %v9655 = vld [vmem:[#allocation10 + $0xd8] sm:$0xff]
    %v9656 = vld [vmem:[#allocation10 + $0xe0] sm:$0xff]
    %v9657 = vld [vmem:[#allocation10 + $0xe8] sm:$0xff]
    %v9658 = vld [vmem:[#allocation10 + $0xf0] sm:$0xff]
    %v9659 = vld [vmem:[#allocation10 + $0xf8] sm:$0xff]
    %v9660 = vld [vmem:[#allocation10 + $0x100] sm:$0xff]
    %v9661 = vld [vmem:[#allocation10 + $0x108] sm:$0xff]
    %v9662 = vld [vmem:[#allocation10 + $0x110] sm:$0xff]
    %v9663 = vld [vmem:[#allocation10 + $0x118] sm:$0xff]
    %v9664 = vld [vmem:[#allocation10 + $0x120] sm:$0xff]
    %v9665 = vld [vmem:[#allocation10 + $0x128] sm:$0xff]
    %v9666 = vld [vmem:[#allocation10 + $0x130] sm:$0xff]
    %v9667 = vld [vmem:[#allocation10 + $0x138] sm:$0xff]
    %v9668 = vld [vmem:[#allocation10 + $0x140] sm:$0xff]
    %v9669 = vld [vmem:[#allocation10 + $0x148] sm:$0xff]
    %v9670 = vld [vmem:[#allocation10 + $0x150] sm:$0xff]
    %v9671 = vld [vmem:[#allocation10 + $0x158] sm:$0xff]
    %v9672 = vld [vmem:[#allocation10 + $0x160] sm:$0xff]
    %v9673 = vld [vmem:[#allocation10 + $0x168] sm:$0xff]
    %v9674 = vld [vmem:[#allocation10 + $0x170] sm:$0xff]
    %v9675 = vld [vmem:[#allocation10 + $0x178] sm:$0xff]
    %v9676 = vld [vmem:[#allocation10 + $0x180] sm:$0xff]
    %v9677 = vld [vmem:[#allocation10 + $0x188] sm:$0xff]
    %v9678 = vld [vmem:[#allocation10 + $0x190] sm:$0xff]
    %v9679 = vld [vmem:[#allocation10 + $0x198] sm:$0xff]
    %v9680 = vld [vmem:[#allocation10 + $0x1a0] sm:$0xff]
    %v9681 = vld [vmem:[#allocation10 + $0x1a8] sm:$0xff]
    %v9682 = vld [vmem:[#allocation10 + $0x1b0] sm:$0xff]
    %v9683 = vld [vmem:[#allocation10 + $0x1b8] sm:$0xff]
    %v9684 = vld [vmem:[#allocation10 + $0x1c0] sm:$0xff]
    %v9685 = vld [vmem:[#allocation10 + $0x1c8] sm:$0xff]
    %v9686 = vld [vmem:[#allocation10 + $0x1d0] sm:$0xff]
    %v9687 = vld [vmem:[#allocation10 + $0x1d8] sm:$0xff]
    %v9688 = vld [vmem:[#allocation10 + $0x1e0] sm:$0xff]
    %v9689 = vld [vmem:[#allocation10 + $0x1e8] sm:$0xff]
    %v9690 = vld [vmem:[#allocation10 + $0x1f0] sm:$0xff]
    %v9691 = vld [vmem:[#allocation10 + $0x1f8] sm:$0xff]
    %v9692 = vld [vmem:[#allocation11] sm:$0x3]
    %v9694 = vlaneseq
    %v9695 = vshrl.u32 %v9694, 7
    %v9696 = vsub.s32 0, %v9695
    %v9697 = vrot.slane %v9692, %v9696
    %v9698 = vlaneseq
    %v9699 = vshrl.u32 %v9698, 7
    %v9700 = vsub.s32 1, %v9699
    %v9701 = vrot.slane %v9692, %v9700
    %v9768 = vunpack.c.l.b16 %v9628
    %v9769 = vunpack.c.h.b16 %v9628
    %v9770 = vunpack.c.l.b16 %v9629
    %v9771 = vunpack.c.h.b16 %v9629
    %v9772 = vunpack.c.l.b16 %v9630
    %v9773 = vunpack.c.h.b16 %v9630
    %v9774 = vunpack.c.l.b16 %v9631
    %v9775 = vunpack.c.h.b16 %v9631
    %v9776 = vunpack.c.l.b16 %v9632
    %v9777 = vunpack.c.h.b16 %v9632
    %v9778 = vunpack.c.l.b16 %v9633
    %v9779 = vunpack.c.h.b16 %v9633
    %v9780 = vunpack.c.l.b16 %v9634
    %v9781 = vunpack.c.h.b16 %v9634
    %v9782 = vunpack.c.l.b16 %v9635
    %v9783 = vunpack.c.h.b16 %v9635
    %v9784 = vunpack.c.l.b16 %v9636
    %v9785 = vunpack.c.h.b16 %v9636
    %v9786 = vunpack.c.l.b16 %v9637
    %v9787 = vunpack.c.h.b16 %v9637
    %v9788 = vunpack.c.l.b16 %v9638
    %v9789 = vunpack.c.h.b16 %v9638
    %v9790 = vunpack.c.l.b16 %v9639
    %v9791 = vunpack.c.h.b16 %v9639
    %v9792 = vunpack.c.l.b16 %v9640
    %v9793 = vunpack.c.h.b16 %v9640
    %v9794 = vunpack.c.l.b16 %v9641
    %v9795 = vunpack.c.h.b16 %v9641
    %v9796 = vunpack.c.l.b16 %v9642
    %v9797 = vunpack.c.h.b16 %v9642
    %v9798 = vunpack.c.l.b16 %v9643
    %v9799 = vunpack.c.h.b16 %v9643
    %v9800 = vunpack.c.l.b16 %v9644
    %v9801 = vunpack.c.h.b16 %v9644
    %v9802 = vunpack.c.l.b16 %v9645
    %v9803 = vunpack.c.h.b16 %v9645
    %v9804 = vunpack.c.l.b16 %v9646
    %v9805 = vunpack.c.h.b16 %v9646
    %v9806 = vunpack.c.l.b16 %v9647
    %v9807 = vunpack.c.h.b16 %v9647
    %v9808 = vunpack.c.l.b16 %v9648
    %v9809 = vunpack.c.h.b16 %v9648
    %v9810 = vunpack.c.l.b16 %v9649
    %v9811 = vunpack.c.h.b16 %v9649
    %v9812 = vunpack.c.l.b16 %v9650
    %v9813 = vunpack.c.h.b16 %v9650
    %v9814 = vunpack.c.l.b16 %v9651
    %v9815 = vunpack.c.h.b16 %v9651
    %v9816 = vunpack.c.l.b16 %v9652
    %v9817 = vunpack.c.h.b16 %v9652
    %v9818 = vunpack.c.l.b16 %v9653
    %v9819 = vunpack.c.h.b16 %v9653
    %v9820 = vunpack.c.l.b16 %v9654
    %v9821 = vunpack.c.h.b16 %v9654
    %v9822 = vunpack.c.l.b16 %v9655
    %v9823 = vunpack.c.h.b16 %v9655
    %v9824 = vunpack.c.l.b16 %v9656
    %v9825 = vunpack.c.h.b16 %v9656
    %v9826 = vunpack.c.l.b16 %v9657
    %v9827 = vunpack.c.h.b16 %v9657
    %v9828 = vunpack.c.l.b16 %v9658
    %v9829 = vunpack.c.h.b16 %v9658
    %v9830 = vunpack.c.l.b16 %v9659
    %v9831 = vunpack.c.h.b16 %v9659
    %v9832 = vunpack.c.l.b16 %v9660
    %v9833 = vunpack.c.h.b16 %v9660
    %v9834 = vunpack.c.l.b16 %v9661
    %v9835 = vunpack.c.h.b16 %v9661
    %v9836 = vunpack.c.l.b16 %v9662
    %v9837 = vunpack.c.h.b16 %v9662
    %v9838 = vunpack.c.l.b16 %v9663
    %v9839 = vunpack.c.h.b16 %v9663
    %v9840 = vunpack.c.l.b16 %v9664
    %v9841 = vunpack.c.h.b16 %v9664
    %v9842 = vunpack.c.l.b16 %v9665
    %v9843 = vunpack.c.h.b16 %v9665
    %v9844 = vunpack.c.l.b16 %v9666
    %v9845 = vunpack.c.h.b16 %v9666
    %v9846 = vunpack.c.l.b16 %v9667
    %v9847 = vunpack.c.h.b16 %v9667
    %v9848 = vunpack.c.l.b16 %v9668
    %v9849 = vunpack.c.h.b16 %v9668
    %v9850 = vunpack.c.l.b16 %v9669
    %v9851 = vunpack.c.h.b16 %v9669
    %v9852 = vunpack.c.l.b16 %v9670
    %v9853 = vunpack.c.h.b16 %v9670
    %v9854 = vunpack.c.l.b16 %v9671
    %v9855 = vunpack.c.h.b16 %v9671
    %v9856 = vunpack.c.l.b16 %v9672
    %v9857 = vunpack.c.h.b16 %v9672
    %v9858 = vunpack.c.l.b16 %v9673
    %v9859 = vunpack.c.h.b16 %v9673
    %v9860 = vunpack.c.l.b16 %v9674
    %v9861 = vunpack.c.h.b16 %v9674
    %v9862 = vunpack.c.l.b16 %v9675
    %v9863 = vunpack.c.h.b16 %v9675
    %v9864 = vunpack.c.l.b16 %v9676
    %v9865 = vunpack.c.h.b16 %v9676
    %v9866 = vunpack.c.l.b16 %v9677
    %v9867 = vunpack.c.h.b16 %v9677
    %v9868 = vunpack.c.l.b16 %v9678
    %v9869 = vunpack.c.h.b16 %v9678
    %v9870 = vunpack.c.l.b16 %v9679
    %v9871 = vunpack.c.h.b16 %v9679
    %v9872 = vunpack.c.l.b16 %v9680
    %v9873 = vunpack.c.h.b16 %v9680
    %v9874 = vunpack.c.l.b16 %v9681
    %v9875 = vunpack.c.h.b16 %v9681
    %v9876 = vunpack.c.l.b16 %v9682
    %v9877 = vunpack.c.h.b16 %v9682
    %v9878 = vunpack.c.l.b16 %v9683
    %v9879 = vunpack.c.h.b16 %v9683
    %v9880 = vunpack.c.l.b16 %v9684
    %v9881 = vunpack.c.h.b16 %v9684
    %v9882 = vunpack.c.l.b16 %v9685
    %v9883 = vunpack.c.h.b16 %v9685
    %v9884 = vunpack.c.l.b16 %v9686
    %v9885 = vunpack.c.h.b16 %v9686
    %v9886 = vunpack.c.l.b16 %v9687
    %v9887 = vunpack.c.h.b16 %v9687
    %v9888 = vunpack.c.l.b16 %v9688
    %v9889 = vunpack.c.h.b16 %v9688
    %v9890 = vunpack.c.l.b16 %v9689
    %v9891 = vunpack.c.h.b16 %v9689
    %v9892 = vunpack.c.l.b16 %v9690
    %v9893 = vunpack.c.h.b16 %v9690
    %v9894 = vunpack.c.l.b16 %v9691
    %v9895 = vunpack.c.h.b16 %v9691
    %v9896 = vpack.c.b16 %v9770, %v9768
    %v9897 = vpack.c.b16 %v9771, %v9769
    %v9898 = vpack.c.b16 %v9774, %v9772
    %v9899 = vpack.c.b16 %v9775, %v9773
    %v9900 = vpack.c.b16 %v9778, %v9776
    %v9901 = vpack.c.b16 %v9779, %v9777
    %v9902 = vpack.c.b16 %v9782, %v9780
    %v9903 = vpack.c.b16 %v9783, %v9781
    %v9904 = vpack.c.b16 %v9786, %v9784
    %v9905 = vpack.c.b16 %v9787, %v9785
    %v9906 = vpack.c.b16 %v9790, %v9788
    %v9907 = vpack.c.b16 %v9791, %v9789
    %v9908 = vpack.c.b16 %v9794, %v9792
    %v9909 = vpack.c.b16 %v9795, %v9793
    %v9910 = vpack.c.b16 %v9798, %v9796
    %v9911 = vpack.c.b16 %v9799, %v9797
    %v9912 = vpack.c.b16 %v9802, %v9800
    %v9913 = vpack.c.b16 %v9803, %v9801
    %v9914 = vpack.c.b16 %v9806, %v9804
    %v9915 = vpack.c.b16 %v9807, %v9805
    %v9916 = vpack.c.b16 %v9810, %v9808
    %v9917 = vpack.c.b16 %v9811, %v9809
    %v9918 = vpack.c.b16 %v9814, %v9812
    %v9919 = vpack.c.b16 %v9815, %v9813
    %v9920 = vpack.c.b16 %v9818, %v9816
    %v9921 = vpack.c.b16 %v9819, %v9817
    %v9922 = vpack.c.b16 %v9822, %v9820
    %v9923 = vpack.c.b16 %v9823, %v9821
    %v9924 = vpack.c.b16 %v9826, %v9824
    %v9925 = vpack.c.b16 %v9827, %v9825
    %v9926 = vpack.c.b16 %v9830, %v9828
    %v9927 = vpack.c.b16 %v9831, %v9829
    %v9928 = vpack.c.b16 %v9834, %v9832
    %v9929 = vpack.c.b16 %v9835, %v9833
    %v9930 = vpack.c.b16 %v9838, %v9836
    %v9931 = vpack.c.b16 %v9839, %v9837
    %v9932 = vpack.c.b16 %v9842, %v9840
    %v9933 = vpack.c.b16 %v9843, %v9841
    %v9934 = vpack.c.b16 %v9846, %v9844
    %v9935 = vpack.c.b16 %v9847, %v9845
    %v9936 = vpack.c.b16 %v9850, %v9848
    %v9937 = vpack.c.b16 %v9851, %v9849
    %v9938 = vpack.c.b16 %v9854, %v9852
    %v9939 = vpack.c.b16 %v9855, %v9853
    %v9940 = vpack.c.b16 %v9858, %v9856
    %v9941 = vpack.c.b16 %v9859, %v9857
    %v9942 = vpack.c.b16 %v9862, %v9860
    %v9943 = vpack.c.b16 %v9863, %v9861
    %v9944 = vpack.c.b16 %v9866, %v9864
    %v9945 = vpack.c.b16 %v9867, %v9865
    %v9946 = vpack.c.b16 %v9870, %v9868
    %v9947 = vpack.c.b16 %v9871, %v9869
    %v9948 = vpack.c.b16 %v9874, %v9872
    %v9949 = vpack.c.b16 %v9875, %v9873
    %v9950 = vpack.c.b16 %v9878, %v9876
    %v9951 = vpack.c.b16 %v9879, %v9877
    %v9952 = vpack.c.b16 %v9882, %v9880
    %v9953 = vpack.c.b16 %v9883, %v9881
    %v9954 = vpack.c.b16 %v9886, %v9884
    %v9955 = vpack.c.b16 %v9887, %v9885
    %v9956 = vpack.c.b16 %v9890, %v9888
    %v9957 = vpack.c.b16 %v9891, %v9889
    %v9958 = vpack.c.b16 %v9894, %v9892
    %v9959 = vpack.c.b16 %v9895, %v9893
    %10024 = vmatprep.subr.bf16.mxu0 %v9897
    %10025 = vmatpush1.bf16.msra.mxu0 %v9896
    %10026 = vmatprep.subr.bf16.mxu0 %v9899
    %10027 = vmatpush1.bf16.msra.mxu0 %v9898
    %10028 = vmatprep.subr.bf16.mxu0 %v9901
    %10029 = vmatpush1.bf16.msra.mxu0 %v9900
    %10030 = vmatprep.subr.bf16.mxu0 %v9903
    %10031 = vmatpush1.bf16.msra.mxu0 %v9902
    %10032 = vmatprep.subr.bf16.mxu0 %v9905
    %10033 = vmatpush1.bf16.msra.mxu0 %v9904
    %10034 = vmatprep.subr.bf16.mxu0 %v9907
    %10035 = vmatpush1.bf16.msra.mxu0 %v9906
    %10036 = vmatprep.subr.bf16.mxu0 %v9909
    %10037 = vmatpush1.bf16.msra.mxu0 %v9908
    %10038 = vmatprep.subr.bf16.mxu0 %v9911
    %10039 = vmatpush1.bf16.msra.mxu0 %v9910
    %10040 = vmatprep.subr.bf16.mxu0 %v9913
    %10041 = vmatpush1.bf16.msra.mxu0 %v9912
    %10042 = vmatprep.subr.bf16.mxu0 %v9915
    %10043 = vmatpush1.bf16.msra.mxu0 %v9914
    %10044 = vmatprep.subr.bf16.mxu0 %v9917
    %10045 = vmatpush1.bf16.msra.mxu0 %v9916
    %10046 = vmatprep.subr.bf16.mxu0 %v9919
    %10047 = vmatpush1.bf16.msra.mxu0 %v9918
    %10048 = vmatprep.subr.bf16.mxu0 %v9921
    %10049 = vmatpush1.bf16.msra.mxu0 %v9920
    %10050 = vmatprep.subr.bf16.mxu0 %v9923
    %10051 = vmatpush1.bf16.msra.mxu0 %v9922
    %10052 = vmatprep.subr.bf16.mxu0 %v9925
    %10053 = vmatpush1.bf16.msra.mxu0 %v9924
    %10054 = vmatprep.subr.bf16.mxu0 %v9927
    %10055 = vmatpush1.bf16.msra.mxu0 %v9926
    %10056 = vmatprep.mubr.bf16.mxu0 %v9625
    %10057 = vmatmul.mubr.bf16.gmra.mrb[0].mxu0 %v9624
    %v10058 = vpop.f32.mrb[0].mxu0
    %v10059 = vadd.f32 %v9697, %v10058
    %v10060 = vpop.f32.mrb[0].mxu0
    %v10061 = vadd.f32 %v9701, %v10060
    %v10062 = vpop.f32.mrb[0].mxu0
    %v10063 = vpop.f32.mrb[0].mxu0
    %10064 = vdwg.mxu0
    %10065 = vmatprep.subr.bf16.mxu0 %v9929
    %10066 = vmatpush1.bf16.msra.mxu0 %v9928
    %10067 = vmatprep.subr.bf16.mxu0 %v9931
    %10068 = vmatpush1.bf16.msra.mxu0 %v9930
    %10069 = vmatprep.subr.bf16.mxu0 %v9933
    %10070 = vmatpush1.bf16.msra.mxu0 %v9932
    %10071 = vmatprep.subr.bf16.mxu0 %v9935
    %10072 = vmatpush1.bf16.msra.mxu0 %v9934
    %10073 = vmatprep.subr.bf16.mxu0 %v9937
    %10074 = vmatpush1.bf16.msra.mxu0 %v9936
    %10075 = vmatprep.subr.bf16.mxu0 %v9939
    %10076 = vmatpush1.bf16.msra.mxu0 %v9938
    %10077 = vmatprep.subr.bf16.mxu0 %v9941
    %10078 = vmatpush1.bf16.msra.mxu0 %v9940
    %10079 = vmatprep.subr.bf16.mxu0 %v9943
    %10080 = vmatpush1.bf16.msra.mxu0 %v9942
    %10081 = vmatprep.subr.bf16.mxu0 %v9945
    %10082 = vmatpush1.bf16.msra.mxu0 %v9944
    %10083 = vmatprep.subr.bf16.mxu0 %v9947
    %10084 = vmatpush1.bf16.msra.mxu0 %v9946
    %10085 = vmatprep.subr.bf16.mxu0 %v9949
    %10086 = vmatpush1.bf16.msra.mxu0 %v9948
    %10087 = vmatprep.subr.bf16.mxu0 %v9951
    %10088 = vmatpush1.bf16.msra.mxu0 %v9950
    %10089 = vmatprep.subr.bf16.mxu0 %v9953
    %10090 = vmatpush1.bf16.msra.mxu0 %v9952
    %10091 = vmatprep.subr.bf16.mxu0 %v9955
    %10092 = vmatpush1.bf16.msra.mxu0 %v9954
    %10093 = vmatprep.subr.bf16.mxu0 %v9957
    %10094 = vmatpush1.bf16.msra.mxu0 %v9956
    %10095 = vmatprep.subr.bf16.mxu0 %v9959
    %10096 = vmatpush1.bf16.msra.mxu0 %v9958
    %10097 = vmatprep.mubr.bf16.mxu0 %v9627
    %10098 = vmatmul.mubr.bf16.gmra.mrb[0].mxu0 %v9626
    %v10099 = vpop.f32.mrb[0].mxu0
    %v10100 = vadd.f32 %v10059, %v10099
    %v10101 = vpop.f32.mrb[0].mxu0
    %v10102 = vadd.f32 %v10061, %v10101
    %v10103 = vpop.f32.mrb[0].mxu0
    %v10104 = vpop.f32.mrb[0].mxu0
    %10105 = vdwg.mxu0
    %v10108 = vcombine.low %v10100, %v10102
    %10110 = vst [vmem:[%s12] sm:$0xff] %v10108
    %v10111 = vpack.c.bf16 %v10100, %v10100
    %v10112 = vpack.c.bf16 %v10102, %v10102
    %v10113 = vld [vmem:[#allocation13] sm:$0xf]
    %v10114 = vld [vmem:[#allocation13 + $0x4] sm:$0xf]
    %v10115 = vld [vmem:[#allocation13 + $0x8] sm:$0xf]
    %v10116 = vld [vmem:[#allocation13 + $0xc] sm:$0xf]
    %v10117 = vld [vmem:[#allocation13 + $0x10] sm:$0xf]
    %v10118 = vld [vmem:[#allocation13 + $0x14] sm:$0xf]
    %v10119 = vld [vmem:[#allocation13 + $0x18] sm:$0xf]
    %v10120 = vld [vmem:[#allocation13 + $0x1c] sm:$0xf]
    %v10121 = vld [vmem:[#allocation13 + $0x20] sm:$0xf]
    %v10122 = vld [vmem:[#allocation13 + $0x24] sm:$0xf]
    %v10123 = vld [vmem:[#allocation13 + $0x28] sm:$0xf]
    %v10124 = vld [vmem:[#allocation13 + $0x2c] sm:$0xf]
    %v10125 = vld [vmem:[#allocation13 + $0x30] sm:$0xf]
    %v10126 = vld [vmem:[#allocation13 + $0x34] sm:$0xf]
    %v10127 = vld [vmem:[#allocation13 + $0x38] sm:$0xf]
    %v10128 = vld [vmem:[#allocation13 + $0x3c] sm:$0xf]
    %v10129 = vld [vmem:[#allocation13 + $0x40] sm:$0xf]
    %v10130 = vld [vmem:[#allocation13 + $0x44] sm:$0xf]
    %v10131 = vld [vmem:[#allocation13 + $0x48] sm:$0xf]
    %v10132 = vld [vmem:[#allocation13 + $0x4c] sm:$0xf]
    %v10133 = vld [vmem:[#allocation13 + $0x50] sm:$0xf]
    %v10134 = vld [vmem:[#allocation13 + $0x54] sm:$0xf]
    %v10135 = vld [vmem:[#allocation13 + $0x58] sm:$0xf]
    %v10136 = vld [vmem:[#allocation13 + $0x5c] sm:$0xf]
    %v10137 = vld [vmem:[#allocation13 + $0x60] sm:$0xf]
    %v10138 = vld [vmem:[#allocation13 + $0x64] sm:$0xf]
    %v10139 = vld [vmem:[#allocation13 + $0x68] sm:$0xf]
    %v10140 = vld [vmem:[#allocation13 + $0x6c] sm:$0xf]
    %v10141 = vld [vmem:[#allocation13 + $0x70] sm:$0xf]
    %v10142 = vld [vmem:[#allocation13 + $0x74] sm:$0xf]
    %v10143 = vld [vmem:[#allocation13 + $0x78] sm:$0xf]
    %v10144 = vld [vmem:[#allocation13 + $0x7c] sm:$0xf]
    %v10145 = vld [vmem:[#allocation14] sm:$0xf]
    %v10146 = vld [vmem:[#allocation14 + $0x4] sm:$0xf]
    %v10147 = vld [vmem:[#allocation14 + $0x8] sm:$0xf]
    %v10148 = vld [vmem:[#allocation14 + $0xc] sm:$0xf]
    %v10149 = vld [vmem:[#allocation14 + $0x10] sm:$0xf]
    %v10150 = vld [vmem:[#allocation14 + $0x14] sm:$0xf]
    %v10151 = vld [vmem:[#allocation14 + $0x18] sm:$0xf]
    %v10152 = vld [vmem:[#allocation14 + $0x1c] sm:$0xf]
    %v10153 = vld [vmem:[#allocation14 + $0x20] sm:$0xf]
    %v10154 = vld [vmem:[#allocation14 + $0x24] sm:$0xf]
    %v10155 = vld [vmem:[#allocation14 + $0x28] sm:$0xf]
    %v10156 = vld [vmem:[#allocation14 + $0x2c] sm:$0xf]
    %v10157 = vld [vmem:[#allocation14 + $0x30] sm:$0xf]
    %v10158 = vld [vmem:[#allocation14 + $0x34] sm:$0xf]
    %v10159 = vld [vmem:[#allocation14 + $0x38] sm:$0xf]
    %v10160 = vld [vmem:[#allocation14 + $0x3c] sm:$0xf]
    %v10161 = vld [vmem:[#allocation14 + $0x40] sm:$0xf]
    %v10162 = vld [vmem:[#allocation14 + $0x44] sm:$0xf]
    %v10163 = vld [vmem:[#allocation14 + $0x48] sm:$0xf]
    %v10164 = vld [vmem:[#allocation14 + $0x4c] sm:$0xf]
    %v10165 = vld [vmem:[#allocation14 + $0x50] sm:$0xf]
    %v10166 = vld [vmem:[#allocation14 + $0x54] sm:$0xf]
    %v10167 = vld [vmem:[#allocation14 + $0x58] sm:$0xf]
    %v10168 = vld [vmem:[#allocation14 + $0x5c] sm:$0xf]
    %v10169 = vld [vmem:[#allocation14 + $0x60] sm:$0xf]
    %v10170 = vld [vmem:[#allocation14 + $0x64] sm:$0xf]
    %v10171 = vld [vmem:[#allocation14 + $0x68] sm:$0xf]
    %v10172 = vld [vmem:[#allocation14 + $0x6c] sm:$0xf]
    %v10173 = vld [vmem:[#allocation14 + $0x70] sm:$0xf]
    %v10174 = vld [vmem:[#allocation14 + $0x74] sm:$0xf]
    %v10175 = vld [vmem:[#allocation14 + $0x78] sm:$0xf]
    %v10176 = vld [vmem:[#allocation14 + $0x7c] sm:$0xf]
    %v10179 = vrot.slane %v10111, 1
    %v10180 = vrot.slane %v10112, 1
    %v10215 = vunpack.c.l.b16 %v10145
    %v10216 = vunpack.c.l.b16 %v10146
    %v10217 = vunpack.c.l.b16 %v10147
    %v10218 = vunpack.c.l.b16 %v10148
    %v10219 = vunpack.c.l.b16 %v10149
    %v10220 = vunpack.c.l.b16 %v10150
    %v10221 = vunpack.c.l.b16 %v10151
    %v10222 = vunpack.c.l.b16 %v10152
    %v10223 = vunpack.c.l.b16 %v10153
    %v10224 = vunpack.c.l.b16 %v10154
    %v10225 = vunpack.c.l.b16 %v10155
    %v10226 = vunpack.c.l.b16 %v10156
    %v10227 = vunpack.c.l.b16 %v10157
    %v10228 = vunpack.c.l.b16 %v10158
    %v10229 = vunpack.c.l.b16 %v10159
    %v10230 = vunpack.c.l.b16 %v10160
    %v10231 = vunpack.c.l.b16 %v10161
    %v10232 = vunpack.c.l.b16 %v10162
    %v10233 = vunpack.c.l.b16 %v10163
    %v10234 = vunpack.c.l.b16 %v10164
    %v10235 = vunpack.c.l.b16 %v10165
    %v10236 = vunpack.c.l.b16 %v10166
    %v10237 = vunpack.c.l.b16 %v10167
    %v10238 = vunpack.c.l.b16 %v10168
    %v10239 = vunpack.c.l.b16 %v10169
    %v10240 = vunpack.c.l.b16 %v10170
    %v10241 = vunpack.c.l.b16 %v10171
    %v10242 = vunpack.c.l.b16 %v10172
    %v10243 = vunpack.c.l.b16 %v10173
    %v10244 = vunpack.c.l.b16 %v10174
    %v10245 = vunpack.c.l.b16 %v10175
    %v10246 = vunpack.c.l.b16 %v10176
    %v10247 = vpack.c.b16 %v10216, %v10215
    %v10248 = vpack.c.b16 %v10218, %v10217
    %v10249 = vpack.c.b16 %v10220, %v10219
    %v10250 = vpack.c.b16 %v10222, %v10221
    %v10251 = vpack.c.b16 %v10224, %v10223
    %v10252 = vpack.c.b16 %v10226, %v10225
    %v10253 = vpack.c.b16 %v10228, %v10227
    %v10254 = vpack.c.b16 %v10230, %v10229
    %v10255 = vpack.c.b16 %v10232, %v10231
    %v10256 = vpack.c.b16 %v10234, %v10233
    %v10257 = vpack.c.b16 %v10236, %v10235
    %v10258 = vpack.c.b16 %v10238, %v10237
    %v10259 = vpack.c.b16 %v10240, %v10239
    %v10260 = vpack.c.b16 %v10242, %v10241
    %v10261 = vpack.c.b16 %v10244, %v10243
    %v10262 = vpack.c.b16 %v10246, %v10245
    %10279 = vmatprep.subr.bf16.mxu0 0
    %10280 = vmatpush1.bf16.msra.mxu0 %v10247
    %10281 = vmatprep.subr.bf16.mxu0 0
    %10282 = vmatpush1.bf16.msra.mxu0 %v10248
    %10283 = vmatprep.subr.bf16.mxu0 0
    %10284 = vmatpush1.bf16.msra.mxu0 %v10249
    %10285 = vmatprep.subr.bf16.mxu0 0
    %10286 = vmatpush1.bf16.msra.mxu0 %v10250
    %10287 = vmatprep.subr.bf16.mxu0 0
    %10288 = vmatpush1.bf16.msra.mxu0 %v10251
    %10289 = vmatprep.subr.bf16.mxu0 0
    %10290 = vmatpush1.bf16.msra.mxu0 %v10252
    %10291 = vmatprep.subr.bf16.mxu0 0
    %10292 = vmatpush1.bf16.msra.mxu0 %v10253
    %10293 = vmatprep.subr.bf16.mxu0 0
    %10294 = vmatpush1.bf16.msra.mxu0 %v10254
    %10295 = vmatprep.subr.bf16.mxu0 0
    %10296 = vmatpush1.bf16.msra.mxu0 %v10255
    %10297 = vmatprep.subr.bf16.mxu0 0
    %10298 = vmatpush1.bf16.msra.mxu0 %v10256
    %10299 = vmatprep.subr.bf16.mxu0 0
    %10300 = vmatpush1.bf16.msra.mxu0 %v10257
    %10301 = vmatprep.subr.bf16.mxu0 0
    %10302 = vmatpush1.bf16.msra.mxu0 %v10258
    %10303 = vmatprep.subr.bf16.mxu0 0
    %10304 = vmatpush1.bf16.msra.mxu0 %v10259
    %10305 = vmatprep.subr.bf16.mxu0 0
    %10306 = vmatpush1.bf16.msra.mxu0 %v10260
    %10307 = vmatprep.subr.bf16.mxu0 0
    %10308 = vmatpush1.bf16.msra.mxu0 %v10261
    %10309 = vmatprep.subr.bf16.mxu0 0
    %10310 = vmatpush1.bf16.msra.mxu0 %v10262
    %10311 = vmatprep.mubr.bf16.mxu0 %v10180
    %10312 = vmatmul.mubr.bf16.gmra.mrb[0].mxu0 %v10179
    %v10313 = vpop.f32.mrb[0].mxu0
    %v10314 = vadd.f32 0.0, %v10313
    %v10315 = vpop.f32.mrb[0].mxu0
    %v10316 = vpop.f32.mrb[0].mxu0
    %v10317 = vpop.f32.mrb[0].mxu0
    %10318 = vdwg.mxu0
    %v10351 = vunpack.c.l.b16 %v10113
    %v10352 = vunpack.c.l.b16 %v10114
    %v10353 = vunpack.c.l.b16 %v10115
    %v10354 = vunpack.c.l.b16 %v10116
    %v10355 = vunpack.c.l.b16 %v10117
    %v10356 = vunpack.c.l.b16 %v10118
    %v10357 = vunpack.c.l.b16 %v10119
    %v10358 = vunpack.c.l.b16 %v10120
    %v10359 = vunpack.c.l.b16 %v10121
    %v10360 = vunpack.c.l.b16 %v10122
    %v10361 = vunpack.c.l.b16 %v10123
    %v10362 = vunpack.c.l.b16 %v10124
    %v10363 = vunpack.c.l.b16 %v10125
    %v10364 = vunpack.c.l.b16 %v10126
    %v10365 = vunpack.c.l.b16 %v10127
    %v10366 = vunpack.c.l.b16 %v10128
    %v10367 = vunpack.c.l.b16 %v10129
    %v10368 = vunpack.c.l.b16 %v10130
    %v10369 = vunpack.c.l.b16 %v10131
    %v10370 = vunpack.c.l.b16 %v10132
    %v10371 = vunpack.c.l.b16 %v10133
    %v10372 = vunpack.c.l.b16 %v10134
    %v10373 = vunpack.c.l.b16 %v10135
    %v10374 = vunpack.c.l.b16 %v10136
    %v10375 = vunpack.c.l.b16 %v10137
    %v10376 = vunpack.c.l.b16 %v10138
    %v10377 = vunpack.c.l.b16 %v10139
    %v10378 = vunpack.c.l.b16 %v10140
    %v10379 = vunpack.c.l.b16 %v10141
    %v10380 = vunpack.c.l.b16 %v10142
    %v10381 = vunpack.c.l.b16 %v10143
    %v10382 = vunpack.c.l.b16 %v10144
    %v10383 = vpack.c.b16 %v10352, %v10351
    %v10384 = vpack.c.b16 %v10354, %v10353
    %v10385 = vpack.c.b16 %v10356, %v10355
    %v10386 = vpack.c.b16 %v10358, %v10357
    %v10387 = vpack.c.b16 %v10360, %v10359
    %v10388 = vpack.c.b16 %v10362, %v10361
    %v10389 = vpack.c.b16 %v10364, %v10363
    %v10390 = vpack.c.b16 %v10366, %v10365
    %v10391 = vpack.c.b16 %v10368, %v10367
    %v10392 = vpack.c.b16 %v10370, %v10369
    %v10393 = vpack.c.b16 %v10372, %v10371
    %v10394 = vpack.c.b16 %v10374, %v10373
    %v10395 = vpack.c.b16 %v10376, %v10375
    %v10396 = vpack.c.b16 %v10378, %v10377
    %v10397 = vpack.c.b16 %v10380, %v10379
    %v10398 = vpack.c.b16 %v10382, %v10381
    %10415 = vmatprep.subr.bf16.mxu0 0
    %10416 = vmatpush1.bf16.msra.mxu0 %v10383
    %10417 = vmatprep.subr.bf16.mxu0 0
    %10418 = vmatpush1.bf16.msra.mxu0 %v10384
    %10419 = vmatprep.subr.bf16.mxu0 0
    %10420 = vmatpush1.bf16.msra.mxu0 %v10385
    %10421 = vmatprep.subr.bf16.mxu0 0
    %10422 = vmatpush1.bf16.msra.mxu0 %v10386
    %10423 = vmatprep.subr.bf16.mxu0 0
    %10424 = vmatpush1.bf16.msra.mxu0 %v10387
    %10425 = vmatprep.subr.bf16.mxu0 0
    %10426 = vmatpush1.bf16.msra.mxu0 %v10388
    %10427 = vmatprep.subr.bf16.mxu0 0
    %10428 = vmatpush1.bf16.msra.mxu0 %v10389
    %10429 = vmatprep.subr.bf16.mxu0 0
    %10430 = vmatpush1.bf16.msra.mxu0 %v10390
    %10431 = vmatprep.subr.bf16.mxu0 0
    %10432 = vmatpush1.bf16.msra.mxu0 %v10391
    %10433 = vmatprep.subr.bf16.mxu0 0
    %10434 = vmatpush1.bf16.msra.mxu0 %v10392
    %10435 = vmatprep.subr.bf16.mxu0 0
    %10436 = vmatpush1.bf16.msra.mxu0 %v10393
    %10437 = vmatprep.subr.bf16.mxu0 0
    %10438 = vmatpush1.bf16.msra.mxu0 %v10394
    %10439 = vmatprep.subr.bf16.mxu0 0
    %10440 = vmatpush1.bf16.msra.mxu0 %v10395
    %10441 = vmatprep.subr.bf16.mxu0 0
    %10442 = vmatpush1.bf16.msra.mxu0 %v10396
    %10443 = vmatprep.subr.bf16.mxu0 0
    %10444 = vmatpush1.bf16.msra.mxu0 %v10397
    %10445 = vmatprep.subr.bf16.mxu0 0
    %10446 = vmatpush1.bf16.msra.mxu0 %v10398
    %10447 = vmatprep.mubr.bf16.mxu0 %v10112
    %10448 = vmatmul.mubr.bf16.gmra.mrb[0].mxu0 %v10111
    %v10449 = vpop.f32.mrb[0].mxu0
    %v10450 = vadd.f32 %v10314, %v10449
    %v10451 = vpop.f32.mrb[0].mxu0
    %v10452 = vpop.f32.mrb[0].mxu0
    %v10453 = vpop.f32.mrb[0].mxu0
    %10454 = vdwg.mxu0
    %v10455 = vld [vmem:[#allocation16] sm:$0x1]
    %v10457 = vlaneseq
    %v10458 = vshrl.u32 %v10457, 7
    %v10459 = vsub.s32 0, %v10458
    %v10460 = vrot.slane %v10455, %v10459
    %v10462 = vadd.f32 %v10450, %v10460
    %v10463 = vmax.f32 %v10462, 0.0
    %v10464 = vld [vmem:[#allocation17] sm:$0x1]
    %v10466 = vlaneseq
    %v10467 = vshrl.u32 %v10466, 7
    %v10468 = vsub.s32 0, %v10467
    %v10469 = vrot.slane %v10464, %v10468
    %v10471 = vmul.f32 %v10463, %v10469
    %vm10472 = vcmask 1041408
    %v10473 = vsel %vm10472, %v10471, 0.0
    %10474 = vadd.xlane.f32.xlu0 %v10473
    %v10475 = vpop.xlane.xlu0 %10474
    %v10476 = vld [vmem:[#allocation2] sm:$0x1]
    %v10478 = vlaneseq
    %v10479 = vshrl.u32 %v10478, 7
    %v10480 = vsub.s32 0, %v10479
    %v10481 = vrot.slane %v10476, %v10480
    %v10483 = vadd.f32 %v10475, %v10481
    %v10484 = vxor.u32 %v10483, 2147483648
    %v10485 = vmul.f32 %v10484, 1.442695
    %v10486 = vpow.pop %v10485
    %v10487 = vadd.f32 %v10486, 1.0
    %v10488 = vrcp.pop %v10487
    %v10489 = vmul.f32 1.0, %v10488
    %vm10490 = vcmask 1024
    %10491 = vst.msk [vmem:[%s13] sm:$0x3] %vm10490, %v10489
    // Predicated region
    $region90: #{prnu_forward.3} parent=1 // pred_check
      _
    $region91: #{prnu_forward.3} parent=1 // pred_check_branch
      %10493 = sbr.rel (0) target = $region93
    $region92: #{prnu_forward.3} parent=1 // pred_region
      _
    $region93: #{prnu_forward.3} parent=1 // pred_fallthru
      _
    // Predicated region
    $region94: #{prnu_forward.3} parent=1 // pred_check
      _
    $region95: #{prnu_forward.3} parent=1 // pred_check_branch
      %10495 = sbr.rel (0) target = $region97
    $region96: #{prnu_forward.3} parent=1 // pred_region
      _
    $region97: #{prnu_forward.3} parent=1 // pred_fallthru
      _
    // Predicated region
    $region98: #{prnu_forward.3} parent=1 // pred_check
      _
    $region99: #{prnu_forward.3} parent=1 // pred_check_branch
      %10497 = sbr.rel (0) target = $region101
    $region100: #{prnu_forward.3} parent=1 // pred_region
      _
    $region101: #{prnu_forward.3} parent=1 // pred_fallthru
      _
    // Predicated region
    $region102: #{prnu_forward.3} parent=1 // pred_check
      _
    $region103: #{prnu_forward.3} parent=1 // pred_check_branch
      %10499 = sbr.rel (0) target = $region105
    $region104: #{prnu_forward.3} parent=1 // pred_region
      _
    $region105: #{prnu_forward.3} parent=1 // pred_fallthru
      _
    %10500 = vsyncpa [#allocation4], 1
    %10501 = vsyncpa [#allocation6], 1
    %10502 = vsyncpa [#allocation9], 1
    %10503 = vsyncpa [#allocation12], 1
    %10504 = vsyncpa [#allocation15], 1
    %10505 = vsyncpa [#allocation18], 1

</llo_original>
